<compile_context>
chip_gen: v5e
topology: v5e:2x2
jax: 0.10.0
libtpu: 0.0.40
codegen_flags: <defaults>
</compile_context>

<pallas_src>
import jax
import jax.numpy as jnp
from jax import lax
from jax.experimental import pallas as pl
from jax.experimental.pallas import tpu as pltpu


# ---------------------------------------------------------------------------
# Static tile-size helpers.
# ---------------------------------------------------------------------------
def _pick_row_tile(n, target=32):
    """Largest multiple-of-8 divisor of n that is <= target (n itself if n <= target)."""
    if n <= target:
        return n
    best = 8
    c = 8
    while c <= target:
        if n % c == 0:
            best = c
        c += 8
    return best


def _pick_time_tile(t, target=32):
    """Largest divisor of t <= target, keeping >= 2 grid steps so x-tile DMAs pipeline."""
    cap = min(target, t if t <= 2 else max(1, t // 2))
    best = 1
    for c in range(1, cap + 1):
        if t % c == 0:
            best = c
    return best


# ---------------------------------------------------------------------------
# Embedding gather: ids in SMEM (scalar prefetch), table rows DMA'd from HBM.
# ---------------------------------------------------------------------------
def _embed_kernel(ids_ref, table_ref, out_ref, sem):
    rows = out_ref.shape[0]
    vmax = table_ref.shape[0] - 1
    base = pl.program_id(0) * rows
    copies = []
    for s in range(rows):
        idx = jnp.clip(ids_ref[base + s], 0, vmax)        # bounds-safe gather index
        cp = pltpu.make_async_copy(table_ref.at[pl.ds(idx, 1)],
                                   out_ref.at[pl.ds(s, 1)],
                                   sem.at[s])
        cp.start()
        copies.append(cp)
    for cp in copies:
        cp.wait()


def embed(ids_flat, table):
    n = ids_flat.shape[0]
    _, e = table.shape
    row_tile = _pick_row_tile(n)
    return pl.pallas_call(
        _embed_kernel,
        out_shape=jax.ShapeDtypeStruct((n, e), jnp.float32),
        grid_spec=pltpu.PrefetchScalarGridSpec(
            num_scalar_prefetch=1,
            grid=(n // row_tile,),
            in_specs=[pl.BlockSpec(memory_space=pl.ANY)],   # table stays in HBM
            out_specs=pl.BlockSpec((row_tile, e), lambda i, ids: (i, 0)),
            scratch_shapes=[pltpu.SemaphoreType.DMA((row_tile,))],
        ),
        compiler_params=pltpu.CompilerParams(dimension_semantics=("arbitrary",)),
    )(ids_flat.astype(jnp.int32), table)


# ---------------------------------------------------------------------------
# Fused bidirectional LSTM layer: per time tile, (a) project x of the forward tile i and the
# backward tile nt-1-i to gates (gate-major 8H columns, MXU), (b) run both recurrences with a
# single (B,2H)@(2H,8H) recurrent matmul per step and full-width masked activations.
# All activations/arrays are 2D time-major (T*B, .) so blocks are sublane/lane dense.
# ---------------------------------------------------------------------------
def _make_bilstm_kernel(n_in):
    def kernel(*args):
        xf = args[0:n_in]                       # forward-tile inputs  (tt*B, Dk)
        xb = args[n_in:2 * n_in]                # backward-tile inputs (tt*B, Dk)
        wf = args[2 * n_in:3 * n_in]            # (Dk, 8H) fwd-direction columns populated
        wb = args[3 * n_in:4 * n_in]            # (Dk, 8H) bwd-direction columns populated
        bias_ref = args[4 * n_in]               # (1, 8H)  b_ih + b_hh, both directions
        whh_ref = args[4 * n_in + 1]            # (2H, 8H) block-diagonal recurrent weight
        out_f = args[4 * n_in + 2]              # (tt*B, H)
        out_b = args[4 * n_in + 3]              # (tt*B, H)
        h_s, c_s, gxf_s, gxb_s = args[4 * n_in + 4:4 * n_in + 8]

        b, h2 = h_s.shape
        h = h2 // 2
        nrow = out_f.shape[0]
        tt = nrow // b

        @pl.when(pl.program_id(0) == 0)
        def _():
            h_s[...] = jnp.zeros_like(h_s)
            c_s[...] = jnp.zeros_like(c_s)

        # ---- time-tile input projection (hoisted out of the recurrence, fused in-kernel).
        gf = bias_ref[...]                                          # broadcasts to (nrow, 8H)
        for k in range(n_in):
            gf = gf + jnp.dot(xf[k][...], wf[k][...],
                              preferred_element_type=jnp.float32)
        gxf_s[...] = gf
        gb = None
        for k in range(n_in):
            t_k = jnp.dot(xb[k][...], wb[k][...],
                          preferred_element_type=jnp.float32)
            gb = t_k if gb is None else gb + t_k
        gxb_s[...] = gb

        # ---- sequential recurrence over the tile (both directions per step).
        whh = whh_ref[...]                                          # hoisted out of the loop
        lane = lax.broadcasted_iota(jnp.int32, (b, 8 * h), 1)
        is_g_lane = jnp.logical_and(lane >= 4 * h, lane < 6 * h)    # g gates use tanh

        h_prev = h_s[...]
        c_prev = c_s[...]
        for s in range(tt):
            sb = tt - 1 - s
            gx = gxf_s[s * b:(s + 1) * b, :] + gxb_s[sb * b:(sb + 1) * b, :]
            gates = gx + jnp.dot(h_prev, whh, preferred_element_type=jnp.float32)
            act = jnp.where(is_g_lane, jnp.tanh(gates), jax.nn.sigmoid(gates))
            i_a = act[:, 0:2 * h]          # [i_f | i_b]
            f_a = act[:, 2 * h:4 * h]      # [f_f | f_b]
            g_a = act[:, 4 * h:6 * h]      # [g_f | g_b]
            o_a = act[:, 6 * h:8 * h]      # [o_f | o_b]
            c_prev = f_a * c_prev + i_a * g_a
            h_prev = o_a * jnp.tanh(c_prev)
            out_f[s * b:(s + 1) * b, :] = h_prev[:, 0:h]
            out_b[sb * b:(sb + 1) * b, :] = h_prev[:, h:2 * h]
        h_s[...] = h_prev
        c_s[...] = c_prev

    return kernel


def bilstm_layer(xs, wf_list, wb_list, bias, whh_bd, t, b, tt):
    """xs: list of 2D time-major inputs (T*B, Dk).  Returns (out_f, out_b) each (T*B, H)."""
    h = whh_bd.shape[0] // 2
    assert t % tt == 0
    nt = t // tt
    n_in = len(xs)
    rows = tt * b

    in_specs = []
    for x in xs:                                                   # forward time tiles
        in_specs.append(pl.BlockSpec((rows, x.shape[-1]), lambda i: (i, 0)))
    for x in xs:                                                   # backward time tiles
        in_specs.append(pl.BlockSpec((rows, x.shape[-1]), lambda i: (nt - 1 - i, 0)))
    for w in list(wf_list) + list(wb_list):
        in_specs.append(pl.BlockSpec(w.shape, lambda i: (0, 0)))
    in_specs.append(pl.BlockSpec(bias.shape, lambda i: (0, 0)))
    in_specs.append(pl.BlockSpec(whh_bd.shape, lambda i: (0, 0)))

    out_specs = (pl.BlockSpec((rows, h), lambda i: (i, 0)),
                 pl.BlockSpec((rows, h), lambda i: (nt - 1 - i, 0)))

    return pl.pallas_call(
        _make_bilstm_kernel(n_in),
        out_shape=(jax.ShapeDtypeStruct((t * b, h), jnp.float32),
                   jax.ShapeDtypeStruct((t * b, h), jnp.float32)),
        grid=(nt,),
        in_specs=in_specs,
        out_specs=out_specs,
        scratch_shapes=[pltpu.VMEM((b, 2 * h), jnp.float32),       # h = [h_f | h_b]
                        pltpu.VMEM((b, 2 * h), jnp.float32),       # c = [c_f | c_b]
                        pltpu.VMEM((rows, 8 * h), jnp.float32),    # fwd x-gates for the tile
                        pltpu.VMEM((rows, 8 * h), jnp.float32)],   # bwd x-gates for the tile
        compiler_params=pltpu.CompilerParams(dimension_semantics=("arbitrary",)),
    )(*xs, *xs, *wf_list, *wb_list, bias, whh_bd)


# ---------------------------------------------------------------------------
# TextEncoder forward: embedding -> 2-layer bidirectional LSTM -> (B, T, 2H)
# ---------------------------------------------------------------------------
def text_encoder_forward(text, params):
    b, t = text.shape
    h = params["whh_bd_l0"].shape[0] // 2
    e = params["embedding"].shape[1]

    # Pad batch to a multiple of 8 so every recurrence vreg is sublane-dense.
    bp = max(8, ((b + 7) // 8) * 8)
    text_p = jnp.pad(text, ((0, bp - b), (0, 0)))

    # Gather embeddings in time-major row order (permute tiny int ids, not activations).
    ids_tm = jnp.transpose(text_p).reshape(-1)                    # (T*Bp,)
    emb = embed(ids_tm, params["embedding"])                      # (T*Bp, E)

    tt = _pick_time_tile(t)

    # ---- layer 0 ----
    f0, b0 = bilstm_layer([emb],
                          params["wih_f_l0"], params["wih_b_l0"],
                          params["bias_l0"], params["whh_bd_l0"], t, bp, tt)

    # ---- layer 1 ---- (fwd/bwd halves consumed via split weight rows: no concat pass)
    f1, b1 = bilstm_layer([f0, b0],
                          params["wih_f_l1"], params["wih_b_l1"],
                          params["bias_l1"], params["whh_bd_l1"], t, bp, tt)

    out = jnp.concatenate([f1, b1], axis=-1).reshape(t, bp, 2 * h)  # (T, Bp, 2H)
    out = jnp.transpose(out, (1, 0, 2))                             # (Bp, T, 2H) batch_first
    return out[:b]


# TODO(synk): like torch.nn.LSTM without packed sequences, the backward direction assumes all
# sequences are full length (no padding-aware reversal).
def init_params(key, vocab_size, embedding_dim, encoder_dim):
    h = encoder_dim
    bound = 1.0 / (h ** 0.5)
    keys = iter(jax.random.split(key, 40))

    def u(shape):
        return jax.random.uniform(next(keys), shape, jnp.float32, -bound, bound)

    def gate_major(w4h, direction):
        # Scatter (D, 4H) columns [i f g o] into (D, 8H) gate-major layout
        # [i_f i_b | f_f f_b | g_f g_b | o_f o_b]; the other direction's columns stay zero.
        d = w4h.shape[0]
        out = jnp.zeros((d, 8 * h), jnp.float32)
        for k in range(4):
            c0 = (2 * k + direction) * h
            out = out.at[:, c0:c0 + h].set(w4h[:, k * h:(k + 1) * h])
        return out

    params = {"embedding": jax.random.normal(next(keys),
                                             (vocab_size, embedding_dim), jnp.float32)}
    in_dims = [embedding_dim, 2 * h]
    for layer in range(2):
        d_in = in_dims[layer]
        wih_f = gate_major(u((d_in, 4 * h)), 0)                 # (d_in, 8H)
        wih_b = gate_major(u((d_in, 4 * h)), 1)                 # (d_in, 8H)
        whh_bd = jnp.concatenate([gate_major(u((h, 4 * h)), 0),
                                  gate_major(u((h, 4 * h)), 1)], axis=0)   # (2H, 8H)
        bias = (gate_major(u((1, 4 * h)) + u((1, 4 * h)), 0) +  # b_ih + b_hh, fwd
                gate_major(u((1, 4 * h)) + u((1, 4 * h)), 1))   # b_ih + b_hh, bwd
        if layer == 0:
            params["wih_f_l0"] = (wih_f,)
            params["wih_b_l0"] = (wih_b,)
        else:
            # Layer-1 input is [fwd half | bwd half] of the layer-0 output: split the weight
            # rows so the two halves are consumed directly (no concat of f0/b0 in HBM).
            params["wih_f_l1"] = (wih_f[:h], wih_f[h:])
            params["wih_b_l1"] = (wih_b[:h], wih_b[h:])
        params[f"whh_bd_l{layer}"] = whh_bd
        params[f"bias_l{layer}"] = bias
    return params


if __name__ == "__main__":
    vocab_size, embedding_dim, encoder_dim = 30, 32, 32
    batch, seq = 2, 8

    key = jax.random.PRNGKey(0)
    k_params, k_text = jax.random.split(key)
    params = init_params(k_params, vocab_size, embedding_dim, encoder_dim)
    text = jax.random.randint(k_text, (batch, seq), 0, vocab_size, jnp.int32)

    fwd = jax.jit(text_encoder_forward)
    out = jax.block_until_ready(fwd(text, params))

    assert out.shape == (batch, seq, 2 * encoder_dim), out.shape
    assert out.dtype == jnp.float32
    print("KERNEL_OK")
</pallas_src>

<mosaic_0001>
module attributes {stable_mosaic.version = 11 : i64} {
  func.func @kernel(%arg0: i32, %arg1: memref<32x32xf32, #tpu.memory_space<vmem>>, %arg2: memref<32x32xf32, #tpu.memory_space<vmem>>, %arg3: memref<32x256xf32, #tpu.memory_space<vmem>>, %arg4: memref<32x256xf32, #tpu.memory_space<vmem>>, %arg5: memref<1x256xf32, #tpu.memory_space<vmem>>, %arg6: memref<64x256xf32, #tpu.memory_space<vmem>>, %arg7: memref<32x32xf32, #tpu.memory_space<vmem>>, %arg8: memref<32x32xf32, #tpu.memory_space<vmem>>, %arg9: memref<8x64xf32, #tpu.memory_space<vmem>>, %arg10: memref<8x64xf32, #tpu.memory_space<vmem>>, %arg11: memref<32x256xf32, #tpu.memory_space<vmem>>, %arg12: memref<32x256xf32, #tpu.memory_space<vmem>>) attributes {dimension_semantics = [#tpu.dimension_semantics<arbitrary>], iteration_bounds = array<i64: 2>, scalar_prefetch = 0 : i64, scratch_operands = 4 : i64, tpu.core_type = #tpu.core_type<tc>, window_params = [{transform_indices = @transform_0, window_bounds = array<i64: 32, 32>}, {transform_indices = @transform_1, window_bounds = array<i64: 32, 32>}, {pipeline_mode = #tpu.pipeline_mode<synchronous>, transform_indices = @transform_2, window_bounds = array<i64: 32, 256>}, {pipeline_mode = #tpu.pipeline_mode<synchronous>, transform_indices = @transform_3, window_bounds = array<i64: 32, 256>}, {pipeline_mode = #tpu.pipeline_mode<synchronous>, transform_indices = @transform_4, window_bounds = array<i64: 1, 256>}, {pipeline_mode = #tpu.pipeline_mode<synchronous>, transform_indices = @transform_5, window_bounds = array<i64: 64, 256>}, {transform_indices = @transform_6, window_bounds = array<i64: 32, 32>}, {transform_indices = @transform_7, window_bounds = array<i64: 32, 32>}]} {
    %c0_i32 = arith.constant 0 : i32
    %0 = arith.cmpi eq, %arg0, %c0_i32 : i32
    %1 = arith.extui %0 : i1 to i32
    %c0_i32_0 = arith.constant 0 : i32
    %2 = arith.cmpi ne, %1, %c0_i32_0 : i32
    scf.if %2 {
      %cst_62 = arith.constant 0.000000e+00 : f32
      %125 = vector.broadcast %cst_62 : f32 to vector<8x64xf32>
      %c0_63 = arith.constant 0 : index
      %c0_64 = arith.constant 0 : index
      %126 = vector.load %arg9[%c0_63, %c0_64] : memref<8x64xf32, #tpu.memory_space<vmem>>, vector<8x64xf32>
      tpu.vector_store %arg9[%c0_63, %c0_64], %125 {strides = array<i32>} : memref<8x64xf32, #tpu.memory_space<vmem>>, vector<8x64xf32>,
      %cst_65 = arith.constant 0.000000e+00 : f32
      %127 = vector.broadcast %cst_65 : f32 to vector<8x64xf32>
      %c0_66 = arith.constant 0 : index
      %c0_67 = arith.constant 0 : index
      %128 = vector.load %arg10[%c0_66, %c0_67] : memref<8x64xf32, #tpu.memory_space<vmem>>, vector<8x64xf32>
      tpu.vector_store %arg10[%c0_66, %c0_67], %127 {strides = array<i32>} : memref<8x64xf32, #tpu.memory_space<vmem>>, vector<8x64xf32>,
    } else {
    }
    %c0 = arith.constant 0 : index
    %c0_1 = arith.constant 0 : index
    %3 = vector.load %arg5[%c0, %c0_1] : memref<1x256xf32, #tpu.memory_space<vmem>>, vector<1x256xf32>
    %c0_2 = arith.constant 0 : index
    %c0_3 = arith.constant 0 : index
    %4 = vector.load %arg1[%c0_2, %c0_3] : memref<32x32xf32, #tpu.memory_space<vmem>>, vector<32x32xf32>
    %c0_4 = arith.constant 0 : index
    %c0_5 = arith.constant 0 : index
    %5 = vector.load %arg3[%c0_4, %c0_5] : memref<32x256xf32, #tpu.memory_space<vmem>>, vector<32x256xf32>
    %cst = arith.constant dense<0.000000e+00> : vector<32x256xf32>
    %6 = tpu.matmul %4, %5, %cst {dimension_numbers = #tpu.dot_dimension_numbers<[1], [0], [0], [1], [0, 0, 1, 1], [], []>} : vector<32x32xf32>, vector<32x256xf32>, vector<32x256xf32> -> vector<32x256xf32>
    %7 = vector.broadcast %3 : vector<1x256xf32> to vector<32x256xf32>
    %8 = arith.addf %7, %6 : vector<32x256xf32>
    %c0_6 = arith.constant 0 : index
    %c0_7 = arith.constant 0 : index
    %9 = vector.load %arg11[%c0_6, %c0_7] : memref<32x256xf32, #tpu.memory_space<vmem>>, vector<32x256xf32>
    tpu.vector_store %arg11[%c0_6, %c0_7], %8 {strides = array<i32>} : memref<32x256xf32, #tpu.memory_space<vmem>>, vector<32x256xf32>,
    %c0_8 = arith.constant 0 : index
    %c0_9 = arith.constant 0 : index
    %10 = vector.load %arg2[%c0_8, %c0_9] : memref<32x32xf32, #tpu.memory_space<vmem>>, vector<32x32xf32>
    %c0_10 = arith.constant 0 : index
    %c0_11 = arith.constant 0 : index
    %11 = vector.load %arg4[%c0_10, %c0_11] : memref<32x256xf32, #tpu.memory_space<vmem>>, vector<32x256xf32>
    %cst_12 = arith.constant dense<0.000000e+00> : vector<32x256xf32>
    %12 = tpu.matmul %10, %11, %cst_12 {dimension_numbers = #tpu.dot_dimension_numbers<[1], [0], [0], [1], [0, 0, 1, 1], [], []>} : vector<32x32xf32>, vector<32x256xf32>, vector<32x256xf32> -> vector<32x256xf32>
    %c0_13 = arith.constant 0 : index
    %c0_14 = arith.constant 0 : index
    %13 = vector.load %arg12[%c0_13, %c0_14] : memref<32x256xf32, #tpu.memory_space<vmem>>, vector<32x256xf32>
    tpu.vector_store %arg12[%c0_13, %c0_14], %12 {strides = array<i32>} : memref<32x256xf32, #tpu.memory_space<vmem>>, vector<32x256xf32>,
    %c0_15 = arith.constant 0 : index
    %c0_16 = arith.constant 0 : index
    %14 = vector.load %arg6[%c0_15, %c0_16] : memref<64x256xf32, #tpu.memory_space<vmem>>, vector<64x256xf32>
    %15 = tpu.iota {dimensions = array<i32: 1>} : vector<8x256xi32>
    %c128_i32 = arith.constant 128 : i32
    %16 = vector.broadcast %c128_i32 : i32 to vector<8x256xi32>
    %17 = arith.cmpi sge, %15, %16 : vector<8x256xi32>
    %c192_i32 = arith.constant 192 : i32
    %18 = vector.broadcast %c192_i32 : i32 to vector<8x256xi32>
    %19 = arith.cmpi slt, %15, %18 : vector<8x256xi32>
    %20 = arith.andi %17, %19 : vector<8x256xi1>
    %c0_17 = arith.constant 0 : index
    %c0_18 = arith.constant 0 : index
    %21 = vector.load %arg9[%c0_17, %c0_18] : memref<8x64xf32, #tpu.memory_space<vmem>>, vector<8x64xf32>
    %c0_19 = arith.constant 0 : index
    %c0_20 = arith.constant 0 : index
    %22 = vector.load %arg10[%c0_19, %c0_20] : memref<8x64xf32, #tpu.memory_space<vmem>>, vector<8x64xf32>
    %c0_21 = arith.constant 0 : index
    %c0_22 = arith.constant 0 : index
    %23 = vector.load %arg11[%c0_21, %c0_22] : memref<32x256xf32, #tpu.memory_space<vmem>>, vector<8x256xf32>
    %c24 = arith.constant 24 : index
    %c0_23 = arith.constant 0 : index
    %24 = vector.load %arg12[%c24, %c0_23] : memref<32x256xf32, #tpu.memory_space<vmem>>, vector<8x256xf32>
    %25 = arith.addf %23, %24 : vector<8x256xf32>
    %cst_24 = arith.constant dense<0.000000e+00> : vector<8x256xf32>
    %26 = tpu.matmul %21, %14, %cst_24 {dimension_numbers = #tpu.dot_dimension_numbers<[1], [0], [0], [1], [0, 0, 1, 1], [], []>} : vector<8x64xf32>, vector<64x256xf32>, vector<8x256xf32> -> vector<8x256xf32>
    %27 = arith.addf %25, %26 : vector<8x256xf32>
    %28 = math.tanh %27 : vector<8x256xf32>
    %29 = arith.negf %27 : vector<8x256xf32>
    %30 = math.exp %29 : vector<8x256xf32>
    %cst_25 = arith.constant 1.000000e+00 : f32
    %31 = vector.broadcast %cst_25 : f32 to vector<8x256xf32>
    %32 = arith.addf %31, %30 : vector<8x256xf32>
    %33 = arith.divf %31, %32 : vector<8x256xf32>
    %34 = arith.select %20, %28, %33 : vector<8x256xi1>, vector<8x256xf32>
    %35 = vector.extract_strided_slice %34 {offsets = [0, 0], sizes = [8, 64], strides = [1, 1]} : vector<8x256xf32> to vector<8x64xf32>
    %36 = vector.extract_strided_slice %34 {offsets = [0, 64], sizes = [8, 64], strides = [1, 1]} : vector<8x256xf32> to vector<8x64xf32>
    %37 = vector.extract_strided_slice %34 {offsets = [0, 128], sizes = [8, 64], strides = [1, 1]} : vector<8x256xf32> to vector<8x64xf32>
    %38 = vector.extract_strided_slice %34 {offsets = [0, 192], sizes = [8, 64], strides = [1, 1]} : vector<8x256xf32> to vector<8x64xf32>
    %39 = arith.mulf %36, %22 : vector<8x64xf32>
    %40 = arith.mulf %35, %37 : vector<8x64xf32>
    %41 = arith.addf %39, %40 : vector<8x64xf32>
    %42 = math.tanh %41 : vector<8x64xf32>
    %43 = arith.mulf %38, %42 : vector<8x64xf32>
    %44 = vector.extract_strided_slice %43 {offsets = [0, 0], sizes = [8, 32], strides = [1, 1]} : vector<8x64xf32> to vector<8x32xf32>
    %c0_26 = arith.constant 0 : index
    %c0_27 = arith.constant 0 : index
    %45 = vector.load %arg7[%c0_26, %c0_27] : memref<32x32xf32, #tpu.memory_space<vmem>>, vector<8x32xf32>
    tpu.vector_store %arg7[%c0_26, %c0_27], %44 {strides = array<i32>} : memref<32x32xf32, #tpu.memory_space<vmem>>, vector<8x32xf32>,
    %46 = vector.extract_strided_slice %43 {offsets = [0, 32], sizes = [8, 32], strides = [1, 1]} : vector<8x64xf32> to vector<8x32xf32>
    %c24_28 = arith.constant 24 : index
    %c0_29 = arith.constant 0 : index
    %47 = vector.load %arg8[%c24_28, %c0_29] : memref<32x32xf32, #tpu.memory_space<vmem>>, vector<8x32xf32>
    tpu.vector_store %arg8[%c24_28, %c0_29], %46 {strides = array<i32>} : memref<32x32xf32, #tpu.memory_space<vmem>>, vector<8x32xf32>,
    %c8 = arith.constant 8 : index
    %c0_30 = arith.constant 0 : index
    %48 = vector.load %arg11[%c8, %c0_30] : memref<32x256xf32, #tpu.memory_space<vmem>>, vector<8x256xf32>
    %c16 = arith.constant 16 : index
    %c0_31 = arith.constant 0 : index
    %49 = vector.load %arg12[%c16, %c0_31] : memref<32x256xf32, #tpu.memory_space<vmem>>, vector<8x256xf32>
    %50 = arith.addf %48, %49 : vector<8x256xf32>
    %cst_32 = arith.constant dense<0.000000e+00> : vector<8x256xf32>
    %51 = tpu.matmul %43, %14, %cst_32 {dimension_numbers = #tpu.dot_dimension_numbers<[1], [0], [0], [1], [0, 0, 1, 1], [], []>} : vector<8x64xf32>, vector<64x256xf32>, vector<8x256xf32> -> vector<8x256xf32>
    %52 = arith.addf %50, %51 : vector<8x256xf32>
    %53 = math.tanh %52 : vector<8x256xf32>
    %54 = arith.negf %52 : vector<8x256xf32>
    %55 = math.exp %54 : vector<8x256xf32>
    %cst_33 = arith.constant 1.000000e+00 : f32
    %56 = vector.broadcast %cst_33 : f32 to vector<8x256xf32>
    %57 = arith.addf %56, %55 : vector<8x256xf32>
    %58 = arith.divf %56, %57 : vector<8x256xf32>
    %59 = arith.select %20, %53, %58 : vector<8x256xi1>, vector<8x256xf32>
    %60 = vector.extract_strided_slice %59 {offsets = [0, 0], sizes = [8, 64], strides = [1, 1]} : vector<8x256xf32> to vector<8x64xf32>
    %61 = vector.extract_strided_slice %59 {offsets = [0, 64], sizes = [8, 64], strides = [1, 1]} : vector<8x256xf32> to vector<8x64xf32>
    %62 = vector.extract_strided_slice %59 {offsets = [0, 128], sizes = [8, 64], strides = [1, 1]} : vector<8x256xf32> to vector<8x64xf32>
    %63 = vector.extract_strided_slice %59 {offsets = [0, 192], sizes = [8, 64], strides = [1, 1]} : vector<8x256xf32> to vector<8x64xf32>
    %64 = arith.mulf %61, %41 : vector<8x64xf32>
    %65 = arith.mulf %60, %62 : vector<8x64xf32>
    %66 = arith.addf %64, %65 : vector<8x64xf32>
    %67 = math.tanh %66 : vector<8x64xf32>
    %68 = arith.mulf %63, %67 : vector<8x64xf32>
    %69 = vector.extract_strided_slice %68 {offsets = [0, 0], sizes = [8, 32], strides = [1, 1]} : vector<8x64xf32> to vector<8x32xf32>
    %c8_34 = arith.constant 8 : index
    %c0_35 = arith.constant 0 : index
    %70 = vector.load %arg7[%c8_34, %c0_35] : memref<32x32xf32, #tpu.memory_space<vmem>>, vector<8x32xf32>
    tpu.vector_store %arg7[%c8_34, %c0_35], %69 {strides = array<i32>} : memref<32x32xf32, #tpu.memory_space<vmem>>, vector<8x32xf32>,
    %71 = vector.extract_strided_slice %68 {offsets = [0, 32], sizes = [8, 32], strides = [1, 1]} : vector<8x64xf32> to vector<8x32xf32>
    %c16_36 = arith.constant 16 : index
    %c0_37 = arith.constant 0 : index
    %72 = vector.load %arg8[%c16_36, %c0_37] : memref<32x32xf32, #tpu.memory_space<vmem>>, vector<8x32xf32>
    tpu.vector_store %arg8[%c16_36, %c0_37], %71 {strides = array<i32>} : memref<32x32xf32, #tpu.memory_space<vmem>>, vector<8x32xf32>,
    %c16_38 = arith.constant 16 : index
    %c0_39 = arith.constant 0 : index
    %73 = vector.load %arg11[%c16_38, %c0_39] : memref<32x256xf32, #tpu.memory_space<vmem>>, vector<8x256xf32>
    %c8_40 = arith.constant 8 : index
    %c0_41 = arith.constant 0 : index
    %74 = vector.load %arg12[%c8_40, %c0_41] : memref<32x256xf32, #tpu.memory_space<vmem>>, vector<8x256xf32>
    %75 = arith.addf %73, %74 : vector<8x256xf32>
    %cst_42 = arith.constant dense<0.000000e+00> : vector<8x256xf32>
    %76 = tpu.matmul %68, %14, %cst_42 {dimension_numbers = #tpu.dot_dimension_numbers<[1], [0], [0], [1], [0, 0, 1, 1], [], []>} : vector<8x64xf32>, vector<64x256xf32>, vector<8x256xf32> -> vector<8x256xf32>
    %77 = arith.addf %75, %76 : vector<8x256xf32>
    %78 = math.tanh %77 : vector<8x256xf32>
    %79 = arith.negf %77 : vector<8x256xf32>
    %80 = math.exp %79 : vector<8x256xf32>
    %cst_43 = arith.constant 1.000000e+00 : f32
    %81 = vector.broadcast %cst_43 : f32 to vector<8x256xf32>
    %82 = arith.addf %81, %80 : vector<8x256xf32>
    %83 = arith.divf %81, %82 : vector<8x256xf32>
    %84 = arith.select %20, %78, %83 : vector<8x256xi1>, vector<8x256xf32>
    %85 = vector.extract_strided_slice %84 {offsets = [0, 0], sizes = [8, 64], strides = [1, 1]} : vector<8x256xf32> to vector<8x64xf32>
    %86 = vector.extract_strided_slice %84 {offsets = [0, 64], sizes = [8, 64], strides = [1, 1]} : vector<8x256xf32> to vector<8x64xf32>
    %87 = vector.extract_strided_slice %84 {offsets = [0, 128], sizes = [8, 64], strides = [1, 1]} : vector<8x256xf32> to vector<8x64xf32>
    %88 = vector.extract_strided_slice %84 {offsets = [0, 192], sizes = [8, 64], strides = [1, 1]} : vector<8x256xf32> to vector<8x64xf32>
    %89 = arith.mulf %86, %66 : vector<8x64xf32>
    %90 = arith.mulf %85, %87 : vector<8x64xf32>
    %91 = arith.addf %89, %90 : vector<8x64xf32>
    %92 = math.tanh %91 : vector<8x64xf32>
    %93 = arith.mulf %88, %92 : vector<8x64xf32>
    %94 = vector.extract_strided_slice %93 {offsets = [0, 0], sizes = [8, 32], strides = [1, 1]} : vector<8x64xf32> to vector<8x32xf32>
    %c16_44 = arith.constant 16 : index
    %c0_45 = arith.constant 0 : index
    %95 = vector.load %arg7[%c16_44, %c0_45] : memref<32x32xf32, #tpu.memory_space<vmem>>, vector<8x32xf32>
    tpu.vector_store %arg7[%c16_44, %c0_45], %94 {strides = array<i32>} : memref<32x32xf32, #tpu.memory_space<vmem>>, vector<8x32xf32>,
    %96 = vector.extract_strided_slice %93 {offsets = [0, 32], sizes = [8, 32], strides = [1, 1]} : vector<8x64xf32> to vector<8x32xf32>
    %c8_46 = arith.constant 8 : index
    %c0_47 = arith.constant 0 : index
    %97 = vector.load %arg8[%c8_46, %c0_47] : memref<32x32xf32, #tpu.memory_space<vmem>>, vector<8x32xf32>
    tpu.vector_store %arg8[%c8_46, %c0_47], %96 {strides = array<i32>} : memref<32x32xf32, #tpu.memory_space<vmem>>, vector<8x32xf32>,
    %c24_48 = arith.constant 24 : index
    %c0_49 = arith.constant 0 : index
    %98 = vector.load %arg11[%c24_48, %c0_49] : memref<32x256xf32, #tpu.memory_space<vmem>>, vector<8x256xf32>
    %c0_50 = arith.constant 0 : index
    %c0_51 = arith.constant 0 : index
    %99 = vector.load %arg12[%c0_50, %c0_51] : memref<32x256xf32, #tpu.memory_space<vmem>>, vector<8x256xf32>
    %100 = arith.addf %98, %99 : vector<8x256xf32>
    %cst_52 = arith.constant dense<0.000000e+00> : vector<8x256xf32>
    %101 = tpu.matmul %93, %14, %cst_52 {dimension_numbers = #tpu.dot_dimension_numbers<[1], [0], [0], [1], [0, 0, 1, 1], [], []>} : vector<8x64xf32>, vector<64x256xf32>, vector<8x256xf32> -> vector<8x256xf32>
    %102 = arith.addf %100, %101 : vector<8x256xf32>
    %103 = math.tanh %102 : vector<8x256xf32>
    %104 = arith.negf %102 : vector<8x256xf32>
    %105 = math.exp %104 : vector<8x256xf32>
    %cst_53 = arith.constant 1.000000e+00 : f32
    %106 = vector.broadcast %cst_53 : f32 to vector<8x256xf32>
    %107 = arith.addf %106, %105 : vector<8x256xf32>
    %108 = arith.divf %106, %107 : vector<8x256xf32>
    %109 = arith.select %20, %103, %108 : vector<8x256xi1>, vector<8x256xf32>
    %110 = vector.extract_strided_slice %109 {offsets = [0, 0], sizes = [8, 64], strides = [1, 1]} : vector<8x256xf32> to vector<8x64xf32>
    %111 = vector.extract_strided_slice %109 {offsets = [0, 64], sizes = [8, 64], strides = [1, 1]} : vector<8x256xf32> to vector<8x64xf32>
    %112 = vector.extract_strided_slice %109 {offsets = [0, 128], sizes = [8, 64], strides = [1, 1]} : vector<8x256xf32> to vector<8x64xf32>
    %113 = vector.extract_strided_slice %109 {offsets = [0, 192], sizes = [8, 64], strides = [1, 1]} : vector<8x256xf32> to vector<8x64xf32>
    %114 = arith.mulf %111, %91 : vector<8x64xf32>
    %115 = arith.mulf %110, %112 : vector<8x64xf32>
    %116 = arith.addf %114, %115 : vector<8x64xf32>
    %117 = math.tanh %116 : vector<8x64xf32>
    %118 = arith.mulf %113, %117 : vector<8x64xf32>
    %119 = vector.extract_strided_slice %118 {offsets = [0, 0], sizes = [8, 32], strides = [1, 1]} : vector<8x64xf32> to vector<8x32xf32>
    %c24_54 = arith.constant 24 : index
    %c0_55 = arith.constant 0 : index
    %120 = vector.load %arg7[%c24_54, %c0_55] : memref<32x32xf32, #tpu.memory_space<vmem>>, vector<8x32xf32>
    tpu.vector_store %arg7[%c24_54, %c0_55], %119 {strides = array<i32>} : memref<32x32xf32, #tpu.memory_space<vmem>>, vector<8x32xf32>,
    %121 = vector.extract_strided_slice %118 {offsets = [0, 32], sizes = [8, 32], strides = [1, 1]} : vector<8x64xf32> to vector<8x32xf32>
    %c0_56 = arith.constant 0 : index
    %c0_57 = arith.constant 0 : index
    %122 = vector.load %arg8[%c0_56, %c0_57] : memref<32x32xf32, #tpu.memory_space<vmem>>, vector<8x32xf32>
    tpu.vector_store %arg8[%c0_56, %c0_57], %121 {strides = array<i32>} : memref<32x32xf32, #tpu.memory_space<vmem>>, vector<8x32xf32>,
    %c0_58 = arith.constant 0 : index
    %c0_59 = arith.constant 0 : index
    %123 = vector.load %arg9[%c0_58, %c0_59] : memref<8x64xf32, #tpu.memory_space<vmem>>, vector<8x64xf32>
    tpu.vector_store %arg9[%c0_58, %c0_59], %118 {strides = array<i32>} : memref<8x64xf32, #tpu.memory_space<vmem>>, vector<8x64xf32>,
    %c0_60 = arith.constant 0 : index
    %c0_61 = arith.constant 0 : index
    %124 = vector.load %arg10[%c0_60, %c0_61] : memref<8x64xf32, #tpu.memory_space<vmem>>, vector<8x64xf32>
    tpu.vector_store %arg10[%c0_60, %c0_61], %116 {strides = array<i32>} : memref<8x64xf32, #tpu.memory_space<vmem>>, vector<8x64xf32>,
    return
  }
  func.func @transform_0(%arg0: i32) -> (i32, i32) {
    %c0_i32 = arith.constant 0 : i32
    %c0_i32_0 = arith.constant 0 : i32
    return %arg0, %c0_i32 : i32, i32
  }
  func.func @transform_1(%arg0: i32) -> (i32, i32) {
    %c1_i32 = arith.constant 1 : i32
    %0 = arith.subi %c1_i32, %arg0 : i32
    %c0_i32 = arith.constant 0 : i32
    %c0_i32_0 = arith.constant 0 : i32
    return %0, %c0_i32 : i32, i32
  }
  func.func @transform_2(%arg0: i32) -> (i32, i32) {
    %c0_i32 = arith.constant 0 : i32
    %c0_i32_0 = arith.constant 0 : i32
    %c0_i32_1 = arith.constant 0 : i32
    return %c0_i32, %c0_i32_0 : i32, i32
  }
  func.func @transform_3(%arg0: i32) -> (i32, i32) {
    %c0_i32 = arith.constant 0 : i32
    %c0_i32_0 = arith.constant 0 : i32
    %c0_i32_1 = arith.constant 0 : i32
    return %c0_i32, %c0_i32_0 : i32, i32
  }
  func.func @transform_4(%arg0: i32) -> (i32, i32) {
    %c0_i32 = arith.constant 0 : i32
    %c0_i32_0 = arith.constant 0 : i32
    %c0_i32_1 = arith.constant 0 : i32
    return %c0_i32, %c0_i32_0 : i32, i32
  }
  func.func @transform_5(%arg0: i32) -> (i32, i32) {
    %c0_i32 = arith.constant 0 : i32
    %c0_i32_0 = arith.constant 0 : i32
    %c0_i32_1 = arith.constant 0 : i32
    return %c0_i32, %c0_i32_0 : i32, i32
  }
  func.func @transform_6(%arg0: i32) -> (i32, i32) {
    %c0_i32 = arith.constant 0 : i32
    %c0_i32_0 = arith.constant 0 : i32
    return %arg0, %c0_i32 : i32, i32
  }
  func.func @transform_7(%arg0: i32) -> (i32, i32) {
    %c1_i32 = arith.constant 1 : i32
    %0 = arith.subi %c1_i32, %arg0 : i32
    %c0_i32 = arith.constant 0 : i32
    %c0_i32_0 = arith.constant 0 : i32
    return %0, %c0_i32 : i32, i32
  }
}

module attributes {stable_mosaic.version = 11 : i64} {
  func.func @_embed_kernel(%arg0: i32, %arg1: memref<64xi32, #tpu.memory_space<smem>>, %arg2: memref<30x32xf32, #tpu.memory_space<any>>, %arg3: memref<32x32xf32, #tpu.memory_space<vmem>>, %arg4: memref<32x!tpu.dma_semaphore, #tpu.memory_space<semaphore_mem>>) attributes {dimension_semantics = [#tpu.dimension_semantics<arbitrary>], iteration_bounds = array<i64: 2>, scalar_prefetch = 1 : i64, scratch_operands = 1 : i64, tpu.core_type = #tpu.core_type<tc>, window_params = [{}, {transform_indices = @transform_1, window_bounds = array<i64: 32, 32>}]} {
    %c32_i32 = arith.constant 32 : i32
    %0 = arith.muli %arg0, %c32_i32 : i32
    %c0_i32 = arith.constant 0 : i32
    %1 = arith.addi %0, %c0_i32 : i32
    %2 = arith.index_cast %1 : i32 to index
    %3 = memref.load %arg1[%2] : memref<64xi32, #tpu.memory_space<smem>>
    %c0_i32_0 = arith.constant 0 : i32
    %c29_i32 = arith.constant 29 : i32
    %4 = arith.maxsi %c0_i32_0, %3 : i32
    %5 = arith.minsi %c29_i32, %4 : i32
    %c0_i32_1 = arith.constant 0 : i32
    %c0_i32_2 = arith.constant 0 : i32
    %6 = tpu.memref_slice %arg2[%5, %c0_i32_2] : memref<30x32xf32, #tpu.memory_space<any>> -> memref<1x32xf32, #tpu.memory_space<any>>
    %c0_i32_3 = arith.constant 0 : i32
    %c0_i32_4 = arith.constant 0 : i32
    %7 = tpu.memref_slice %arg3[%c0_i32_3, %c0_i32_4] : memref<32x32xf32, #tpu.memory_space<vmem>> -> memref<1x32xf32, #tpu.memory_space<vmem>>
    %8 = tpu.memref_slice %arg4[%c0_i32_1] : memref<32x!tpu.dma_semaphore, #tpu.memory_space<semaphore_mem>> -> memref<1x!tpu.dma_semaphore, #tpu.memory_space<semaphore_mem>>
    %9 = tpu.memref_squeeze %8 : memref<1x!tpu.dma_semaphore, #tpu.memory_space<semaphore_mem>> -> memref<!tpu.dma_semaphore, #tpu.memory_space<semaphore_mem>>
    tpu.enqueue_dma source(%6 : memref<1x32xf32, #tpu.memory_space<any>>) target(%7 : memref<1x32xf32, #tpu.memory_space<vmem>>) target_semaphore(%9 : memref<!tpu.dma_semaphore, #tpu.memory_space<semaphore_mem>>)
    %c1_i32 = arith.constant 1 : i32
    %10 = arith.addi %0, %c1_i32 : i32
    %11 = arith.index_cast %10 : i32 to index
    %12 = memref.load %arg1[%11] : memref<64xi32, #tpu.memory_space<smem>>
    %c0_i32_5 = arith.constant 0 : i32
    %c29_i32_6 = arith.constant 29 : i32
    %13 = arith.maxsi %c0_i32_5, %12 : i32
    %14 = arith.minsi %c29_i32_6, %13 : i32
    %c1_i32_7 = arith.constant 1 : i32
    %c0_i32_8 = arith.constant 0 : i32
    %15 = tpu.memref_slice %arg2[%14, %c0_i32_8] : memref<30x32xf32, #tpu.memory_space<any>> -> memref<1x32xf32, #tpu.memory_space<any>>
    %c1_i32_9 = arith.constant 1 : i32
    %c0_i32_10 = arith.constant 0 : i32
    %16 = tpu.memref_slice %arg3[%c1_i32_9, %c0_i32_10] : memref<32x32xf32, #tpu.memory_space<vmem>> -> memref<1x32xf32, #tpu.memory_space<vmem>>
    %17 = tpu.memref_slice %arg4[%c1_i32_7] : memref<32x!tpu.dma_semaphore, #tpu.memory_space<semaphore_mem>> -> memref<1x!tpu.dma_semaphore, #tpu.memory_space<semaphore_mem>>
    %18 = tpu.memref_squeeze %17 : memref<1x!tpu.dma_semaphore, #tpu.memory_space<semaphore_mem>> -> memref<!tpu.dma_semaphore, #tpu.memory_space<semaphore_mem>>
    tpu.enqueue_dma source(%15 : memref<1x32xf32, #tpu.memory_space<any>>) target(%16 : memref<1x32xf32, #tpu.memory_space<vmem>>) target_semaphore(%18 : memref<!tpu.dma_semaphore, #tpu.memory_space<semaphore_mem>>)
    %c2_i32 = arith.constant 2 : i32
    %19 = arith.addi %0, %c2_i32 : i32
    %20 = arith.index_cast %19 : i32 to index
    %21 = memref.load %arg1[%20] : memref<64xi32, #tpu.memory_space<smem>>
    %c0_i32_11 = arith.constant 0 : i32
    %c29_i32_12 = arith.constant 29 : i32
    %22 = arith.maxsi %c0_i32_11, %21 : i32
    %23 = arith.minsi %c29_i32_12, %22 : i32
    %c2_i32_13 = arith.constant 2 : i32
    %c0_i32_14 = arith.constant 0 : i32
    %24 = tpu.memref_slice %arg2[%23, %c0_i32_14] : memref<30x32xf32, #tpu.memory_space<any>> -> memref<1x32xf32, #tpu.memory_space<any>>
    %c2_i32_15 = arith.constant 2 : i32
    %c0_i32_16 = arith.constant 0 : i32
    %25 = tpu.memref_slice %arg3[%c2_i32_15, %c0_i32_16] : memref<32x32xf32, #tpu.memory_space<vmem>> -> memref<1x32xf32, #tpu.memory_space<vmem>>
    %26 = tpu.memref_slice %arg4[%c2_i32_13] : memref<32x!tpu.dma_semaphore, #tpu.memory_space<semaphore_mem>> -> memref<1x!tpu.dma_semaphore, #tpu.memory_space<semaphore_mem>>
    %27 = tpu.memref_squeeze %26 : memref<1x!tpu.dma_semaphore, #tpu.memory_space<semaphore_mem>> -> memref<!tpu.dma_semaphore, #tpu.memory_space<semaphore_mem>>
    tpu.enqueue_dma source(%24 : memref<1x32xf32, #tpu.memory_space<any>>) target(%25 : memref<1x32xf32, #tpu.memory_space<vmem>>) target_semaphore(%27 : memref<!tpu.dma_semaphore, #tpu.memory_space<semaphore_mem>>)
    %c3_i32 = arith.constant 3 : i32
    %28 = arith.addi %0, %c3_i32 : i32
    %29 = arith.index_cast %28 : i32 to index
    %30 = memref.load %arg1[%29] : memref<64xi32, #tpu.memory_space<smem>>
    %c0_i32_17 = arith.constant 0 : i32
    %c29_i32_18 = arith.constant 29 : i32
    %31 = arith.maxsi %c0_i32_17, %30 : i32
    %32 = arith.minsi %c29_i32_18, %31 : i32
    %c3_i32_19 = arith.constant 3 : i32
    %c0_i32_20 = arith.constant 0 : i32
    %33 = tpu.memref_slice %arg2[%32, %c0_i32_20] : memref<30x32xf32, #tpu.memory_space<any>> -> memref<1x32xf32, #tpu.memory_space<any>>
    %c3_i32_21 = arith.constant 3 : i32
    %c0_i32_22 = arith.constant 0 : i32
    %34 = tpu.memref_slice %arg3[%c3_i32_21, %c0_i32_22] : memref<32x32xf32, #tpu.memory_space<vmem>> -> memref<1x32xf32, #tpu.memory_space<vmem>>
    %35 = tpu.memref_slice %arg4[%c3_i32_19] : memref<32x!tpu.dma_semaphore, #tpu.memory_space<semaphore_mem>> -> memref<1x!tpu.dma_semaphore, #tpu.memory_space<semaphore_mem>>
    %36 = tpu.memref_squeeze %35 : memref<1x!tpu.dma_semaphore, #tpu.memory_space<semaphore_mem>> -> memref<!tpu.dma_semaphore, #tpu.memory_space<semaphore_mem>>
    tpu.enqueue_dma source(%33 : memref<1x32xf32, #tpu.memory_space<any>>) target(%34 : memref<1x32xf32, #tpu.memory_space<vmem>>) target_semaphore(%36 : memref<!tpu.dma_semaphore, #tpu.memory_space<semaphore_mem>>)
    %c4_i32 = arith.constant 4 : i32
    %37 = arith.addi %0, %c4_i32 : i32
    %38 = arith.index_cast %37 : i32 to index
    %39 = memref.load %arg1[%38] : memref<64xi32, #tpu.memory_space<smem>>
    %c0_i32_23 = arith.constant 0 : i32
    %c29_i32_24 = arith.constant 29 : i32
    %40 = arith.maxsi %c0_i32_23, %39 : i32
    %41 = arith.minsi %c29_i32_24, %40 : i32
    %c4_i32_25 = arith.constant 4 : i32
    %c0_i32_26 = arith.constant 0 : i32
    %42 = tpu.memref_slice %arg2[%41, %c0_i32_26] : memref<30x32xf32, #tpu.memory_space<any>> -> memref<1x32xf32, #tpu.memory_space<any>>
    %c4_i32_27 = arith.constant 4 : i32
    %c0_i32_28 = arith.constant 0 : i32
    %43 = tpu.memref_slice %arg3[%c4_i32_27, %c0_i32_28] : memref<32x32xf32, #tpu.memory_space<vmem>> -> memref<1x32xf32, #tpu.memory_space<vmem>>
    %44 = tpu.memref_slice %arg4[%c4_i32_25] : memref<32x!tpu.dma_semaphore, #tpu.memory_space<semaphore_mem>> -> memref<1x!tpu.dma_semaphore, #tpu.memory_space<semaphore_mem>>
    %45 = tpu.memref_squeeze %44 : memref<1x!tpu.dma_semaphore, #tpu.memory_space<semaphore_mem>> -> memref<!tpu.dma_semaphore, #tpu.memory_space<semaphore_mem>>
    tpu.enqueue_dma source(%42 : memref<1x32xf32, #tpu.memory_space<any>>) target(%43 : memref<1x32xf32, #tpu.memory_space<vmem>>) target_semaphore(%45 : memref<!tpu.dma_semaphore, #tpu.memory_space<semaphore_mem>>)
    %c5_i32 = arith.constant 5 : i32
    %46 = arith.addi %0, %c5_i32 : i32
    %47 = arith.index_cast %46 : i32 to index
    %48 = memref.load %arg1[%47] : memref<64xi32, #tpu.memory_space<smem>>
    %c0_i32_29 = arith.constant 0 : i32
    %c29_i32_30 = arith.constant 29 : i32
    %49 = arith.maxsi %c0_i32_29, %48 : i32
    %50 = arith.minsi %c29_i32_30, %49 : i32
    %c5_i32_31 = arith.constant 5 : i32
    %c0_i32_32 = arith.constant 0 : i32
    %51 = tpu.memref_slice %arg2[%50, %c0_i32_32] : memref<30x32xf32, #tpu.memory_space<any>> -> memref<1x32xf32, #tpu.memory_space<any>>
    %c5_i32_33 = arith.constant 5 : i32
    %c0_i32_34 = arith.constant 0 : i32
    %52 = tpu.memref_slice %arg3[%c5_i32_33, %c0_i32_34] : memref<32x32xf32, #tpu.memory_space<vmem>> -> memref<1x32xf32, #tpu.memory_space<vmem>>
    %53 = tpu.memref_slice %arg4[%c5_i32_31] : memref<32x!tpu.dma_semaphore, #tpu.memory_space<semaphore_mem>> -> memref<1x!tpu.dma_semaphore, #tpu.memory_space<semaphore_mem>>
    %54 = tpu.memref_squeeze %53 : memref<1x!tpu.dma_semaphore, #tpu.memory_space<semaphore_mem>> -> memref<!tpu.dma_semaphore, #tpu.memory_space<semaphore_mem>>
    tpu.enqueue_dma source(%51 : memref<1x32xf32, #tpu.memory_space<any>>) target(%52 : memref<1x32xf32, #tpu.memory_space<vmem>>) target_semaphore(%54 : memref<!tpu.dma_semaphore, #tpu.memory_space<semaphore_mem>>)
    %c6_i32 = arith.constant 6 : i32
    %55 = arith.addi %0, %c6_i32 : i32
    %56 = arith.index_cast %55 : i32 to index
    %57 = memref.load %arg1[%56] : memref<64xi32, #tpu.memory_space<smem>>
    %c0_i32_35 = arith.constant 0 : i32
    %c29_i32_36 = arith.constant 29 : i32
    %58 = arith.maxsi %c0_i32_35, %57 : i32
    %59 = arith.minsi %c29_i32_36, %58 : i32
    %c6_i32_37 = arith.constant 6 : i32
    %c0_i32_38 = arith.constant 0 : i32
    %60 = tpu.memref_slice %arg2[%59, %c0_i32_38] : memref<30x32xf32, #tpu.memory_space<any>> -> memref<1x32xf32, #tpu.memory_space<any>>
    %c6_i32_39 = arith.constant 6 : i32
    %c0_i32_40 = arith.constant 0 : i32
    %61 = tpu.memref_slice %arg3[%c6_i32_39, %c0_i32_40] : memref<32x32xf32, #tpu.memory_space<vmem>> -> memref<1x32xf32, #tpu.memory_space<vmem>>
    %62 = tpu.memref_slice %arg4[%c6_i32_37] : memref<32x!tpu.dma_semaphore, #tpu.memory_space<semaphore_mem>> -> memref<1x!tpu.dma_semaphore, #tpu.memory_space<semaphore_mem>>
    %63 = tpu.memref_squeeze %62 : memref<1x!tpu.dma_semaphore, #tpu.memory_space<semaphore_mem>> -> memref<!tpu.dma_semaphore, #tpu.memory_space<semaphore_mem>>
    tpu.enqueue_dma source(%60 : memref<1x32xf32, #tpu.memory_space<any>>) target(%61 : memref<1x32xf32, #tpu.memory_space<vmem>>) target_semaphore(%63 : memref<!tpu.dma_semaphore, #tpu.memory_space<semaphore_mem>>)
    %c7_i32 = arith.constant 7 : i32
    %64 = arith.addi %0, %c7_i32 : i32
    %65 = arith.index_cast %64 : i32 to index
    %66 = memref.load %arg1[%65] : memref<64xi32, #tpu.memory_space<smem>>
    %c0_i32_41 = arith.constant 0 : i32
    %c29_i32_42 = arith.constant 29 : i32
    %67 = arith.maxsi %c0_i32_41, %66 : i32
    %68 = arith.minsi %c29_i32_42, %67 : i32
    %c7_i32_43 = arith.constant 7 : i32
    %c0_i32_44 = arith.constant 0 : i32
    %69 = tpu.memref_slice %arg2[%68, %c0_i32_44] : memref<30x32xf32, #tpu.memory_space<any>> -> memref<1x32xf32, #tpu.memory_space<any>>
    %c7_i32_45 = arith.constant 7 : i32
    %c0_i32_46 = arith.constant 0 : i32
    %70 = tpu.memref_slice %arg3[%c7_i32_45, %c0_i32_46] : memref<32x32xf32, #tpu.memory_space<vmem>> -> memref<1x32xf32, #tpu.memory_space<vmem>>
    %71 = tpu.memref_slice %arg4[%c7_i32_43] : memref<32x!tpu.dma_semaphore, #tpu.memory_space<semaphore_mem>> -> memref<1x!tpu.dma_semaphore, #tpu.memory_space<semaphore_mem>>
    %72 = tpu.memref_squeeze %71 : memref<1x!tpu.dma_semaphore, #tpu.memory_space<semaphore_mem>> -> memref<!tpu.dma_semaphore, #tpu.memory_space<semaphore_mem>>
    tpu.enqueue_dma source(%69 : memref<1x32xf32, #tpu.memory_space<any>>) target(%70 : memref<1x32xf32, #tpu.memory_space<vmem>>) target_semaphore(%72 : memref<!tpu.dma_semaphore, #tpu.memory_space<semaphore_mem>>)
    %c8_i32 = arith.constant 8 : i32
    %73 = arith.addi %0, %c8_i32 : i32
    %74 = arith.index_cast %73 : i32 to index
    %75 = memref.load %arg1[%74] : memref<64xi32, #tpu.memory_space<smem>>
    %c0_i32_47 = arith.constant 0 : i32
    %c29_i32_48 = arith.constant 29 : i32
    %76 = arith.maxsi %c0_i32_47, %75 : i32
    %77 = arith.minsi %c29_i32_48, %76 : i32
    %c8_i32_49 = arith.constant 8 : i32
    %c0_i32_50 = arith.constant 0 : i32
    %78 = tpu.memref_slice %arg2[%77, %c0_i32_50] : memref<30x32xf32, #tpu.memory_space<any>> -> memref<1x32xf32, #tpu.memory_space<any>>
    %c8_i32_51 = arith.constant 8 : i32
    %c0_i32_52 = arith.constant 0 : i32
    %79 = tpu.memref_slice %arg3[%c8_i32_51, %c0_i32_52] : memref<32x32xf32, #tpu.memory_space<vmem>> -> memref<1x32xf32, #tpu.memory_space<vmem>>
    %80 = tpu.memref_slice %arg4[%c8_i32_49] : memref<32x!tpu.dma_semaphore, #tpu.memory_space<semaphore_mem>> -> memref<1x!tpu.dma_semaphore, #tpu.memory_space<semaphore_mem>>
    %81 = tpu.memref_squeeze %80 : memref<1x!tpu.dma_semaphore, #tpu.memory_space<semaphore_mem>> -> memref<!tpu.dma_semaphore, #tpu.memory_space<semaphore_mem>>
    tpu.enqueue_dma source(%78 : memref<1x32xf32, #tpu.memory_space<any>>) target(%79 : memref<1x32xf32, #tpu.memory_space<vmem>>) target_semaphore(%81 : memref<!tpu.dma_semaphore, #tpu.memory_space<semaphore_mem>>)
    %c9_i32 = arith.constant 9 : i32
    %82 = arith.addi %0, %c9_i32 : i32
    %83 = arith.index_cast %82 : i32 to index
    %84 = memref.load %arg1[%83] : memref<64xi32, #tpu.memory_space<smem>>
    %c0_i32_53 = arith.constant 0 : i32
    %c29_i32_54 = arith.constant 29 : i32
    %85 = arith.maxsi %c0_i32_53, %84 : i32
    %86 = arith.minsi %c29_i32_54, %85 : i32
    %c9_i32_55 = arith.constant 9 : i32
    %c0_i32_56 = arith.constant 0 : i32
    %87 = tpu.memref_slice %arg2[%86, %c0_i32_56] : memref<30x32xf32, #tpu.memory_space<any>> -> memref<1x32xf32, #tpu.memory_space<any>>
    %c9_i32_57 = arith.constant 9 : i32
    %c0_i32_58 = arith.constant 0 : i32
    %88 = tpu.memref_slice %arg3[%c9_i32_57, %c0_i32_58] : memref<32x32xf32, #tpu.memory_space<vmem>> -> memref<1x32xf32, #tpu.memory_space<vmem>>
    %89 = tpu.memref_slice %arg4[%c9_i32_55] : memref<32x!tpu.dma_semaphore, #tpu.memory_space<semaphore_mem>> -> memref<1x!tpu.dma_semaphore, #tpu.memory_space<semaphore_mem>>
    %90 = tpu.memref_squeeze %89 : memref<1x!tpu.dma_semaphore, #tpu.memory_space<semaphore_mem>> -> memref<!tpu.dma_semaphore, #tpu.memory_space<semaphore_mem>>
    tpu.enqueue_dma source(%87 : memref<1x32xf32, #tpu.memory_space<any>>) target(%88 : memref<1x32xf32, #tpu.memory_space<vmem>>) target_semaphore(%90 : memref<!tpu.dma_semaphore, #tpu.memory_space<semaphore_mem>>)
    %c10_i32 = arith.constant 10 : i32
    %91 = arith.addi %0, %c10_i32 : i32
    %92 = arith.index_cast %91 : i32 to index
    %93 = memref.load %arg1[%92] : memref<64xi32, #tpu.memory_space<smem>>
    %c0_i32_59 = arith.constant 0 : i32
    %c29_i32_60 = arith.constant 29 : i32
    %94 = arith.maxsi %c0_i32_59, %93 : i32
    %95 = arith.minsi %c29_i32_60, %94 : i32
    %c10_i32_61 = arith.constant 10 : i32
    %c0_i32_62 = arith.constant 0 : i32
    %96 = tpu.memref_slice %arg2[%95, %c0_i32_62] : memref<30x32xf32, #tpu.memory_space<any>> -> memref<1x32xf32, #tpu.memory_space<any>>
    %c10_i32_63 = arith.constant 10 : i32
    %c0_i32_64 = arith.constant 0 : i32
    %97 = tpu.memref_slice %arg3[%c10_i32_63, %c0_i32_64] : memref<32x32xf32, #tpu.memory_space<vmem>> -> memref<1x32xf32, #tpu.memory_space<vmem>>
    %98 = tpu.memref_slice %arg4[%c10_i32_61] : memref<32x!tpu.dma_semaphore, #tpu.memory_space<semaphore_mem>> -> memref<1x!tpu.dma_semaphore, #tpu.memory_space<semaphore_mem>>
    %99 = tpu.memref_squeeze %98 : memref<1x!tpu.dma_semaphore, #tpu.memory_space<semaphore_mem>> -> memref<!tpu.dma_semaphore, #tpu.memory_space<semaphore_mem>>
    tpu.enqueue_dma source(%96 : memref<1x32xf32, #tpu.memory_space<any>>) target(%97 : memref<1x32xf32, #tpu.memory_space<vmem>>) target_semaphore(%99 : memref<!tpu.dma_semaphore, #tpu.memory_space<semaphore_mem>>)
    %c11_i32 = arith.constant 11 : i32
    %100 = arith.addi %0, %c11_i32 : i32
    %101 = arith.index_cast %100 : i32 to index
    %102 = memref.load %arg1[%101] : memref<64xi32, #tpu.memory_space<smem>>
    %c0_i32_65 = arith.constant 0 : i32
    %c29_i32_66 = arith.constant 29 : i32
    %103 = arith.maxsi %c0_i32_65, %102 : i32
    %104 = arith.minsi %c29_i32_66, %103 : i32
    %c11_i32_67 = arith.constant 11 : i32
    %c0_i32_68 = arith.constant 0 : i32
    %105 = tpu.memref_slice %arg2[%104, %c0_i32_68] : memref<30x32xf32, #tpu.memory_space<any>> -> memref<1x32xf32, #tpu.memory_space<any>>
    %c11_i32_69 = arith.constant 11 : i32
    %c0_i32_70 = arith.constant 0 : i32
    %106 = tpu.memref_slice %arg3[%c11_i32_69, %c0_i32_70] : memref<32x32xf32, #tpu.memory_space<vmem>> -> memref<1x32xf32, #tpu.memory_space<vmem>>
    %107 = tpu.memref_slice %arg4[%c11_i32_67] : memref<32x!tpu.dma_semaphore, #tpu.memory_space<semaphore_mem>> -> memref<1x!tpu.dma_semaphore, #tpu.memory_space<semaphore_mem>>
    %108 = tpu.memref_squeeze %107 : memref<1x!tpu.dma_semaphore, #tpu.memory_space<semaphore_mem>> -> memref<!tpu.dma_semaphore, #tpu.memory_space<semaphore_mem>>
    tpu.enqueue_dma source(%105 : memref<1x32xf32, #tpu.memory_space<any>>) target(%106 : memref<1x32xf32, #tpu.memory_space<vmem>>) target_semaphore(%108 : memref<!tpu.dma_semaphore, #tpu.memory_space<semaphore_mem>>)
    %c12_i32 = arith.constant 12 : i32
    %109 = arith.addi %0, %c12_i32 : i32
    %110 = arith.index_cast %109 : i32 to index
    %111 = memref.load %arg1[%110] : memref<64xi32, #tpu.memory_space<smem>>
    %c0_i32_71 = arith.constant 0 : i32
    %c29_i32_72 = arith.constant 29 : i32
    %112 = arith.maxsi %c0_i32_71, %111 : i32
    %113 = arith.minsi %c29_i32_72, %112 : i32
    %c12_i32_73 = arith.constant 12 : i32
    %c0_i32_74 = arith.constant 0 : i32
    %114 = tpu.memref_slice %arg2[%113, %c0_i32_74] : memref<30x32xf32, #tpu.memory_space<any>> -> memref<1x32xf32, #tpu.memory_space<any>>
    %c12_i32_75 = arith.constant 12 : i32
    %c0_i32_76 = arith.constant 0 : i32
    %115 = tpu.memref_slice %arg3[%c12_i32_75, %c0_i32_76] : memref<32x32xf32, #tpu.memory_space<vmem>> -> memref<1x32xf32, #tpu.memory_space<vmem>>
    %116 = tpu.memref_slice %arg4[%c12_i32_73] : memref<32x!tpu.dma_semaphore, #tpu.memory_space<semaphore_mem>> -> memref<1x!tpu.dma_semaphore, #tpu.memory_space<semaphore_mem>>
    %117 = tpu.memref_squeeze %116 : memref<1x!tpu.dma_semaphore, #tpu.memory_space<semaphore_mem>> -> memref<!tpu.dma_semaphore, #tpu.memory_space<semaphore_mem>>
    tpu.enqueue_dma source(%114 : memref<1x32xf32, #tpu.memory_space<any>>) target(%115 : memref<1x32xf32, #tpu.memory_space<vmem>>) target_semaphore(%117 : memref<!tpu.dma_semaphore, #tpu.memory_space<semaphore_mem>>)
    %c13_i32 = arith.constant 13 : i32
    %118 = arith.addi %0, %c13_i32 : i32
    %119 = arith.index_cast %118 : i32 to index
    %120 = memref.load %arg1[%119] : memref<64xi32, #tpu.memory_space<smem>>
    %c0_i32_77 = arith.constant 0 : i32
    %c29_i32_78 = arith.constant 29 : i32
    %121 = arith.maxsi %c0_i32_77, %120 : i32
    %122 = arith.minsi %c29_i32_78, %121 : i32
    %c13_i32_79 = arith.constant 13 : i32
    %c0_i32_80 = arith.constant 0 : i32
    %123 = tpu.memref_slice %arg2[%122, %c0_i32_80] : memref<30x32xf32, #tpu.memory_space<any>> -> memref<1x32xf32, #tpu.memory_space<any>>
    %c13_i32_81 = arith.constant 13 : i32
    %c0_i32_82 = arith.constant 0 : i32
    %124 = tpu.memref_slice %arg3[%c13_i32_81, %c0_i32_82] : memref<32x32xf32, #tpu.memory_space<vmem>> -> memref<1x32xf32, #tpu.memory_space<vmem>>
    %125 = tpu.memref_slice %arg4[%c13_i32_79] : memref<32x!tpu.dma_semaphore, #tpu.memory_space<semaphore_mem>> -> memref<1x!tpu.dma_semaphore, #tpu.memory_space<semaphore_mem>>
    %126 = tpu.memref_squeeze %125 : memref<1x!tpu.dma_semaphore, #tpu.memory_space<semaphore_mem>> -> memref<!tpu.dma_semaphore, #tpu.memory_space<semaphore_mem>>
    tpu.enqueue_dma source(%123 : memref<1x32xf32, #tpu.memory_space<any>>) target(%124 : memref<1x32xf32, #tpu.memory_space<vmem>>) target_semaphore(%126 : memref<!tpu.dma_semaphore, #tpu.memory_space<semaphore_mem>>)
    %c14_i32 = arith.constant 14 : i32
    %127 = arith.addi %0, %c14_i32 : i32
    %128 = arith.index_cast %127 : i32 to index
    %129 = memref.load %arg1[%128] : memref<64xi32, #tpu.memory_space<smem>>
    %c0_i32_83 = arith.constant 0 : i32
    %c29_i32_84 = arith.constant 29 : i32
    %130 = arith.maxsi %c0_i32_83, %129 : i32
    %131 = arith.minsi %c29_i32_84, %130 : i32
    %c14_i32_85 = arith.constant 14 : i32
    %c0_i32_86 = arith.constant 0 : i32
    %132 = tpu.memref_slice %arg2[%131, %c0_i32_86] : memref<30x32xf32, #tpu.memory_space<any>> -> memref<1x32xf32, #tpu.memory_space<any>>
    %c14_i32_87 = arith.constant 14 : i32
    %c0_i32_88 = arith.constant 0 : i32
    %133 = tpu.memref_slice %arg3[%c14_i32_87, %c0_i32_88] : memref<32x32xf32, #tpu.memory_space<vmem>> -> memref<1x32xf32, #tpu.memory_space<vmem>>
    %134 = tpu.memref_slice %arg4[%c14_i32_85] : memref<32x!tpu.dma_semaphore, #tpu.memory_space<semaphore_mem>> -> memref<1x!tpu.dma_semaphore, #tpu.memory_space<semaphore_mem>>
    %135 = tpu.memref_squeeze %134 : memref<1x!tpu.dma_semaphore, #tpu.memory_space<semaphore_mem>> -> memref<!tpu.dma_semaphore, #tpu.memory_space<semaphore_mem>>
    tpu.enqueue_dma source(%132 : memref<1x32xf32, #tpu.memory_space<any>>) target(%133 : memref<1x32xf32, #tpu.memory_space<vmem>>) target_semaphore(%135 : memref<!tpu.dma_semaphore, #tpu.memory_space<semaphore_mem>>)
    %c15_i32 = arith.constant 15 : i32
    %136 = arith.addi %0, %c15_i32 : i32
    %137 = arith.index_cast %136 : i32 to index
    %138 = memref.load %arg1[%137] : memref<64xi32, #tpu.memory_space<smem>>
    %c0_i32_89 = arith.constant 0 : i32
    %c29_i32_90 = arith.constant 29 : i32
    %139 = arith.maxsi %c0_i32_89, %138 : i32
    %140 = arith.minsi %c29_i32_90, %139 : i32
    %c15_i32_91 = arith.constant 15 : i32
    %c0_i32_92 = arith.constant 0 : i32
    %141 = tpu.memref_slice %arg2[%140, %c0_i32_92] : memref<30x32xf32, #tpu.memory_space<any>> -> memref<1x32xf32, #tpu.memory_space<any>>
    %c15_i32_93 = arith.constant 15 : i32
    %c0_i32_94 = arith.constant 0 : i32
    %142 = tpu.memref_slice %arg3[%c15_i32_93, %c0_i32_94] : memref<32x32xf32, #tpu.memory_space<vmem>> -> memref<1x32xf32, #tpu.memory_space<vmem>>
    %143 = tpu.memref_slice %arg4[%c15_i32_91] : memref<32x!tpu.dma_semaphore, #tpu.memory_space<semaphore_mem>> -> memref<1x!tpu.dma_semaphore, #tpu.memory_space<semaphore_mem>>
    %144 = tpu.memref_squeeze %143 : memref<1x!tpu.dma_semaphore, #tpu.memory_space<semaphore_mem>> -> memref<!tpu.dma_semaphore, #tpu.memory_space<semaphore_mem>>
    tpu.enqueue_dma source(%141 : memref<1x32xf32, #tpu.memory_space<any>>) target(%142 : memref<1x32xf32, #tpu.memory_space<vmem>>) target_semaphore(%144 : memref<!tpu.dma_semaphore, #tpu.memory_space<semaphore_mem>>)
    %c16_i32 = arith.constant 16 : i32
    %145 = arith.addi %0, %c16_i32 : i32
    %146 = arith.index_cast %145 : i32 to index
    %147 = memref.load %arg1[%146] : memref<64xi32, #tpu.memory_space<smem>>
    %c0_i32_95 = arith.constant 0 : i32
    %c29_i32_96 = arith.constant 29 : i32
    %148 = arith.maxsi %c0_i32_95, %147 : i32
    %149 = arith.minsi %c29_i32_96, %148 : i32
    %c16_i32_97 = arith.constant 16 : i32
    %c0_i32_98 = arith.constant 0 : i32
    %150 = tpu.memref_slice %arg2[%149, %c0_i32_98] : memref<30x32xf32, #tpu.memory_space<any>> -> memref<1x32xf32, #tpu.memory_space<any>>
    %c16_i32_99 = arith.constant 16 : i32
    %c0_i32_100 = arith.constant 0 : i32
    %151 = tpu.memref_slice %arg3[%c16_i32_99, %c0_i32_100] : memref<32x32xf32, #tpu.memory_space<vmem>> -> memref<1x32xf32, #tpu.memory_space<vmem>>
    %152 = tpu.memref_slice %arg4[%c16_i32_97] : memref<32x!tpu.dma_semaphore, #tpu.memory_space<semaphore_mem>> -> memref<1x!tpu.dma_semaphore, #tpu.memory_space<semaphore_mem>>
    %153 = tpu.memref_squeeze %152 : memref<1x!tpu.dma_semaphore, #tpu.memory_space<semaphore_mem>> -> memref<!tpu.dma_semaphore, #tpu.memory_space<semaphore_mem>>
    tpu.enqueue_dma source(%150 : memref<1x32xf32, #tpu.memory_space<any>>) target(%151 : memref<1x32xf32, #tpu.memory_space<vmem>>) target_semaphore(%153 : memref<!tpu.dma_semaphore, #tpu.memory_space<semaphore_mem>>)
    %c17_i32 = arith.constant 17 : i32
    %154 = arith.addi %0, %c17_i32 : i32
    %155 = arith.index_cast %154 : i32 to index
    %156 = memref.load %arg1[%155] : memref<64xi32, #tpu.memory_space<smem>>
    %c0_i32_101 = arith.constant 0 : i32
    %c29_i32_102 = arith.constant 29 : i32
    %157 = arith.maxsi %c0_i32_101, %156 : i32
    %158 = arith.minsi %c29_i32_102, %157 : i32
    %c17_i32_103 = arith.constant 17 : i32
    %c0_i32_104 = arith.constant 0 : i32
    %159 = tpu.memref_slice %arg2[%158, %c0_i32_104] : memref<30x32xf32, #tpu.memory_space<any>> -> memref<1x32xf32, #tpu.memory_space<any>>
    %c17_i32_105 = arith.constant 17 : i32
    %c0_i32_106 = arith.constant 0 : i32
    %160 = tpu.memref_slice %arg3[%c17_i32_105, %c0_i32_106] : memref<32x32xf32, #tpu.memory_space<vmem>> -> memref<1x32xf32, #tpu.memory_space<vmem>>
    %161 = tpu.memref_slice %arg4[%c17_i32_103] : memref<32x!tpu.dma_semaphore, #tpu.memory_space<semaphore_mem>> -> memref<1x!tpu.dma_semaphore, #tpu.memory_space<semaphore_mem>>
    %162 = tpu.memref_squeeze %161 : memref<1x!tpu.dma_semaphore, #tpu.memory_space<semaphore_mem>> -> memref<!tpu.dma_semaphore, #tpu.memory_space<semaphore_mem>>
    tpu.enqueue_dma source(%159 : memref<1x32xf32, #tpu.memory_space<any>>) target(%160 : memref<1x32xf32, #tpu.memory_space<vmem>>) target_semaphore(%162 : memref<!tpu.dma_semaphore, #tpu.memory_space<semaphore_mem>>)
    %c18_i32 = arith.constant 18 : i32
    %163 = arith.addi %0, %c18_i32 : i32
    %164 = arith.index_cast %163 : i32 to index
    %165 = memref.load %arg1[%164] : memref<64xi32, #tpu.memory_space<smem>>
    %c0_i32_107 = arith.constant 0 : i32
    %c29_i32_108 = arith.constant 29 : i32
    %166 = arith.maxsi %c0_i32_107, %165 : i32
    %167 = arith.minsi %c29_i32_108, %166 : i32
    %c18_i32_109 = arith.constant 18 : i32
    %c0_i32_110 = arith.constant 0 : i32
    %168 = tpu.memref_slice %arg2[%167, %c0_i32_110] : memref<30x32xf32, #tpu.memory_space<any>> -> memref<1x32xf32, #tpu.memory_space<any>>
    %c18_i32_111 = arith.constant 18 : i32
    %c0_i32_112 = arith.constant 0 : i32
    %169 = tpu.memref_slice %arg3[%c18_i32_111, %c0_i32_112] : memref<32x32xf32, #tpu.memory_space<vmem>> -> memref<1x32xf32, #tpu.memory_space<vmem>>
    %170 = tpu.memref_slice %arg4[%c18_i32_109] : memref<32x!tpu.dma_semaphore, #tpu.memory_space<semaphore_mem>> -> memref<1x!tpu.dma_semaphore, #tpu.memory_space<semaphore_mem>>
    %171 = tpu.memref_squeeze %170 : memref<1x!tpu.dma_semaphore, #tpu.memory_space<semaphore_mem>> -> memref<!tpu.dma_semaphore, #tpu.memory_space<semaphore_mem>>
    tpu.enqueue_dma source(%168 : memref<1x32xf32, #tpu.memory_space<any>>) target(%169 : memref<1x32xf32, #tpu.memory_space<vmem>>) target_semaphore(%171 : memref<!tpu.dma_semaphore, #tpu.memory_space<semaphore_mem>>)
    %c19_i32 = arith.constant 19 : i32
    %172 = arith.addi %0, %c19_i32 : i32
    %173 = arith.index_cast %172 : i32 to index
    %174 = memref.load %arg1[%173] : memref<64xi32, #tpu.memory_space<smem>>
    %c0_i32_113 = arith.constant 0 : i32
    %c29_i32_114 = arith.constant 29 : i32
    %175 = arith.maxsi %c0_i32_113, %174 : i32
    %176 = arith.minsi %c29_i32_114, %175 : i32
    %c19_i32_115 = arith.constant 19 : i32
    %c0_i32_116 = arith.constant 0 : i32
    %177 = tpu.memref_slice %arg2[%176, %c0_i32_116] : memref<30x32xf32, #tpu.memory_space<any>> -> memref<1x32xf32, #tpu.memory_space<any>>
    %c19_i32_117 = arith.constant 19 : i32
    %c0_i32_118 = arith.constant 0 : i32
    %178 = tpu.memref_slice %arg3[%c19_i32_117, %c0_i32_118] : memref<32x32xf32, #tpu.memory_space<vmem>> -> memref<1x32xf32, #tpu.memory_space<vmem>>
    %179 = tpu.memref_slice %arg4[%c19_i32_115] : memref<32x!tpu.dma_semaphore, #tpu.memory_space<semaphore_mem>> -> memref<1x!tpu.dma_semaphore, #tpu.memory_space<semaphore_mem>>
    %180 = tpu.memref_squeeze %179 : memref<1x!tpu.dma_semaphore, #tpu.memory_space<semaphore_mem>> -> memref<!tpu.dma_semaphore, #tpu.memory_space<semaphore_mem>>
    tpu.enqueue_dma source(%177 : memref<1x32xf32, #tpu.memory_space<any>>) target(%178 : memref<1x32xf32, #tpu.memory_space<vmem>>) target_semaphore(%180 : memref<!tpu.dma_semaphore, #tpu.memory_space<semaphore_mem>>)
    %c20_i32 = arith.constant 20 : i32
    %181 = arith.addi %0, %c20_i32 : i32
    %182 = arith.index_cast %181 : i32 to index
    %183 = memref.load %arg1[%182] : memref<64xi32, #tpu.memory_space<smem>>
    %c0_i32_119 = arith.constant 0 : i32
    %c29_i32_120 = arith.constant 29 : i32
    %184 = arith.maxsi %c0_i32_119, %183 : i32
    %185 = arith.minsi %c29_i32_120, %184 : i32
    %c20_i32_121 = arith.constant 20 : i32
    %c0_i32_122 = arith.constant 0 : i32
    %186 = tpu.memref_slice %arg2[%185, %c0_i32_122] : memref<30x32xf32, #tpu.memory_space<any>> -> memref<1x32xf32, #tpu.memory_space<any>>
    %c20_i32_123 = arith.constant 20 : i32
    %c0_i32_124 = arith.constant 0 : i32
    %187 = tpu.memref_slice %arg3[%c20_i32_123, %c0_i32_124] : memref<32x32xf32, #tpu.memory_space<vmem>> -> memref<1x32xf32, #tpu.memory_space<vmem>>
    %188 = tpu.memref_slice %arg4[%c20_i32_121] : memref<32x!tpu.dma_semaphore, #tpu.memory_space<semaphore_mem>> -> memref<1x!tpu.dma_semaphore, #tpu.memory_space<semaphore_mem>>
    %189 = tpu.memref_squeeze %188 : memref<1x!tpu.dma_semaphore, #tpu.memory_space<semaphore_mem>> -> memref<!tpu.dma_semaphore, #tpu.memory_space<semaphore_mem>>
    tpu.enqueue_dma source(%186 : memref<1x32xf32, #tpu.memory_space<any>>) target(%187 : memref<1x32xf32, #tpu.memory_space<vmem>>) target_semaphore(%189 : memref<!tpu.dma_semaphore, #tpu.memory_space<semaphore_mem>>)
    %c21_i32 = arith.constant 21 : i32
    %190 = arith.addi %0, %c21_i32 : i32
    %191 = arith.index_cast %190 : i32 to index
    %192 = memref.load %arg1[%191] : memref<64xi32, #tpu.memory_space<smem>>
    %c0_i32_125 = arith.constant 0 : i32
    %c29_i32_126 = arith.constant 29 : i32
    %193 = arith.maxsi %c0_i32_125, %192 : i32
    %194 = arith.minsi %c29_i32_126, %193 : i32
    %c21_i32_127 = arith.constant 21 : i32
    %c0_i32_128 = arith.constant 0 : i32
    %195 = tpu.memref_slice %arg2[%194, %c0_i32_128] : memref<30x32xf32, #tpu.memory_space<any>> -> memref<1x32xf32, #tpu.memory_space<any>>
    %c21_i32_129 = arith.constant 21 : i32
    %c0_i32_130 = arith.constant 0 : i32
    %196 = tpu.memref_slice %arg3[%c21_i32_129, %c0_i32_130] : memref<32x32xf32, #tpu.memory_space<vmem>> -> memref<1x32xf32, #tpu.memory_space<vmem>>
    %197 = tpu.memref_slice %arg4[%c21_i32_127] : memref<32x!tpu.dma_semaphore, #tpu.memory_space<semaphore_mem>> -> memref<1x!tpu.dma_semaphore, #tpu.memory_space<semaphore_mem>>
    %198 = tpu.memref_squeeze %197 : memref<1x!tpu.dma_semaphore, #tpu.memory_space<semaphore_mem>> -> memref<!tpu.dma_semaphore, #tpu.memory_space<semaphore_mem>>
    tpu.enqueue_dma source(%195 : memref<1x32xf32, #tpu.memory_space<any>>) target(%196 : memref<1x32xf32, #tpu.memory_space<vmem>>) target_semaphore(%198 : memref<!tpu.dma_semaphore, #tpu.memory_space<semaphore_mem>>)
    %c22_i32 = arith.constant 22 : i32
    %199 = arith.addi %0, %c22_i32 : i32
    %200 = arith.index_cast %199 : i32 to index
    %201 = memref.load %arg1[%200] : memref<64xi32, #tpu.memory_space<smem>>
    %c0_i32_131 = arith.constant 0 : i32
    %c29_i32_132 = arith.constant 29 : i32
    %202 = arith.maxsi %c0_i32_131, %201 : i32
    %203 = arith.minsi %c29_i32_132, %202 : i32
    %c22_i32_133 = arith.constant 22 : i32
    %c0_i32_134 = arith.constant 0 : i32
    %204 = tpu.memref_slice %arg2[%203, %c0_i32_134] : memref<30x32xf32, #tpu.memory_space<any>> -> memref<1x32xf32, #tpu.memory_space<any>>
    %c22_i32_135 = arith.constant 22 : i32
    %c0_i32_136 = arith.constant 0 : i32
    %205 = tpu.memref_slice %arg3[%c22_i32_135, %c0_i32_136] : memref<32x32xf32, #tpu.memory_space<vmem>> -> memref<1x32xf32, #tpu.memory_space<vmem>>
    %206 = tpu.memref_slice %arg4[%c22_i32_133] : memref<32x!tpu.dma_semaphore, #tpu.memory_space<semaphore_mem>> -> memref<1x!tpu.dma_semaphore, #tpu.memory_space<semaphore_mem>>
    %207 = tpu.memref_squeeze %206 : memref<1x!tpu.dma_semaphore, #tpu.memory_space<semaphore_mem>> -> memref<!tpu.dma_semaphore, #tpu.memory_space<semaphore_mem>>
    tpu.enqueue_dma source(%204 : memref<1x32xf32, #tpu.memory_space<any>>) target(%205 : memref<1x32xf32, #tpu.memory_space<vmem>>) target_semaphore(%207 : memref<!tpu.dma_semaphore, #tpu.memory_space<semaphore_mem>>)
    %c23_i32 = arith.constant 23 : i32
    %208 = arith.addi %0, %c23_i32 : i32
    %209 = arith.index_cast %208 : i32 to index
    %210 = memref.load %arg1[%209] : memref<64xi32, #tpu.memory_space<smem>>
    %c0_i32_137 = arith.constant 0 : i32
    %c29_i32_138 = arith.constant 29 : i32
    %211 = arith.maxsi %c0_i32_137, %210 : i32
    %212 = arith.minsi %c29_i32_138, %211 : i32
    %c23_i32_139 = arith.constant 23 : i32
    %c0_i32_140 = arith.constant 0 : i32
    %213 = tpu.memref_slice %arg2[%212, %c0_i32_140] : memref<30x32xf32, #tpu.memory_space<any>> -> memref<1x32xf32, #tpu.memory_space<any>>
    %c23_i32_141 = arith.constant 23 : i32
    %c0_i32_142 = arith.constant 0 : i32
    %214 = tpu.memref_slice %arg3[%c23_i32_141, %c0_i32_142] : memref<32x32xf32, #tpu.memory_space<vmem>> -> memref<1x32xf32, #tpu.memory_space<vmem>>
    %215 = tpu.memref_slice %arg4[%c23_i32_139] : memref<32x!tpu.dma_semaphore, #tpu.memory_space<semaphore_mem>> -> memref<1x!tpu.dma_semaphore, #tpu.memory_space<semaphore_mem>>
    %216 = tpu.memref_squeeze %215 : memref<1x!tpu.dma_semaphore, #tpu.memory_space<semaphore_mem>> -> memref<!tpu.dma_semaphore, #tpu.memory_space<semaphore_mem>>
    tpu.enqueue_dma source(%213 : memref<1x32xf32, #tpu.memory_space<any>>) target(%214 : memref<1x32xf32, #tpu.memory_space<vmem>>) target_semaphore(%216 : memref<!tpu.dma_semaphore, #tpu.memory_space<semaphore_mem>>)
    %c24_i32 = arith.constant 24 : i32
    %217 = arith.addi %0, %c24_i32 : i32
    %218 = arith.index_cast %217 : i32 to index
    %219 = memref.load %arg1[%218] : memref<64xi32, #tpu.memory_space<smem>>
    %c0_i32_143 = arith.constant 0 : i32
    %c29_i32_144 = arith.constant 29 : i32
    %220 = arith.maxsi %c0_i32_143, %219 : i32
    %221 = arith.minsi %c29_i32_144, %220 : i32
    %c24_i32_145 = arith.constant 24 : i32
    %c0_i32_146 = arith.constant 0 : i32
    %222 = tpu.memref_slice %arg2[%221, %c0_i32_146] : memref<30x32xf32, #tpu.memory_space<any>> -> memref<1x32xf32, #tpu.memory_space<any>>
    %c24_i32_147 = arith.constant 24 : i32
    %c0_i32_148 = arith.constant 0 : i32
    %223 = tpu.memref_slice %arg3[%c24_i32_147, %c0_i32_148] : memref<32x32xf32, #tpu.memory_space<vmem>> -> memref<1x32xf32, #tpu.memory_space<vmem>>
    %224 = tpu.memref_slice %arg4[%c24_i32_145] : memref<32x!tpu.dma_semaphore, #tpu.memory_space<semaphore_mem>> -> memref<1x!tpu.dma_semaphore, #tpu.memory_space<semaphore_mem>>
    %225 = tpu.memref_squeeze %224 : memref<1x!tpu.dma_semaphore, #tpu.memory_space<semaphore_mem>> -> memref<!tpu.dma_semaphore, #tpu.memory_space<semaphore_mem>>
    tpu.enqueue_dma source(%222 : memref<1x32xf32, #tpu.memory_space<any>>) target(%223 : memref<1x32xf32, #tpu.memory_space<vmem>>) target_semaphore(%225 : memref<!tpu.dma_semaphore, #tpu.memory_space<semaphore_mem>>)
    %c25_i32 = arith.constant 25 : i32
    %226 = arith.addi %0, %c25_i32 : i32
    %227 = arith.index_cast %226 : i32 to index
    %228 = memref.load %arg1[%227] : memref<64xi32, #tpu.memory_space<smem>>
    %c0_i32_149 = arith.constant 0 : i32
    %c29_i32_150 = arith.constant 29 : i32
    %229 = arith.maxsi %c0_i32_149, %228 : i32
    %230 = arith.minsi %c29_i32_150, %229 : i32
    %c25_i32_151 = arith.constant 25 : i32
    %c0_i32_152 = arith.constant 0 : i32
    %231 = tpu.memref_slice %arg2[%230, %c0_i32_152] : memref<30x32xf32, #tpu.memory_space<any>> -> memref<1x32xf32, #tpu.memory_space<any>>
    %c25_i32_153 = arith.constant 25 : i32
    %c0_i32_154 = arith.constant 0 : i32
    %232 = tpu.memref_slice %arg3[%c25_i32_153, %c0_i32_154] : memref<32x32xf32, #tpu.memory_space<vmem>> -> memref<1x32xf32, #tpu.memory_space<vmem>>
    %233 = tpu.memref_slice %arg4[%c25_i32_151] : memref<32x!tpu.dma_semaphore, #tpu.memory_space<semaphore_mem>> -> memref<1x!tpu.dma_semaphore, #tpu.memory_space<semaphore_mem>>
    %234 = tpu.memref_squeeze %233 : memref<1x!tpu.dma_semaphore, #tpu.memory_space<semaphore_mem>> -> memref<!tpu.dma_semaphore, #tpu.memory_space<semaphore_mem>>
    tpu.enqueue_dma source(%231 : memref<1x32xf32, #tpu.memory_space<any>>) target(%232 : memref<1x32xf32, #tpu.memory_space<vmem>>) target_semaphore(%234 : memref<!tpu.dma_semaphore, #tpu.memory_space<semaphore_mem>>)
    %c26_i32 = arith.constant 26 : i32
    %235 = arith.addi %0, %c26_i32 : i32
    %236 = arith.index_cast %235 : i32 to index
    %237 = memref.load %arg1[%236] : memref<64xi32, #tpu.memory_space<smem>>
    %c0_i32_155 = arith.constant 0 : i32
    %c29_i32_156 = arith.constant 29 : i32
    %238 = arith.maxsi %c0_i32_155, %237 : i32
    %239 = arith.minsi %c29_i32_156, %238 : i32
    %c26_i32_157 = arith.constant 26 : i32
    %c0_i32_158 = arith.constant 0 : i32
    %240 = tpu.memref_slice %arg2[%239, %c0_i32_158] : memref<30x32xf32, #tpu.memory_space<any>> -> memref<1x32xf32, #tpu.memory_space<any>>
    %c26_i32_159 = arith.constant 26 : i32
    %c0_i32_160 = arith.constant 0 : i32
    %241 = tpu.memref_slice %arg3[%c26_i32_159, %c0_i32_160] : memref<32x32xf32, #tpu.memory_space<vmem>> -> memref<1x32xf32, #tpu.memory_space<vmem>>
    %242 = tpu.memref_slice %arg4[%c26_i32_157] : memref<32x!tpu.dma_semaphore, #tpu.memory_space<semaphore_mem>> -> memref<1x!tpu.dma_semaphore, #tpu.memory_space<semaphore_mem>>
    %243 = tpu.memref_squeeze %242 : memref<1x!tpu.dma_semaphore, #tpu.memory_space<semaphore_mem>> -> memref<!tpu.dma_semaphore, #tpu.memory_space<semaphore_mem>>
    tpu.enqueue_dma source(%240 : memref<1x32xf32, #tpu.memory_space<any>>) target(%241 : memref<1x32xf32, #tpu.memory_space<vmem>>) target_semaphore(%243 : memref<!tpu.dma_semaphore, #tpu.memory_space<semaphore_mem>>)
    %c27_i32 = arith.constant 27 : i32
    %244 = arith.addi %0, %c27_i32 : i32
    %245 = arith.index_cast %244 : i32 to index
    %246 = memref.load %arg1[%245] : memref<64xi32, #tpu.memory_space<smem>>
    %c0_i32_161 = arith.constant 0 : i32
    %c29_i32_162 = arith.constant 29 : i32
    %247 = arith.maxsi %c0_i32_161, %246 : i32
    %248 = arith.minsi %c29_i32_162, %247 : i32
    %c27_i32_163 = arith.constant 27 : i32
    %c0_i32_164 = arith.constant 0 : i32
    %249 = tpu.memref_slice %arg2[%248, %c0_i32_164] : memref<30x32xf32, #tpu.memory_space<any>> -> memref<1x32xf32, #tpu.memory_space<any>>
    %c27_i32_165 = arith.constant 27 : i32
    %c0_i32_166 = arith.constant 0 : i32
    %250 = tpu.memref_slice %arg3[%c27_i32_165, %c0_i32_166] : memref<32x32xf32, #tpu.memory_space<vmem>> -> memref<1x32xf32, #tpu.memory_space<vmem>>
    %251 = tpu.memref_slice %arg4[%c27_i32_163] : memref<32x!tpu.dma_semaphore, #tpu.memory_space<semaphore_mem>> -> memref<1x!tpu.dma_semaphore, #tpu.memory_space<semaphore_mem>>
    %252 = tpu.memref_squeeze %251 : memref<1x!tpu.dma_semaphore, #tpu.memory_space<semaphore_mem>> -> memref<!tpu.dma_semaphore, #tpu.memory_space<semaphore_mem>>
    tpu.enqueue_dma source(%249 : memref<1x32xf32, #tpu.memory_space<any>>) target(%250 : memref<1x32xf32, #tpu.memory_space<vmem>>) target_semaphore(%252 : memref<!tpu.dma_semaphore, #tpu.memory_space<semaphore_mem>>)
    %c28_i32 = arith.constant 28 : i32
    %253 = arith.addi %0, %c28_i32 : i32
    %254 = arith.index_cast %253 : i32 to index
    %255 = memref.load %arg1[%254] : memref<64xi32, #tpu.memory_space<smem>>
    %c0_i32_167 = arith.constant 0 : i32
    %c29_i32_168 = arith.constant 29 : i32
    %256 = arith.maxsi %c0_i32_167, %255 : i32
    %257 = arith.minsi %c29_i32_168, %256 : i32
    %c28_i32_169 = arith.constant 28 : i32
    %c0_i32_170 = arith.constant 0 : i32
    %258 = tpu.memref_slice %arg2[%257, %c0_i32_170] : memref<30x32xf32, #tpu.memory_space<any>> -> memref<1x32xf32, #tpu.memory_space<any>>
    %c28_i32_171 = arith.constant 28 : i32
    %c0_i32_172 = arith.constant 0 : i32
    %259 = tpu.memref_slice %arg3[%c28_i32_171, %c0_i32_172] : memref<32x32xf32, #tpu.memory_space<vmem>> -> memref<1x32xf32, #tpu.memory_space<vmem>>
    %260 = tpu.memref_slice %arg4[%c28_i32_169] : memref<32x!tpu.dma_semaphore, #tpu.memory_space<semaphore_mem>> -> memref<1x!tpu.dma_semaphore, #tpu.memory_space<semaphore_mem>>
    %261 = tpu.memref_squeeze %260 : memref<1x!tpu.dma_semaphore, #tpu.memory_space<semaphore_mem>> -> memref<!tpu.dma_semaphore, #tpu.memory_space<semaphore_mem>>
    tpu.enqueue_dma source(%258 : memref<1x32xf32, #tpu.memory_space<any>>) target(%259 : memref<1x32xf32, #tpu.memory_space<vmem>>) target_semaphore(%261 : memref<!tpu.dma_semaphore, #tpu.memory_space<semaphore_mem>>)
    %c29_i32_173 = arith.constant 29 : i32
    %262 = arith.addi %0, %c29_i32_173 : i32
    %263 = arith.index_cast %262 : i32 to index
    %264 = memref.load %arg1[%263] : memref<64xi32, #tpu.memory_space<smem>>
    %c0_i32_174 = arith.constant 0 : i32
    %c29_i32_175 = arith.constant 29 : i32
    %265 = arith.maxsi %c0_i32_174, %264 : i32
    %266 = arith.minsi %c29_i32_175, %265 : i32
    %c29_i32_176 = arith.constant 29 : i32
    %c0_i32_177 = arith.constant 0 : i32
    %267 = tpu.memref_slice %arg2[%266, %c0_i32_177] : memref<30x32xf32, #tpu.memory_space<any>> -> memref<1x32xf32, #tpu.memory_space<any>>
    %c29_i32_178 = arith.constant 29 : i32
    %c0_i32_179 = arith.constant 0 : i32
    %268 = tpu.memref_slice %arg3[%c29_i32_178, %c0_i32_179] : memref<32x32xf32, #tpu.memory_space<vmem>> -> memref<1x32xf32, #tpu.memory_space<vmem>>
    %269 = tpu.memref_slice %arg4[%c29_i32_176] : memref<32x!tpu.dma_semaphore, #tpu.memory_space<semaphore_mem>> -> memref<1x!tpu.dma_semaphore, #tpu.memory_space<semaphore_mem>>
    %270 = tpu.memref_squeeze %269 : memref<1x!tpu.dma_semaphore, #tpu.memory_space<semaphore_mem>> -> memref<!tpu.dma_semaphore, #tpu.memory_space<semaphore_mem>>
    tpu.enqueue_dma source(%267 : memref<1x32xf32, #tpu.memory_space<any>>) target(%268 : memref<1x32xf32, #tpu.memory_space<vmem>>) target_semaphore(%270 : memref<!tpu.dma_semaphore, #tpu.memory_space<semaphore_mem>>)
    %c30_i32 = arith.constant 30 : i32
    %271 = arith.addi %0, %c30_i32 : i32
    %272 = arith.index_cast %271 : i32 to index
    %273 = memref.load %arg1[%272] : memref<64xi32, #tpu.memory_space<smem>>
    %c0_i32_180 = arith.constant 0 : i32
    %c29_i32_181 = arith.constant 29 : i32
    %274 = arith.maxsi %c0_i32_180, %273 : i32
    %275 = arith.minsi %c29_i32_181, %274 : i32
    %c30_i32_182 = arith.constant 30 : i32
    %c0_i32_183 = arith.constant 0 : i32
    %276 = tpu.memref_slice %arg2[%275, %c0_i32_183] : memref<30x32xf32, #tpu.memory_space<any>> -> memref<1x32xf32, #tpu.memory_space<any>>
    %c30_i32_184 = arith.constant 30 : i32
    %c0_i32_185 = arith.constant 0 : i32
    %277 = tpu.memref_slice %arg3[%c30_i32_184, %c0_i32_185] : memref<32x32xf32, #tpu.memory_space<vmem>> -> memref<1x32xf32, #tpu.memory_space<vmem>>
    %278 = tpu.memref_slice %arg4[%c30_i32_182] : memref<32x!tpu.dma_semaphore, #tpu.memory_space<semaphore_mem>> -> memref<1x!tpu.dma_semaphore, #tpu.memory_space<semaphore_mem>>
    %279 = tpu.memref_squeeze %278 : memref<1x!tpu.dma_semaphore, #tpu.memory_space<semaphore_mem>> -> memref<!tpu.dma_semaphore, #tpu.memory_space<semaphore_mem>>
    tpu.enqueue_dma source(%276 : memref<1x32xf32, #tpu.memory_space<any>>) target(%277 : memref<1x32xf32, #tpu.memory_space<vmem>>) target_semaphore(%279 : memref<!tpu.dma_semaphore, #tpu.memory_space<semaphore_mem>>)
    %c31_i32 = arith.constant 31 : i32
    %280 = arith.addi %0, %c31_i32 : i32
    %281 = arith.index_cast %280 : i32 to index
    %282 = memref.load %arg1[%281] : memref<64xi32, #tpu.memory_space<smem>>
    %c0_i32_186 = arith.constant 0 : i32
    %c29_i32_187 = arith.constant 29 : i32
    %283 = arith.maxsi %c0_i32_186, %282 : i32
    %284 = arith.minsi %c29_i32_187, %283 : i32
    %c31_i32_188 = arith.constant 31 : i32
    %c0_i32_189 = arith.constant 0 : i32
    %285 = tpu.memref_slice %arg2[%284, %c0_i32_189] : memref<30x32xf32, #tpu.memory_space<any>> -> memref<1x32xf32, #tpu.memory_space<any>>
    %c31_i32_190 = arith.constant 31 : i32
    %c0_i32_191 = arith.constant 0 : i32
    %286 = tpu.memref_slice %arg3[%c31_i32_190, %c0_i32_191] : memref<32x32xf32, #tpu.memory_space<vmem>> -> memref<1x32xf32, #tpu.memory_space<vmem>>
    %287 = tpu.memref_slice %arg4[%c31_i32_188] : memref<32x!tpu.dma_semaphore, #tpu.memory_space<semaphore_mem>> -> memref<1x!tpu.dma_semaphore, #tpu.memory_space<semaphore_mem>>
    %288 = tpu.memref_squeeze %287 : memref<1x!tpu.dma_semaphore, #tpu.memory_space<semaphore_mem>> -> memref<!tpu.dma_semaphore, #tpu.memory_space<semaphore_mem>>
    tpu.enqueue_dma source(%285 : memref<1x32xf32, #tpu.memory_space<any>>) target(%286 : memref<1x32xf32, #tpu.memory_space<vmem>>) target_semaphore(%288 : memref<!tpu.dma_semaphore, #tpu.memory_space<semaphore_mem>>)
    %c0_i32_192 = arith.constant 0 : i32
    %c0_i32_193 = arith.constant 0 : i32
    %289 = tpu.memref_slice %arg2[%5, %c0_i32_193] : memref<30x32xf32, #tpu.memory_space<any>> -> memref<1x32xf32, #tpu.memory_space<any>>
    %c0_i32_194 = arith.constant 0 : i32
    %c0_i32_195 = arith.constant 0 : i32
    %290 = tpu.memref_slice %arg3[%c0_i32_194, %c0_i32_195] : memref<32x32xf32, #tpu.memory_space<vmem>> -> memref<1x32xf32, #tpu.memory_space<vmem>>
    %291 = tpu.memref_slice %arg4[%c0_i32_192] : memref<32x!tpu.dma_semaphore, #tpu.memory_space<semaphore_mem>> -> memref<1x!tpu.dma_semaphore, #tpu.memory_space<semaphore_mem>>
    %292 = tpu.memref_squeeze %291 : memref<1x!tpu.dma_semaphore, #tpu.memory_space<semaphore_mem>> -> memref<!tpu.dma_semaphore, #tpu.memory_space<semaphore_mem>>
    tpu.wait_dma2 semaphore(%292 : memref<!tpu.dma_semaphore, #tpu.memory_space<semaphore_mem>>) src(%289 : memref<1x32xf32, #tpu.memory_space<any>>) dst(%290 : memref<1x32xf32, #tpu.memory_space<vmem>>)
    %c1_i32_196 = arith.constant 1 : i32
    %c0_i32_197 = arith.constant 0 : i32
    %293 = tpu.memref_slice %arg2[%14, %c0_i32_197] : memref<30x32xf32, #tpu.memory_space<any>> -> memref<1x32xf32, #tpu.memory_space<any>>
    %c1_i32_198 = arith.constant 1 : i32
    %c0_i32_199 = arith.constant 0 : i32
    %294 = tpu.memref_slice %arg3[%c1_i32_198, %c0_i32_199] : memref<32x32xf32, #tpu.memory_space<vmem>> -> memref<1x32xf32, #tpu.memory_space<vmem>>
    %295 = tpu.memref_slice %arg4[%c1_i32_196] : memref<32x!tpu.dma_semaphore, #tpu.memory_space<semaphore_mem>> -> memref<1x!tpu.dma_semaphore, #tpu.memory_space<semaphore_mem>>
    %296 = tpu.memref_squeeze %295 : memref<1x!tpu.dma_semaphore, #tpu.memory_space<semaphore_mem>> -> memref<!tpu.dma_semaphore, #tpu.memory_space<semaphore_mem>>
    tpu.wait_dma2 semaphore(%296 : memref<!tpu.dma_semaphore, #tpu.memory_space<semaphore_mem>>) src(%293 : memref<1x32xf32, #tpu.memory_space<any>>) dst(%294 : memref<1x32xf32, #tpu.memory_space<vmem>>)
    %c2_i32_200 = arith.constant 2 : i32
    %c0_i32_201 = arith.constant 0 : i32
    %297 = tpu.memref_slice %arg2[%23, %c0_i32_201] : memref<30x32xf32, #tpu.memory_space<any>> -> memref<1x32xf32, #tpu.memory_space<any>>
    %c2_i32_202 = arith.constant 2 : i32
    %c0_i32_203 = arith.constant 0 : i32
    %298 = tpu.memref_slice %arg3[%c2_i32_202, %c0_i32_203] : memref<32x32xf32, #tpu.memory_space<vmem>> -> memref<1x32xf32, #tpu.memory_space<vmem>>
    %299 = tpu.memref_slice %arg4[%c2_i32_200] : memref<32x!tpu.dma_semaphore, #tpu.memory_space<semaphore_mem>> -> memref<1x!tpu.dma_semaphore, #tpu.memory_space<semaphore_mem>>
    %300 = tpu.memref_squeeze %299 : memref<1x!tpu.dma_semaphore, #tpu.memory_space<semaphore_mem>> -> memref<!tpu.dma_semaphore, #tpu.memory_space<semaphore_mem>>
    tpu.wait_dma2 semaphore(%300 : memref<!tpu.dma_semaphore, #tpu.memory_space<semaphore_mem>>) src(%297 : memref<1x32xf32, #tpu.memory_space<any>>) dst(%298 : memref<1x32xf32, #tpu.memory_space<vmem>>)
    %c3_i32_204 = arith.constant 3 : i32
    %c0_i32_205 = arith.constant 0 : i32
    %301 = tpu.memref_slice %arg2[%32, %c0_i32_205] : memref<30x32xf32, #tpu.memory_space<any>> -> memref<1x32xf32, #tpu.memory_space<any>>
    %c3_i32_206 = arith.constant 3 : i32
    %c0_i32_207 = arith.constant 0 : i32
    %302 = tpu.memref_slice %arg3[%c3_i32_206, %c0_i32_207] : memref<32x32xf32, #tpu.memory_space<vmem>> -> memref<1x32xf32, #tpu.memory_space<vmem>>
    %303 = tpu.memref_slice %arg4[%c3_i32_204] : memref<32x!tpu.dma_semaphore, #tpu.memory_space<semaphore_mem>> -> memref<1x!tpu.dma_semaphore, #tpu.memory_space<semaphore_mem>>
    %304 = tpu.memref_squeeze %303 : memref<1x!tpu.dma_semaphore, #tpu.memory_space<semaphore_mem>> -> memref<!tpu.dma_semaphore, #tpu.memory_space<semaphore_mem>>
    tpu.wait_dma2 semaphore(%304 : memref<!tpu.dma_semaphore, #tpu.memory_space<semaphore_mem>>) src(%301 : memref<1x32xf32, #tpu.memory_space<any>>) dst(%302 : memref<1x32xf32, #tpu.memory_space<vmem>>)
    %c4_i32_208 = arith.constant 4 : i32
    %c0_i32_209 = arith.constant 0 : i32
    %305 = tpu.memref_slice %arg2[%41, %c0_i32_209] : memref<30x32xf32, #tpu.memory_space<any>> -> memref<1x32xf32, #tpu.memory_space<any>>
    %c4_i32_210 = arith.constant 4 : i32
    %c0_i32_211 = arith.constant 0 : i32
    %306 = tpu.memref_slice %arg3[%c4_i32_210, %c0_i32_211] : memref<32x32xf32, #tpu.memory_space<vmem>> -> memref<1x32xf32, #tpu.memory_space<vmem>>
    %307 = tpu.memref_slice %arg4[%c4_i32_208] : memref<32x!tpu.dma_semaphore, #tpu.memory_space<semaphore_mem>> -> memref<1x!tpu.dma_semaphore, #tpu.memory_space<semaphore_mem>>
    %308 = tpu.memref_squeeze %307 : memref<1x!tpu.dma_semaphore, #tpu.memory_space<semaphore_mem>> -> memref<!tpu.dma_semaphore, #tpu.memory_space<semaphore_mem>>
    tpu.wait_dma2 semaphore(%308 : memref<!tpu.dma_semaphore, #tpu.memory_space<semaphore_mem>>) src(%305 : memref<1x32xf32, #tpu.memory_space<any>>) dst(%306 : memref<1x32xf32, #tpu.memory_space<vmem>>)
    %c5_i32_212 = arith.constant 5 : i32
    %c0_i32_213 = arith.constant 0 : i32
    %309 = tpu.memref_slice %arg2[%50, %c0_i32_213] : memref<30x32xf32, #tpu.memory_space<any>> -> memref<1x32xf32, #tpu.memory_space<any>>
    %c5_i32_214 = arith.constant 5 : i32
    %c0_i32_215 = arith.constant 0 : i32
    %310 = tpu.memref_slice %arg3[%c5_i32_214, %c0_i32_215] : memref<32x32xf32, #tpu.memory_space<vmem>> -> memref<1x32xf32, #tpu.memory_space<vmem>>
    %311 = tpu.memref_slice %arg4[%c5_i32_212] : memref<32x!tpu.dma_semaphore, #tpu.memory_space<semaphore_mem>> -> memref<1x!tpu.dma_semaphore, #tpu.memory_space<semaphore_mem>>
    %312 = tpu.memref_squeeze %311 : memref<1x!tpu.dma_semaphore, #tpu.memory_space<semaphore_mem>> -> memref<!tpu.dma_semaphore, #tpu.memory_space<semaphore_mem>>
    tpu.wait_dma2 semaphore(%312 : memref<!tpu.dma_semaphore, #tpu.memory_space<semaphore_mem>>) src(%309 : memref<1x32xf32, #tpu.memory_space<any>>) dst(%310 : memref<1x32xf32, #tpu.memory_space<vmem>>)
    %c6_i32_216 = arith.constant 6 : i32
    %c0_i32_217 = arith.constant 0 : i32
    %313 = tpu.memref_slice %arg2[%59, %c0_i32_217] : memref<30x32xf32, #tpu.memory_space<any>> -> memref<1x32xf32, #tpu.memory_space<any>>
    %c6_i32_218 = arith.constant 6 : i32
    %c0_i32_219 = arith.constant 0 : i32
    %314 = tpu.memref_slice %arg3[%c6_i32_218, %c0_i32_219] : memref<32x32xf32, #tpu.memory_space<vmem>> -> memref<1x32xf32, #tpu.memory_space<vmem>>
    %315 = tpu.memref_slice %arg4[%c6_i32_216] : memref<32x!tpu.dma_semaphore, #tpu.memory_space<semaphore_mem>> -> memref<1x!tpu.dma_semaphore, #tpu.memory_space<semaphore_mem>>
    %316 = tpu.memref_squeeze %315 : memref<1x!tpu.dma_semaphore, #tpu.memory_space<semaphore_mem>> -> memref<!tpu.dma_semaphore, #tpu.memory_space<semaphore_mem>>
    tpu.wait_dma2 semaphore(%316 : memref<!tpu.dma_semaphore, #tpu.memory_space<semaphore_mem>>) src(%313 : memref<1x32xf32, #tpu.memory_space<any>>) dst(%314 : memref<1x32xf32, #tpu.memory_space<vmem>>)
    %c7_i32_220 = arith.constant 7 : i32
    %c0_i32_221 = arith.constant 0 : i32
    %317 = tpu.memref_slice %arg2[%68, %c0_i32_221] : memref<30x32xf32, #tpu.memory_space<any>> -> memref<1x32xf32, #tpu.memory_space<any>>
    %c7_i32_222 = arith.constant 7 : i32
    %c0_i32_223 = arith.constant 0 : i32
    %318 = tpu.memref_slice %arg3[%c7_i32_222, %c0_i32_223] : memref<32x32xf32, #tpu.memory_space<vmem>> -> memref<1x32xf32, #tpu.memory_space<vmem>>
    %319 = tpu.memref_slice %arg4[%c7_i32_220] : memref<32x!tpu.dma_semaphore, #tpu.memory_space<semaphore_mem>> -> memref<1x!tpu.dma_semaphore, #tpu.memory_space<semaphore_mem>>
    %320 = tpu.memref_squeeze %319 : memref<1x!tpu.dma_semaphore, #tpu.memory_space<semaphore_mem>> -> memref<!tpu.dma_semaphore, #tpu.memory_space<semaphore_mem>>
    tpu.wait_dma2 semaphore(%320 : memref<!tpu.dma_semaphore, #tpu.memory_space<semaphore_mem>>) src(%317 : memref<1x32xf32, #tpu.memory_space<any>>) dst(%318 : memref<1x32xf32, #tpu.memory_space<vmem>>)
    %c8_i32_224 = arith.constant 8 : i32
    %c0_i32_225 = arith.constant 0 : i32
    %321 = tpu.memref_slice %arg2[%77, %c0_i32_225] : memref<30x32xf32, #tpu.memory_space<any>> -> memref<1x32xf32, #tpu.memory_space<any>>
    %c8_i32_226 = arith.constant 8 : i32
    %c0_i32_227 = arith.constant 0 : i32
    %322 = tpu.memref_slice %arg3[%c8_i32_226, %c0_i32_227] : memref<32x32xf32, #tpu.memory_space<vmem>> -> memref<1x32xf32, #tpu.memory_space<vmem>>
    %323 = tpu.memref_slice %arg4[%c8_i32_224] : memref<32x!tpu.dma_semaphore, #tpu.memory_space<semaphore_mem>> -> memref<1x!tpu.dma_semaphore, #tpu.memory_space<semaphore_mem>>
    %324 = tpu.memref_squeeze %323 : memref<1x!tpu.dma_semaphore, #tpu.memory_space<semaphore_mem>> -> memref<!tpu.dma_semaphore, #tpu.memory_space<semaphore_mem>>
    tpu.wait_dma2 semaphore(%324 : memref<!tpu.dma_semaphore, #tpu.memory_space<semaphore_mem>>) src(%321 : memref<1x32xf32, #tpu.memory_space<any>>) dst(%322 : memref<1x32xf32, #tpu.memory_space<vmem>>)
    %c9_i32_228 = arith.constant 9 : i32
    %c0_i32_229 = arith.constant 0 : i32
    %325 = tpu.memref_slice %arg2[%86, %c0_i32_229] : memref<30x32xf32, #tpu.memory_space<any>> -> memref<1x32xf32, #tpu.memory_space<any>>
    %c9_i32_230 = arith.constant 9 : i32
    %c0_i32_231 = arith.constant 0 : i32
    %326 = tpu.memref_slice %arg3[%c9_i32_230, %c0_i32_231] : memref<32x32xf32, #tpu.memory_space<vmem>> -> memref<1x32xf32, #tpu.memory_space<vmem>>
    %327 = tpu.memref_slice %arg4[%c9_i32_228] : memref<32x!tpu.dma_semaphore, #tpu.memory_space<semaphore_mem>> -> memref<1x!tpu.dma_semaphore, #tpu.memory_space<semaphore_mem>>
    %328 = tpu.memref_squeeze %327 : memref<1x!tpu.dma_semaphore, #tpu.memory_space<semaphore_mem>> -> memref<!tpu.dma_semaphore, #tpu.memory_space<semaphore_mem>>
    tpu.wait_dma2 semaphore(%328 : memref<!tpu.dma_semaphore, #tpu.memory_space<semaphore_mem>>) src(%325 : memref<1x32xf32, #tpu.memory_space<any>>) dst(%326 : memref<1x32xf32, #tpu.memory_space<vmem>>)
    %c10_i32_232 = arith.constant 10 : i32
    %c0_i32_233 = arith.constant 0 : i32
    %329 = tpu.memref_slice %arg2[%95, %c0_i32_233] : memref<30x32xf32, #tpu.memory_space<any>> -> memref<1x32xf32, #tpu.memory_space<any>>
    %c10_i32_234 = arith.constant 10 : i32
    %c0_i32_235 = arith.constant 0 : i32
    %330 = tpu.memref_slice %arg3[%c10_i32_234, %c0_i32_235] : memref<32x32xf32, #tpu.memory_space<vmem>> -> memref<1x32xf32, #tpu.memory_space<vmem>>
    %331 = tpu.memref_slice %arg4[%c10_i32_232] : memref<32x!tpu.dma_semaphore, #tpu.memory_space<semaphore_mem>> -> memref<1x!tpu.dma_semaphore, #tpu.memory_space<semaphore_mem>>
    %332 = tpu.memref_squeeze %331 : memref<1x!tpu.dma_semaphore, #tpu.memory_space<semaphore_mem>> -> memref<!tpu.dma_semaphore, #tpu.memory_space<semaphore_mem>>
    tpu.wait_dma2 semaphore(%332 : memref<!tpu.dma_semaphore, #tpu.memory_space<semaphore_mem>>) src(%329 : memref<1x32xf32, #tpu.memory_space<any>>) dst(%330 : memref<1x32xf32, #tpu.memory_space<vmem>>)
    %c11_i32_236 = arith.constant 11 : i32
    %c0_i32_237 = arith.constant 0 : i32
    %333 = tpu.memref_slice %arg2[%104, %c0_i32_237] : memref<30x32xf32, #tpu.memory_space<any>> -> memref<1x32xf32, #tpu.memory_space<any>>
    %c11_i32_238 = arith.constant 11 : i32
    %c0_i32_239 = arith.constant 0 : i32
    %334 = tpu.memref_slice %arg3[%c11_i32_238, %c0_i32_239] : memref<32x32xf32, #tpu.memory_space<vmem>> -> memref<1x32xf32, #tpu.memory_space<vmem>>
    %335 = tpu.memref_slice %arg4[%c11_i32_236] : memref<32x!tpu.dma_semaphore, #tpu.memory_space<semaphore_mem>> -> memref<1x!tpu.dma_semaphore, #tpu.memory_space<semaphore_mem>>
    %336 = tpu.memref_squeeze %335 : memref<1x!tpu.dma_semaphore, #tpu.memory_space<semaphore_mem>> -> memref<!tpu.dma_semaphore, #tpu.memory_space<semaphore_mem>>
    tpu.wait_dma2 semaphore(%336 : memref<!tpu.dma_semaphore, #tpu.memory_space<semaphore_mem>>) src(%333 : memref<1x32xf32, #tpu.memory_space<any>>) dst(%334 : memref<1x32xf32, #tpu.memory_space<vmem>>)
    %c12_i32_240 = arith.constant 12 : i32
    %c0_i32_241 = arith.constant 0 : i32
    %337 = tpu.memref_slice %arg2[%113, %c0_i32_241] : memref<30x32xf32, #tpu.memory_space<any>> -> memref<1x32xf32, #tpu.memory_space<any>>
    %c12_i32_242 = arith.constant 12 : i32
    %c0_i32_243 = arith.constant 0 : i32
    %338 = tpu.memref_slice %arg3[%c12_i32_242, %c0_i32_243] : memref<32x32xf32, #tpu.memory_space<vmem>> -> memref<1x32xf32, #tpu.memory_space<vmem>>
    %339 = tpu.memref_slice %arg4[%c12_i32_240] : memref<32x!tpu.dma_semaphore, #tpu.memory_space<semaphore_mem>> -> memref<1x!tpu.dma_semaphore, #tpu.memory_space<semaphore_mem>>
    %340 = tpu.memref_squeeze %339 : memref<1x!tpu.dma_semaphore, #tpu.memory_space<semaphore_mem>> -> memref<!tpu.dma_semaphore, #tpu.memory_space<semaphore_mem>>
    tpu.wait_dma2 semaphore(%340 : memref<!tpu.dma_semaphore, #tpu.memory_space<semaphore_mem>>) src(%337 : memref<1x32xf32, #tpu.memory_space<any>>) dst(%338 : memref<1x32xf32, #tpu.memory_space<vmem>>)
    %c13_i32_244 = arith.constant 13 : i32
    %c0_i32_245 = arith.constant 0 : i32
    %341 = tpu.memref_slice %arg2[%122, %c0_i32_245] : memref<30x32xf32, #tpu.memory_space<any>> -> memref<1x32xf32, #tpu.memory_space<any>>
    %c13_i32_246 = arith.constant 13 : i32
    %c0_i32_247 = arith.constant 0 : i32
    %342 = tpu.memref_slice %arg3[%c13_i32_246, %c0_i32_247] : memref<32x32xf32, #tpu.memory_space<vmem>> -> memref<1x32xf32, #tpu.memory_space<vmem>>
    %343 = tpu.memref_slice %arg4[%c13_i32_244] : memref<32x!tpu.dma_semaphore, #tpu.memory_space<semaphore_mem>> -> memref<1x!tpu.dma_semaphore, #tpu.memory_space<semaphore_mem>>
    %344 = tpu.memref_squeeze %343 : memref<1x!tpu.dma_semaphore, #tpu.memory_space<semaphore_mem>> -> memref<!tpu.dma_semaphore, #tpu.memory_space<semaphore_mem>>
    tpu.wait_dma2 semaphore(%344 : memref<!tpu.dma_semaphore, #tpu.memory_space<semaphore_mem>>) src(%341 : memref<1x32xf32, #tpu.memory_space<any>>) dst(%342 : memref<1x32xf32, #tpu.memory_space<vmem>>)
    %c14_i32_248 = arith.constant 14 : i32
    %c0_i32_249 = arith.constant 0 : i32
    %345 = tpu.memref_slice %arg2[%131, %c0_i32_249] : memref<30x32xf32, #tpu.memory_space<any>> -> memref<1x32xf32, #tpu.memory_space<any>>
    %c14_i32_250 = arith.constant 14 : i32
    %c0_i32_251 = arith.constant 0 : i32
    %346 = tpu.memref_slice %arg3[%c14_i32_250, %c0_i32_251] : memref<32x32xf32, #tpu.memory_space<vmem>> -> memref<1x32xf32, #tpu.memory_space<vmem>>
    %347 = tpu.memref_slice %arg4[%c14_i32_248] : memref<32x!tpu.dma_semaphore, #tpu.memory_space<semaphore_mem>> -> memref<1x!tpu.dma_semaphore, #tpu.memory_space<semaphore_mem>>
    %348 = tpu.memref_squeeze %347 : memref<1x!tpu.dma_semaphore, #tpu.memory_space<semaphore_mem>> -> memref<!tpu.dma_semaphore, #tpu.memory_space<semaphore_mem>>
    tpu.wait_dma2 semaphore(%348 : memref<!tpu.dma_semaphore, #tpu.memory_space<semaphore_mem>>) src(%345 : memref<1x32xf32, #tpu.memory_space<any>>) dst(%346 : memref<1x32xf32, #tpu.memory_space<vmem>>)
    %c15_i32_252 = arith.constant 15 : i32
    %c0_i32_253 = arith.constant 0 : i32
    %349 = tpu.memref_slice %arg2[%140, %c0_i32_253] : memref<30x32xf32, #tpu.memory_space<any>> -> memref<1x32xf32, #tpu.memory_space<any>>
    %c15_i32_254 = arith.constant 15 : i32
    %c0_i32_255 = arith.constant 0 : i32
    %350 = tpu.memref_slice %arg3[%c15_i32_254, %c0_i32_255] : memref<32x32xf32, #tpu.memory_space<vmem>> -> memref<1x32xf32, #tpu.memory_space<vmem>>
    %351 = tpu.memref_slice %arg4[%c15_i32_252] : memref<32x!tpu.dma_semaphore, #tpu.memory_space<semaphore_mem>> -> memref<1x!tpu.dma_semaphore, #tpu.memory_space<semaphore_mem>>
    %352 = tpu.memref_squeeze %351 : memref<1x!tpu.dma_semaphore, #tpu.memory_space<semaphore_mem>> -> memref<!tpu.dma_semaphore, #tpu.memory_space<semaphore_mem>>
    tpu.wait_dma2 semaphore(%352 : memref<!tpu.dma_semaphore, #tpu.memory_space<semaphore_mem>>) src(%349 : memref<1x32xf32, #tpu.memory_space<any>>) dst(%350 : memref<1x32xf32, #tpu.memory_space<vmem>>)
    %c16_i32_256 = arith.constant 16 : i32
    %c0_i32_257 = arith.constant 0 : i32
    %353 = tpu.memref_slice %arg2[%149, %c0_i32_257] : memref<30x32xf32, #tpu.memory_space<any>> -> memref<1x32xf32, #tpu.memory_space<any>>
    %c16_i32_258 = arith.constant 16 : i32
    %c0_i32_259 = arith.constant 0 : i32
    %354 = tpu.memref_slice %arg3[%c16_i32_258, %c0_i32_259] : memref<32x32xf32, #tpu.memory_space<vmem>> -> memref<1x32xf32, #tpu.memory_space<vmem>>
    %355 = tpu.memref_slice %arg4[%c16_i32_256] : memref<32x!tpu.dma_semaphore, #tpu.memory_space<semaphore_mem>> -> memref<1x!tpu.dma_semaphore, #tpu.memory_space<semaphore_mem>>
    %356 = tpu.memref_squeeze %355 : memref<1x!tpu.dma_semaphore, #tpu.memory_space<semaphore_mem>> -> memref<!tpu.dma_semaphore, #tpu.memory_space<semaphore_mem>>
    tpu.wait_dma2 semaphore(%356 : memref<!tpu.dma_semaphore, #tpu.memory_space<semaphore_mem>>) src(%353 : memref<1x32xf32, #tpu.memory_space<any>>) dst(%354 : memref<1x32xf32, #tpu.memory_space<vmem>>)
    %c17_i32_260 = arith.constant 17 : i32
    %c0_i32_261 = arith.constant 0 : i32
    %357 = tpu.memref_slice %arg2[%158, %c0_i32_261] : memref<30x32xf32, #tpu.memory_space<any>> -> memref<1x32xf32, #tpu.memory_space<any>>
    %c17_i32_262 = arith.constant 17 : i32
    %c0_i32_263 = arith.constant 0 : i32
    %358 = tpu.memref_slice %arg3[%c17_i32_262, %c0_i32_263] : memref<32x32xf32, #tpu.memory_space<vmem>> -> memref<1x32xf32, #tpu.memory_space<vmem>>
    %359 = tpu.memref_slice %arg4[%c17_i32_260] : memref<32x!tpu.dma_semaphore, #tpu.memory_space<semaphore_mem>> -> memref<1x!tpu.dma_semaphore, #tpu.memory_space<semaphore_mem>>
    %360 = tpu.memref_squeeze %359 : memref<1x!tpu.dma_semaphore, #tpu.memory_space<semaphore_mem>> -> memref<!tpu.dma_semaphore, #tpu.memory_space<semaphore_mem>>
    tpu.wait_dma2 semaphore(%360 : memref<!tpu.dma_semaphore, #tpu.memory_space<semaphore_mem>>) src(%357 : memref<1x32xf32, #tpu.memory_space<any>>) dst(%358 : memref<1x32xf32, #tpu.memory_space<vmem>>)
    %c18_i32_264 = arith.constant 18 : i32
    %c0_i32_265 = arith.constant 0 : i32
    %361 = tpu.memref_slice %arg2[%167, %c0_i32_265] : memref<30x32xf32, #tpu.memory_space<any>> -> memref<1x32xf32, #tpu.memory_space<any>>
    %c18_i32_266 = arith.constant 18 : i32
    %c0_i32_267 = arith.constant 0 : i32
    %362 = tpu.memref_slice %arg3[%c18_i32_266, %c0_i32_267] : memref<32x32xf32, #tpu.memory_space<vmem>> -> memref<1x32xf32, #tpu.memory_space<vmem>>
    %363 = tpu.memref_slice %arg4[%c18_i32_264] : memref<32x!tpu.dma_semaphore, #tpu.memory_space<semaphore_mem>> -> memref<1x!tpu.dma_semaphore, #tpu.memory_space<semaphore_mem>>
    %364 = tpu.memref_squeeze %363 : memref<1x!tpu.dma_semaphore, #tpu.memory_space<semaphore_mem>> -> memref<!tpu.dma_semaphore, #tpu.memory_space<semaphore_mem>>
    tpu.wait_dma2 semaphore(%364 : memref<!tpu.dma_semaphore, #tpu.memory_space<semaphore_mem>>) src(%361 : memref<1x32xf32, #tpu.memory_space<any>>) dst(%362 : memref<1x32xf32, #tpu.memory_space<vmem>>)
    %c19_i32_268 = arith.constant 19 : i32
    %c0_i32_269 = arith.constant 0 : i32
    %365 = tpu.memref_slice %arg2[%176, %c0_i32_269] : memref<30x32xf32, #tpu.memory_space<any>> -> memref<1x32xf32, #tpu.memory_space<any>>
    %c19_i32_270 = arith.constant 19 : i32
    %c0_i32_271 = arith.constant 0 : i32
    %366 = tpu.memref_slice %arg3[%c19_i32_270, %c0_i32_271] : memref<32x32xf32, #tpu.memory_space<vmem>> -> memref<1x32xf32, #tpu.memory_space<vmem>>
    %367 = tpu.memref_slice %arg4[%c19_i32_268] : memref<32x!tpu.dma_semaphore, #tpu.memory_space<semaphore_mem>> -> memref<1x!tpu.dma_semaphore, #tpu.memory_space<semaphore_mem>>
    %368 = tpu.memref_squeeze %367 : memref<1x!tpu.dma_semaphore, #tpu.memory_space<semaphore_mem>> -> memref<!tpu.dma_semaphore, #tpu.memory_space<semaphore_mem>>
    tpu.wait_dma2 semaphore(%368 : memref<!tpu.dma_semaphore, #tpu.memory_space<semaphore_mem>>) src(%365 : memref<1x32xf32, #tpu.memory_space<any>>) dst(%366 : memref<1x32xf32, #tpu.memory_space<vmem>>)
    %c20_i32_272 = arith.constant 20 : i32
    %c0_i32_273 = arith.constant 0 : i32
    %369 = tpu.memref_slice %arg2[%185, %c0_i32_273] : memref<30x32xf32, #tpu.memory_space<any>> -> memref<1x32xf32, #tpu.memory_space<any>>
    %c20_i32_274 = arith.constant 20 : i32
    %c0_i32_275 = arith.constant 0 : i32
    %370 = tpu.memref_slice %arg3[%c20_i32_274, %c0_i32_275] : memref<32x32xf32, #tpu.memory_space<vmem>> -> memref<1x32xf32, #tpu.memory_space<vmem>>
    %371 = tpu.memref_slice %arg4[%c20_i32_272] : memref<32x!tpu.dma_semaphore, #tpu.memory_space<semaphore_mem>> -> memref<1x!tpu.dma_semaphore, #tpu.memory_space<semaphore_mem>>
    %372 = tpu.memref_squeeze %371 : memref<1x!tpu.dma_semaphore, #tpu.memory_space<semaphore_mem>> -> memref<!tpu.dma_semaphore, #tpu.memory_space<semaphore_mem>>
    tpu.wait_dma2 semaphore(%372 : memref<!tpu.dma_semaphore, #tpu.memory_space<semaphore_mem>>) src(%369 : memref<1x32xf32, #tpu.memory_space<any>>) dst(%370 : memref<1x32xf32, #tpu.memory_space<vmem>>)
    %c21_i32_276 = arith.constant 21 : i32
    %c0_i32_277 = arith.constant 0 : i32
    %373 = tpu.memref_slice %arg2[%194, %c0_i32_277] : memref<30x32xf32, #tpu.memory_space<any>> -> memref<1x32xf32, #tpu.memory_space<any>>
    %c21_i32_278 = arith.constant 21 : i32
    %c0_i32_279 = arith.constant 0 : i32
    %374 = tpu.memref_slice %arg3[%c21_i32_278, %c0_i32_279] : memref<32x32xf32, #tpu.memory_space<vmem>> -> memref<1x32xf32, #tpu.memory_space<vmem>>
    %375 = tpu.memref_slice %arg4[%c21_i32_276] : memref<32x!tpu.dma_semaphore, #tpu.memory_space<semaphore_mem>> -> memref<1x!tpu.dma_semaphore, #tpu.memory_space<semaphore_mem>>
    %376 = tpu.memref_squeeze %375 : memref<1x!tpu.dma_semaphore, #tpu.memory_space<semaphore_mem>> -> memref<!tpu.dma_semaphore, #tpu.memory_space<semaphore_mem>>
    tpu.wait_dma2 semaphore(%376 : memref<!tpu.dma_semaphore, #tpu.memory_space<semaphore_mem>>) src(%373 : memref<1x32xf32, #tpu.memory_space<any>>) dst(%374 : memref<1x32xf32, #tpu.memory_space<vmem>>)
    %c22_i32_280 = arith.constant 22 : i32
    %c0_i32_281 = arith.constant 0 : i32
    %377 = tpu.memref_slice %arg2[%203, %c0_i32_281] : memref<30x32xf32, #tpu.memory_space<any>> -> memref<1x32xf32, #tpu.memory_space<any>>
    %c22_i32_282 = arith.constant 22 : i32
    %c0_i32_283 = arith.constant 0 : i32
    %378 = tpu.memref_slice %arg3[%c22_i32_282, %c0_i32_283] : memref<32x32xf32, #tpu.memory_space<vmem>> -> memref<1x32xf32, #tpu.memory_space<vmem>>
    %379 = tpu.memref_slice %arg4[%c22_i32_280] : memref<32x!tpu.dma_semaphore, #tpu.memory_space<semaphore_mem>> -> memref<1x!tpu.dma_semaphore, #tpu.memory_space<semaphore_mem>>
    %380 = tpu.memref_squeeze %379 : memref<1x!tpu.dma_semaphore, #tpu.memory_space<semaphore_mem>> -> memref<!tpu.dma_semaphore, #tpu.memory_space<semaphore_mem>>
    tpu.wait_dma2 semaphore(%380 : memref<!tpu.dma_semaphore, #tpu.memory_space<semaphore_mem>>) src(%377 : memref<1x32xf32, #tpu.memory_space<any>>) dst(%378 : memref<1x32xf32, #tpu.memory_space<vmem>>)
    %c23_i32_284 = arith.constant 23 : i32
    %c0_i32_285 = arith.constant 0 : i32
    %381 = tpu.memref_slice %arg2[%212, %c0_i32_285] : memref<30x32xf32, #tpu.memory_space<any>> -> memref<1x32xf32, #tpu.memory_space<any>>
    %c23_i32_286 = arith.constant 23 : i32
    %c0_i32_287 = arith.constant 0 : i32
    %382 = tpu.memref_slice %arg3[%c23_i32_286, %c0_i32_287] : memref<32x32xf32, #tpu.memory_space<vmem>> -> memref<1x32xf32, #tpu.memory_space<vmem>>
    %383 = tpu.memref_slice %arg4[%c23_i32_284] : memref<32x!tpu.dma_semaphore, #tpu.memory_space<semaphore_mem>> -> memref<1x!tpu.dma_semaphore, #tpu.memory_space<semaphore_mem>>
    %384 = tpu.memref_squeeze %383 : memref<1x!tpu.dma_semaphore, #tpu.memory_space<semaphore_mem>> -> memref<!tpu.dma_semaphore, #tpu.memory_space<semaphore_mem>>
    tpu.wait_dma2 semaphore(%384 : memref<!tpu.dma_semaphore, #tpu.memory_space<semaphore_mem>>) src(%381 : memref<1x32xf32, #tpu.memory_space<any>>) dst(%382 : memref<1x32xf32, #tpu.memory_space<vmem>>)
    %c24_i32_288 = arith.constant 24 : i32
    %c0_i32_289 = arith.constant 0 : i32
    %385 = tpu.memref_slice %arg2[%221, %c0_i32_289] : memref<30x32xf32, #tpu.memory_space<any>> -> memref<1x32xf32, #tpu.memory_space<any>>
    %c24_i32_290 = arith.constant 24 : i32
    %c0_i32_291 = arith.constant 0 : i32
    %386 = tpu.memref_slice %arg3[%c24_i32_290, %c0_i32_291] : memref<32x32xf32, #tpu.memory_space<vmem>> -> memref<1x32xf32, #tpu.memory_space<vmem>>
    %387 = tpu.memref_slice %arg4[%c24_i32_288] : memref<32x!tpu.dma_semaphore, #tpu.memory_space<semaphore_mem>> -> memref<1x!tpu.dma_semaphore, #tpu.memory_space<semaphore_mem>>
    %388 = tpu.memref_squeeze %387 : memref<1x!tpu.dma_semaphore, #tpu.memory_space<semaphore_mem>> -> memref<!tpu.dma_semaphore, #tpu.memory_space<semaphore_mem>>
    tpu.wait_dma2 semaphore(%388 : memref<!tpu.dma_semaphore, #tpu.memory_space<semaphore_mem>>) src(%385 : memref<1x32xf32, #tpu.memory_space<any>>) dst(%386 : memref<1x32xf32, #tpu.memory_space<vmem>>)
    %c25_i32_292 = arith.constant 25 : i32
    %c0_i32_293 = arith.constant 0 : i32
    %389 = tpu.memref_slice %arg2[%230, %c0_i32_293] : memref<30x32xf32, #tpu.memory_space<any>> -> memref<1x32xf32, #tpu.memory_space<any>>
    %c25_i32_294 = arith.constant 25 : i32
    %c0_i32_295 = arith.constant 0 : i32
    %390 = tpu.memref_slice %arg3[%c25_i32_294, %c0_i32_295] : memref<32x32xf32, #tpu.memory_space<vmem>> -> memref<1x32xf32, #tpu.memory_space<vmem>>
    %391 = tpu.memref_slice %arg4[%c25_i32_292] : memref<32x!tpu.dma_semaphore, #tpu.memory_space<semaphore_mem>> -> memref<1x!tpu.dma_semaphore, #tpu.memory_space<semaphore_mem>>
    %392 = tpu.memref_squeeze %391 : memref<1x!tpu.dma_semaphore, #tpu.memory_space<semaphore_mem>> -> memref<!tpu.dma_semaphore, #tpu.memory_space<semaphore_mem>>
    tpu.wait_dma2 semaphore(%392 : memref<!tpu.dma_semaphore, #tpu.memory_space<semaphore_mem>>) src(%389 : memref<1x32xf32, #tpu.memory_space<any>>) dst(%390 : memref<1x32xf32, #tpu.memory_space<vmem>>)
    %c26_i32_296 = arith.constant 26 : i32
    %c0_i32_297 = arith.constant 0 : i32
    %393 = tpu.memref_slice %arg2[%239, %c0_i32_297] : memref<30x32xf32, #tpu.memory_space<any>> -> memref<1x32xf32, #tpu.memory_space<any>>
    %c26_i32_298 = arith.constant 26 : i32
    %c0_i32_299 = arith.constant 0 : i32
    %394 = tpu.memref_slice %arg3[%c26_i32_298, %c0_i32_299] : memref<32x32xf32, #tpu.memory_space<vmem>> -> memref<1x32xf32, #tpu.memory_space<vmem>>
    %395 = tpu.memref_slice %arg4[%c26_i32_296] : memref<32x!tpu.dma_semaphore, #tpu.memory_space<semaphore_mem>> -> memref<1x!tpu.dma_semaphore, #tpu.memory_space<semaphore_mem>>
    %396 = tpu.memref_squeeze %395 : memref<1x!tpu.dma_semaphore, #tpu.memory_space<semaphore_mem>> -> memref<!tpu.dma_semaphore, #tpu.memory_space<semaphore_mem>>
    tpu.wait_dma2 semaphore(%396 : memref<!tpu.dma_semaphore, #tpu.memory_space<semaphore_mem>>) src(%393 : memref<1x32xf32, #tpu.memory_space<any>>) dst(%394 : memref<1x32xf32, #tpu.memory_space<vmem>>)
    %c27_i32_300 = arith.constant 27 : i32
    %c0_i32_301 = arith.constant 0 : i32
    %397 = tpu.memref_slice %arg2[%248, %c0_i32_301] : memref<30x32xf32, #tpu.memory_space<any>> -> memref<1x32xf32, #tpu.memory_space<any>>
    %c27_i32_302 = arith.constant 27 : i32
    %c0_i32_303 = arith.constant 0 : i32
    %398 = tpu.memref_slice %arg3[%c27_i32_302, %c0_i32_303] : memref<32x32xf32, #tpu.memory_space<vmem>> -> memref<1x32xf32, #tpu.memory_space<vmem>>
    %399 = tpu.memref_slice %arg4[%c27_i32_300] : memref<32x!tpu.dma_semaphore, #tpu.memory_space<semaphore_mem>> -> memref<1x!tpu.dma_semaphore, #tpu.memory_space<semaphore_mem>>
    %400 = tpu.memref_squeeze %399 : memref<1x!tpu.dma_semaphore, #tpu.memory_space<semaphore_mem>> -> memref<!tpu.dma_semaphore, #tpu.memory_space<semaphore_mem>>
    tpu.wait_dma2 semaphore(%400 : memref<!tpu.dma_semaphore, #tpu.memory_space<semaphore_mem>>) src(%397 : memref<1x32xf32, #tpu.memory_space<any>>) dst(%398 : memref<1x32xf32, #tpu.memory_space<vmem>>)
    %c28_i32_304 = arith.constant 28 : i32
    %c0_i32_305 = arith.constant 0 : i32
    %401 = tpu.memref_slice %arg2[%257, %c0_i32_305] : memref<30x32xf32, #tpu.memory_space<any>> -> memref<1x32xf32, #tpu.memory_space<any>>
    %c28_i32_306 = arith.constant 28 : i32
    %c0_i32_307 = arith.constant 0 : i32
    %402 = tpu.memref_slice %arg3[%c28_i32_306, %c0_i32_307] : memref<32x32xf32, #tpu.memory_space<vmem>> -> memref<1x32xf32, #tpu.memory_space<vmem>>
    %403 = tpu.memref_slice %arg4[%c28_i32_304] : memref<32x!tpu.dma_semaphore, #tpu.memory_space<semaphore_mem>> -> memref<1x!tpu.dma_semaphore, #tpu.memory_space<semaphore_mem>>
    %404 = tpu.memref_squeeze %403 : memref<1x!tpu.dma_semaphore, #tpu.memory_space<semaphore_mem>> -> memref<!tpu.dma_semaphore, #tpu.memory_space<semaphore_mem>>
    tpu.wait_dma2 semaphore(%404 : memref<!tpu.dma_semaphore, #tpu.memory_space<semaphore_mem>>) src(%401 : memref<1x32xf32, #tpu.memory_space<any>>) dst(%402 : memref<1x32xf32, #tpu.memory_space<vmem>>)
    %c29_i32_308 = arith.constant 29 : i32
    %c0_i32_309 = arith.constant 0 : i32
    %405 = tpu.memref_slice %arg2[%266, %c0_i32_309] : memref<30x32xf32, #tpu.memory_space<any>> -> memref<1x32xf32, #tpu.memory_space<any>>
    %c29_i32_310 = arith.constant 29 : i32
    %c0_i32_311 = arith.constant 0 : i32
    %406 = tpu.memref_slice %arg3[%c29_i32_310, %c0_i32_311] : memref<32x32xf32, #tpu.memory_space<vmem>> -> memref<1x32xf32, #tpu.memory_space<vmem>>
    %407 = tpu.memref_slice %arg4[%c29_i32_308] : memref<32x!tpu.dma_semaphore, #tpu.memory_space<semaphore_mem>> -> memref<1x!tpu.dma_semaphore, #tpu.memory_space<semaphore_mem>>
    %408 = tpu.memref_squeeze %407 : memref<1x!tpu.dma_semaphore, #tpu.memory_space<semaphore_mem>> -> memref<!tpu.dma_semaphore, #tpu.memory_space<semaphore_mem>>
    tpu.wait_dma2 semaphore(%408 : memref<!tpu.dma_semaphore, #tpu.memory_space<semaphore_mem>>) src(%405 : memref<1x32xf32, #tpu.memory_space<any>>) dst(%406 : memref<1x32xf32, #tpu.memory_space<vmem>>)
    %c30_i32_312 = arith.constant 30 : i32
    %c0_i32_313 = arith.constant 0 : i32
    %409 = tpu.memref_slice %arg2[%275, %c0_i32_313] : memref<30x32xf32, #tpu.memory_space<any>> -> memref<1x32xf32, #tpu.memory_space<any>>
    %c30_i32_314 = arith.constant 30 : i32
    %c0_i32_315 = arith.constant 0 : i32
    %410 = tpu.memref_slice %arg3[%c30_i32_314, %c0_i32_315] : memref<32x32xf32, #tpu.memory_space<vmem>> -> memref<1x32xf32, #tpu.memory_space<vmem>>
    %411 = tpu.memref_slice %arg4[%c30_i32_312] : memref<32x!tpu.dma_semaphore, #tpu.memory_space<semaphore_mem>> -> memref<1x!tpu.dma_semaphore, #tpu.memory_space<semaphore_mem>>
    %412 = tpu.memref_squeeze %411 : memref<1x!tpu.dma_semaphore, #tpu.memory_space<semaphore_mem>> -> memref<!tpu.dma_semaphore, #tpu.memory_space<semaphore_mem>>
    tpu.wait_dma2 semaphore(%412 : memref<!tpu.dma_semaphore, #tpu.memory_space<semaphore_mem>>) src(%409 : memref<1x32xf32, #tpu.memory_space<any>>) dst(%410 : memref<1x32xf32, #tpu.memory_space<vmem>>)
    %c31_i32_316 = arith.constant 31 : i32
    %c0_i32_317 = arith.constant 0 : i32
    %413 = tpu.memref_slice %arg2[%284, %c0_i32_317] : memref<30x32xf32, #tpu.memory_space<any>> -> memref<1x32xf32, #tpu.memory_space<any>>
    %c31_i32_318 = arith.constant 31 : i32
    %c0_i32_319 = arith.constant 0 : i32
    %414 = tpu.memref_slice %arg3[%c31_i32_318, %c0_i32_319] : memref<32x32xf32, #tpu.memory_space<vmem>> -> memref<1x32xf32, #tpu.memory_space<vmem>>
    %415 = tpu.memref_slice %arg4[%c31_i32_316] : memref<32x!tpu.dma_semaphore, #tpu.memory_space<semaphore_mem>> -> memref<1x!tpu.dma_semaphore, #tpu.memory_space<semaphore_mem>>
    %416 = tpu.memref_squeeze %415 : memref<1x!tpu.dma_semaphore, #tpu.memory_space<semaphore_mem>> -> memref<!tpu.dma_semaphore, #tpu.memory_space<semaphore_mem>>
    tpu.wait_dma2 semaphore(%416 : memref<!tpu.dma_semaphore, #tpu.memory_space<semaphore_mem>>) src(%413 : memref<1x32xf32, #tpu.memory_space<any>>) dst(%414 : memref<1x32xf32, #tpu.memory_space<vmem>>)
    return
  }
  func.func @transform_1(%arg0: i32, %arg1: memref<64xi32, #tpu.memory_space<smem>>) -> (i32, i32) {
    %c0_i32 = arith.constant 0 : i32
    %c0_i32_0 = arith.constant 0 : i32
    return %arg0, %c0_i32 : i32, i32
  }
}

module attributes {stable_mosaic.version = 11 : i64} {
  func.func @kernel(%arg0: i32, %arg1: memref<32x32xf32, #tpu.memory_space<vmem>>, %arg2: memref<32x32xf32, #tpu.memory_space<vmem>>, %arg3: memref<32x32xf32, #tpu.memory_space<vmem>>, %arg4: memref<32x32xf32, #tpu.memory_space<vmem>>, %arg5: memref<32x256xf32, #tpu.memory_space<vmem>>, %arg6: memref<32x256xf32, #tpu.memory_space<vmem>>, %arg7: memref<32x256xf32, #tpu.memory_space<vmem>>, %arg8: memref<32x256xf32, #tpu.memory_space<vmem>>, %arg9: memref<1x256xf32, #tpu.memory_space<vmem>>, %arg10: memref<64x256xf32, #tpu.memory_space<vmem>>, %arg11: memref<32x32xf32, #tpu.memory_space<vmem>>, %arg12: memref<32x32xf32, #tpu.memory_space<vmem>>, %arg13: memref<8x64xf32, #tpu.memory_space<vmem>>, %arg14: memref<8x64xf32, #tpu.memory_space<vmem>>, %arg15: memref<32x256xf32, #tpu.memory_space<vmem>>, %arg16: memref<32x256xf32, #tpu.memory_space<vmem>>) attributes {dimension_semantics = [#tpu.dimension_semantics<arbitrary>], iteration_bounds = array<i64: 2>, scalar_prefetch = 0 : i64, scratch_operands = 4 : i64, tpu.core_type = #tpu.core_type<tc>, window_params = [{transform_indices = @transform_0, window_bounds = array<i64: 32, 32>}, {transform_indices = @transform_1, window_bounds = array<i64: 32, 32>}, {transform_indices = @transform_2, window_bounds = array<i64: 32, 32>}, {transform_indices = @transform_3, window_bounds = array<i64: 32, 32>}, {pipeline_mode = #tpu.pipeline_mode<synchronous>, transform_indices = @transform_4, window_bounds = array<i64: 32, 256>}, {pipeline_mode = #tpu.pipeline_mode<synchronous>, transform_indices = @transform_5, window_bounds = array<i64: 32, 256>}, {pipeline_mode = #tpu.pipeline_mode<synchronous>, transform_indices = @transform_6, window_bounds = array<i64: 32, 256>}, {pipeline_mode = #tpu.pipeline_mode<synchronous>, transform_indices = @transform_7, window_bounds = array<i64: 32, 256>}, {pipeline_mode = #tpu.pipeline_mode<synchronous>, transform_indices = @transform_8, window_bounds = array<i64: 1, 256>}, {pipeline_mode = #tpu.pipeline_mode<synchronous>, transform_indices = @transform_9, window_bounds = array<i64: 64, 256>}, {transform_indices = @transform_10, window_bounds = array<i64: 32, 32>}, {transform_indices = @transform_11, window_bounds = array<i64: 32, 32>}]} {
    %c0_i32 = arith.constant 0 : i32
    %0 = arith.cmpi eq, %arg0, %c0_i32 : i32
    %1 = arith.extui %0 : i1 to i32
    %c0_i32_0 = arith.constant 0 : i32
    %2 = arith.cmpi ne, %1, %c0_i32_0 : i32
    scf.if %2 {
      %cst_72 = arith.constant 0.000000e+00 : f32
      %133 = vector.broadcast %cst_72 : f32 to vector<8x64xf32>
      %c0_73 = arith.constant 0 : index
      %c0_74 = arith.constant 0 : index
      %134 = vector.load %arg13[%c0_73, %c0_74] : memref<8x64xf32, #tpu.memory_space<vmem>>, vector<8x64xf32>
      tpu.vector_store %arg13[%c0_73, %c0_74], %133 {strides = array<i32>} : memref<8x64xf32, #tpu.memory_space<vmem>>, vector<8x64xf32>,
      %cst_75 = arith.constant 0.000000e+00 : f32
      %135 = vector.broadcast %cst_75 : f32 to vector<8x64xf32>
      %c0_76 = arith.constant 0 : index
      %c0_77 = arith.constant 0 : index
      %136 = vector.load %arg14[%c0_76, %c0_77] : memref<8x64xf32, #tpu.memory_space<vmem>>, vector<8x64xf32>
      tpu.vector_store %arg14[%c0_76, %c0_77], %135 {strides = array<i32>} : memref<8x64xf32, #tpu.memory_space<vmem>>, vector<8x64xf32>,
    } else {
    }
    %c0 = arith.constant 0 : index
    %c0_1 = arith.constant 0 : index
    %3 = vector.load %arg9[%c0, %c0_1] : memref<1x256xf32, #tpu.memory_space<vmem>>, vector<1x256xf32>
    %c0_2 = arith.constant 0 : index
    %c0_3 = arith.constant 0 : index
    %4 = vector.load %arg1[%c0_2, %c0_3] : memref<32x32xf32, #tpu.memory_space<vmem>>, vector<32x32xf32>
    %c0_4 = arith.constant 0 : index
    %c0_5 = arith.constant 0 : index
    %5 = vector.load %arg5[%c0_4, %c0_5] : memref<32x256xf32, #tpu.memory_space<vmem>>, vector<32x256xf32>
    %cst = arith.constant dense<0.000000e+00> : vector<32x256xf32>
    %6 = tpu.matmul %4, %5, %cst {dimension_numbers = #tpu.dot_dimension_numbers<[1], [0], [0], [1], [0, 0, 1, 1], [], []>} : vector<32x32xf32>, vector<32x256xf32>, vector<32x256xf32> -> vector<32x256xf32>
    %7 = vector.broadcast %3 : vector<1x256xf32> to vector<32x256xf32>
    %8 = arith.addf %7, %6 : vector<32x256xf32>
    %c0_6 = arith.constant 0 : index
    %c0_7 = arith.constant 0 : index
    %9 = vector.load %arg2[%c0_6, %c0_7] : memref<32x32xf32, #tpu.memory_space<vmem>>, vector<32x32xf32>
    %c0_8 = arith.constant 0 : index
    %c0_9 = arith.constant 0 : index
    %10 = vector.load %arg6[%c0_8, %c0_9] : memref<32x256xf32, #tpu.memory_space<vmem>>, vector<32x256xf32>
    %cst_10 = arith.constant dense<0.000000e+00> : vector<32x256xf32>
    %11 = tpu.matmul %9, %10, %cst_10 {dimension_numbers = #tpu.dot_dimension_numbers<[1], [0], [0], [1], [0, 0, 1, 1], [], []>} : vector<32x32xf32>, vector<32x256xf32>, vector<32x256xf32> -> vector<32x256xf32>
    %12 = arith.addf %8, %11 : vector<32x256xf32>
    %c0_11 = arith.constant 0 : index
    %c0_12 = arith.constant 0 : index
    %13 = vector.load %arg15[%c0_11, %c0_12] : memref<32x256xf32, #tpu.memory_space<vmem>>, vector<32x256xf32>
    tpu.vector_store %arg15[%c0_11, %c0_12], %12 {strides = array<i32>} : memref<32x256xf32, #tpu.memory_space<vmem>>, vector<32x256xf32>,
    %c0_13 = arith.constant 0 : index
    %c0_14 = arith.constant 0 : index
    %14 = vector.load %arg3[%c0_13, %c0_14] : memref<32x32xf32, #tpu.memory_space<vmem>>, vector<32x32xf32>
    %c0_15 = arith.constant 0 : index
    %c0_16 = arith.constant 0 : index
    %15 = vector.load %arg7[%c0_15, %c0_16] : memref<32x256xf32, #tpu.memory_space<vmem>>, vector<32x256xf32>
    %cst_17 = arith.constant dense<0.000000e+00> : vector<32x256xf32>
    %16 = tpu.matmul %14, %15, %cst_17 {dimension_numbers = #tpu.dot_dimension_numbers<[1], [0], [0], [1], [0, 0, 1, 1], [], []>} : vector<32x32xf32>, vector<32x256xf32>, vector<32x256xf32> -> vector<32x256xf32>
    %c0_18 = arith.constant 0 : index
    %c0_19 = arith.constant 0 : index
    %17 = vector.load %arg4[%c0_18, %c0_19] : memref<32x32xf32, #tpu.memory_space<vmem>>, vector<32x32xf32>
    %c0_20 = arith.constant 0 : index
    %c0_21 = arith.constant 0 : index
    %18 = vector.load %arg8[%c0_20, %c0_21] : memref<32x256xf32, #tpu.memory_space<vmem>>, vector<32x256xf32>
    %cst_22 = arith.constant dense<0.000000e+00> : vector<32x256xf32>
    %19 = tpu.matmul %17, %18, %cst_22 {dimension_numbers = #tpu.dot_dimension_numbers<[1], [0], [0], [1], [0, 0, 1, 1], [], []>} : vector<32x32xf32>, vector<32x256xf32>, vector<32x256xf32> -> vector<32x256xf32>
    %20 = arith.addf %16, %19 : vector<32x256xf32>
    %c0_23 = arith.constant 0 : index
    %c0_24 = arith.constant 0 : index
    %21 = vector.load %arg16[%c0_23, %c0_24] : memref<32x256xf32, #tpu.memory_space<vmem>>, vector<32x256xf32>
    tpu.vector_store %arg16[%c0_23, %c0_24], %20 {strides = array<i32>} : memref<32x256xf32, #tpu.memory_space<vmem>>, vector<32x256xf32>,
    %c0_25 = arith.constant 0 : index
    %c0_26 = arith.constant 0 : index
    %22 = vector.load %arg10[%c0_25, %c0_26] : memref<64x256xf32, #tpu.memory_space<vmem>>, vector<64x256xf32>
    %23 = tpu.iota {dimensions = array<i32: 1>} : vector<8x256xi32>
    %c128_i32 = arith.constant 128 : i32
    %24 = vector.broadcast %c128_i32 : i32 to vector<8x256xi32>
    %25 = arith.cmpi sge, %23, %24 : vector<8x256xi32>
    %c192_i32 = arith.constant 192 : i32
    %26 = vector.broadcast %c192_i32 : i32 to vector<8x256xi32>
    %27 = arith.cmpi slt, %23, %26 : vector<8x256xi32>
    %28 = arith.andi %25, %27 : vector<8x256xi1>
    %c0_27 = arith.constant 0 : index
    %c0_28 = arith.constant 0 : index
    %29 = vector.load %arg13[%c0_27, %c0_28] : memref<8x64xf32, #tpu.memory_space<vmem>>, vector<8x64xf32>
    %c0_29 = arith.constant 0 : index
    %c0_30 = arith.constant 0 : index
    %30 = vector.load %arg14[%c0_29, %c0_30] : memref<8x64xf32, #tpu.memory_space<vmem>>, vector<8x64xf32>
    %c0_31 = arith.constant 0 : index
    %c0_32 = arith.constant 0 : index
    %31 = vector.load %arg15[%c0_31, %c0_32] : memref<32x256xf32, #tpu.memory_space<vmem>>, vector<8x256xf32>
    %c24 = arith.constant 24 : index
    %c0_33 = arith.constant 0 : index
    %32 = vector.load %arg16[%c24, %c0_33] : memref<32x256xf32, #tpu.memory_space<vmem>>, vector<8x256xf32>
    %33 = arith.addf %31, %32 : vector<8x256xf32>
    %cst_34 = arith.constant dense<0.000000e+00> : vector<8x256xf32>
    %34 = tpu.matmul %29, %22, %cst_34 {dimension_numbers = #tpu.dot_dimension_numbers<[1], [0], [0], [1], [0, 0, 1, 1], [], []>} : vector<8x64xf32>, vector<64x256xf32>, vector<8x256xf32> -> vector<8x256xf32>
    %35 = arith.addf %33, %34 : vector<8x256xf32>
    %36 = math.tanh %35 : vector<8x256xf32>
    %37 = arith.negf %35 : vector<8x256xf32>
    %38 = math.exp %37 : vector<8x256xf32>
    %cst_35 = arith.constant 1.000000e+00 : f32
    %39 = vector.broadcast %cst_35 : f32 to vector<8x256xf32>
    %40 = arith.addf %39, %38 : vector<8x256xf32>
    %41 = arith.divf %39, %40 : vector<8x256xf32>
    %42 = arith.select %28, %36, %41 : vector<8x256xi1>, vector<8x256xf32>
    %43 = vector.extract_strided_slice %42 {offsets = [0, 0], sizes = [8, 64], strides = [1, 1]} : vector<8x256xf32> to vector<8x64xf32>
    %44 = vector.extract_strided_slice %42 {offsets = [0, 64], sizes = [8, 64], strides = [1, 1]} : vector<8x256xf32> to vector<8x64xf32>
    %45 = vector.extract_strided_slice %42 {offsets = [0, 128], sizes = [8, 64], strides = [1, 1]} : vector<8x256xf32> to vector<8x64xf32>
    %46 = vector.extract_strided_slice %42 {offsets = [0, 192], sizes = [8, 64], strides = [1, 1]} : vector<8x256xf32> to vector<8x64xf32>
    %47 = arith.mulf %44, %30 : vector<8x64xf32>
    %48 = arith.mulf %43, %45 : vector<8x64xf32>
    %49 = arith.addf %47, %48 : vector<8x64xf32>
    %50 = math.tanh %49 : vector<8x64xf32>
    %51 = arith.mulf %46, %50 : vector<8x64xf32>
    %52 = vector.extract_strided_slice %51 {offsets = [0, 0], sizes = [8, 32], strides = [1, 1]} : vector<8x64xf32> to vector<8x32xf32>
    %c0_36 = arith.constant 0 : index
    %c0_37 = arith.constant 0 : index
    %53 = vector.load %arg11[%c0_36, %c0_37] : memref<32x32xf32, #tpu.memory_space<vmem>>, vector<8x32xf32>
    tpu.vector_store %arg11[%c0_36, %c0_37], %52 {strides = array<i32>} : memref<32x32xf32, #tpu.memory_space<vmem>>, vector<8x32xf32>,
    %54 = vector.extract_strided_slice %51 {offsets = [0, 32], sizes = [8, 32], strides = [1, 1]} : vector<8x64xf32> to vector<8x32xf32>
    %c24_38 = arith.constant 24 : index
    %c0_39 = arith.constant 0 : index
    %55 = vector.load %arg12[%c24_38, %c0_39] : memref<32x32xf32, #tpu.memory_space<vmem>>, vector<8x32xf32>
    tpu.vector_store %arg12[%c24_38, %c0_39], %54 {strides = array<i32>} : memref<32x32xf32, #tpu.memory_space<vmem>>, vector<8x32xf32>,
    %c8 = arith.constant 8 : index
    %c0_40 = arith.constant 0 : index
    %56 = vector.load %arg15[%c8, %c0_40] : memref<32x256xf32, #tpu.memory_space<vmem>>, vector<8x256xf32>
    %c16 = arith.constant 16 : index
    %c0_41 = arith.constant 0 : index
    %57 = vector.load %arg16[%c16, %c0_41] : memref<32x256xf32, #tpu.memory_space<vmem>>, vector<8x256xf32>
    %58 = arith.addf %56, %57 : vector<8x256xf32>
    %cst_42 = arith.constant dense<0.000000e+00> : vector<8x256xf32>
    %59 = tpu.matmul %51, %22, %cst_42 {dimension_numbers = #tpu.dot_dimension_numbers<[1], [0], [0], [1], [0, 0, 1, 1], [], []>} : vector<8x64xf32>, vector<64x256xf32>, vector<8x256xf32> -> vector<8x256xf32>
    %60 = arith.addf %58, %59 : vector<8x256xf32>
    %61 = math.tanh %60 : vector<8x256xf32>
    %62 = arith.negf %60 : vector<8x256xf32>
    %63 = math.exp %62 : vector<8x256xf32>
    %cst_43 = arith.constant 1.000000e+00 : f32
    %64 = vector.broadcast %cst_43 : f32 to vector<8x256xf32>
    %65 = arith.addf %64, %63 : vector<8x256xf32>
    %66 = arith.divf %64, %65 : vector<8x256xf32>
    %67 = arith.select %28, %61, %66 : vector<8x256xi1>, vector<8x256xf32>
    %68 = vector.extract_strided_slice %67 {offsets = [0, 0], sizes = [8, 64], strides = [1, 1]} : vector<8x256xf32> to vector<8x64xf32>
    %69 = vector.extract_strided_slice %67 {offsets = [0, 64], sizes = [8, 64], strides = [1, 1]} : vector<8x256xf32> to vector<8x64xf32>
    %70 = vector.extract_strided_slice %67 {offsets = [0, 128], sizes = [8, 64], strides = [1, 1]} : vector<8x256xf32> to vector<8x64xf32>
    %71 = vector.extract_strided_slice %67 {offsets = [0, 192], sizes = [8, 64], strides = [1, 1]} : vector<8x256xf32> to vector<8x64xf32>
    %72 = arith.mulf %69, %49 : vector<8x64xf32>
    %73 = arith.mulf %68, %70 : vector<8x64xf32>
    %74 = arith.addf %72, %73 : vector<8x64xf32>
    %75 = math.tanh %74 : vector<8x64xf32>
    %76 = arith.mulf %71, %75 : vector<8x64xf32>
    %77 = vector.extract_strided_slice %76 {offsets = [0, 0], sizes = [8, 32], strides = [1, 1]} : vector<8x64xf32> to vector<8x32xf32>
    %c8_44 = arith.constant 8 : index
    %c0_45 = arith.constant 0 : index
    %78 = vector.load %arg11[%c8_44, %c0_45] : memref<32x32xf32, #tpu.memory_space<vmem>>, vector<8x32xf32>
    tpu.vector_store %arg11[%c8_44, %c0_45], %77 {strides = array<i32>} : memref<32x32xf32, #tpu.memory_space<vmem>>, vector<8x32xf32>,
    %79 = vector.extract_strided_slice %76 {offsets = [0, 32], sizes = [8, 32], strides = [1, 1]} : vector<8x64xf32> to vector<8x32xf32>
    %c16_46 = arith.constant 16 : index
    %c0_47 = arith.constant 0 : index
    %80 = vector.load %arg12[%c16_46, %c0_47] : memref<32x32xf32, #tpu.memory_space<vmem>>, vector<8x32xf32>
    tpu.vector_store %arg12[%c16_46, %c0_47], %79 {strides = array<i32>} : memref<32x32xf32, #tpu.memory_space<vmem>>, vector<8x32xf32>,
    %c16_48 = arith.constant 16 : index
    %c0_49 = arith.constant 0 : index
    %81 = vector.load %arg15[%c16_48, %c0_49] : memref<32x256xf32, #tpu.memory_space<vmem>>, vector<8x256xf32>
    %c8_50 = arith.constant 8 : index
    %c0_51 = arith.constant 0 : index
    %82 = vector.load %arg16[%c8_50, %c0_51] : memref<32x256xf32, #tpu.memory_space<vmem>>, vector<8x256xf32>
    %83 = arith.addf %81, %82 : vector<8x256xf32>
    %cst_52 = arith.constant dense<0.000000e+00> : vector<8x256xf32>
    %84 = tpu.matmul %76, %22, %cst_52 {dimension_numbers = #tpu.dot_dimension_numbers<[1], [0], [0], [1], [0, 0, 1, 1], [], []>} : vector<8x64xf32>, vector<64x256xf32>, vector<8x256xf32> -> vector<8x256xf32>
    %85 = arith.addf %83, %84 : vector<8x256xf32>
    %86 = math.tanh %85 : vector<8x256xf32>
    %87 = arith.negf %85 : vector<8x256xf32>
    %88 = math.exp %87 : vector<8x256xf32>
    %cst_53 = arith.constant 1.000000e+00 : f32
    %89 = vector.broadcast %cst_53 : f32 to vector<8x256xf32>
    %90 = arith.addf %89, %88 : vector<8x256xf32>
    %91 = arith.divf %89, %90 : vector<8x256xf32>
    %92 = arith.select %28, %86, %91 : vector<8x256xi1>, vector<8x256xf32>
    %93 = vector.extract_strided_slice %92 {offsets = [0, 0], sizes = [8, 64], strides = [1, 1]} : vector<8x256xf32> to vector<8x64xf32>
    %94 = vector.extract_strided_slice %92 {offsets = [0, 64], sizes = [8, 64], strides = [1, 1]} : vector<8x256xf32> to vector<8x64xf32>
    %95 = vector.extract_strided_slice %92 {offsets = [0, 128], sizes = [8, 64], strides = [1, 1]} : vector<8x256xf32> to vector<8x64xf32>
    %96 = vector.extract_strided_slice %92 {offsets = [0, 192], sizes = [8, 64], strides = [1, 1]} : vector<8x256xf32> to vector<8x64xf32>
    %97 = arith.mulf %94, %74 : vector<8x64xf32>
    %98 = arith.mulf %93, %95 : vector<8x64xf32>
    %99 = arith.addf %97, %98 : vector<8x64xf32>
    %100 = math.tanh %99 : vector<8x64xf32>
    %101 = arith.mulf %96, %100 : vector<8x64xf32>
    %102 = vector.extract_strided_slice %101 {offsets = [0, 0], sizes = [8, 32], strides = [1, 1]} : vector<8x64xf32> to vector<8x32xf32>
    %c16_54 = arith.constant 16 : index
    %c0_55 = arith.constant 0 : index
    %103 = vector.load %arg11[%c16_54, %c0_55] : memref<32x32xf32, #tpu.memory_space<vmem>>, vector<8x32xf32>
    tpu.vector_store %arg11[%c16_54, %c0_55], %102 {strides = array<i32>} : memref<32x32xf32, #tpu.memory_space<vmem>>, vector<8x32xf32>,
    %104 = vector.extract_strided_slice %101 {offsets = [0, 32], sizes = [8, 32], strides = [1, 1]} : vector<8x64xf32> to vector<8x32xf32>
    %c8_56 = arith.constant 8 : index
    %c0_57 = arith.constant 0 : index
    %105 = vector.load %arg12[%c8_56, %c0_57] : memref<32x32xf32, #tpu.memory_space<vmem>>, vector<8x32xf32>
    tpu.vector_store %arg12[%c8_56, %c0_57], %104 {strides = array<i32>} : memref<32x32xf32, #tpu.memory_space<vmem>>, vector<8x32xf32>,
    %c24_58 = arith.constant 24 : index
    %c0_59 = arith.constant 0 : index
    %106 = vector.load %arg15[%c24_58, %c0_59] : memref<32x256xf32, #tpu.memory_space<vmem>>, vector<8x256xf32>
    %c0_60 = arith.constant 0 : index
    %c0_61 = arith.constant 0 : index
    %107 = vector.load %arg16[%c0_60, %c0_61] : memref<32x256xf32, #tpu.memory_space<vmem>>, vector<8x256xf32>
    %108 = arith.addf %106, %107 : vector<8x256xf32>
    %cst_62 = arith.constant dense<0.000000e+00> : vector<8x256xf32>
    %109 = tpu.matmul %101, %22, %cst_62 {dimension_numbers = #tpu.dot_dimension_numbers<[1], [0], [0], [1], [0, 0, 1, 1], [], []>} : vector<8x64xf32>, vector<64x256xf32>, vector<8x256xf32> -> vector<8x256xf32>
    %110 = arith.addf %108, %109 : vector<8x256xf32>
    %111 = math.tanh %110 : vector<8x256xf32>
    %112 = arith.negf %110 : vector<8x256xf32>
    %113 = math.exp %112 : vector<8x256xf32>
    %cst_63 = arith.constant 1.000000e+00 : f32
    %114 = vector.broadcast %cst_63 : f32 to vector<8x256xf32>
    %115 = arith.addf %114, %113 : vector<8x256xf32>
    %116 = arith.divf %114, %115 : vector<8x256xf32>
    %117 = arith.select %28, %111, %116 : vector<8x256xi1>, vector<8x256xf32>
    %118 = vector.extract_strided_slice %117 {offsets = [0, 0], sizes = [8, 64], strides = [1, 1]} : vector<8x256xf32> to vector<8x64xf32>
    %119 = vector.extract_strided_slice %117 {offsets = [0, 64], sizes = [8, 64], strides = [1, 1]} : vector<8x256xf32> to vector<8x64xf32>
    %120 = vector.extract_strided_slice %117 {offsets = [0, 128], sizes = [8, 64], strides = [1, 1]} : vector<8x256xf32> to vector<8x64xf32>
    %121 = vector.extract_strided_slice %117 {offsets = [0, 192], sizes = [8, 64], strides = [1, 1]} : vector<8x256xf32> to vector<8x64xf32>
    %122 = arith.mulf %119, %99 : vector<8x64xf32>
    %123 = arith.mulf %118, %120 : vector<8x64xf32>
    %124 = arith.addf %122, %123 : vector<8x64xf32>
    %125 = math.tanh %124 : vector<8x64xf32>
    %126 = arith.mulf %121, %125 : vector<8x64xf32>
    %127 = vector.extract_strided_slice %126 {offsets = [0, 0], sizes = [8, 32], strides = [1, 1]} : vector<8x64xf32> to vector<8x32xf32>
    %c24_64 = arith.constant 24 : index
    %c0_65 = arith.constant 0 : index
    %128 = vector.load %arg11[%c24_64, %c0_65] : memref<32x32xf32, #tpu.memory_space<vmem>>, vector<8x32xf32>
    tpu.vector_store %arg11[%c24_64, %c0_65], %127 {strides = array<i32>} : memref<32x32xf32, #tpu.memory_space<vmem>>, vector<8x32xf32>,
    %129 = vector.extract_strided_slice %126 {offsets = [0, 32], sizes = [8, 32], strides = [1, 1]} : vector<8x64xf32> to vector<8x32xf32>
    %c0_66 = arith.constant 0 : index
    %c0_67 = arith.constant 0 : index
    %130 = vector.load %arg12[%c0_66, %c0_67] : memref<32x32xf32, #tpu.memory_space<vmem>>, vector<8x32xf32>
    tpu.vector_store %arg12[%c0_66, %c0_67], %129 {strides = array<i32>} : memref<32x32xf32, #tpu.memory_space<vmem>>, vector<8x32xf32>,
    %c0_68 = arith.constant 0 : index
    %c0_69 = arith.constant 0 : index
    %131 = vector.load %arg13[%c0_68, %c0_69] : memref<8x64xf32, #tpu.memory_space<vmem>>, vector<8x64xf32>
    tpu.vector_store %arg13[%c0_68, %c0_69], %126 {strides = array<i32>} : memref<8x64xf32, #tpu.memory_space<vmem>>, vector<8x64xf32>,
    %c0_70 = arith.constant 0 : index
    %c0_71 = arith.constant 0 : index
    %132 = vector.load %arg14[%c0_70, %c0_71] : memref<8x64xf32, #tpu.memory_space<vmem>>, vector<8x64xf32>
    tpu.vector_store %arg14[%c0_70, %c0_71], %124 {strides = array<i32>} : memref<8x64xf32, #tpu.memory_space<vmem>>, vector<8x64xf32>,
    return
  }
  func.func @transform_0(%arg0: i32) -> (i32, i32) {
    %c0_i32 = arith.constant 0 : i32
    %c0_i32_0 = arith.constant 0 : i32
    return %arg0, %c0_i32 : i32, i32
  }
  func.func @transform_1(%arg0: i32) -> (i32, i32) {
    %c0_i32 = arith.constant 0 : i32
    %c0_i32_0 = arith.constant 0 : i32
    return %arg0, %c0_i32 : i32, i32
  }
  func.func @transform_2(%arg0: i32) -> (i32, i32) {
    %c1_i32 = arith.constant 1 : i32
    %0 = arith.subi %c1_i32, %arg0 : i32
    %c0_i32 = arith.constant 0 : i32
    %c0_i32_0 = arith.constant 0 : i32
    return %0, %c0_i32 : i32, i32
  }
  func.func @transform_3(%arg0: i32) -> (i32, i32) {
    %c1_i32 = arith.constant 1 : i32
    %0 = arith.subi %c1_i32, %arg0 : i32
    %c0_i32 = arith.constant 0 : i32
    %c0_i32_0 = arith.constant 0 : i32
    return %0, %c0_i32 : i32, i32
  }
  func.func @transform_4(%arg0: i32) -> (i32, i32) {
    %c0_i32 = arith.constant 0 : i32
    %c0_i32_0 = arith.constant 0 : i32
    %c0_i32_1 = arith.constant 0 : i32
    return %c0_i32, %c0_i32_0 : i32, i32
  }
  func.func @transform_5(%arg0: i32) -> (i32, i32) {
    %c0_i32 = arith.constant 0 : i32
    %c0_i32_0 = arith.constant 0 : i32
    %c0_i32_1 = arith.constant 0 : i32
    return %c0_i32, %c0_i32_0 : i32, i32
  }
  func.func @transform_6(%arg0: i32) -> (i32, i32) {
    %c0_i32 = arith.constant 0 : i32
    %c0_i32_0 = arith.constant 0 : i32
    %c0_i32_1 = arith.constant 0 : i32
    return %c0_i32, %c0_i32_0 : i32, i32
  }
  func.func @transform_7(%arg0: i32) -> (i32, i32) {
    %c0_i32 = arith.constant 0 : i32
    %c0_i32_0 = arith.constant 0 : i32
    %c0_i32_1 = arith.constant 0 : i32
    return %c0_i32, %c0_i32_0 : i32, i32
  }
  func.func @transform_8(%arg0: i32) -> (i32, i32) {
    %c0_i32 = arith.constant 0 : i32
    %c0_i32_0 = arith.constant 0 : i32
    %c0_i32_1 = arith.constant 0 : i32
    return %c0_i32, %c0_i32_0 : i32, i32
  }
  func.func @transform_9(%arg0: i32) -> (i32, i32) {
    %c0_i32 = arith.constant 0 : i32
    %c0_i32_0 = arith.constant 0 : i32
    %c0_i32_1 = arith.constant 0 : i32
    return %c0_i32, %c0_i32_0 : i32, i32
  }
  func.func @transform_10(%arg0: i32) -> (i32, i32) {
    %c0_i32 = arith.constant 0 : i32
    %c0_i32_0 = arith.constant 0 : i32
    return %arg0, %c0_i32 : i32, i32
  }
  func.func @transform_11(%arg0: i32) -> (i32, i32) {
    %c1_i32 = arith.constant 1 : i32
    %0 = arith.subi %c1_i32, %arg0 : i32
    %c0_i32 = arith.constant 0 : i32
    %c0_i32_0 = arith.constant 0 : i32
    return %0, %c0_i32 : i32, i32
  }
}

</mosaic_0001>

<llo_original>
// kernel: text_encoder_forward.3
$region0: #{text_encoder_forward.3}
  #allocation0 [shape = 'u32[]', space=smem, size = 0x4, offset = 0x4, fixed_abs, tag = 'smem constant byte address 0x4 - core index']
  #allocation1 [shape = 'u32[72,128]{1,0:T(1,128)}', space=vmem, size = 0x9000, scoped, tag = 'internal scratch']
  #allocation2 [shape = 's32[32]{0}', space=sflag, size = 0x80, scoped, tag = 'scratch operand']
  #allocation3 [shape = 's32[1]{0}', space=sflag, size = 0x4, scoped, tag = 'scoped memory for text_encoder_forward.3']
  #allocation4 [shape = 'u8[512]{0}', space=smem, size = 0x200, scoped, tag = 'prefetched SMEM operand 0']
  #allocation5 [shape = 's32[]', space=sflag, size = 0x4, offset = 0, fixed_abs, tag = 'sflag constant byte address 0x0 - dummy sync flag']
  #allocation6 [shape = 's32[]', space=sflag, size = 0x4, offset = 0, fixed_abs, tag = 'sflag constant byte address 0x0 - dummy sync flag']
  #allocation7 [shape = 's32[]', space=sflag, size = 0x4, offset = 0, fixed_abs, tag = 'sflag constant byte address 0x0 - dummy sync flag']
  #allocation8 [shape = 's32[]', space=sflag, size = 0x4, offset = 0, fixed_abs, tag = 'sflag constant byte address 0x0 - dummy sync flag']
  #allocation9 [shape = 's32[]', space=sflag, size = 0x4, offset = 0, fixed_abs, tag = 'sflag constant byte address 0x0 - dummy sync flag']
  #allocation10 [shape = 's32[]', space=sflag, size = 0x4, offset = 0, fixed_abs, tag = 'sflag constant byte address 0x0 - dummy sync flag']
  #allocation11 [shape = 's32[]', space=sflag, size = 0x4, offset = 0, fixed_abs, tag = 'sflag constant byte address 0x0 - dummy sync flag']
  #allocation12 [shape = 's32[]', space=sflag, size = 0x4, offset = 0, fixed_abs, tag = 'sflag constant byte address 0x0 - dummy sync flag']
  #allocation13 [shape = 's32[]', space=sflag, size = 0x4, offset = 0, fixed_abs, tag = 'sflag constant byte address 0x0 - dummy sync flag']
  #allocation14 [shape = 's32[]', space=sflag, size = 0x4, offset = 0, fixed_abs, tag = 'sflag constant byte address 0x0 - dummy sync flag']
  #allocation15 [shape = 's32[]', space=sflag, size = 0x4, offset = 0, fixed_abs, tag = 'sflag constant byte address 0x0 - dummy sync flag']
  #allocation16 [shape = 's32[]', space=sflag, size = 0x4, offset = 0, fixed_abs, tag = 'sflag constant byte address 0x0 - dummy sync flag']
  #allocation17 [shape = 's32[]', space=sflag, size = 0x4, offset = 0, fixed_abs, tag = 'sflag constant byte address 0x0 - dummy sync flag']
  #allocation18 [shape = 's32[]', space=sflag, size = 0x4, offset = 0, fixed_abs, tag = 'sflag constant byte address 0x0 - dummy sync flag']
  #allocation19 [shape = 's32[]', space=sflag, size = 0x4, offset = 0, fixed_abs, tag = 'sflag constant byte address 0x0 - dummy sync flag']
  #allocation20 [shape = 's32[]', space=sflag, size = 0x4, offset = 0, fixed_abs, tag = 'sflag constant byte address 0x0 - dummy sync flag']
  #allocation21 [shape = 's32[]', space=sflag, size = 0x4, offset = 0, fixed_abs, tag = 'sflag constant byte address 0x0 - dummy sync flag']
  #allocation22 [shape = 's32[]', space=sflag, size = 0x4, offset = 0, fixed_abs, tag = 'sflag constant byte address 0x0 - dummy sync flag']
  #allocation23 [shape = 's32[]', space=sflag, size = 0x4, offset = 0, fixed_abs, tag = 'sflag constant byte address 0x0 - dummy sync flag']
  #allocation24 [shape = 's32[]', space=sflag, size = 0x4, offset = 0, fixed_abs, tag = 'sflag constant byte address 0x0 - dummy sync flag']
  #allocation25 [shape = 's32[]', space=sflag, size = 0x4, offset = 0, fixed_abs, tag = 'sflag constant byte address 0x0 - dummy sync flag']
  #allocation26 [shape = 's32[]', space=sflag, size = 0x4, offset = 0, fixed_abs, tag = 'sflag constant byte address 0x0 - dummy sync flag']
  #allocation27 [shape = 's32[]', space=sflag, size = 0x4, offset = 0, fixed_abs, tag = 'sflag constant byte address 0x0 - dummy sync flag']
  #allocation28 [shape = 's32[]', space=sflag, size = 0x4, offset = 0, fixed_abs, tag = 'sflag constant byte address 0x0 - dummy sync flag']
  #allocation29 [shape = 's32[]', space=sflag, size = 0x4, offset = 0, fixed_abs, tag = 'sflag constant byte address 0x0 - dummy sync flag']
  #allocation30 [shape = 's32[]', space=sflag, size = 0x4, offset = 0, fixed_abs, tag = 'sflag constant byte address 0x0 - dummy sync flag']
  #allocation31 [shape = 's32[]', space=sflag, size = 0x4, offset = 0, fixed_abs, tag = 'sflag constant byte address 0x0 - dummy sync flag']
  #allocation32 [shape = 's32[]', space=sflag, size = 0x4, offset = 0, fixed_abs, tag = 'sflag constant byte address 0x0 - dummy sync flag']
  #allocation33 [shape = 's32[]', space=sflag, size = 0x4, offset = 0, fixed_abs, tag = 'sflag constant byte address 0x0 - dummy sync flag']
  #allocation34 [shape = 's32[]', space=sflag, size = 0x4, offset = 0, fixed_abs, tag = 'sflag constant byte address 0x0 - dummy sync flag']
  #allocation35 [shape = 's32[]', space=sflag, size = 0x4, offset = 0, fixed_abs, tag = 'sflag constant byte address 0x0 - dummy sync flag']
  #allocation36 [shape = 's32[]', space=sflag, size = 0x4, offset = 0, fixed_abs, tag = 'sflag constant byte address 0x0 - dummy sync flag']
  %s0 = inlined_call_operand.vmem [shape: s32[64], index: 0, kind: input, shape index: {}]
  %s1 = inlined_call_operand.vmem [shape: f32[30,32], index: 1, kind: input, shape index: {}]
  %s2 = inlined_call_operand.vmem [shape: f32[64,32], index: 2, kind: output, shape index: {}]
  %s3 = sld [smem:[#allocation0]]
  $region985: #{text_encoder_forward.3} parent=0
    _
  %s5 = ssub.s32 1, %s3
  %s6 = scalar_select 0, %s5, %s3
  %s8 = sshll.u32 %s0, 4
  %s9 = int_to_ptr.vmem [resolvable:$true] %s8
  %11 = dma.vmem_to_smem %s9, 16, [#allocation4], [#allocation3]
  %13 = dma.done [#allocation3], 16
  %14 = sfence
  loop: start=0, step=1, limit=3
  $region2: #{text_encoder_forward.3} parent=0 // loop_pre_header
    _
  $region3: #{text_encoder_forward.3} parent=0 // loop_header
    %s16 = sphi 0, %s20
    %p17 = scmp.ge.s32.totalorder %s16, 3
    %s25 = sphi 0, %s27
    %s28 = sphi 0, %s25
    %s38 = sphi 0, %s28
  $region4: #{text_encoder_forward.3} parent=0 // loop_header_branch
    %19 = sbr.rel (%p17) target = $region8
  $region5: #{text_encoder_forward.3} parent=0 // loop_body
    %s21 = ssub.s32 %s16, 1
    %s22 = sadd.s32 %s16, 1
    %s23 = ssub.s32 %s16, %s22
    %p24 = scmp.eq.s32.totalorder %s23, 0
    %s26 = sadd.s32 %s25, 1
    %s27 = scalar_select %p24, %s25, %s26
    %p29 = pneg %p24
    %p30 = scmp.eq.s32.totalorder %s16, 1
    %p31 = por %p29, %p30
    %p32 = scmp.ne.s32.totalorder %s25, %s28
    %p33 = scmp.eq.s32.totalorder %s16, 0
    %p34 = por %p32, %p33
    %p35 = scmp.ne.s32.totalorder %s25, %s28
    %p36 = scmp.eq.s32.totalorder %s21, 1
    %p37 = por %p35, %p36
    %p39 = scmp.ne.s32.totalorder %s28, %s38
    %p40 = scmp.eq.s32.totalorder %s21, 0
    %p41 = por %p39, %p40
    %p42 = scmp.lt.s32.totalorder %s16, 2
    // Predicated region
    $region9: #{text_encoder_forward.3} parent=5 // pred_check
      %p43 = pneg %p42
    $region10: #{text_encoder_forward.3} parent=5 // pred_check_branch
      %45 = sbr.rel (%p43) target = $region12
    $region11: #{text_encoder_forward.3} parent=5 // pred_region
      %p46 = pneg %p34
      %p47 = pneg %p31
      %s48 = smul.u32 4, %s16
      %p49 = scmp.lt.s32.totalorder %s48, 7
      %s50 = scalar_select %p49, %s48, 7
      %s51 = smul.addr %s50, 8
      %s52 = scalar_lea.vmem %s2, %s51
      %s53 = smul.u32 4, %s16
      %p54 = scmp.lt.s32.totalorder %s53, 7
      %s55 = scalar_select %p54, %s53, 7
      %s56 = smul.addr %s55, 8
      %s57 = scalar_lea.vmem %s2, %s56
      %s58 = smul.u32 4, %s16
      %s59 = smul.u32 %s16, 32
      %s60 = sld [smem:[#allocation4 + %s59]]
      %p61 = scmp.gt.s32.totalorder %s60, 0
      %s62 = scalar_select %p61, %s60, 0
      %p63 = scmp.lt.s32.totalorder %s62, 29
      %s64 = scalar_select %p63, %s62, 29
      %s65 = scalar_lea.vmem %s1, %s64
      // Predicated region
      $region13: #{text_encoder_forward.3} parent=11 // pred_check
        _
      $region14: #{text_encoder_forward.3} parent=11 // pred_check_branch
        %67 = sbr.rel target = $region16
      $region15: #{text_encoder_forward.3} parent=11 // pred_region
        // Predicated region
        $region28: #{text_encoder_forward.3} parent=15 // pred_check
          _
        $region29: #{text_encoder_forward.3} parent=15 // pred_check_branch
          %83 = sbr.rel (0) target = $region31
        $region30: #{text_encoder_forward.3} parent=15 // pred_region
          %s85 = ssub.s32 2, 1
          loop: start=0, step=1, limit=1
          $region32: #{text_encoder_forward.3} parent=30 // loop_pre_header
            _
          $region33: #{text_encoder_forward.3} parent=30 // loop_header
            %s87 = sphi 0, %s91
            %p88 = scmp.ge.s32.totalorder %s87, 1
            %s92 = sphi %s65, %s65
            %s93 = sphi %s57, %s57
          $region34: #{text_encoder_forward.3} parent=30 // loop_header_branch
            %90 = sbr.rel (%p88) target = $region38
          $region35: #{text_encoder_forward.3} parent=30 // loop_body
            %v94 = vld [vmem:[%s92] sm:%s85]
            %95 = vst [vmem:[%s93] sm:%s85] %v94
          $region36: #{text_encoder_forward.3} parent=30 // loop_footer
            %s91 = sadd.s32 1, %s87
          $region37: #{text_encoder_forward.3} parent=30 // loop_footer_branch
            %86 = sbr.rel target = $region33
          $region38: #{text_encoder_forward.3} parent=30 // loop_exit
            _
        $region31: #{text_encoder_forward.3} parent=15 // pred_fallthru
          _
      $region16: #{text_encoder_forward.3} parent=11 // pred_fallthru
        _
      // Predicated region
      $region17: #{text_encoder_forward.3} parent=11 // pred_check
        _
      $region18: #{text_encoder_forward.3} parent=11 // pred_check_branch
        %69 = sbr.rel (0) target = $region20
      $region19: #{text_encoder_forward.3} parent=11 // pred_region
        %s71 = ssub.s32 2, 1
        loop: start=0, step=1, limit=1
        $region21: #{text_encoder_forward.3} parent=19 // loop_pre_header
          _
        $region22: #{text_encoder_forward.3} parent=19 // loop_header
          %s73 = sphi 0, %s77
          %p74 = scmp.ge.s32.totalorder %s73, 1
          %s78 = sphi %s65, %s65
          %s79 = sphi %s57, %s57
        $region23: #{text_encoder_forward.3} parent=19 // loop_header_branch
          %76 = sbr.rel (%p74) target = $region27
        $region24: #{text_encoder_forward.3} parent=19 // loop_body
          %v80 = vld [vmem:[%s78] sm:%s71]
          %81 = vst [vmem:[%s79] sm:%s71] %v80
        $region25: #{text_encoder_forward.3} parent=19 // loop_footer
          %s77 = sadd.s32 1, %s73
        $region26: #{text_encoder_forward.3} parent=19 // loop_footer_branch
          %72 = sbr.rel target = $region22
        $region27: #{text_encoder_forward.3} parent=19 // loop_exit
          _
      $region20: #{text_encoder_forward.3} parent=11 // pred_fallthru
        _
      // Predicated region
      $region39: #{text_encoder_forward.3} parent=11 // pred_check
        _
      $region40: #{text_encoder_forward.3} parent=11 // pred_check_branch
        %98 = sbr.rel (0) target = $region42
      $region41: #{text_encoder_forward.3} parent=11 // pred_region
        %99 = vsyncadd [#allocation2], 16
      $region42: #{text_encoder_forward.3} parent=11 // pred_fallthru
        _
      %s100 = sadd.s32 %s59, 1
      %s101 = sld [smem:[#allocation4 + %s100]]
      %p102 = scmp.gt.s32.totalorder %s101, 0
      %s103 = scalar_select %p102, %s101, 0
      %p104 = scmp.lt.s32.totalorder %s103, 29
      %s105 = scalar_select %p104, %s103, 29
      %s106 = scalar_lea.vmem %s1, %s105
      %s107 = scalar_lea.vmem %s57, 1
      %s108 = scalar_lea.sflag [#allocation2], 1
      // Predicated region
      $region43: #{text_encoder_forward.3} parent=11 // pred_check
        _
      $region44: #{text_encoder_forward.3} parent=11 // pred_check_branch
        %110 = sbr.rel target = $region46
      $region45: #{text_encoder_forward.3} parent=11 // pred_region
        // Predicated region
        $region58: #{text_encoder_forward.3} parent=45 // pred_check
          _
        $region59: #{text_encoder_forward.3} parent=45 // pred_check_branch
          %126 = sbr.rel (0) target = $region61
        $region60: #{text_encoder_forward.3} parent=45 // pred_region
          %s128 = ssub.s32 2, 1
          loop: start=0, step=1, limit=1
          $region62: #{text_encoder_forward.3} parent=60 // loop_pre_header
            _
          $region63: #{text_encoder_forward.3} parent=60 // loop_header
            %s130 = sphi 0, %s134
            %p131 = scmp.ge.s32.totalorder %s130, 1
            %s135 = sphi %s106, %s106
            %s136 = sphi %s107, %s107
          $region64: #{text_encoder_forward.3} parent=60 // loop_header_branch
            %133 = sbr.rel (%p131) target = $region68
          $region65: #{text_encoder_forward.3} parent=60 // loop_body
            %v137 = vld [vmem:[%s135] sm:%s128]
            %138 = vst [vmem:[%s136] sm:%s128] %v137
          $region66: #{text_encoder_forward.3} parent=60 // loop_footer
            %s134 = sadd.s32 1, %s130
          $region67: #{text_encoder_forward.3} parent=60 // loop_footer_branch
            %129 = sbr.rel target = $region63
          $region68: #{text_encoder_forward.3} parent=60 // loop_exit
            _
        $region61: #{text_encoder_forward.3} parent=45 // pred_fallthru
          _
      $region46: #{text_encoder_forward.3} parent=11 // pred_fallthru
        _
      // Predicated region
      $region47: #{text_encoder_forward.3} parent=11 // pred_check
        _
      $region48: #{text_encoder_forward.3} parent=11 // pred_check_branch
        %112 = sbr.rel (0) target = $region50
      $region49: #{text_encoder_forward.3} parent=11 // pred_region
        %s114 = ssub.s32 2, 1
        loop: start=0, step=1, limit=1
        $region51: #{text_encoder_forward.3} parent=49 // loop_pre_header
          _
        $region52: #{text_encoder_forward.3} parent=49 // loop_header
          %s116 = sphi 0, %s120
          %p117 = scmp.ge.s32.totalorder %s116, 1
          %s121 = sphi %s106, %s106
          %s122 = sphi %s107, %s107
        $region53: #{text_encoder_forward.3} parent=49 // loop_header_branch
          %119 = sbr.rel (%p117) target = $region57
        $region54: #{text_encoder_forward.3} parent=49 // loop_body
          %v123 = vld [vmem:[%s121] sm:%s114]
          %124 = vst [vmem:[%s122] sm:%s114] %v123
        $region55: #{text_encoder_forward.3} parent=49 // loop_footer
          %s120 = sadd.s32 1, %s116
        $region56: #{text_encoder_forward.3} parent=49 // loop_footer_branch
          %115 = sbr.rel target = $region52
        $region57: #{text_encoder_forward.3} parent=49 // loop_exit
          _
      $region50: #{text_encoder_forward.3} parent=11 // pred_fallthru
        _
      // Predicated region
      $region69: #{text_encoder_forward.3} parent=11 // pred_check
        _
      $region70: #{text_encoder_forward.3} parent=11 // pred_check_branch
        %141 = sbr.rel (0) target = $region72
      $region71: #{text_encoder_forward.3} parent=11 // pred_region
        %142 = vsyncadd %s108, 16
      $region72: #{text_encoder_forward.3} parent=11 // pred_fallthru
        _
      %s143 = sadd.s32 %s59, 2
      %s144 = sld [smem:[#allocation4 + %s143]]
      %p145 = scmp.gt.s32.totalorder %s144, 0
      %s146 = scalar_select %p145, %s144, 0
      %p147 = scmp.lt.s32.totalorder %s146, 29
      %s148 = scalar_select %p147, %s146, 29
      %s149 = scalar_lea.vmem %s1, %s148
      %s150 = scalar_lea.vmem %s57, 2
      %s151 = scalar_lea.sflag [#allocation2], 2
      // Predicated region
      $region73: #{text_encoder_forward.3} parent=11 // pred_check
        _
      $region74: #{text_encoder_forward.3} parent=11 // pred_check_branch
        %153 = sbr.rel target = $region76
      $region75: #{text_encoder_forward.3} parent=11 // pred_region
        // Predicated region
        $region88: #{text_encoder_forward.3} parent=75 // pred_check
          _
        $region89: #{text_encoder_forward.3} parent=75 // pred_check_branch
          %169 = sbr.rel (0) target = $region91
        $region90: #{text_encoder_forward.3} parent=75 // pred_region
          %s171 = ssub.s32 2, 1
          loop: start=0, step=1, limit=1
          $region92: #{text_encoder_forward.3} parent=90 // loop_pre_header
            _
          $region93: #{text_encoder_forward.3} parent=90 // loop_header
            %s173 = sphi 0, %s177
            %p174 = scmp.ge.s32.totalorder %s173, 1
            %s178 = sphi %s149, %s149
            %s179 = sphi %s150, %s150
          $region94: #{text_encoder_forward.3} parent=90 // loop_header_branch
            %176 = sbr.rel (%p174) target = $region98
          $region95: #{text_encoder_forward.3} parent=90 // loop_body
            %v180 = vld [vmem:[%s178] sm:%s171]
            %181 = vst [vmem:[%s179] sm:%s171] %v180
          $region96: #{text_encoder_forward.3} parent=90 // loop_footer
            %s177 = sadd.s32 1, %s173
          $region97: #{text_encoder_forward.3} parent=90 // loop_footer_branch
            %172 = sbr.rel target = $region93
          $region98: #{text_encoder_forward.3} parent=90 // loop_exit
            _
        $region91: #{text_encoder_forward.3} parent=75 // pred_fallthru
          _
      $region76: #{text_encoder_forward.3} parent=11 // pred_fallthru
        _
      // Predicated region
      $region77: #{text_encoder_forward.3} parent=11 // pred_check
        _
      $region78: #{text_encoder_forward.3} parent=11 // pred_check_branch
        %155 = sbr.rel (0) target = $region80
      $region79: #{text_encoder_forward.3} parent=11 // pred_region
        %s157 = ssub.s32 2, 1
        loop: start=0, step=1, limit=1
        $region81: #{text_encoder_forward.3} parent=79 // loop_pre_header
          _
        $region82: #{text_encoder_forward.3} parent=79 // loop_header
          %s159 = sphi 0, %s163
          %p160 = scmp.ge.s32.totalorder %s159, 1
          %s164 = sphi %s149, %s149
          %s165 = sphi %s150, %s150
        $region83: #{text_encoder_forward.3} parent=79 // loop_header_branch
          %162 = sbr.rel (%p160) target = $region87
        $region84: #{text_encoder_forward.3} parent=79 // loop_body
          %v166 = vld [vmem:[%s164] sm:%s157]
          %167 = vst [vmem:[%s165] sm:%s157] %v166
        $region85: #{text_encoder_forward.3} parent=79 // loop_footer
          %s163 = sadd.s32 1, %s159
        $region86: #{text_encoder_forward.3} parent=79 // loop_footer_branch
          %158 = sbr.rel target = $region82
        $region87: #{text_encoder_forward.3} parent=79 // loop_exit
          _
      $region80: #{text_encoder_forward.3} parent=11 // pred_fallthru
        _
      // Predicated region
      $region99: #{text_encoder_forward.3} parent=11 // pred_check
        _
      $region100: #{text_encoder_forward.3} parent=11 // pred_check_branch
        %184 = sbr.rel (0) target = $region102
      $region101: #{text_encoder_forward.3} parent=11 // pred_region
        %185 = vsyncadd %s151, 16
      $region102: #{text_encoder_forward.3} parent=11 // pred_fallthru
        _
      %s186 = sadd.s32 %s59, 3
      %s187 = sld [smem:[#allocation4 + %s186]]
      %p188 = scmp.gt.s32.totalorder %s187, 0
      %s189 = scalar_select %p188, %s187, 0
      %p190 = scmp.lt.s32.totalorder %s189, 29
      %s191 = scalar_select %p190, %s189, 29
      %s192 = scalar_lea.vmem %s1, %s191
      %s193 = scalar_lea.vmem %s57, 3
      %s194 = scalar_lea.sflag [#allocation2], 3
      // Predicated region
      $region103: #{text_encoder_forward.3} parent=11 // pred_check
        _
      $region104: #{text_encoder_forward.3} parent=11 // pred_check_branch
        %196 = sbr.rel target = $region106
      $region105: #{text_encoder_forward.3} parent=11 // pred_region
        // Predicated region
        $region118: #{text_encoder_forward.3} parent=105 // pred_check
          _
        $region119: #{text_encoder_forward.3} parent=105 // pred_check_branch
          %212 = sbr.rel (0) target = $region121
        $region120: #{text_encoder_forward.3} parent=105 // pred_region
          %s214 = ssub.s32 2, 1
          loop: start=0, step=1, limit=1
          $region122: #{text_encoder_forward.3} parent=120 // loop_pre_header
            _
          $region123: #{text_encoder_forward.3} parent=120 // loop_header
            %s216 = sphi 0, %s220
            %p217 = scmp.ge.s32.totalorder %s216, 1
            %s221 = sphi %s192, %s192
            %s222 = sphi %s193, %s193
          $region124: #{text_encoder_forward.3} parent=120 // loop_header_branch
            %219 = sbr.rel (%p217) target = $region128
          $region125: #{text_encoder_forward.3} parent=120 // loop_body
            %v223 = vld [vmem:[%s221] sm:%s214]
            %224 = vst [vmem:[%s222] sm:%s214] %v223
          $region126: #{text_encoder_forward.3} parent=120 // loop_footer
            %s220 = sadd.s32 1, %s216
          $region127: #{text_encoder_forward.3} parent=120 // loop_footer_branch
            %215 = sbr.rel target = $region123
          $region128: #{text_encoder_forward.3} parent=120 // loop_exit
            _
        $region121: #{text_encoder_forward.3} parent=105 // pred_fallthru
          _
      $region106: #{text_encoder_forward.3} parent=11 // pred_fallthru
        _
      // Predicated region
      $region107: #{text_encoder_forward.3} parent=11 // pred_check
        _
      $region108: #{text_encoder_forward.3} parent=11 // pred_check_branch
        %198 = sbr.rel (0) target = $region110
      $region109: #{text_encoder_forward.3} parent=11 // pred_region
        %s200 = ssub.s32 2, 1
        loop: start=0, step=1, limit=1
        $region111: #{text_encoder_forward.3} parent=109 // loop_pre_header
          _
        $region112: #{text_encoder_forward.3} parent=109 // loop_header
          %s202 = sphi 0, %s206
          %p203 = scmp.ge.s32.totalorder %s202, 1
          %s207 = sphi %s192, %s192
          %s208 = sphi %s193, %s193
        $region113: #{text_encoder_forward.3} parent=109 // loop_header_branch
          %205 = sbr.rel (%p203) target = $region117
        $region114: #{text_encoder_forward.3} parent=109 // loop_body
          %v209 = vld [vmem:[%s207] sm:%s200]
          %210 = vst [vmem:[%s208] sm:%s200] %v209
        $region115: #{text_encoder_forward.3} parent=109 // loop_footer
          %s206 = sadd.s32 1, %s202
        $region116: #{text_encoder_forward.3} parent=109 // loop_footer_branch
          %201 = sbr.rel target = $region112
        $region117: #{text_encoder_forward.3} parent=109 // loop_exit
          _
      $region110: #{text_encoder_forward.3} parent=11 // pred_fallthru
        _
      // Predicated region
      $region129: #{text_encoder_forward.3} parent=11 // pred_check
        _
      $region130: #{text_encoder_forward.3} parent=11 // pred_check_branch
        %227 = sbr.rel (0) target = $region132
      $region131: #{text_encoder_forward.3} parent=11 // pred_region
        %228 = vsyncadd %s194, 16
      $region132: #{text_encoder_forward.3} parent=11 // pred_fallthru
        _
      %s229 = sadd.s32 %s59, 4
      %s230 = sld [smem:[#allocation4 + %s229]]
      %p231 = scmp.gt.s32.totalorder %s230, 0
      %s232 = scalar_select %p231, %s230, 0
      %p233 = scmp.lt.s32.totalorder %s232, 29
      %s234 = scalar_select %p233, %s232, 29
      %s235 = scalar_lea.vmem %s1, %s234
      %s236 = scalar_lea.vmem %s57, 4
      %s237 = scalar_lea.sflag [#allocation2], 4
      // Predicated region
      $region133: #{text_encoder_forward.3} parent=11 // pred_check
        _
      $region134: #{text_encoder_forward.3} parent=11 // pred_check_branch
        %239 = sbr.rel target = $region136
      $region135: #{text_encoder_forward.3} parent=11 // pred_region
        // Predicated region
        $region148: #{text_encoder_forward.3} parent=135 // pred_check
          _
        $region149: #{text_encoder_forward.3} parent=135 // pred_check_branch
          %255 = sbr.rel (0) target = $region151
        $region150: #{text_encoder_forward.3} parent=135 // pred_region
          %s257 = ssub.s32 2, 1
          loop: start=0, step=1, limit=1
          $region152: #{text_encoder_forward.3} parent=150 // loop_pre_header
            _
          $region153: #{text_encoder_forward.3} parent=150 // loop_header
            %s259 = sphi 0, %s263
            %p260 = scmp.ge.s32.totalorder %s259, 1
            %s264 = sphi %s235, %s235
            %s265 = sphi %s236, %s236
          $region154: #{text_encoder_forward.3} parent=150 // loop_header_branch
            %262 = sbr.rel (%p260) target = $region158
          $region155: #{text_encoder_forward.3} parent=150 // loop_body
            %v266 = vld [vmem:[%s264] sm:%s257]
            %267 = vst [vmem:[%s265] sm:%s257] %v266
          $region156: #{text_encoder_forward.3} parent=150 // loop_footer
            %s263 = sadd.s32 1, %s259
          $region157: #{text_encoder_forward.3} parent=150 // loop_footer_branch
            %258 = sbr.rel target = $region153
          $region158: #{text_encoder_forward.3} parent=150 // loop_exit
            _
        $region151: #{text_encoder_forward.3} parent=135 // pred_fallthru
          _
      $region136: #{text_encoder_forward.3} parent=11 // pred_fallthru
        _
      // Predicated region
      $region137: #{text_encoder_forward.3} parent=11 // pred_check
        _
      $region138: #{text_encoder_forward.3} parent=11 // pred_check_branch
        %241 = sbr.rel (0) target = $region140
      $region139: #{text_encoder_forward.3} parent=11 // pred_region
        %s243 = ssub.s32 2, 1
        loop: start=0, step=1, limit=1
        $region141: #{text_encoder_forward.3} parent=139 // loop_pre_header
          _
        $region142: #{text_encoder_forward.3} parent=139 // loop_header
          %s245 = sphi 0, %s249
          %p246 = scmp.ge.s32.totalorder %s245, 1
          %s250 = sphi %s235, %s235
          %s251 = sphi %s236, %s236
        $region143: #{text_encoder_forward.3} parent=139 // loop_header_branch
          %248 = sbr.rel (%p246) target = $region147
        $region144: #{text_encoder_forward.3} parent=139 // loop_body
          %v252 = vld [vmem:[%s250] sm:%s243]
          %253 = vst [vmem:[%s251] sm:%s243] %v252
        $region145: #{text_encoder_forward.3} parent=139 // loop_footer
          %s249 = sadd.s32 1, %s245
        $region146: #{text_encoder_forward.3} parent=139 // loop_footer_branch
          %244 = sbr.rel target = $region142
        $region147: #{text_encoder_forward.3} parent=139 // loop_exit
          _
      $region140: #{text_encoder_forward.3} parent=11 // pred_fallthru
        _
      // Predicated region
      $region159: #{text_encoder_forward.3} parent=11 // pred_check
        _
      $region160: #{text_encoder_forward.3} parent=11 // pred_check_branch
        %270 = sbr.rel (0) target = $region162
      $region161: #{text_encoder_forward.3} parent=11 // pred_region
        %271 = vsyncadd %s237, 16
      $region162: #{text_encoder_forward.3} parent=11 // pred_fallthru
        _
      %s272 = sadd.s32 %s59, 5
      %s273 = sld [smem:[#allocation4 + %s272]]
      %p274 = scmp.gt.s32.totalorder %s273, 0
      %s275 = scalar_select %p274, %s273, 0
      %p276 = scmp.lt.s32.totalorder %s275, 29
      %s277 = scalar_select %p276, %s275, 29
      %s278 = scalar_lea.vmem %s1, %s277
      %s279 = scalar_lea.vmem %s57, 5
      %s280 = scalar_lea.sflag [#allocation2], 5
      // Predicated region
      $region163: #{text_encoder_forward.3} parent=11 // pred_check
        _
      $region164: #{text_encoder_forward.3} parent=11 // pred_check_branch
        %282 = sbr.rel target = $region166
      $region165: #{text_encoder_forward.3} parent=11 // pred_region
        // Predicated region
        $region178: #{text_encoder_forward.3} parent=165 // pred_check
          _
        $region179: #{text_encoder_forward.3} parent=165 // pred_check_branch
          %298 = sbr.rel (0) target = $region181
        $region180: #{text_encoder_forward.3} parent=165 // pred_region
          %s300 = ssub.s32 2, 1
          loop: start=0, step=1, limit=1
          $region182: #{text_encoder_forward.3} parent=180 // loop_pre_header
            _
          $region183: #{text_encoder_forward.3} parent=180 // loop_header
            %s302 = sphi 0, %s306
            %p303 = scmp.ge.s32.totalorder %s302, 1
            %s307 = sphi %s278, %s278
            %s308 = sphi %s279, %s279
          $region184: #{text_encoder_forward.3} parent=180 // loop_header_branch
            %305 = sbr.rel (%p303) target = $region188
          $region185: #{text_encoder_forward.3} parent=180 // loop_body
            %v309 = vld [vmem:[%s307] sm:%s300]
            %310 = vst [vmem:[%s308] sm:%s300] %v309
          $region186: #{text_encoder_forward.3} parent=180 // loop_footer
            %s306 = sadd.s32 1, %s302
          $region187: #{text_encoder_forward.3} parent=180 // loop_footer_branch
            %301 = sbr.rel target = $region183
          $region188: #{text_encoder_forward.3} parent=180 // loop_exit
            _
        $region181: #{text_encoder_forward.3} parent=165 // pred_fallthru
          _
      $region166: #{text_encoder_forward.3} parent=11 // pred_fallthru
        _
      // Predicated region
      $region167: #{text_encoder_forward.3} parent=11 // pred_check
        _
      $region168: #{text_encoder_forward.3} parent=11 // pred_check_branch
        %284 = sbr.rel (0) target = $region170
      $region169: #{text_encoder_forward.3} parent=11 // pred_region
        %s286 = ssub.s32 2, 1
        loop: start=0, step=1, limit=1
        $region171: #{text_encoder_forward.3} parent=169 // loop_pre_header
          _
        $region172: #{text_encoder_forward.3} parent=169 // loop_header
          %s288 = sphi 0, %s292
          %p289 = scmp.ge.s32.totalorder %s288, 1
          %s293 = sphi %s278, %s278
          %s294 = sphi %s279, %s279
        $region173: #{text_encoder_forward.3} parent=169 // loop_header_branch
          %291 = sbr.rel (%p289) target = $region177
        $region174: #{text_encoder_forward.3} parent=169 // loop_body
          %v295 = vld [vmem:[%s293] sm:%s286]
          %296 = vst [vmem:[%s294] sm:%s286] %v295
        $region175: #{text_encoder_forward.3} parent=169 // loop_footer
          %s292 = sadd.s32 1, %s288
        $region176: #{text_encoder_forward.3} parent=169 // loop_footer_branch
          %287 = sbr.rel target = $region172
        $region177: #{text_encoder_forward.3} parent=169 // loop_exit
          _
      $region170: #{text_encoder_forward.3} parent=11 // pred_fallthru
        _
      // Predicated region
      $region189: #{text_encoder_forward.3} parent=11 // pred_check
        _
      $region190: #{text_encoder_forward.3} parent=11 // pred_check_branch
        %313 = sbr.rel (0) target = $region192
      $region191: #{text_encoder_forward.3} parent=11 // pred_region
        %314 = vsyncadd %s280, 16
      $region192: #{text_encoder_forward.3} parent=11 // pred_fallthru
        _
      %s315 = sadd.s32 %s59, 6
      %s316 = sld [smem:[#allocation4 + %s315]]
      %p317 = scmp.gt.s32.totalorder %s316, 0
      %s318 = scalar_select %p317, %s316, 0
      %p319 = scmp.lt.s32.totalorder %s318, 29
      %s320 = scalar_select %p319, %s318, 29
      %s321 = scalar_lea.vmem %s1, %s320
      %s322 = scalar_lea.vmem %s57, 6
      %s323 = scalar_lea.sflag [#allocation2], 6
      // Predicated region
      $region193: #{text_encoder_forward.3} parent=11 // pred_check
        _
      $region194: #{text_encoder_forward.3} parent=11 // pred_check_branch
        %325 = sbr.rel target = $region196
      $region195: #{text_encoder_forward.3} parent=11 // pred_region
        // Predicated region
        $region208: #{text_encoder_forward.3} parent=195 // pred_check
          _
        $region209: #{text_encoder_forward.3} parent=195 // pred_check_branch
          %341 = sbr.rel (0) target = $region211
        $region210: #{text_encoder_forward.3} parent=195 // pred_region
          %s343 = ssub.s32 2, 1
          loop: start=0, step=1, limit=1
          $region212: #{text_encoder_forward.3} parent=210 // loop_pre_header
            _
          $region213: #{text_encoder_forward.3} parent=210 // loop_header
            %s345 = sphi 0, %s349
            %p346 = scmp.ge.s32.totalorder %s345, 1
            %s350 = sphi %s321, %s321
            %s351 = sphi %s322, %s322
          $region214: #{text_encoder_forward.3} parent=210 // loop_header_branch
            %348 = sbr.rel (%p346) target = $region218
          $region215: #{text_encoder_forward.3} parent=210 // loop_body
            %v352 = vld [vmem:[%s350] sm:%s343]
            %353 = vst [vmem:[%s351] sm:%s343] %v352
          $region216: #{text_encoder_forward.3} parent=210 // loop_footer
            %s349 = sadd.s32 1, %s345
          $region217: #{text_encoder_forward.3} parent=210 // loop_footer_branch
            %344 = sbr.rel target = $region213
          $region218: #{text_encoder_forward.3} parent=210 // loop_exit
            _
        $region211: #{text_encoder_forward.3} parent=195 // pred_fallthru
          _
      $region196: #{text_encoder_forward.3} parent=11 // pred_fallthru
        _
      // Predicated region
      $region197: #{text_encoder_forward.3} parent=11 // pred_check
        _
      $region198: #{text_encoder_forward.3} parent=11 // pred_check_branch
        %327 = sbr.rel (0) target = $region200
      $region199: #{text_encoder_forward.3} parent=11 // pred_region
        %s329 = ssub.s32 2, 1
        loop: start=0, step=1, limit=1
        $region201: #{text_encoder_forward.3} parent=199 // loop_pre_header
          _
        $region202: #{text_encoder_forward.3} parent=199 // loop_header
          %s331 = sphi 0, %s335
          %p332 = scmp.ge.s32.totalorder %s331, 1
          %s336 = sphi %s321, %s321
          %s337 = sphi %s322, %s322
        $region203: #{text_encoder_forward.3} parent=199 // loop_header_branch
          %334 = sbr.rel (%p332) target = $region207
        $region204: #{text_encoder_forward.3} parent=199 // loop_body
          %v338 = vld [vmem:[%s336] sm:%s329]
          %339 = vst [vmem:[%s337] sm:%s329] %v338
        $region205: #{text_encoder_forward.3} parent=199 // loop_footer
          %s335 = sadd.s32 1, %s331
        $region206: #{text_encoder_forward.3} parent=199 // loop_footer_branch
          %330 = sbr.rel target = $region202
        $region207: #{text_encoder_forward.3} parent=199 // loop_exit
          _
      $region200: #{text_encoder_forward.3} parent=11 // pred_fallthru
        _
      // Predicated region
      $region219: #{text_encoder_forward.3} parent=11 // pred_check
        _
      $region220: #{text_encoder_forward.3} parent=11 // pred_check_branch
        %356 = sbr.rel (0) target = $region222
      $region221: #{text_encoder_forward.3} parent=11 // pred_region
        %357 = vsyncadd %s323, 16
      $region222: #{text_encoder_forward.3} parent=11 // pred_fallthru
        _
      %s358 = sadd.s32 %s59, 7
      %s359 = sld [smem:[#allocation4 + %s358]]
      %p360 = scmp.gt.s32.totalorder %s359, 0
      %s361 = scalar_select %p360, %s359, 0
      %p362 = scmp.lt.s32.totalorder %s361, 29
      %s363 = scalar_select %p362, %s361, 29
      %s364 = scalar_lea.vmem %s1, %s363
      %s365 = scalar_lea.vmem %s57, 7
      %s366 = scalar_lea.sflag [#allocation2], 7
      // Predicated region
      $region223: #{text_encoder_forward.3} parent=11 // pred_check
        _
      $region224: #{text_encoder_forward.3} parent=11 // pred_check_branch
        %368 = sbr.rel target = $region226
      $region225: #{text_encoder_forward.3} parent=11 // pred_region
        // Predicated region
        $region238: #{text_encoder_forward.3} parent=225 // pred_check
          _
        $region239: #{text_encoder_forward.3} parent=225 // pred_check_branch
          %384 = sbr.rel (0) target = $region241
        $region240: #{text_encoder_forward.3} parent=225 // pred_region
          %s386 = ssub.s32 2, 1
          loop: start=0, step=1, limit=1
          $region242: #{text_encoder_forward.3} parent=240 // loop_pre_header
            _
          $region243: #{text_encoder_forward.3} parent=240 // loop_header
            %s388 = sphi 0, %s392
            %p389 = scmp.ge.s32.totalorder %s388, 1
            %s393 = sphi %s364, %s364
            %s394 = sphi %s365, %s365
          $region244: #{text_encoder_forward.3} parent=240 // loop_header_branch
            %391 = sbr.rel (%p389) target = $region248
          $region245: #{text_encoder_forward.3} parent=240 // loop_body
            %v395 = vld [vmem:[%s393] sm:%s386]
            %396 = vst [vmem:[%s394] sm:%s386] %v395
          $region246: #{text_encoder_forward.3} parent=240 // loop_footer
            %s392 = sadd.s32 1, %s388
          $region247: #{text_encoder_forward.3} parent=240 // loop_footer_branch
            %387 = sbr.rel target = $region243
          $region248: #{text_encoder_forward.3} parent=240 // loop_exit
            _
        $region241: #{text_encoder_forward.3} parent=225 // pred_fallthru
          _
      $region226: #{text_encoder_forward.3} parent=11 // pred_fallthru
        _
      // Predicated region
      $region227: #{text_encoder_forward.3} parent=11 // pred_check
        _
      $region228: #{text_encoder_forward.3} parent=11 // pred_check_branch
        %370 = sbr.rel (0) target = $region230
      $region229: #{text_encoder_forward.3} parent=11 // pred_region
        %s372 = ssub.s32 2, 1
        loop: start=0, step=1, limit=1
        $region231: #{text_encoder_forward.3} parent=229 // loop_pre_header
          _
        $region232: #{text_encoder_forward.3} parent=229 // loop_header
          %s374 = sphi 0, %s378
          %p375 = scmp.ge.s32.totalorder %s374, 1
          %s379 = sphi %s364, %s364
          %s380 = sphi %s365, %s365
        $region233: #{text_encoder_forward.3} parent=229 // loop_header_branch
          %377 = sbr.rel (%p375) target = $region237
        $region234: #{text_encoder_forward.3} parent=229 // loop_body
          %v381 = vld [vmem:[%s379] sm:%s372]
          %382 = vst [vmem:[%s380] sm:%s372] %v381
        $region235: #{text_encoder_forward.3} parent=229 // loop_footer
          %s378 = sadd.s32 1, %s374
        $region236: #{text_encoder_forward.3} parent=229 // loop_footer_branch
          %373 = sbr.rel target = $region232
        $region237: #{text_encoder_forward.3} parent=229 // loop_exit
          _
      $region230: #{text_encoder_forward.3} parent=11 // pred_fallthru
        _
      // Predicated region
      $region249: #{text_encoder_forward.3} parent=11 // pred_check
        _
      $region250: #{text_encoder_forward.3} parent=11 // pred_check_branch
        %399 = sbr.rel (0) target = $region252
      $region251: #{text_encoder_forward.3} parent=11 // pred_region
        %400 = vsyncadd %s366, 16
      $region252: #{text_encoder_forward.3} parent=11 // pred_fallthru
        _
      %s401 = sadd.s32 %s59, 8
      %s402 = sld [smem:[#allocation4 + %s401]]
      %p403 = scmp.gt.s32.totalorder %s402, 0
      %s404 = scalar_select %p403, %s402, 0
      %p405 = scmp.lt.s32.totalorder %s404, 29
      %s406 = scalar_select %p405, %s404, 29
      %s407 = scalar_lea.vmem %s1, %s406
      %s408 = scalar_lea.vmem %s57, 8
      %s409 = scalar_lea.sflag [#allocation2], 8
      // Predicated region
      $region253: #{text_encoder_forward.3} parent=11 // pred_check
        _
      $region254: #{text_encoder_forward.3} parent=11 // pred_check_branch
        %411 = sbr.rel target = $region256
      $region255: #{text_encoder_forward.3} parent=11 // pred_region
        // Predicated region
        $region268: #{text_encoder_forward.3} parent=255 // pred_check
          _
        $region269: #{text_encoder_forward.3} parent=255 // pred_check_branch
          %427 = sbr.rel (0) target = $region271
        $region270: #{text_encoder_forward.3} parent=255 // pred_region
          %s429 = ssub.s32 2, 1
          loop: start=0, step=1, limit=1
          $region272: #{text_encoder_forward.3} parent=270 // loop_pre_header
            _
          $region273: #{text_encoder_forward.3} parent=270 // loop_header
            %s431 = sphi 0, %s435
            %p432 = scmp.ge.s32.totalorder %s431, 1
            %s436 = sphi %s407, %s407
            %s437 = sphi %s408, %s408
          $region274: #{text_encoder_forward.3} parent=270 // loop_header_branch
            %434 = sbr.rel (%p432) target = $region278
          $region275: #{text_encoder_forward.3} parent=270 // loop_body
            %v438 = vld [vmem:[%s436] sm:%s429]
            %439 = vst [vmem:[%s437] sm:%s429] %v438
          $region276: #{text_encoder_forward.3} parent=270 // loop_footer
            %s435 = sadd.s32 1, %s431
          $region277: #{text_encoder_forward.3} parent=270 // loop_footer_branch
            %430 = sbr.rel target = $region273
          $region278: #{text_encoder_forward.3} parent=270 // loop_exit
            _
        $region271: #{text_encoder_forward.3} parent=255 // pred_fallthru
          _
      $region256: #{text_encoder_forward.3} parent=11 // pred_fallthru
        _
      // Predicated region
      $region257: #{text_encoder_forward.3} parent=11 // pred_check
        _
      $region258: #{text_encoder_forward.3} parent=11 // pred_check_branch
        %413 = sbr.rel (0) target = $region260
      $region259: #{text_encoder_forward.3} parent=11 // pred_region
        %s415 = ssub.s32 2, 1
        loop: start=0, step=1, limit=1
        $region261: #{text_encoder_forward.3} parent=259 // loop_pre_header
          _
        $region262: #{text_encoder_forward.3} parent=259 // loop_header
          %s417 = sphi 0, %s421
          %p418 = scmp.ge.s32.totalorder %s417, 1
          %s422 = sphi %s407, %s407
          %s423 = sphi %s408, %s408
        $region263: #{text_encoder_forward.3} parent=259 // loop_header_branch
          %420 = sbr.rel (%p418) target = $region267
        $region264: #{text_encoder_forward.3} parent=259 // loop_body
          %v424 = vld [vmem:[%s422] sm:%s415]
          %425 = vst [vmem:[%s423] sm:%s415] %v424
        $region265: #{text_encoder_forward.3} parent=259 // loop_footer
          %s421 = sadd.s32 1, %s417
        $region266: #{text_encoder_forward.3} parent=259 // loop_footer_branch
          %416 = sbr.rel target = $region262
        $region267: #{text_encoder_forward.3} parent=259 // loop_exit
          _
      $region260: #{text_encoder_forward.3} parent=11 // pred_fallthru
        _
      // Predicated region
      $region279: #{text_encoder_forward.3} parent=11 // pred_check
        _
      $region280: #{text_encoder_forward.3} parent=11 // pred_check_branch
        %442 = sbr.rel (0) target = $region282
      $region281: #{text_encoder_forward.3} parent=11 // pred_region
        %443 = vsyncadd %s409, 16
      $region282: #{text_encoder_forward.3} parent=11 // pred_fallthru
        _
      %s444 = sadd.s32 %s59, 9
      %s445 = sld [smem:[#allocation4 + %s444]]
      %p446 = scmp.gt.s32.totalorder %s445, 0
      %s447 = scalar_select %p446, %s445, 0
      %p448 = scmp.lt.s32.totalorder %s447, 29
      %s449 = scalar_select %p448, %s447, 29
      %s450 = scalar_lea.vmem %s1, %s449
      %s451 = scalar_lea.vmem %s57, 9
      %s452 = scalar_lea.sflag [#allocation2], 9
      // Predicated region
      $region283: #{text_encoder_forward.3} parent=11 // pred_check
        _
      $region284: #{text_encoder_forward.3} parent=11 // pred_check_branch
        %454 = sbr.rel target = $region286
      $region285: #{text_encoder_forward.3} parent=11 // pred_region
        // Predicated region
        $region298: #{text_encoder_forward.3} parent=285 // pred_check
          _
        $region299: #{text_encoder_forward.3} parent=285 // pred_check_branch
          %470 = sbr.rel (0) target = $region301
        $region300: #{text_encoder_forward.3} parent=285 // pred_region
          %s472 = ssub.s32 2, 1
          loop: start=0, step=1, limit=1
          $region302: #{text_encoder_forward.3} parent=300 // loop_pre_header
            _
          $region303: #{text_encoder_forward.3} parent=300 // loop_header
            %s474 = sphi 0, %s478
            %p475 = scmp.ge.s32.totalorder %s474, 1
            %s479 = sphi %s450, %s450
            %s480 = sphi %s451, %s451
          $region304: #{text_encoder_forward.3} parent=300 // loop_header_branch
            %477 = sbr.rel (%p475) target = $region308
          $region305: #{text_encoder_forward.3} parent=300 // loop_body
            %v481 = vld [vmem:[%s479] sm:%s472]
            %482 = vst [vmem:[%s480] sm:%s472] %v481
          $region306: #{text_encoder_forward.3} parent=300 // loop_footer
            %s478 = sadd.s32 1, %s474
          $region307: #{text_encoder_forward.3} parent=300 // loop_footer_branch
            %473 = sbr.rel target = $region303
          $region308: #{text_encoder_forward.3} parent=300 // loop_exit
            _
        $region301: #{text_encoder_forward.3} parent=285 // pred_fallthru
          _
      $region286: #{text_encoder_forward.3} parent=11 // pred_fallthru
        _
      // Predicated region
      $region287: #{text_encoder_forward.3} parent=11 // pred_check
        _
      $region288: #{text_encoder_forward.3} parent=11 // pred_check_branch
        %456 = sbr.rel (0) target = $region290
      $region289: #{text_encoder_forward.3} parent=11 // pred_region
        %s458 = ssub.s32 2, 1
        loop: start=0, step=1, limit=1
        $region291: #{text_encoder_forward.3} parent=289 // loop_pre_header
          _
        $region292: #{text_encoder_forward.3} parent=289 // loop_header
          %s460 = sphi 0, %s464
          %p461 = scmp.ge.s32.totalorder %s460, 1
          %s465 = sphi %s450, %s450
          %s466 = sphi %s451, %s451
        $region293: #{text_encoder_forward.3} parent=289 // loop_header_branch
          %463 = sbr.rel (%p461) target = $region297
        $region294: #{text_encoder_forward.3} parent=289 // loop_body
          %v467 = vld [vmem:[%s465] sm:%s458]
          %468 = vst [vmem:[%s466] sm:%s458] %v467
        $region295: #{text_encoder_forward.3} parent=289 // loop_footer
          %s464 = sadd.s32 1, %s460
        $region296: #{text_encoder_forward.3} parent=289 // loop_footer_branch
          %459 = sbr.rel target = $region292
        $region297: #{text_encoder_forward.3} parent=289 // loop_exit
          _
      $region290: #{text_encoder_forward.3} parent=11 // pred_fallthru
        _
      // Predicated region
      $region309: #{text_encoder_forward.3} parent=11 // pred_check
        _
      $region310: #{text_encoder_forward.3} parent=11 // pred_check_branch
        %485 = sbr.rel (0) target = $region312
      $region311: #{text_encoder_forward.3} parent=11 // pred_region
        %486 = vsyncadd %s452, 16
      $region312: #{text_encoder_forward.3} parent=11 // pred_fallthru
        _
      %s487 = sadd.s32 %s59, 10
      %s488 = sld [smem:[#allocation4 + %s487]]
      %p489 = scmp.gt.s32.totalorder %s488, 0
      %s490 = scalar_select %p489, %s488, 0
      %p491 = scmp.lt.s32.totalorder %s490, 29
      %s492 = scalar_select %p491, %s490, 29
      %s493 = scalar_lea.vmem %s1, %s492
      %s494 = scalar_lea.vmem %s57, 10
      %s495 = scalar_lea.sflag [#allocation2], 10
      // Predicated region
      $region313: #{text_encoder_forward.3} parent=11 // pred_check
        _
      $region314: #{text_encoder_forward.3} parent=11 // pred_check_branch
        %497 = sbr.rel target = $region316
      $region315: #{text_encoder_forward.3} parent=11 // pred_region
        // Predicated region
        $region328: #{text_encoder_forward.3} parent=315 // pred_check
          _
        $region329: #{text_encoder_forward.3} parent=315 // pred_check_branch
          %513 = sbr.rel (0) target = $region331
        $region330: #{text_encoder_forward.3} parent=315 // pred_region
          %s515 = ssub.s32 2, 1
          loop: start=0, step=1, limit=1
          $region332: #{text_encoder_forward.3} parent=330 // loop_pre_header
            _
          $region333: #{text_encoder_forward.3} parent=330 // loop_header
            %s517 = sphi 0, %s521
            %p518 = scmp.ge.s32.totalorder %s517, 1
            %s522 = sphi %s493, %s493
            %s523 = sphi %s494, %s494
          $region334: #{text_encoder_forward.3} parent=330 // loop_header_branch
            %520 = sbr.rel (%p518) target = $region338
          $region335: #{text_encoder_forward.3} parent=330 // loop_body
            %v524 = vld [vmem:[%s522] sm:%s515]
            %525 = vst [vmem:[%s523] sm:%s515] %v524
          $region336: #{text_encoder_forward.3} parent=330 // loop_footer
            %s521 = sadd.s32 1, %s517
          $region337: #{text_encoder_forward.3} parent=330 // loop_footer_branch
            %516 = sbr.rel target = $region333
          $region338: #{text_encoder_forward.3} parent=330 // loop_exit
            _
        $region331: #{text_encoder_forward.3} parent=315 // pred_fallthru
          _
      $region316: #{text_encoder_forward.3} parent=11 // pred_fallthru
        _
      // Predicated region
      $region317: #{text_encoder_forward.3} parent=11 // pred_check
        _
      $region318: #{text_encoder_forward.3} parent=11 // pred_check_branch
        %499 = sbr.rel (0) target = $region320
      $region319: #{text_encoder_forward.3} parent=11 // pred_region
        %s501 = ssub.s32 2, 1
        loop: start=0, step=1, limit=1
        $region321: #{text_encoder_forward.3} parent=319 // loop_pre_header
          _
        $region322: #{text_encoder_forward.3} parent=319 // loop_header
          %s503 = sphi 0, %s507
          %p504 = scmp.ge.s32.totalorder %s503, 1
          %s508 = sphi %s493, %s493
          %s509 = sphi %s494, %s494
        $region323: #{text_encoder_forward.3} parent=319 // loop_header_branch
          %506 = sbr.rel (%p504) target = $region327
        $region324: #{text_encoder_forward.3} parent=319 // loop_body
          %v510 = vld [vmem:[%s508] sm:%s501]
          %511 = vst [vmem:[%s509] sm:%s501] %v510
        $region325: #{text_encoder_forward.3} parent=319 // loop_footer
          %s507 = sadd.s32 1, %s503
        $region326: #{text_encoder_forward.3} parent=319 // loop_footer_branch
          %502 = sbr.rel target = $region322
        $region327: #{text_encoder_forward.3} parent=319 // loop_exit
          _
      $region320: #{text_encoder_forward.3} parent=11 // pred_fallthru
        _
      // Predicated region
      $region339: #{text_encoder_forward.3} parent=11 // pred_check
        _
      $region340: #{text_encoder_forward.3} parent=11 // pred_check_branch
        %528 = sbr.rel (0) target = $region342
      $region341: #{text_encoder_forward.3} parent=11 // pred_region
        %529 = vsyncadd %s495, 16
      $region342: #{text_encoder_forward.3} parent=11 // pred_fallthru
        _
      %s530 = sadd.s32 %s59, 11
      %s531 = sld [smem:[#allocation4 + %s530]]
      %p532 = scmp.gt.s32.totalorder %s531, 0
      %s533 = scalar_select %p532, %s531, 0
      %p534 = scmp.lt.s32.totalorder %s533, 29
      %s535 = scalar_select %p534, %s533, 29
      %s536 = scalar_lea.vmem %s1, %s535
      %s537 = scalar_lea.vmem %s57, 11
      %s538 = scalar_lea.sflag [#allocation2], 11
      // Predicated region
      $region343: #{text_encoder_forward.3} parent=11 // pred_check
        _
      $region344: #{text_encoder_forward.3} parent=11 // pred_check_branch
        %540 = sbr.rel target = $region346
      $region345: #{text_encoder_forward.3} parent=11 // pred_region
        // Predicated region
        $region358: #{text_encoder_forward.3} parent=345 // pred_check
          _
        $region359: #{text_encoder_forward.3} parent=345 // pred_check_branch
          %556 = sbr.rel (0) target = $region361
        $region360: #{text_encoder_forward.3} parent=345 // pred_region
          %s558 = ssub.s32 2, 1
          loop: start=0, step=1, limit=1
          $region362: #{text_encoder_forward.3} parent=360 // loop_pre_header
            _
          $region363: #{text_encoder_forward.3} parent=360 // loop_header
            %s560 = sphi 0, %s564
            %p561 = scmp.ge.s32.totalorder %s560, 1
            %s565 = sphi %s536, %s536
            %s566 = sphi %s537, %s537
          $region364: #{text_encoder_forward.3} parent=360 // loop_header_branch
            %563 = sbr.rel (%p561) target = $region368
          $region365: #{text_encoder_forward.3} parent=360 // loop_body
            %v567 = vld [vmem:[%s565] sm:%s558]
            %568 = vst [vmem:[%s566] sm:%s558] %v567
          $region366: #{text_encoder_forward.3} parent=360 // loop_footer
            %s564 = sadd.s32 1, %s560
          $region367: #{text_encoder_forward.3} parent=360 // loop_footer_branch
            %559 = sbr.rel target = $region363
          $region368: #{text_encoder_forward.3} parent=360 // loop_exit
            _
        $region361: #{text_encoder_forward.3} parent=345 // pred_fallthru
          _
      $region346: #{text_encoder_forward.3} parent=11 // pred_fallthru
        _
      // Predicated region
      $region347: #{text_encoder_forward.3} parent=11 // pred_check
        _
      $region348: #{text_encoder_forward.3} parent=11 // pred_check_branch
        %542 = sbr.rel (0) target = $region350
      $region349: #{text_encoder_forward.3} parent=11 // pred_region
        %s544 = ssub.s32 2, 1
        loop: start=0, step=1, limit=1
        $region351: #{text_encoder_forward.3} parent=349 // loop_pre_header
          _
        $region352: #{text_encoder_forward.3} parent=349 // loop_header
          %s546 = sphi 0, %s550
          %p547 = scmp.ge.s32.totalorder %s546, 1
          %s551 = sphi %s536, %s536
          %s552 = sphi %s537, %s537
        $region353: #{text_encoder_forward.3} parent=349 // loop_header_branch
          %549 = sbr.rel (%p547) target = $region357
        $region354: #{text_encoder_forward.3} parent=349 // loop_body
          %v553 = vld [vmem:[%s551] sm:%s544]
          %554 = vst [vmem:[%s552] sm:%s544] %v553
        $region355: #{text_encoder_forward.3} parent=349 // loop_footer
          %s550 = sadd.s32 1, %s546
        $region356: #{text_encoder_forward.3} parent=349 // loop_footer_branch
          %545 = sbr.rel target = $region352
        $region357: #{text_encoder_forward.3} parent=349 // loop_exit
          _
      $region350: #{text_encoder_forward.3} parent=11 // pred_fallthru
        _
      // Predicated region
      $region369: #{text_encoder_forward.3} parent=11 // pred_check
        _
      $region370: #{text_encoder_forward.3} parent=11 // pred_check_branch
        %571 = sbr.rel (0) target = $region372
      $region371: #{text_encoder_forward.3} parent=11 // pred_region
        %572 = vsyncadd %s538, 16
      $region372: #{text_encoder_forward.3} parent=11 // pred_fallthru
        _
      %s573 = sadd.s32 %s59, 12
      %s574 = sld [smem:[#allocation4 + %s573]]
      %p575 = scmp.gt.s32.totalorder %s574, 0
      %s576 = scalar_select %p575, %s574, 0
      %p577 = scmp.lt.s32.totalorder %s576, 29
      %s578 = scalar_select %p577, %s576, 29
      %s579 = scalar_lea.vmem %s1, %s578
      %s580 = scalar_lea.vmem %s57, 12
      %s581 = scalar_lea.sflag [#allocation2], 12
      // Predicated region
      $region373: #{text_encoder_forward.3} parent=11 // pred_check
        _
      $region374: #{text_encoder_forward.3} parent=11 // pred_check_branch
        %583 = sbr.rel target = $region376
      $region375: #{text_encoder_forward.3} parent=11 // pred_region
        // Predicated region
        $region388: #{text_encoder_forward.3} parent=375 // pred_check
          _
        $region389: #{text_encoder_forward.3} parent=375 // pred_check_branch
          %599 = sbr.rel (0) target = $region391
        $region390: #{text_encoder_forward.3} parent=375 // pred_region
          %s601 = ssub.s32 2, 1
          loop: start=0, step=1, limit=1
          $region392: #{text_encoder_forward.3} parent=390 // loop_pre_header
            _
          $region393: #{text_encoder_forward.3} parent=390 // loop_header
            %s603 = sphi 0, %s607
            %p604 = scmp.ge.s32.totalorder %s603, 1
            %s608 = sphi %s579, %s579
            %s609 = sphi %s580, %s580
          $region394: #{text_encoder_forward.3} parent=390 // loop_header_branch
            %606 = sbr.rel (%p604) target = $region398
          $region395: #{text_encoder_forward.3} parent=390 // loop_body
            %v610 = vld [vmem:[%s608] sm:%s601]
            %611 = vst [vmem:[%s609] sm:%s601] %v610
          $region396: #{text_encoder_forward.3} parent=390 // loop_footer
            %s607 = sadd.s32 1, %s603
          $region397: #{text_encoder_forward.3} parent=390 // loop_footer_branch
            %602 = sbr.rel target = $region393
          $region398: #{text_encoder_forward.3} parent=390 // loop_exit
            _
        $region391: #{text_encoder_forward.3} parent=375 // pred_fallthru
          _
      $region376: #{text_encoder_forward.3} parent=11 // pred_fallthru
        _
      // Predicated region
      $region377: #{text_encoder_forward.3} parent=11 // pred_check
        _
      $region378: #{text_encoder_forward.3} parent=11 // pred_check_branch
        %585 = sbr.rel (0) target = $region380
      $region379: #{text_encoder_forward.3} parent=11 // pred_region
        %s587 = ssub.s32 2, 1
        loop: start=0, step=1, limit=1
        $region381: #{text_encoder_forward.3} parent=379 // loop_pre_header
          _
        $region382: #{text_encoder_forward.3} parent=379 // loop_header
          %s589 = sphi 0, %s593
          %p590 = scmp.ge.s32.totalorder %s589, 1
          %s594 = sphi %s579, %s579
          %s595 = sphi %s580, %s580
        $region383: #{text_encoder_forward.3} parent=379 // loop_header_branch
          %592 = sbr.rel (%p590) target = $region387
        $region384: #{text_encoder_forward.3} parent=379 // loop_body
          %v596 = vld [vmem:[%s594] sm:%s587]
          %597 = vst [vmem:[%s595] sm:%s587] %v596
        $region385: #{text_encoder_forward.3} parent=379 // loop_footer
          %s593 = sadd.s32 1, %s589
        $region386: #{text_encoder_forward.3} parent=379 // loop_footer_branch
          %588 = sbr.rel target = $region382
        $region387: #{text_encoder_forward.3} parent=379 // loop_exit
          _
      $region380: #{text_encoder_forward.3} parent=11 // pred_fallthru
        _
      // Predicated region
      $region399: #{text_encoder_forward.3} parent=11 // pred_check
        _
      $region400: #{text_encoder_forward.3} parent=11 // pred_check_branch
        %614 = sbr.rel (0) target = $region402
      $region401: #{text_encoder_forward.3} parent=11 // pred_region
        %615 = vsyncadd %s581, 16
      $region402: #{text_encoder_forward.3} parent=11 // pred_fallthru
        _
      %s616 = sadd.s32 %s59, 13
      %s617 = sld [smem:[#allocation4 + %s616]]
      %p618 = scmp.gt.s32.totalorder %s617, 0
      %s619 = scalar_select %p618, %s617, 0
      %p620 = scmp.lt.s32.totalorder %s619, 29
      %s621 = scalar_select %p620, %s619, 29
      %s622 = scalar_lea.vmem %s1, %s621
      %s623 = scalar_lea.vmem %s57, 13
      %s624 = scalar_lea.sflag [#allocation2], 13
      // Predicated region
      $region403: #{text_encoder_forward.3} parent=11 // pred_check
        _
      $region404: #{text_encoder_forward.3} parent=11 // pred_check_branch
        %626 = sbr.rel target = $region406
      $region405: #{text_encoder_forward.3} parent=11 // pred_region
        // Predicated region
        $region418: #{text_encoder_forward.3} parent=405 // pred_check
          _
        $region419: #{text_encoder_forward.3} parent=405 // pred_check_branch
          %642 = sbr.rel (0) target = $region421
        $region420: #{text_encoder_forward.3} parent=405 // pred_region
          %s644 = ssub.s32 2, 1
          loop: start=0, step=1, limit=1
          $region422: #{text_encoder_forward.3} parent=420 // loop_pre_header
            _
          $region423: #{text_encoder_forward.3} parent=420 // loop_header
            %s646 = sphi 0, %s650
            %p647 = scmp.ge.s32.totalorder %s646, 1
            %s651 = sphi %s622, %s622
            %s652 = sphi %s623, %s623
          $region424: #{text_encoder_forward.3} parent=420 // loop_header_branch
            %649 = sbr.rel (%p647) target = $region428
          $region425: #{text_encoder_forward.3} parent=420 // loop_body
            %v653 = vld [vmem:[%s651] sm:%s644]
            %654 = vst [vmem:[%s652] sm:%s644] %v653
          $region426: #{text_encoder_forward.3} parent=420 // loop_footer
            %s650 = sadd.s32 1, %s646
          $region427: #{text_encoder_forward.3} parent=420 // loop_footer_branch
            %645 = sbr.rel target = $region423
          $region428: #{text_encoder_forward.3} parent=420 // loop_exit
            _
        $region421: #{text_encoder_forward.3} parent=405 // pred_fallthru
          _
      $region406: #{text_encoder_forward.3} parent=11 // pred_fallthru
        _
      // Predicated region
      $region407: #{text_encoder_forward.3} parent=11 // pred_check
        _
      $region408: #{text_encoder_forward.3} parent=11 // pred_check_branch
        %628 = sbr.rel (0) target = $region410
      $region409: #{text_encoder_forward.3} parent=11 // pred_region
        %s630 = ssub.s32 2, 1
        loop: start=0, step=1, limit=1
        $region411: #{text_encoder_forward.3} parent=409 // loop_pre_header
          _
        $region412: #{text_encoder_forward.3} parent=409 // loop_header
          %s632 = sphi 0, %s636
          %p633 = scmp.ge.s32.totalorder %s632, 1
          %s637 = sphi %s622, %s622
          %s638 = sphi %s623, %s623
        $region413: #{text_encoder_forward.3} parent=409 // loop_header_branch
          %635 = sbr.rel (%p633) target = $region417
        $region414: #{text_encoder_forward.3} parent=409 // loop_body
          %v639 = vld [vmem:[%s637] sm:%s630]
          %640 = vst [vmem:[%s638] sm:%s630] %v639
        $region415: #{text_encoder_forward.3} parent=409 // loop_footer
          %s636 = sadd.s32 1, %s632
        $region416: #{text_encoder_forward.3} parent=409 // loop_footer_branch
          %631 = sbr.rel target = $region412
        $region417: #{text_encoder_forward.3} parent=409 // loop_exit
          _
      $region410: #{text_encoder_forward.3} parent=11 // pred_fallthru
        _
      // Predicated region
      $region429: #{text_encoder_forward.3} parent=11 // pred_check
        _
      $region430: #{text_encoder_forward.3} parent=11 // pred_check_branch
        %657 = sbr.rel (0) target = $region432
      $region431: #{text_encoder_forward.3} parent=11 // pred_region
        %658 = vsyncadd %s624, 16
      $region432: #{text_encoder_forward.3} parent=11 // pred_fallthru
        _
      %s659 = sadd.s32 %s59, 14
      %s660 = sld [smem:[#allocation4 + %s659]]
      %p661 = scmp.gt.s32.totalorder %s660, 0
      %s662 = scalar_select %p661, %s660, 0
      %p663 = scmp.lt.s32.totalorder %s662, 29
      %s664 = scalar_select %p663, %s662, 29
      %s665 = scalar_lea.vmem %s1, %s664
      %s666 = scalar_lea.vmem %s57, 14
      %s667 = scalar_lea.sflag [#allocation2], 14
      // Predicated region
      $region433: #{text_encoder_forward.3} parent=11 // pred_check
        _
      $region434: #{text_encoder_forward.3} parent=11 // pred_check_branch
        %669 = sbr.rel target = $region436
      $region435: #{text_encoder_forward.3} parent=11 // pred_region
        // Predicated region
        $region448: #{text_encoder_forward.3} parent=435 // pred_check
          _
        $region449: #{text_encoder_forward.3} parent=435 // pred_check_branch
          %685 = sbr.rel (0) target = $region451
        $region450: #{text_encoder_forward.3} parent=435 // pred_region
          %s687 = ssub.s32 2, 1
          loop: start=0, step=1, limit=1
          $region452: #{text_encoder_forward.3} parent=450 // loop_pre_header
            _
          $region453: #{text_encoder_forward.3} parent=450 // loop_header
            %s689 = sphi 0, %s693
            %p690 = scmp.ge.s32.totalorder %s689, 1
            %s694 = sphi %s665, %s665
            %s695 = sphi %s666, %s666
          $region454: #{text_encoder_forward.3} parent=450 // loop_header_branch
            %692 = sbr.rel (%p690) target = $region458
          $region455: #{text_encoder_forward.3} parent=450 // loop_body
            %v696 = vld [vmem:[%s694] sm:%s687]
            %697 = vst [vmem:[%s695] sm:%s687] %v696
          $region456: #{text_encoder_forward.3} parent=450 // loop_footer
            %s693 = sadd.s32 1, %s689
          $region457: #{text_encoder_forward.3} parent=450 // loop_footer_branch
            %688 = sbr.rel target = $region453
          $region458: #{text_encoder_forward.3} parent=450 // loop_exit
            _
        $region451: #{text_encoder_forward.3} parent=435 // pred_fallthru
          _
      $region436: #{text_encoder_forward.3} parent=11 // pred_fallthru
        _
      // Predicated region
      $region437: #{text_encoder_forward.3} parent=11 // pred_check
        _
      $region438: #{text_encoder_forward.3} parent=11 // pred_check_branch
        %671 = sbr.rel (0) target = $region440
      $region439: #{text_encoder_forward.3} parent=11 // pred_region
        %s673 = ssub.s32 2, 1
        loop: start=0, step=1, limit=1
        $region441: #{text_encoder_forward.3} parent=439 // loop_pre_header
          _
        $region442: #{text_encoder_forward.3} parent=439 // loop_header
          %s675 = sphi 0, %s679
          %p676 = scmp.ge.s32.totalorder %s675, 1
          %s680 = sphi %s665, %s665
          %s681 = sphi %s666, %s666
        $region443: #{text_encoder_forward.3} parent=439 // loop_header_branch
          %678 = sbr.rel (%p676) target = $region447
        $region444: #{text_encoder_forward.3} parent=439 // loop_body
          %v682 = vld [vmem:[%s680] sm:%s673]
          %683 = vst [vmem:[%s681] sm:%s673] %v682
        $region445: #{text_encoder_forward.3} parent=439 // loop_footer
          %s679 = sadd.s32 1, %s675
        $region446: #{text_encoder_forward.3} parent=439 // loop_footer_branch
          %674 = sbr.rel target = $region442
        $region447: #{text_encoder_forward.3} parent=439 // loop_exit
          _
      $region440: #{text_encoder_forward.3} parent=11 // pred_fallthru
        _
      // Predicated region
      $region459: #{text_encoder_forward.3} parent=11 // pred_check
        _
      $region460: #{text_encoder_forward.3} parent=11 // pred_check_branch
        %700 = sbr.rel (0) target = $region462
      $region461: #{text_encoder_forward.3} parent=11 // pred_region
        %701 = vsyncadd %s667, 16
      $region462: #{text_encoder_forward.3} parent=11 // pred_fallthru
        _
      %s702 = sadd.s32 %s59, 15
      %s703 = sld [smem:[#allocation4 + %s702]]
      %p704 = scmp.gt.s32.totalorder %s703, 0
      %s705 = scalar_select %p704, %s703, 0
      %p706 = scmp.lt.s32.totalorder %s705, 29
      %s707 = scalar_select %p706, %s705, 29
      %s708 = scalar_lea.vmem %s1, %s707
      %s709 = scalar_lea.vmem %s57, 15
      %s710 = scalar_lea.sflag [#allocation2], 15
      // Predicated region
      $region463: #{text_encoder_forward.3} parent=11 // pred_check
        _
      $region464: #{text_encoder_forward.3} parent=11 // pred_check_branch
        %712 = sbr.rel target = $region466
      $region465: #{text_encoder_forward.3} parent=11 // pred_region
        // Predicated region
        $region478: #{text_encoder_forward.3} parent=465 // pred_check
          _
        $region479: #{text_encoder_forward.3} parent=465 // pred_check_branch
          %728 = sbr.rel (0) target = $region481
        $region480: #{text_encoder_forward.3} parent=465 // pred_region
          %s730 = ssub.s32 2, 1
          loop: start=0, step=1, limit=1
          $region482: #{text_encoder_forward.3} parent=480 // loop_pre_header
            _
          $region483: #{text_encoder_forward.3} parent=480 // loop_header
            %s732 = sphi 0, %s736
            %p733 = scmp.ge.s32.totalorder %s732, 1
            %s737 = sphi %s708, %s708
            %s738 = sphi %s709, %s709
          $region484: #{text_encoder_forward.3} parent=480 // loop_header_branch
            %735 = sbr.rel (%p733) target = $region488
          $region485: #{text_encoder_forward.3} parent=480 // loop_body
            %v739 = vld [vmem:[%s737] sm:%s730]
            %740 = vst [vmem:[%s738] sm:%s730] %v739
          $region486: #{text_encoder_forward.3} parent=480 // loop_footer
            %s736 = sadd.s32 1, %s732
          $region487: #{text_encoder_forward.3} parent=480 // loop_footer_branch
            %731 = sbr.rel target = $region483
          $region488: #{text_encoder_forward.3} parent=480 // loop_exit
            _
        $region481: #{text_encoder_forward.3} parent=465 // pred_fallthru
          _
      $region466: #{text_encoder_forward.3} parent=11 // pred_fallthru
        _
      // Predicated region
      $region467: #{text_encoder_forward.3} parent=11 // pred_check
        _
      $region468: #{text_encoder_forward.3} parent=11 // pred_check_branch
        %714 = sbr.rel (0) target = $region470
      $region469: #{text_encoder_forward.3} parent=11 // pred_region
        %s716 = ssub.s32 2, 1
        loop: start=0, step=1, limit=1
        $region471: #{text_encoder_forward.3} parent=469 // loop_pre_header
          _
        $region472: #{text_encoder_forward.3} parent=469 // loop_header
          %s718 = sphi 0, %s722
          %p719 = scmp.ge.s32.totalorder %s718, 1
          %s723 = sphi %s708, %s708
          %s724 = sphi %s709, %s709
        $region473: #{text_encoder_forward.3} parent=469 // loop_header_branch
          %721 = sbr.rel (%p719) target = $region477
        $region474: #{text_encoder_forward.3} parent=469 // loop_body
          %v725 = vld [vmem:[%s723] sm:%s716]
          %726 = vst [vmem:[%s724] sm:%s716] %v725
        $region475: #{text_encoder_forward.3} parent=469 // loop_footer
          %s722 = sadd.s32 1, %s718
        $region476: #{text_encoder_forward.3} parent=469 // loop_footer_branch
          %717 = sbr.rel target = $region472
        $region477: #{text_encoder_forward.3} parent=469 // loop_exit
          _
      $region470: #{text_encoder_forward.3} parent=11 // pred_fallthru
        _
      // Predicated region
      $region489: #{text_encoder_forward.3} parent=11 // pred_check
        _
      $region490: #{text_encoder_forward.3} parent=11 // pred_check_branch
        %743 = sbr.rel (0) target = $region492
      $region491: #{text_encoder_forward.3} parent=11 // pred_region
        %744 = vsyncadd %s710, 16
      $region492: #{text_encoder_forward.3} parent=11 // pred_fallthru
        _
      %s745 = sadd.s32 %s59, 16
      %s746 = sld [smem:[#allocation4 + %s745]]
      %p747 = scmp.gt.s32.totalorder %s746, 0
      %s748 = scalar_select %p747, %s746, 0
      %p749 = scmp.lt.s32.totalorder %s748, 29
      %s750 = scalar_select %p749, %s748, 29
      %s751 = scalar_lea.vmem %s1, %s750
      %s752 = scalar_lea.vmem %s57, 16
      %s753 = scalar_lea.sflag [#allocation2], 16
      // Predicated region
      $region493: #{text_encoder_forward.3} parent=11 // pred_check
        _
      $region494: #{text_encoder_forward.3} parent=11 // pred_check_branch
        %755 = sbr.rel target = $region496
      $region495: #{text_encoder_forward.3} parent=11 // pred_region
        // Predicated region
        $region508: #{text_encoder_forward.3} parent=495 // pred_check
          _
        $region509: #{text_encoder_forward.3} parent=495 // pred_check_branch
          %771 = sbr.rel (0) target = $region511
        $region510: #{text_encoder_forward.3} parent=495 // pred_region
          %s773 = ssub.s32 2, 1
          loop: start=0, step=1, limit=1
          $region512: #{text_encoder_forward.3} parent=510 // loop_pre_header
            _
          $region513: #{text_encoder_forward.3} parent=510 // loop_header
            %s775 = sphi 0, %s779
            %p776 = scmp.ge.s32.totalorder %s775, 1
            %s780 = sphi %s751, %s751
            %s781 = sphi %s752, %s752
          $region514: #{text_encoder_forward.3} parent=510 // loop_header_branch
            %778 = sbr.rel (%p776) target = $region518
          $region515: #{text_encoder_forward.3} parent=510 // loop_body
            %v782 = vld [vmem:[%s780] sm:%s773]
            %783 = vst [vmem:[%s781] sm:%s773] %v782
          $region516: #{text_encoder_forward.3} parent=510 // loop_footer
            %s779 = sadd.s32 1, %s775
          $region517: #{text_encoder_forward.3} parent=510 // loop_footer_branch
            %774 = sbr.rel target = $region513
          $region518: #{text_encoder_forward.3} parent=510 // loop_exit
            _
        $region511: #{text_encoder_forward.3} parent=495 // pred_fallthru
          _
      $region496: #{text_encoder_forward.3} parent=11 // pred_fallthru
        _
      // Predicated region
      $region497: #{text_encoder_forward.3} parent=11 // pred_check
        _
      $region498: #{text_encoder_forward.3} parent=11 // pred_check_branch
        %757 = sbr.rel (0) target = $region500
      $region499: #{text_encoder_forward.3} parent=11 // pred_region
        %s759 = ssub.s32 2, 1
        loop: start=0, step=1, limit=1
        $region501: #{text_encoder_forward.3} parent=499 // loop_pre_header
          _
        $region502: #{text_encoder_forward.3} parent=499 // loop_header
          %s761 = sphi 0, %s765
          %p762 = scmp.ge.s32.totalorder %s761, 1
          %s766 = sphi %s751, %s751
          %s767 = sphi %s752, %s752
        $region503: #{text_encoder_forward.3} parent=499 // loop_header_branch
          %764 = sbr.rel (%p762) target = $region507
        $region504: #{text_encoder_forward.3} parent=499 // loop_body
          %v768 = vld [vmem:[%s766] sm:%s759]
          %769 = vst [vmem:[%s767] sm:%s759] %v768
        $region505: #{text_encoder_forward.3} parent=499 // loop_footer
          %s765 = sadd.s32 1, %s761
        $region506: #{text_encoder_forward.3} parent=499 // loop_footer_branch
          %760 = sbr.rel target = $region502
        $region507: #{text_encoder_forward.3} parent=499 // loop_exit
          _
      $region500: #{text_encoder_forward.3} parent=11 // pred_fallthru
        _
      // Predicated region
      $region519: #{text_encoder_forward.3} parent=11 // pred_check
        _
      $region520: #{text_encoder_forward.3} parent=11 // pred_check_branch
        %786 = sbr.rel (0) target = $region522
      $region521: #{text_encoder_forward.3} parent=11 // pred_region
        %787 = vsyncadd %s753, 16
      $region522: #{text_encoder_forward.3} parent=11 // pred_fallthru
        _
      %s788 = sadd.s32 %s59, 17
      %s789 = sld [smem:[#allocation4 + %s788]]
      %p790 = scmp.gt.s32.totalorder %s789, 0
      %s791 = scalar_select %p790, %s789, 0
      %p792 = scmp.lt.s32.totalorder %s791, 29
      %s793 = scalar_select %p792, %s791, 29
      %s794 = scalar_lea.vmem %s1, %s793
      %s795 = scalar_lea.vmem %s57, 17
      %s796 = scalar_lea.sflag [#allocation2], 17
      // Predicated region
      $region523: #{text_encoder_forward.3} parent=11 // pred_check
        _
      $region524: #{text_encoder_forward.3} parent=11 // pred_check_branch
        %798 = sbr.rel target = $region526
      $region525: #{text_encoder_forward.3} parent=11 // pred_region
        // Predicated region
        $region538: #{text_encoder_forward.3} parent=525 // pred_check
          _
        $region539: #{text_encoder_forward.3} parent=525 // pred_check_branch
          %814 = sbr.rel (0) target = $region541
        $region540: #{text_encoder_forward.3} parent=525 // pred_region
          %s816 = ssub.s32 2, 1
          loop: start=0, step=1, limit=1
          $region542: #{text_encoder_forward.3} parent=540 // loop_pre_header
            _
          $region543: #{text_encoder_forward.3} parent=540 // loop_header
            %s818 = sphi 0, %s822
            %p819 = scmp.ge.s32.totalorder %s818, 1
            %s823 = sphi %s794, %s794
            %s824 = sphi %s795, %s795
          $region544: #{text_encoder_forward.3} parent=540 // loop_header_branch
            %821 = sbr.rel (%p819) target = $region548
          $region545: #{text_encoder_forward.3} parent=540 // loop_body
            %v825 = vld [vmem:[%s823] sm:%s816]
            %826 = vst [vmem:[%s824] sm:%s816] %v825
          $region546: #{text_encoder_forward.3} parent=540 // loop_footer
            %s822 = sadd.s32 1, %s818
          $region547: #{text_encoder_forward.3} parent=540 // loop_footer_branch
            %817 = sbr.rel target = $region543
          $region548: #{text_encoder_forward.3} parent=540 // loop_exit
            _
        $region541: #{text_encoder_forward.3} parent=525 // pred_fallthru
          _
      $region526: #{text_encoder_forward.3} parent=11 // pred_fallthru
        _
      // Predicated region
      $region527: #{text_encoder_forward.3} parent=11 // pred_check
        _
      $region528: #{text_encoder_forward.3} parent=11 // pred_check_branch
        %800 = sbr.rel (0) target = $region530
      $region529: #{text_encoder_forward.3} parent=11 // pred_region
        %s802 = ssub.s32 2, 1
        loop: start=0, step=1, limit=1
        $region531: #{text_encoder_forward.3} parent=529 // loop_pre_header
          _
        $region532: #{text_encoder_forward.3} parent=529 // loop_header
          %s804 = sphi 0, %s808
          %p805 = scmp.ge.s32.totalorder %s804, 1
          %s809 = sphi %s794, %s794
          %s810 = sphi %s795, %s795
        $region533: #{text_encoder_forward.3} parent=529 // loop_header_branch
          %807 = sbr.rel (%p805) target = $region537
        $region534: #{text_encoder_forward.3} parent=529 // loop_body
          %v811 = vld [vmem:[%s809] sm:%s802]
          %812 = vst [vmem:[%s810] sm:%s802] %v811
        $region535: #{text_encoder_forward.3} parent=529 // loop_footer
          %s808 = sadd.s32 1, %s804
        $region536: #{text_encoder_forward.3} parent=529 // loop_footer_branch
          %803 = sbr.rel target = $region532
        $region537: #{text_encoder_forward.3} parent=529 // loop_exit
          _
      $region530: #{text_encoder_forward.3} parent=11 // pred_fallthru
        _
      // Predicated region
      $region549: #{text_encoder_forward.3} parent=11 // pred_check
        _
      $region550: #{text_encoder_forward.3} parent=11 // pred_check_branch
        %829 = sbr.rel (0) target = $region552
      $region551: #{text_encoder_forward.3} parent=11 // pred_region
        %830 = vsyncadd %s796, 16
      $region552: #{text_encoder_forward.3} parent=11 // pred_fallthru
        _
      %s831 = sadd.s32 %s59, 18
      %s832 = sld [smem:[#allocation4 + %s831]]
      %p833 = scmp.gt.s32.totalorder %s832, 0
      %s834 = scalar_select %p833, %s832, 0
      %p835 = scmp.lt.s32.totalorder %s834, 29
      %s836 = scalar_select %p835, %s834, 29
      %s837 = scalar_lea.vmem %s1, %s836
      %s838 = scalar_lea.vmem %s57, 18
      %s839 = scalar_lea.sflag [#allocation2], 18
      // Predicated region
      $region553: #{text_encoder_forward.3} parent=11 // pred_check
        _
      $region554: #{text_encoder_forward.3} parent=11 // pred_check_branch
        %841 = sbr.rel target = $region556
      $region555: #{text_encoder_forward.3} parent=11 // pred_region
        // Predicated region
        $region568: #{text_encoder_forward.3} parent=555 // pred_check
          _
        $region569: #{text_encoder_forward.3} parent=555 // pred_check_branch
          %857 = sbr.rel (0) target = $region571
        $region570: #{text_encoder_forward.3} parent=555 // pred_region
          %s859 = ssub.s32 2, 1
          loop: start=0, step=1, limit=1
          $region572: #{text_encoder_forward.3} parent=570 // loop_pre_header
            _
          $region573: #{text_encoder_forward.3} parent=570 // loop_header
            %s861 = sphi 0, %s865
            %p862 = scmp.ge.s32.totalorder %s861, 1
            %s866 = sphi %s837, %s837
            %s867 = sphi %s838, %s838
          $region574: #{text_encoder_forward.3} parent=570 // loop_header_branch
            %864 = sbr.rel (%p862) target = $region578
          $region575: #{text_encoder_forward.3} parent=570 // loop_body
            %v868 = vld [vmem:[%s866] sm:%s859]
            %869 = vst [vmem:[%s867] sm:%s859] %v868
          $region576: #{text_encoder_forward.3} parent=570 // loop_footer
            %s865 = sadd.s32 1, %s861
          $region577: #{text_encoder_forward.3} parent=570 // loop_footer_branch
            %860 = sbr.rel target = $region573
          $region578: #{text_encoder_forward.3} parent=570 // loop_exit
            _
        $region571: #{text_encoder_forward.3} parent=555 // pred_fallthru
          _
      $region556: #{text_encoder_forward.3} parent=11 // pred_fallthru
        _
      // Predicated region
      $region557: #{text_encoder_forward.3} parent=11 // pred_check
        _
      $region558: #{text_encoder_forward.3} parent=11 // pred_check_branch
        %843 = sbr.rel (0) target = $region560
      $region559: #{text_encoder_forward.3} parent=11 // pred_region
        %s845 = ssub.s32 2, 1
        loop: start=0, step=1, limit=1
        $region561: #{text_encoder_forward.3} parent=559 // loop_pre_header
          _
        $region562: #{text_encoder_forward.3} parent=559 // loop_header
          %s847 = sphi 0, %s851
          %p848 = scmp.ge.s32.totalorder %s847, 1
          %s852 = sphi %s837, %s837
          %s853 = sphi %s838, %s838
        $region563: #{text_encoder_forward.3} parent=559 // loop_header_branch
          %850 = sbr.rel (%p848) target = $region567
        $region564: #{text_encoder_forward.3} parent=559 // loop_body
          %v854 = vld [vmem:[%s852] sm:%s845]
          %855 = vst [vmem:[%s853] sm:%s845] %v854
        $region565: #{text_encoder_forward.3} parent=559 // loop_footer
          %s851 = sadd.s32 1, %s847
        $region566: #{text_encoder_forward.3} parent=559 // loop_footer_branch
          %846 = sbr.rel target = $region562
        $region567: #{text_encoder_forward.3} parent=559 // loop_exit
          _
      $region560: #{text_encoder_forward.3} parent=11 // pred_fallthru
        _
      // Predicated region
      $region579: #{text_encoder_forward.3} parent=11 // pred_check
        _
      $region580: #{text_encoder_forward.3} parent=11 // pred_check_branch
        %872 = sbr.rel (0) target = $region582
      $region581: #{text_encoder_forward.3} parent=11 // pred_region
        %873 = vsyncadd %s839, 16
      $region582: #{text_encoder_forward.3} parent=11 // pred_fallthru
        _
      %s874 = sadd.s32 %s59, 19
      %s875 = sld [smem:[#allocation4 + %s874]]
      %p876 = scmp.gt.s32.totalorder %s875, 0
      %s877 = scalar_select %p876, %s875, 0
      %p878 = scmp.lt.s32.totalorder %s877, 29
      %s879 = scalar_select %p878, %s877, 29
      %s880 = scalar_lea.vmem %s1, %s879
      %s881 = scalar_lea.vmem %s57, 19
      %s882 = scalar_lea.sflag [#allocation2], 19
      // Predicated region
      $region583: #{text_encoder_forward.3} parent=11 // pred_check
        _
      $region584: #{text_encoder_forward.3} parent=11 // pred_check_branch
        %884 = sbr.rel target = $region586
      $region585: #{text_encoder_forward.3} parent=11 // pred_region
        // Predicated region
        $region598: #{text_encoder_forward.3} parent=585 // pred_check
          _
        $region599: #{text_encoder_forward.3} parent=585 // pred_check_branch
          %900 = sbr.rel (0) target = $region601
        $region600: #{text_encoder_forward.3} parent=585 // pred_region
          %s902 = ssub.s32 2, 1
          loop: start=0, step=1, limit=1
          $region602: #{text_encoder_forward.3} parent=600 // loop_pre_header
            _
          $region603: #{text_encoder_forward.3} parent=600 // loop_header
            %s904 = sphi 0, %s908
            %p905 = scmp.ge.s32.totalorder %s904, 1
            %s909 = sphi %s880, %s880
            %s910 = sphi %s881, %s881
          $region604: #{text_encoder_forward.3} parent=600 // loop_header_branch
            %907 = sbr.rel (%p905) target = $region608
          $region605: #{text_encoder_forward.3} parent=600 // loop_body
            %v911 = vld [vmem:[%s909] sm:%s902]
            %912 = vst [vmem:[%s910] sm:%s902] %v911
          $region606: #{text_encoder_forward.3} parent=600 // loop_footer
            %s908 = sadd.s32 1, %s904
          $region607: #{text_encoder_forward.3} parent=600 // loop_footer_branch
            %903 = sbr.rel target = $region603
          $region608: #{text_encoder_forward.3} parent=600 // loop_exit
            _
        $region601: #{text_encoder_forward.3} parent=585 // pred_fallthru
          _
      $region586: #{text_encoder_forward.3} parent=11 // pred_fallthru
        _
      // Predicated region
      $region587: #{text_encoder_forward.3} parent=11 // pred_check
        _
      $region588: #{text_encoder_forward.3} parent=11 // pred_check_branch
        %886 = sbr.rel (0) target = $region590
      $region589: #{text_encoder_forward.3} parent=11 // pred_region
        %s888 = ssub.s32 2, 1
        loop: start=0, step=1, limit=1
        $region591: #{text_encoder_forward.3} parent=589 // loop_pre_header
          _
        $region592: #{text_encoder_forward.3} parent=589 // loop_header
          %s890 = sphi 0, %s894
          %p891 = scmp.ge.s32.totalorder %s890, 1
          %s895 = sphi %s880, %s880
          %s896 = sphi %s881, %s881
        $region593: #{text_encoder_forward.3} parent=589 // loop_header_branch
          %893 = sbr.rel (%p891) target = $region597
        $region594: #{text_encoder_forward.3} parent=589 // loop_body
          %v897 = vld [vmem:[%s895] sm:%s888]
          %898 = vst [vmem:[%s896] sm:%s888] %v897
        $region595: #{text_encoder_forward.3} parent=589 // loop_footer
          %s894 = sadd.s32 1, %s890
        $region596: #{text_encoder_forward.3} parent=589 // loop_footer_branch
          %889 = sbr.rel target = $region592
        $region597: #{text_encoder_forward.3} parent=589 // loop_exit
          _
      $region590: #{text_encoder_forward.3} parent=11 // pred_fallthru
        _
      // Predicated region
      $region609: #{text_encoder_forward.3} parent=11 // pred_check
        _
      $region610: #{text_encoder_forward.3} parent=11 // pred_check_branch
        %915 = sbr.rel (0) target = $region612
      $region611: #{text_encoder_forward.3} parent=11 // pred_region
        %916 = vsyncadd %s882, 16
      $region612: #{text_encoder_forward.3} parent=11 // pred_fallthru
        _
      %s917 = sadd.s32 %s59, 20
      %s918 = sld [smem:[#allocation4 + %s917]]
      %p919 = scmp.gt.s32.totalorder %s918, 0
      %s920 = scalar_select %p919, %s918, 0
      %p921 = scmp.lt.s32.totalorder %s920, 29
      %s922 = scalar_select %p921, %s920, 29
      %s923 = scalar_lea.vmem %s1, %s922
      %s924 = scalar_lea.vmem %s57, 20
      %s925 = scalar_lea.sflag [#allocation2], 20
      // Predicated region
      $region613: #{text_encoder_forward.3} parent=11 // pred_check
        _
      $region614: #{text_encoder_forward.3} parent=11 // pred_check_branch
        %927 = sbr.rel target = $region616
      $region615: #{text_encoder_forward.3} parent=11 // pred_region
        // Predicated region
        $region628: #{text_encoder_forward.3} parent=615 // pred_check
          _
        $region629: #{text_encoder_forward.3} parent=615 // pred_check_branch
          %943 = sbr.rel (0) target = $region631
        $region630: #{text_encoder_forward.3} parent=615 // pred_region
          %s945 = ssub.s32 2, 1
          loop: start=0, step=1, limit=1
          $region632: #{text_encoder_forward.3} parent=630 // loop_pre_header
            _
          $region633: #{text_encoder_forward.3} parent=630 // loop_header
            %s947 = sphi 0, %s951
            %p948 = scmp.ge.s32.totalorder %s947, 1
            %s952 = sphi %s923, %s923
            %s953 = sphi %s924, %s924
          $region634: #{text_encoder_forward.3} parent=630 // loop_header_branch
            %950 = sbr.rel (%p948) target = $region638
          $region635: #{text_encoder_forward.3} parent=630 // loop_body
            %v954 = vld [vmem:[%s952] sm:%s945]
            %955 = vst [vmem:[%s953] sm:%s945] %v954
          $region636: #{text_encoder_forward.3} parent=630 // loop_footer
            %s951 = sadd.s32 1, %s947
          $region637: #{text_encoder_forward.3} parent=630 // loop_footer_branch
            %946 = sbr.rel target = $region633
          $region638: #{text_encoder_forward.3} parent=630 // loop_exit
            _
        $region631: #{text_encoder_forward.3} parent=615 // pred_fallthru
          _
      $region616: #{text_encoder_forward.3} parent=11 // pred_fallthru
        _
      // Predicated region
      $region617: #{text_encoder_forward.3} parent=11 // pred_check
        _
      $region618: #{text_encoder_forward.3} parent=11 // pred_check_branch
        %929 = sbr.rel (0) target = $region620
      $region619: #{text_encoder_forward.3} parent=11 // pred_region
        %s931 = ssub.s32 2, 1
        loop: start=0, step=1, limit=1
        $region621: #{text_encoder_forward.3} parent=619 // loop_pre_header
          _
        $region622: #{text_encoder_forward.3} parent=619 // loop_header
          %s933 = sphi 0, %s937
          %p934 = scmp.ge.s32.totalorder %s933, 1
          %s938 = sphi %s923, %s923
          %s939 = sphi %s924, %s924
        $region623: #{text_encoder_forward.3} parent=619 // loop_header_branch
          %936 = sbr.rel (%p934) target = $region627
        $region624: #{text_encoder_forward.3} parent=619 // loop_body
          %v940 = vld [vmem:[%s938] sm:%s931]
          %941 = vst [vmem:[%s939] sm:%s931] %v940
        $region625: #{text_encoder_forward.3} parent=619 // loop_footer
          %s937 = sadd.s32 1, %s933
        $region626: #{text_encoder_forward.3} parent=619 // loop_footer_branch
          %932 = sbr.rel target = $region622
        $region627: #{text_encoder_forward.3} parent=619 // loop_exit
          _
      $region620: #{text_encoder_forward.3} parent=11 // pred_fallthru
        _
      // Predicated region
      $region639: #{text_encoder_forward.3} parent=11 // pred_check
        _
      $region640: #{text_encoder_forward.3} parent=11 // pred_check_branch
        %958 = sbr.rel (0) target = $region642
      $region641: #{text_encoder_forward.3} parent=11 // pred_region
        %959 = vsyncadd %s925, 16
      $region642: #{text_encoder_forward.3} parent=11 // pred_fallthru
        _
      %s960 = sadd.s32 %s59, 21
      %s961 = sld [smem:[#allocation4 + %s960]]
      %p962 = scmp.gt.s32.totalorder %s961, 0
      %s963 = scalar_select %p962, %s961, 0
      %p964 = scmp.lt.s32.totalorder %s963, 29
      %s965 = scalar_select %p964, %s963, 29
      %s966 = scalar_lea.vmem %s1, %s965
      %s967 = scalar_lea.vmem %s57, 21
      %s968 = scalar_lea.sflag [#allocation2], 21
      // Predicated region
      $region643: #{text_encoder_forward.3} parent=11 // pred_check
        _
      $region644: #{text_encoder_forward.3} parent=11 // pred_check_branch
        %970 = sbr.rel target = $region646
      $region645: #{text_encoder_forward.3} parent=11 // pred_region
        // Predicated region
        $region658: #{text_encoder_forward.3} parent=645 // pred_check
          _
        $region659: #{text_encoder_forward.3} parent=645 // pred_check_branch
          %986 = sbr.rel (0) target = $region661
        $region660: #{text_encoder_forward.3} parent=645 // pred_region
          %s988 = ssub.s32 2, 1
          loop: start=0, step=1, limit=1
          $region662: #{text_encoder_forward.3} parent=660 // loop_pre_header
            _
          $region663: #{text_encoder_forward.3} parent=660 // loop_header
            %s990 = sphi 0, %s994
            %p991 = scmp.ge.s32.totalorder %s990, 1
            %s995 = sphi %s966, %s966
            %s996 = sphi %s967, %s967
          $region664: #{text_encoder_forward.3} parent=660 // loop_header_branch
            %993 = sbr.rel (%p991) target = $region668
          $region665: #{text_encoder_forward.3} parent=660 // loop_body
            %v997 = vld [vmem:[%s995] sm:%s988]
            %998 = vst [vmem:[%s996] sm:%s988] %v997
          $region666: #{text_encoder_forward.3} parent=660 // loop_footer
            %s994 = sadd.s32 1, %s990
          $region667: #{text_encoder_forward.3} parent=660 // loop_footer_branch
            %989 = sbr.rel target = $region663
          $region668: #{text_encoder_forward.3} parent=660 // loop_exit
            _
        $region661: #{text_encoder_forward.3} parent=645 // pred_fallthru
          _
      $region646: #{text_encoder_forward.3} parent=11 // pred_fallthru
        _
      // Predicated region
      $region647: #{text_encoder_forward.3} parent=11 // pred_check
        _
      $region648: #{text_encoder_forward.3} parent=11 // pred_check_branch
        %972 = sbr.rel (0) target = $region650
      $region649: #{text_encoder_forward.3} parent=11 // pred_region
        %s974 = ssub.s32 2, 1
        loop: start=0, step=1, limit=1
        $region651: #{text_encoder_forward.3} parent=649 // loop_pre_header
          _
        $region652: #{text_encoder_forward.3} parent=649 // loop_header
          %s976 = sphi 0, %s980
          %p977 = scmp.ge.s32.totalorder %s976, 1
          %s981 = sphi %s966, %s966
          %s982 = sphi %s967, %s967
        $region653: #{text_encoder_forward.3} parent=649 // loop_header_branch
          %979 = sbr.rel (%p977) target = $region657
        $region654: #{text_encoder_forward.3} parent=649 // loop_body
          %v983 = vld [vmem:[%s981] sm:%s974]
          %984 = vst [vmem:[%s982] sm:%s974] %v983
        $region655: #{text_encoder_forward.3} parent=649 // loop_footer
          %s980 = sadd.s32 1, %s976
        $region656: #{text_encoder_forward.3} parent=649 // loop_footer_branch
          %975 = sbr.rel target = $region652
        $region657: #{text_encoder_forward.3} parent=649 // loop_exit
          _
      $region650: #{text_encoder_forward.3} parent=11 // pred_fallthru
        _
      // Predicated region
      $region669: #{text_encoder_forward.3} parent=11 // pred_check
        _
      $region670: #{text_encoder_forward.3} parent=11 // pred_check_branch
        %1001 = sbr.rel (0) target = $region672
      $region671: #{text_encoder_forward.3} parent=11 // pred_region
        %1002 = vsyncadd %s968, 16
      $region672: #{text_encoder_forward.3} parent=11 // pred_fallthru
        _
      %s1003 = sadd.s32 %s59, 22
      %s1004 = sld [smem:[#allocation4 + %s1003]]
      %p1005 = scmp.gt.s32.totalorder %s1004, 0
      %s1006 = scalar_select %p1005, %s1004, 0
      %p1007 = scmp.lt.s32.totalorder %s1006, 29
      %s1008 = scalar_select %p1007, %s1006, 29
      %s1009 = scalar_lea.vmem %s1, %s1008
      %s1010 = scalar_lea.vmem %s57, 22
      %s1011 = scalar_lea.sflag [#allocation2], 22
      // Predicated region
      $region673: #{text_encoder_forward.3} parent=11 // pred_check
        _
      $region674: #{text_encoder_forward.3} parent=11 // pred_check_branch
        %1013 = sbr.rel target = $region676
      $region675: #{text_encoder_forward.3} parent=11 // pred_region
        // Predicated region
        $region688: #{text_encoder_forward.3} parent=675 // pred_check
          _
        $region689: #{text_encoder_forward.3} parent=675 // pred_check_branch
          %1029 = sbr.rel (0) target = $region691
        $region690: #{text_encoder_forward.3} parent=675 // pred_region
          %s1031 = ssub.s32 2, 1
          loop: start=0, step=1, limit=1
          $region692: #{text_encoder_forward.3} parent=690 // loop_pre_header
            _
          $region693: #{text_encoder_forward.3} parent=690 // loop_header
            %s1033 = sphi 0, %s1037
            %p1034 = scmp.ge.s32.totalorder %s1033, 1
            %s1038 = sphi %s1009, %s1009
            %s1039 = sphi %s1010, %s1010
          $region694: #{text_encoder_forward.3} parent=690 // loop_header_branch
            %1036 = sbr.rel (%p1034) target = $region698
          $region695: #{text_encoder_forward.3} parent=690 // loop_body
            %v1040 = vld [vmem:[%s1038] sm:%s1031]
            %1041 = vst [vmem:[%s1039] sm:%s1031] %v1040
          $region696: #{text_encoder_forward.3} parent=690 // loop_footer
            %s1037 = sadd.s32 1, %s1033
          $region697: #{text_encoder_forward.3} parent=690 // loop_footer_branch
            %1032 = sbr.rel target = $region693
          $region698: #{text_encoder_forward.3} parent=690 // loop_exit
            _
        $region691: #{text_encoder_forward.3} parent=675 // pred_fallthru
          _
      $region676: #{text_encoder_forward.3} parent=11 // pred_fallthru
        _
      // Predicated region
      $region677: #{text_encoder_forward.3} parent=11 // pred_check
        _
      $region678: #{text_encoder_forward.3} parent=11 // pred_check_branch
        %1015 = sbr.rel (0) target = $region680
      $region679: #{text_encoder_forward.3} parent=11 // pred_region
        %s1017 = ssub.s32 2, 1
        loop: start=0, step=1, limit=1
        $region681: #{text_encoder_forward.3} parent=679 // loop_pre_header
          _
        $region682: #{text_encoder_forward.3} parent=679 // loop_header
          %s1019 = sphi 0, %s1023
          %p1020 = scmp.ge.s32.totalorder %s1019, 1
          %s1024 = sphi %s1009, %s1009
          %s1025 = sphi %s1010, %s1010
        $region683: #{text_encoder_forward.3} parent=679 // loop_header_branch
          %1022 = sbr.rel (%p1020) target = $region687
        $region684: #{text_encoder_forward.3} parent=679 // loop_body
          %v1026 = vld [vmem:[%s1024] sm:%s1017]
          %1027 = vst [vmem:[%s1025] sm:%s1017] %v1026
        $region685: #{text_encoder_forward.3} parent=679 // loop_footer
          %s1023 = sadd.s32 1, %s1019
        $region686: #{text_encoder_forward.3} parent=679 // loop_footer_branch
          %1018 = sbr.rel target = $region682
        $region687: #{text_encoder_forward.3} parent=679 // loop_exit
          _
      $region680: #{text_encoder_forward.3} parent=11 // pred_fallthru
        _
      // Predicated region
      $region699: #{text_encoder_forward.3} parent=11 // pred_check
        _
      $region700: #{text_encoder_forward.3} parent=11 // pred_check_branch
        %1044 = sbr.rel (0) target = $region702
      $region701: #{text_encoder_forward.3} parent=11 // pred_region
        %1045 = vsyncadd %s1011, 16
      $region702: #{text_encoder_forward.3} parent=11 // pred_fallthru
        _
      %s1046 = sadd.s32 %s59, 23
      %s1047 = sld [smem:[#allocation4 + %s1046]]
      %p1048 = scmp.gt.s32.totalorder %s1047, 0
      %s1049 = scalar_select %p1048, %s1047, 0
      %p1050 = scmp.lt.s32.totalorder %s1049, 29
      %s1051 = scalar_select %p1050, %s1049, 29
      %s1052 = scalar_lea.vmem %s1, %s1051
      %s1053 = scalar_lea.vmem %s57, 23
      %s1054 = scalar_lea.sflag [#allocation2], 23
      // Predicated region
      $region703: #{text_encoder_forward.3} parent=11 // pred_check
        _
      $region704: #{text_encoder_forward.3} parent=11 // pred_check_branch
        %1056 = sbr.rel target = $region706
      $region705: #{text_encoder_forward.3} parent=11 // pred_region
        // Predicated region
        $region718: #{text_encoder_forward.3} parent=705 // pred_check
          _
        $region719: #{text_encoder_forward.3} parent=705 // pred_check_branch
          %1072 = sbr.rel (0) target = $region721
        $region720: #{text_encoder_forward.3} parent=705 // pred_region
          %s1074 = ssub.s32 2, 1
          loop: start=0, step=1, limit=1
          $region722: #{text_encoder_forward.3} parent=720 // loop_pre_header
            _
          $region723: #{text_encoder_forward.3} parent=720 // loop_header
            %s1076 = sphi 0, %s1080
            %p1077 = scmp.ge.s32.totalorder %s1076, 1
            %s1081 = sphi %s1052, %s1052
            %s1082 = sphi %s1053, %s1053
          $region724: #{text_encoder_forward.3} parent=720 // loop_header_branch
            %1079 = sbr.rel (%p1077) target = $region728
          $region725: #{text_encoder_forward.3} parent=720 // loop_body
            %v1083 = vld [vmem:[%s1081] sm:%s1074]
            %1084 = vst [vmem:[%s1082] sm:%s1074] %v1083
          $region726: #{text_encoder_forward.3} parent=720 // loop_footer
            %s1080 = sadd.s32 1, %s1076
          $region727: #{text_encoder_forward.3} parent=720 // loop_footer_branch
            %1075 = sbr.rel target = $region723
          $region728: #{text_encoder_forward.3} parent=720 // loop_exit
            _
        $region721: #{text_encoder_forward.3} parent=705 // pred_fallthru
          _
      $region706: #{text_encoder_forward.3} parent=11 // pred_fallthru
        _
      // Predicated region
      $region707: #{text_encoder_forward.3} parent=11 // pred_check
        _
      $region708: #{text_encoder_forward.3} parent=11 // pred_check_branch
        %1058 = sbr.rel (0) target = $region710
      $region709: #{text_encoder_forward.3} parent=11 // pred_region
        %s1060 = ssub.s32 2, 1
        loop: start=0, step=1, limit=1
        $region711: #{text_encoder_forward.3} parent=709 // loop_pre_header
          _
        $region712: #{text_encoder_forward.3} parent=709 // loop_header
          %s1062 = sphi 0, %s1066
          %p1063 = scmp.ge.s32.totalorder %s1062, 1
          %s1067 = sphi %s1052, %s1052
          %s1068 = sphi %s1053, %s1053
        $region713: #{text_encoder_forward.3} parent=709 // loop_header_branch
          %1065 = sbr.rel (%p1063) target = $region717
        $region714: #{text_encoder_forward.3} parent=709 // loop_body
          %v1069 = vld [vmem:[%s1067] sm:%s1060]
          %1070 = vst [vmem:[%s1068] sm:%s1060] %v1069
        $region715: #{text_encoder_forward.3} parent=709 // loop_footer
          %s1066 = sadd.s32 1, %s1062
        $region716: #{text_encoder_forward.3} parent=709 // loop_footer_branch
          %1061 = sbr.rel target = $region712
        $region717: #{text_encoder_forward.3} parent=709 // loop_exit
          _
      $region710: #{text_encoder_forward.3} parent=11 // pred_fallthru
        _
      // Predicated region
      $region729: #{text_encoder_forward.3} parent=11 // pred_check
        _
      $region730: #{text_encoder_forward.3} parent=11 // pred_check_branch
        %1087 = sbr.rel (0) target = $region732
      $region731: #{text_encoder_forward.3} parent=11 // pred_region
        %1088 = vsyncadd %s1054, 16
      $region732: #{text_encoder_forward.3} parent=11 // pred_fallthru
        _
      %s1089 = sadd.s32 %s59, 24
      %s1090 = sld [smem:[#allocation4 + %s1089]]
      %p1091 = scmp.gt.s32.totalorder %s1090, 0
      %s1092 = scalar_select %p1091, %s1090, 0
      %p1093 = scmp.lt.s32.totalorder %s1092, 29
      %s1094 = scalar_select %p1093, %s1092, 29
      %s1095 = scalar_lea.vmem %s1, %s1094
      %s1096 = scalar_lea.vmem %s57, 24
      %s1097 = scalar_lea.sflag [#allocation2], 24
      // Predicated region
      $region733: #{text_encoder_forward.3} parent=11 // pred_check
        _
      $region734: #{text_encoder_forward.3} parent=11 // pred_check_branch
        %1099 = sbr.rel target = $region736
      $region735: #{text_encoder_forward.3} parent=11 // pred_region
        // Predicated region
        $region748: #{text_encoder_forward.3} parent=735 // pred_check
          _
        $region749: #{text_encoder_forward.3} parent=735 // pred_check_branch
          %1115 = sbr.rel (0) target = $region751
        $region750: #{text_encoder_forward.3} parent=735 // pred_region
          %s1117 = ssub.s32 2, 1
          loop: start=0, step=1, limit=1
          $region752: #{text_encoder_forward.3} parent=750 // loop_pre_header
            _
          $region753: #{text_encoder_forward.3} parent=750 // loop_header
            %s1119 = sphi 0, %s1123
            %p1120 = scmp.ge.s32.totalorder %s1119, 1
            %s1124 = sphi %s1095, %s1095
            %s1125 = sphi %s1096, %s1096
          $region754: #{text_encoder_forward.3} parent=750 // loop_header_branch
            %1122 = sbr.rel (%p1120) target = $region758
          $region755: #{text_encoder_forward.3} parent=750 // loop_body
            %v1126 = vld [vmem:[%s1124] sm:%s1117]
            %1127 = vst [vmem:[%s1125] sm:%s1117] %v1126
          $region756: #{text_encoder_forward.3} parent=750 // loop_footer
            %s1123 = sadd.s32 1, %s1119
          $region757: #{text_encoder_forward.3} parent=750 // loop_footer_branch
            %1118 = sbr.rel target = $region753
          $region758: #{text_encoder_forward.3} parent=750 // loop_exit
            _
        $region751: #{text_encoder_forward.3} parent=735 // pred_fallthru
          _
      $region736: #{text_encoder_forward.3} parent=11 // pred_fallthru
        _
      // Predicated region
      $region737: #{text_encoder_forward.3} parent=11 // pred_check
        _
      $region738: #{text_encoder_forward.3} parent=11 // pred_check_branch
        %1101 = sbr.rel (0) target = $region740
      $region739: #{text_encoder_forward.3} parent=11 // pred_region
        %s1103 = ssub.s32 2, 1
        loop: start=0, step=1, limit=1
        $region741: #{text_encoder_forward.3} parent=739 // loop_pre_header
          _
        $region742: #{text_encoder_forward.3} parent=739 // loop_header
          %s1105 = sphi 0, %s1109
          %p1106 = scmp.ge.s32.totalorder %s1105, 1
          %s1110 = sphi %s1095, %s1095
          %s1111 = sphi %s1096, %s1096
        $region743: #{text_encoder_forward.3} parent=739 // loop_header_branch
          %1108 = sbr.rel (%p1106) target = $region747
        $region744: #{text_encoder_forward.3} parent=739 // loop_body
          %v1112 = vld [vmem:[%s1110] sm:%s1103]
          %1113 = vst [vmem:[%s1111] sm:%s1103] %v1112
        $region745: #{text_encoder_forward.3} parent=739 // loop_footer
          %s1109 = sadd.s32 1, %s1105
        $region746: #{text_encoder_forward.3} parent=739 // loop_footer_branch
          %1104 = sbr.rel target = $region742
        $region747: #{text_encoder_forward.3} parent=739 // loop_exit
          _
      $region740: #{text_encoder_forward.3} parent=11 // pred_fallthru
        _
      // Predicated region
      $region759: #{text_encoder_forward.3} parent=11 // pred_check
        _
      $region760: #{text_encoder_forward.3} parent=11 // pred_check_branch
        %1130 = sbr.rel (0) target = $region762
      $region761: #{text_encoder_forward.3} parent=11 // pred_region
        %1131 = vsyncadd %s1097, 16
      $region762: #{text_encoder_forward.3} parent=11 // pred_fallthru
        _
      %s1132 = sadd.s32 %s59, 25
      %s1133 = sld [smem:[#allocation4 + %s1132]]
      %p1134 = scmp.gt.s32.totalorder %s1133, 0
      %s1135 = scalar_select %p1134, %s1133, 0
      %p1136 = scmp.lt.s32.totalorder %s1135, 29
      %s1137 = scalar_select %p1136, %s1135, 29
      %s1138 = scalar_lea.vmem %s1, %s1137
      %s1139 = scalar_lea.vmem %s57, 25
      %s1140 = scalar_lea.sflag [#allocation2], 25
      // Predicated region
      $region763: #{text_encoder_forward.3} parent=11 // pred_check
        _
      $region764: #{text_encoder_forward.3} parent=11 // pred_check_branch
        %1142 = sbr.rel target = $region766
      $region765: #{text_encoder_forward.3} parent=11 // pred_region
        // Predicated region
        $region778: #{text_encoder_forward.3} parent=765 // pred_check
          _
        $region779: #{text_encoder_forward.3} parent=765 // pred_check_branch
          %1158 = sbr.rel (0) target = $region781
        $region780: #{text_encoder_forward.3} parent=765 // pred_region
          %s1160 = ssub.s32 2, 1
          loop: start=0, step=1, limit=1
          $region782: #{text_encoder_forward.3} parent=780 // loop_pre_header
            _
          $region783: #{text_encoder_forward.3} parent=780 // loop_header
            %s1162 = sphi 0, %s1166
            %p1163 = scmp.ge.s32.totalorder %s1162, 1
            %s1167 = sphi %s1138, %s1138
            %s1168 = sphi %s1139, %s1139
          $region784: #{text_encoder_forward.3} parent=780 // loop_header_branch
            %1165 = sbr.rel (%p1163) target = $region788
          $region785: #{text_encoder_forward.3} parent=780 // loop_body
            %v1169 = vld [vmem:[%s1167] sm:%s1160]
            %1170 = vst [vmem:[%s1168] sm:%s1160] %v1169
          $region786: #{text_encoder_forward.3} parent=780 // loop_footer
            %s1166 = sadd.s32 1, %s1162
          $region787: #{text_encoder_forward.3} parent=780 // loop_footer_branch
            %1161 = sbr.rel target = $region783
          $region788: #{text_encoder_forward.3} parent=780 // loop_exit
            _
        $region781: #{text_encoder_forward.3} parent=765 // pred_fallthru
          _
      $region766: #{text_encoder_forward.3} parent=11 // pred_fallthru
        _
      // Predicated region
      $region767: #{text_encoder_forward.3} parent=11 // pred_check
        _
      $region768: #{text_encoder_forward.3} parent=11 // pred_check_branch
        %1144 = sbr.rel (0) target = $region770
      $region769: #{text_encoder_forward.3} parent=11 // pred_region
        %s1146 = ssub.s32 2, 1
        loop: start=0, step=1, limit=1
        $region771: #{text_encoder_forward.3} parent=769 // loop_pre_header
          _
        $region772: #{text_encoder_forward.3} parent=769 // loop_header
          %s1148 = sphi 0, %s1152
          %p1149 = scmp.ge.s32.totalorder %s1148, 1
          %s1153 = sphi %s1138, %s1138
          %s1154 = sphi %s1139, %s1139
        $region773: #{text_encoder_forward.3} parent=769 // loop_header_branch
          %1151 = sbr.rel (%p1149) target = $region777
        $region774: #{text_encoder_forward.3} parent=769 // loop_body
          %v1155 = vld [vmem:[%s1153] sm:%s1146]
          %1156 = vst [vmem:[%s1154] sm:%s1146] %v1155
        $region775: #{text_encoder_forward.3} parent=769 // loop_footer
          %s1152 = sadd.s32 1, %s1148
        $region776: #{text_encoder_forward.3} parent=769 // loop_footer_branch
          %1147 = sbr.rel target = $region772
        $region777: #{text_encoder_forward.3} parent=769 // loop_exit
          _
      $region770: #{text_encoder_forward.3} parent=11 // pred_fallthru
        _
      // Predicated region
      $region789: #{text_encoder_forward.3} parent=11 // pred_check
        _
      $region790: #{text_encoder_forward.3} parent=11 // pred_check_branch
        %1173 = sbr.rel (0) target = $region792
      $region791: #{text_encoder_forward.3} parent=11 // pred_region
        %1174 = vsyncadd %s1140, 16
      $region792: #{text_encoder_forward.3} parent=11 // pred_fallthru
        _
      %s1175 = sadd.s32 %s59, 26
      %s1176 = sld [smem:[#allocation4 + %s1175]]
      %p1177 = scmp.gt.s32.totalorder %s1176, 0
      %s1178 = scalar_select %p1177, %s1176, 0
      %p1179 = scmp.lt.s32.totalorder %s1178, 29
      %s1180 = scalar_select %p1179, %s1178, 29
      %s1181 = scalar_lea.vmem %s1, %s1180
      %s1182 = scalar_lea.vmem %s57, 26
      %s1183 = scalar_lea.sflag [#allocation2], 26
      // Predicated region
      $region793: #{text_encoder_forward.3} parent=11 // pred_check
        _
      $region794: #{text_encoder_forward.3} parent=11 // pred_check_branch
        %1185 = sbr.rel target = $region796
      $region795: #{text_encoder_forward.3} parent=11 // pred_region
        // Predicated region
        $region808: #{text_encoder_forward.3} parent=795 // pred_check
          _
        $region809: #{text_encoder_forward.3} parent=795 // pred_check_branch
          %1201 = sbr.rel (0) target = $region811
        $region810: #{text_encoder_forward.3} parent=795 // pred_region
          %s1203 = ssub.s32 2, 1
          loop: start=0, step=1, limit=1
          $region812: #{text_encoder_forward.3} parent=810 // loop_pre_header
            _
          $region813: #{text_encoder_forward.3} parent=810 // loop_header
            %s1205 = sphi 0, %s1209
            %p1206 = scmp.ge.s32.totalorder %s1205, 1
            %s1210 = sphi %s1181, %s1181
            %s1211 = sphi %s1182, %s1182
          $region814: #{text_encoder_forward.3} parent=810 // loop_header_branch
            %1208 = sbr.rel (%p1206) target = $region818
          $region815: #{text_encoder_forward.3} parent=810 // loop_body
            %v1212 = vld [vmem:[%s1210] sm:%s1203]
            %1213 = vst [vmem:[%s1211] sm:%s1203] %v1212
          $region816: #{text_encoder_forward.3} parent=810 // loop_footer
            %s1209 = sadd.s32 1, %s1205
          $region817: #{text_encoder_forward.3} parent=810 // loop_footer_branch
            %1204 = sbr.rel target = $region813
          $region818: #{text_encoder_forward.3} parent=810 // loop_exit
            _
        $region811: #{text_encoder_forward.3} parent=795 // pred_fallthru
          _
      $region796: #{text_encoder_forward.3} parent=11 // pred_fallthru
        _
      // Predicated region
      $region797: #{text_encoder_forward.3} parent=11 // pred_check
        _
      $region798: #{text_encoder_forward.3} parent=11 // pred_check_branch
        %1187 = sbr.rel (0) target = $region800
      $region799: #{text_encoder_forward.3} parent=11 // pred_region
        %s1189 = ssub.s32 2, 1
        loop: start=0, step=1, limit=1
        $region801: #{text_encoder_forward.3} parent=799 // loop_pre_header
          _
        $region802: #{text_encoder_forward.3} parent=799 // loop_header
          %s1191 = sphi 0, %s1195
          %p1192 = scmp.ge.s32.totalorder %s1191, 1
          %s1196 = sphi %s1181, %s1181
          %s1197 = sphi %s1182, %s1182
        $region803: #{text_encoder_forward.3} parent=799 // loop_header_branch
          %1194 = sbr.rel (%p1192) target = $region807
        $region804: #{text_encoder_forward.3} parent=799 // loop_body
          %v1198 = vld [vmem:[%s1196] sm:%s1189]
          %1199 = vst [vmem:[%s1197] sm:%s1189] %v1198
        $region805: #{text_encoder_forward.3} parent=799 // loop_footer
          %s1195 = sadd.s32 1, %s1191
        $region806: #{text_encoder_forward.3} parent=799 // loop_footer_branch
          %1190 = sbr.rel target = $region802
        $region807: #{text_encoder_forward.3} parent=799 // loop_exit
          _
      $region800: #{text_encoder_forward.3} parent=11 // pred_fallthru
        _
      // Predicated region
      $region819: #{text_encoder_forward.3} parent=11 // pred_check
        _
      $region820: #{text_encoder_forward.3} parent=11 // pred_check_branch
        %1216 = sbr.rel (0) target = $region822
      $region821: #{text_encoder_forward.3} parent=11 // pred_region
        %1217 = vsyncadd %s1183, 16
      $region822: #{text_encoder_forward.3} parent=11 // pred_fallthru
        _
      %s1218 = sadd.s32 %s59, 27
      %s1219 = sld [smem:[#allocation4 + %s1218]]
      %p1220 = scmp.gt.s32.totalorder %s1219, 0
      %s1221 = scalar_select %p1220, %s1219, 0
      %p1222 = scmp.lt.s32.totalorder %s1221, 29
      %s1223 = scalar_select %p1222, %s1221, 29
      %s1224 = scalar_lea.vmem %s1, %s1223
      %s1225 = scalar_lea.vmem %s57, 27
      %s1226 = scalar_lea.sflag [#allocation2], 27
      // Predicated region
      $region823: #{text_encoder_forward.3} parent=11 // pred_check
        _
      $region824: #{text_encoder_forward.3} parent=11 // pred_check_branch
        %1228 = sbr.rel target = $region826
      $region825: #{text_encoder_forward.3} parent=11 // pred_region
        // Predicated region
        $region838: #{text_encoder_forward.3} parent=825 // pred_check
          _
        $region839: #{text_encoder_forward.3} parent=825 // pred_check_branch
          %1244 = sbr.rel (0) target = $region841
        $region840: #{text_encoder_forward.3} parent=825 // pred_region
          %s1246 = ssub.s32 2, 1
          loop: start=0, step=1, limit=1
          $region842: #{text_encoder_forward.3} parent=840 // loop_pre_header
            _
          $region843: #{text_encoder_forward.3} parent=840 // loop_header
            %s1248 = sphi 0, %s1252
            %p1249 = scmp.ge.s32.totalorder %s1248, 1
            %s1253 = sphi %s1224, %s1224
            %s1254 = sphi %s1225, %s1225
          $region844: #{text_encoder_forward.3} parent=840 // loop_header_branch
            %1251 = sbr.rel (%p1249) target = $region848
          $region845: #{text_encoder_forward.3} parent=840 // loop_body
            %v1255 = vld [vmem:[%s1253] sm:%s1246]
            %1256 = vst [vmem:[%s1254] sm:%s1246] %v1255
          $region846: #{text_encoder_forward.3} parent=840 // loop_footer
            %s1252 = sadd.s32 1, %s1248
          $region847: #{text_encoder_forward.3} parent=840 // loop_footer_branch
            %1247 = sbr.rel target = $region843
          $region848: #{text_encoder_forward.3} parent=840 // loop_exit
            _
        $region841: #{text_encoder_forward.3} parent=825 // pred_fallthru
          _
      $region826: #{text_encoder_forward.3} parent=11 // pred_fallthru
        _
      // Predicated region
      $region827: #{text_encoder_forward.3} parent=11 // pred_check
        _
      $region828: #{text_encoder_forward.3} parent=11 // pred_check_branch
        %1230 = sbr.rel (0) target = $region830
      $region829: #{text_encoder_forward.3} parent=11 // pred_region
        %s1232 = ssub.s32 2, 1
        loop: start=0, step=1, limit=1
        $region831: #{text_encoder_forward.3} parent=829 // loop_pre_header
          _
        $region832: #{text_encoder_forward.3} parent=829 // loop_header
          %s1234 = sphi 0, %s1238
          %p1235 = scmp.ge.s32.totalorder %s1234, 1
          %s1239 = sphi %s1224, %s1224
          %s1240 = sphi %s1225, %s1225
        $region833: #{text_encoder_forward.3} parent=829 // loop_header_branch
          %1237 = sbr.rel (%p1235) target = $region837
        $region834: #{text_encoder_forward.3} parent=829 // loop_body
          %v1241 = vld [vmem:[%s1239] sm:%s1232]
          %1242 = vst [vmem:[%s1240] sm:%s1232] %v1241
        $region835: #{text_encoder_forward.3} parent=829 // loop_footer
          %s1238 = sadd.s32 1, %s1234
        $region836: #{text_encoder_forward.3} parent=829 // loop_footer_branch
          %1233 = sbr.rel target = $region832
        $region837: #{text_encoder_forward.3} parent=829 // loop_exit
          _
      $region830: #{text_encoder_forward.3} parent=11 // pred_fallthru
        _
      // Predicated region
      $region849: #{text_encoder_forward.3} parent=11 // pred_check
        _
      $region850: #{text_encoder_forward.3} parent=11 // pred_check_branch
        %1259 = sbr.rel (0) target = $region852
      $region851: #{text_encoder_forward.3} parent=11 // pred_region
        %1260 = vsyncadd %s1226, 16
      $region852: #{text_encoder_forward.3} parent=11 // pred_fallthru
        _
      %s1261 = sadd.s32 %s59, 28
      %s1262 = sld [smem:[#allocation4 + %s1261]]
      %p1263 = scmp.gt.s32.totalorder %s1262, 0
      %s1264 = scalar_select %p1263, %s1262, 0
      %p1265 = scmp.lt.s32.totalorder %s1264, 29
      %s1266 = scalar_select %p1265, %s1264, 29
      %s1267 = scalar_lea.vmem %s1, %s1266
      %s1268 = scalar_lea.vmem %s57, 28
      %s1269 = scalar_lea.sflag [#allocation2], 28
      // Predicated region
      $region853: #{text_encoder_forward.3} parent=11 // pred_check
        _
      $region854: #{text_encoder_forward.3} parent=11 // pred_check_branch
        %1271 = sbr.rel target = $region856
      $region855: #{text_encoder_forward.3} parent=11 // pred_region
        // Predicated region
        $region868: #{text_encoder_forward.3} parent=855 // pred_check
          _
        $region869: #{text_encoder_forward.3} parent=855 // pred_check_branch
          %1287 = sbr.rel (0) target = $region871
        $region870: #{text_encoder_forward.3} parent=855 // pred_region
          %s1289 = ssub.s32 2, 1
          loop: start=0, step=1, limit=1
          $region872: #{text_encoder_forward.3} parent=870 // loop_pre_header
            _
          $region873: #{text_encoder_forward.3} parent=870 // loop_header
            %s1291 = sphi 0, %s1295
            %p1292 = scmp.ge.s32.totalorder %s1291, 1
            %s1296 = sphi %s1267, %s1267
            %s1297 = sphi %s1268, %s1268
          $region874: #{text_encoder_forward.3} parent=870 // loop_header_branch
            %1294 = sbr.rel (%p1292) target = $region878
          $region875: #{text_encoder_forward.3} parent=870 // loop_body
            %v1298 = vld [vmem:[%s1296] sm:%s1289]
            %1299 = vst [vmem:[%s1297] sm:%s1289] %v1298
          $region876: #{text_encoder_forward.3} parent=870 // loop_footer
            %s1295 = sadd.s32 1, %s1291
          $region877: #{text_encoder_forward.3} parent=870 // loop_footer_branch
            %1290 = sbr.rel target = $region873
          $region878: #{text_encoder_forward.3} parent=870 // loop_exit
            _
        $region871: #{text_encoder_forward.3} parent=855 // pred_fallthru
          _
      $region856: #{text_encoder_forward.3} parent=11 // pred_fallthru
        _
      // Predicated region
      $region857: #{text_encoder_forward.3} parent=11 // pred_check
        _
      $region858: #{text_encoder_forward.3} parent=11 // pred_check_branch
        %1273 = sbr.rel (0) target = $region860
      $region859: #{text_encoder_forward.3} parent=11 // pred_region
        %s1275 = ssub.s32 2, 1
        loop: start=0, step=1, limit=1
        $region861: #{text_encoder_forward.3} parent=859 // loop_pre_header
          _
        $region862: #{text_encoder_forward.3} parent=859 // loop_header
          %s1277 = sphi 0, %s1281
          %p1278 = scmp.ge.s32.totalorder %s1277, 1
          %s1282 = sphi %s1267, %s1267
          %s1283 = sphi %s1268, %s1268
        $region863: #{text_encoder_forward.3} parent=859 // loop_header_branch
          %1280 = sbr.rel (%p1278) target = $region867
        $region864: #{text_encoder_forward.3} parent=859 // loop_body
          %v1284 = vld [vmem:[%s1282] sm:%s1275]
          %1285 = vst [vmem:[%s1283] sm:%s1275] %v1284
        $region865: #{text_encoder_forward.3} parent=859 // loop_footer
          %s1281 = sadd.s32 1, %s1277
        $region866: #{text_encoder_forward.3} parent=859 // loop_footer_branch
          %1276 = sbr.rel target = $region862
        $region867: #{text_encoder_forward.3} parent=859 // loop_exit
          _
      $region860: #{text_encoder_forward.3} parent=11 // pred_fallthru
        _
      // Predicated region
      $region879: #{text_encoder_forward.3} parent=11 // pred_check
        _
      $region880: #{text_encoder_forward.3} parent=11 // pred_check_branch
        %1302 = sbr.rel (0) target = $region882
      $region881: #{text_encoder_forward.3} parent=11 // pred_region
        %1303 = vsyncadd %s1269, 16
      $region882: #{text_encoder_forward.3} parent=11 // pred_fallthru
        _
      %s1304 = sadd.s32 %s59, 29
      %s1305 = sld [smem:[#allocation4 + %s1304]]
      %p1306 = scmp.gt.s32.totalorder %s1305, 0
      %s1307 = scalar_select %p1306, %s1305, 0
      %p1308 = scmp.lt.s32.totalorder %s1307, 29
      %s1309 = scalar_select %p1308, %s1307, 29
      %s1310 = scalar_lea.vmem %s1, %s1309
      %s1311 = scalar_lea.vmem %s57, 29
      %s1312 = scalar_lea.sflag [#allocation2], 29
      // Predicated region
      $region883: #{text_encoder_forward.3} parent=11 // pred_check
        _
      $region884: #{text_encoder_forward.3} parent=11 // pred_check_branch
        %1314 = sbr.rel target = $region886
      $region885: #{text_encoder_forward.3} parent=11 // pred_region
        // Predicated region
        $region898: #{text_encoder_forward.3} parent=885 // pred_check
          _
        $region899: #{text_encoder_forward.3} parent=885 // pred_check_branch
          %1330 = sbr.rel (0) target = $region901
        $region900: #{text_encoder_forward.3} parent=885 // pred_region
          %s1332 = ssub.s32 2, 1
          loop: start=0, step=1, limit=1
          $region902: #{text_encoder_forward.3} parent=900 // loop_pre_header
            _
          $region903: #{text_encoder_forward.3} parent=900 // loop_header
            %s1334 = sphi 0, %s1338
            %p1335 = scmp.ge.s32.totalorder %s1334, 1
            %s1339 = sphi %s1310, %s1310
            %s1340 = sphi %s1311, %s1311
          $region904: #{text_encoder_forward.3} parent=900 // loop_header_branch
            %1337 = sbr.rel (%p1335) target = $region908
          $region905: #{text_encoder_forward.3} parent=900 // loop_body
            %v1341 = vld [vmem:[%s1339] sm:%s1332]
            %1342 = vst [vmem:[%s1340] sm:%s1332] %v1341
          $region906: #{text_encoder_forward.3} parent=900 // loop_footer
            %s1338 = sadd.s32 1, %s1334
          $region907: #{text_encoder_forward.3} parent=900 // loop_footer_branch
            %1333 = sbr.rel target = $region903
          $region908: #{text_encoder_forward.3} parent=900 // loop_exit
            _
        $region901: #{text_encoder_forward.3} parent=885 // pred_fallthru
          _
      $region886: #{text_encoder_forward.3} parent=11 // pred_fallthru
        _
      // Predicated region
      $region887: #{text_encoder_forward.3} parent=11 // pred_check
        _
      $region888: #{text_encoder_forward.3} parent=11 // pred_check_branch
        %1316 = sbr.rel (0) target = $region890
      $region889: #{text_encoder_forward.3} parent=11 // pred_region
        %s1318 = ssub.s32 2, 1
        loop: start=0, step=1, limit=1
        $region891: #{text_encoder_forward.3} parent=889 // loop_pre_header
          _
        $region892: #{text_encoder_forward.3} parent=889 // loop_header
          %s1320 = sphi 0, %s1324
          %p1321 = scmp.ge.s32.totalorder %s1320, 1
          %s1325 = sphi %s1310, %s1310
          %s1326 = sphi %s1311, %s1311
        $region893: #{text_encoder_forward.3} parent=889 // loop_header_branch
          %1323 = sbr.rel (%p1321) target = $region897
        $region894: #{text_encoder_forward.3} parent=889 // loop_body
          %v1327 = vld [vmem:[%s1325] sm:%s1318]
          %1328 = vst [vmem:[%s1326] sm:%s1318] %v1327
        $region895: #{text_encoder_forward.3} parent=889 // loop_footer
          %s1324 = sadd.s32 1, %s1320
        $region896: #{text_encoder_forward.3} parent=889 // loop_footer_branch
          %1319 = sbr.rel target = $region892
        $region897: #{text_encoder_forward.3} parent=889 // loop_exit
          _
      $region890: #{text_encoder_forward.3} parent=11 // pred_fallthru
        _
      // Predicated region
      $region909: #{text_encoder_forward.3} parent=11 // pred_check
        _
      $region910: #{text_encoder_forward.3} parent=11 // pred_check_branch
        %1345 = sbr.rel (0) target = $region912
      $region911: #{text_encoder_forward.3} parent=11 // pred_region
        %1346 = vsyncadd %s1312, 16
      $region912: #{text_encoder_forward.3} parent=11 // pred_fallthru
        _
      %s1347 = sadd.s32 %s59, 30
      %s1348 = sld [smem:[#allocation4 + %s1347]]
      %p1349 = scmp.gt.s32.totalorder %s1348, 0
      %s1350 = scalar_select %p1349, %s1348, 0
      %p1351 = scmp.lt.s32.totalorder %s1350, 29
      %s1352 = scalar_select %p1351, %s1350, 29
      %s1353 = scalar_lea.vmem %s1, %s1352
      %s1354 = scalar_lea.vmem %s57, 30
      %s1355 = scalar_lea.sflag [#allocation2], 30
      // Predicated region
      $region913: #{text_encoder_forward.3} parent=11 // pred_check
        _
      $region914: #{text_encoder_forward.3} parent=11 // pred_check_branch
        %1357 = sbr.rel target = $region916
      $region915: #{text_encoder_forward.3} parent=11 // pred_region
        // Predicated region
        $region928: #{text_encoder_forward.3} parent=915 // pred_check
          _
        $region929: #{text_encoder_forward.3} parent=915 // pred_check_branch
          %1373 = sbr.rel (0) target = $region931
        $region930: #{text_encoder_forward.3} parent=915 // pred_region
          %s1375 = ssub.s32 2, 1
          loop: start=0, step=1, limit=1
          $region932: #{text_encoder_forward.3} parent=930 // loop_pre_header
            _
          $region933: #{text_encoder_forward.3} parent=930 // loop_header
            %s1377 = sphi 0, %s1381
            %p1378 = scmp.ge.s32.totalorder %s1377, 1
            %s1382 = sphi %s1353, %s1353
            %s1383 = sphi %s1354, %s1354
          $region934: #{text_encoder_forward.3} parent=930 // loop_header_branch
            %1380 = sbr.rel (%p1378) target = $region938
          $region935: #{text_encoder_forward.3} parent=930 // loop_body
            %v1384 = vld [vmem:[%s1382] sm:%s1375]
            %1385 = vst [vmem:[%s1383] sm:%s1375] %v1384
          $region936: #{text_encoder_forward.3} parent=930 // loop_footer
            %s1381 = sadd.s32 1, %s1377
          $region937: #{text_encoder_forward.3} parent=930 // loop_footer_branch
            %1376 = sbr.rel target = $region933
          $region938: #{text_encoder_forward.3} parent=930 // loop_exit
            _
        $region931: #{text_encoder_forward.3} parent=915 // pred_fallthru
          _
      $region916: #{text_encoder_forward.3} parent=11 // pred_fallthru
        _
      // Predicated region
      $region917: #{text_encoder_forward.3} parent=11 // pred_check
        _
      $region918: #{text_encoder_forward.3} parent=11 // pred_check_branch
        %1359 = sbr.rel (0) target = $region920
      $region919: #{text_encoder_forward.3} parent=11 // pred_region
        %s1361 = ssub.s32 2, 1
        loop: start=0, step=1, limit=1
        $region921: #{text_encoder_forward.3} parent=919 // loop_pre_header
          _
        $region922: #{text_encoder_forward.3} parent=919 // loop_header
          %s1363 = sphi 0, %s1367
          %p1364 = scmp.ge.s32.totalorder %s1363, 1
          %s1368 = sphi %s1353, %s1353
          %s1369 = sphi %s1354, %s1354
        $region923: #{text_encoder_forward.3} parent=919 // loop_header_branch
          %1366 = sbr.rel (%p1364) target = $region927
        $region924: #{text_encoder_forward.3} parent=919 // loop_body
          %v1370 = vld [vmem:[%s1368] sm:%s1361]
          %1371 = vst [vmem:[%s1369] sm:%s1361] %v1370
        $region925: #{text_encoder_forward.3} parent=919 // loop_footer
          %s1367 = sadd.s32 1, %s1363
        $region926: #{text_encoder_forward.3} parent=919 // loop_footer_branch
          %1362 = sbr.rel target = $region922
        $region927: #{text_encoder_forward.3} parent=919 // loop_exit
          _
      $region920: #{text_encoder_forward.3} parent=11 // pred_fallthru
        _
      // Predicated region
      $region939: #{text_encoder_forward.3} parent=11 // pred_check
        _
      $region940: #{text_encoder_forward.3} parent=11 // pred_check_branch
        %1388 = sbr.rel (0) target = $region942
      $region941: #{text_encoder_forward.3} parent=11 // pred_region
        %1389 = vsyncadd %s1355, 16
      $region942: #{text_encoder_forward.3} parent=11 // pred_fallthru
        _
      %s1390 = sadd.s32 %s59, 31
      %s1391 = sld [smem:[#allocation4 + %s1390]]
      %p1392 = scmp.gt.s32.totalorder %s1391, 0
      %s1393 = scalar_select %p1392, %s1391, 0
      %p1394 = scmp.lt.s32.totalorder %s1393, 29
      %s1395 = scalar_select %p1394, %s1393, 29
      %s1396 = scalar_lea.vmem %s1, %s1395
      %s1397 = scalar_lea.vmem %s57, 31
      %s1398 = scalar_lea.sflag [#allocation2], 31
      // Predicated region
      $region943: #{text_encoder_forward.3} parent=11 // pred_check
        _
      $region944: #{text_encoder_forward.3} parent=11 // pred_check_branch
        %1400 = sbr.rel target = $region946
      $region945: #{text_encoder_forward.3} parent=11 // pred_region
        // Predicated region
        $region958: #{text_encoder_forward.3} parent=945 // pred_check
          _
        $region959: #{text_encoder_forward.3} parent=945 // pred_check_branch
          %1416 = sbr.rel (0) target = $region961
        $region960: #{text_encoder_forward.3} parent=945 // pred_region
          %s1418 = ssub.s32 2, 1
          loop: start=0, step=1, limit=1
          $region962: #{text_encoder_forward.3} parent=960 // loop_pre_header
            _
          $region963: #{text_encoder_forward.3} parent=960 // loop_header
            %s1420 = sphi 0, %s1424
            %p1421 = scmp.ge.s32.totalorder %s1420, 1
            %s1425 = sphi %s1396, %s1396
            %s1426 = sphi %s1397, %s1397
          $region964: #{text_encoder_forward.3} parent=960 // loop_header_branch
            %1423 = sbr.rel (%p1421) target = $region968
          $region965: #{text_encoder_forward.3} parent=960 // loop_body
            %v1427 = vld [vmem:[%s1425] sm:%s1418]
            %1428 = vst [vmem:[%s1426] sm:%s1418] %v1427
          $region966: #{text_encoder_forward.3} parent=960 // loop_footer
            %s1424 = sadd.s32 1, %s1420
          $region967: #{text_encoder_forward.3} parent=960 // loop_footer_branch
            %1419 = sbr.rel target = $region963
          $region968: #{text_encoder_forward.3} parent=960 // loop_exit
            _
        $region961: #{text_encoder_forward.3} parent=945 // pred_fallthru
          _
      $region946: #{text_encoder_forward.3} parent=11 // pred_fallthru
        _
      // Predicated region
      $region947: #{text_encoder_forward.3} parent=11 // pred_check
        _
      $region948: #{text_encoder_forward.3} parent=11 // pred_check_branch
        %1402 = sbr.rel (0) target = $region950
      $region949: #{text_encoder_forward.3} parent=11 // pred_region
        %s1404 = ssub.s32 2, 1
        loop: start=0, step=1, limit=1
        $region951: #{text_encoder_forward.3} parent=949 // loop_pre_header
          _
        $region952: #{text_encoder_forward.3} parent=949 // loop_header
          %s1406 = sphi 0, %s1410
          %p1407 = scmp.ge.s32.totalorder %s1406, 1
          %s1411 = sphi %s1396, %s1396
          %s1412 = sphi %s1397, %s1397
        $region953: #{text_encoder_forward.3} parent=949 // loop_header_branch
          %1409 = sbr.rel (%p1407) target = $region957
        $region954: #{text_encoder_forward.3} parent=949 // loop_body
          %v1413 = vld [vmem:[%s1411] sm:%s1404]
          %1414 = vst [vmem:[%s1412] sm:%s1404] %v1413
        $region955: #{text_encoder_forward.3} parent=949 // loop_footer
          %s1410 = sadd.s32 1, %s1406
        $region956: #{text_encoder_forward.3} parent=949 // loop_footer_branch
          %1405 = sbr.rel target = $region952
        $region957: #{text_encoder_forward.3} parent=949 // loop_exit
          _
      $region950: #{text_encoder_forward.3} parent=11 // pred_fallthru
        _
      // Predicated region
      $region969: #{text_encoder_forward.3} parent=11 // pred_check
        _
      $region970: #{text_encoder_forward.3} parent=11 // pred_check_branch
        %1431 = sbr.rel (0) target = $region972
      $region971: #{text_encoder_forward.3} parent=11 // pred_region
        %1432 = vsyncadd %s1398, 16
      $region972: #{text_encoder_forward.3} parent=11 // pred_fallthru
        _
      %s1433 = smul.u32 1, 1
      %s1434 = sshll.u32 %s1433, 4
      %1435 = dma.done [#allocation2], %s1434
      %s1436 = sshll.u32 %s1433, 4
      %1437 = dma.done %s108, %s1436
      %s1438 = sshll.u32 %s1433, 4
      %1439 = dma.done %s151, %s1438
      %s1440 = sshll.u32 %s1433, 4
      %1441 = dma.done %s194, %s1440
      %s1442 = sshll.u32 %s1433, 4
      %1443 = dma.done %s237, %s1442
      %s1444 = sshll.u32 %s1433, 4
      %1445 = dma.done %s280, %s1444
      %s1446 = sshll.u32 %s1433, 4
      %1447 = dma.done %s323, %s1446
      %s1448 = sshll.u32 %s1433, 4
      %1449 = dma.done %s366, %s1448
      %s1450 = sshll.u32 %s1433, 4
      %1451 = dma.done %s409, %s1450
      %s1452 = sshll.u32 %s1433, 4
      %1453 = dma.done %s452, %s1452
      %s1454 = sshll.u32 %s1433, 4
      %1455 = dma.done %s495, %s1454
      %s1456 = sshll.u32 %s1433, 4
      %1457 = dma.done %s538, %s1456
      %s1458 = sshll.u32 %s1433, 4
      %1459 = dma.done %s581, %s1458
      %s1460 = sshll.u32 %s1433, 4
      %1461 = dma.done %s624, %s1460
      %s1462 = sshll.u32 %s1433, 4
      %1463 = dma.done %s667, %s1462
      %s1464 = sshll.u32 %s1433, 4
      %1465 = dma.done %s710, %s1464
      %s1466 = sshll.u32 %s1433, 4
      %1467 = dma.done %s753, %s1466
      %s1468 = sshll.u32 %s1433, 4
      %1469 = dma.done %s796, %s1468
      %s1470 = sshll.u32 %s1433, 4
      %1471 = dma.done %s839, %s1470
      %s1472 = sshll.u32 %s1433, 4
      %1473 = dma.done %s882, %s1472
      %s1474 = sshll.u32 %s1433, 4
      %1475 = dma.done %s925, %s1474
      %s1476 = sshll.u32 %s1433, 4
      %1477 = dma.done %s968, %s1476
      %s1478 = sshll.u32 %s1433, 4
      %1479 = dma.done %s1011, %s1478
      %s1480 = sshll.u32 %s1433, 4
      %1481 = dma.done %s1054, %s1480
      %s1482 = sshll.u32 %s1433, 4
      %1483 = dma.done %s1097, %s1482
      %s1484 = sshll.u32 %s1433, 4
      %1485 = dma.done %s1140, %s1484
      %s1486 = sshll.u32 %s1433, 4
      %1487 = dma.done %s1183, %s1486
      %s1488 = sshll.u32 %s1433, 4
      %1489 = dma.done %s1226, %s1488
      %s1490 = sshll.u32 %s1433, 4
      %1491 = dma.done %s1269, %s1490
      %s1492 = sshll.u32 %s1433, 4
      %1493 = dma.done %s1312, %s1492
      %s1494 = sshll.u32 %s1433, 4
      %1495 = dma.done %s1355, %s1494
      %s1496 = sshll.u32 %s1433, 4
      %1497 = dma.done %s1398, %s1496
      %s1498 = smul.u32 4, %s16
      %p1499 = scmp.lt.s32.totalorder %s1498, 7
      %s1500 = scalar_select %p1499, %s1498, 7
      %s1501 = smul.addr %s1500, 8
      %s1502 = scalar_lea.vmem %s2, %s1501
      // Predicated region
      $region973: #{text_encoder_forward.3} parent=11 // pred_check
        %p1503 = pneg %p31
      $region974: #{text_encoder_forward.3} parent=11 // pred_check_branch
        %1505 = sbr.rel (%p1503) target = $region976
      $region975: #{text_encoder_forward.3} parent=11 // pred_region
        %s1506 = smul.u32 4, %s16
      $region976: #{text_encoder_forward.3} parent=11 // pred_fallthru
        _
    $region12: #{text_encoder_forward.3} parent=5 // pred_fallthru
      _
    %p1507 = scmp.le.s32.totalorder 1, %s16
    // Predicated region
    $region977: #{text_encoder_forward.3} parent=5 // pred_check
      %p1508 = pneg %p1507
    $region978: #{text_encoder_forward.3} parent=5 // pred_check_branch
      %1510 = sbr.rel (%p1508) target = $region980
    $region979: #{text_encoder_forward.3} parent=5 // pred_region
      %s1511 = ssub.s32 %s16, 1
      // Predicated region
      $region981: #{text_encoder_forward.3} parent=979 // pred_check
        %p1512 = pneg %p37
      $region982: #{text_encoder_forward.3} parent=979 // pred_check_branch
        %1514 = sbr.rel (%p1512) target = $region984
      $region983: #{text_encoder_forward.3} parent=979 // pred_region
        %s1515 = smul.u32 4, %s21
        %p1516 = scmp.lt.s32.totalorder %s1515, 7
        %s1517 = scalar_select %p1516, %s1515, 7
        %s1518 = smul.addr %s1517, 8
        %s1519 = scalar_lea.vmem %s2, %s1518
      $region984: #{text_encoder_forward.3} parent=979 // pred_fallthru
        _
    $region980: #{text_encoder_forward.3} parent=5 // pred_fallthru
      _
  $region6: #{text_encoder_forward.3} parent=0 // loop_footer
    %s20 = sadd.s32 1, %s16
  $region7: #{text_encoder_forward.3} parent=0 // loop_footer_branch
    %15 = sbr.rel target = $region3
  $region8: #{text_encoder_forward.3} parent=0 // loop_exit
    _
  %1520 = vsyncmov [#allocation2]
  %s1521 = vpop.sfrf %1520
  %p1522 = scmp.eq.s32.totalorder %s1521, 0
  %p1523 = pneg %p1522
  %1525 = shalt.err (%p1523)
  %s1526 = scalar_lea.sflag [#allocation2], 1
  %1527 = vsyncmov %s1526
  %s1528 = vpop.sfrf %1527
  %p1529 = scmp.eq.s32.totalorder %s1528, 0
  %p1530 = pneg %p1529
  %1532 = shalt.err (%p1530)
  %s1533 = scalar_lea.sflag [#allocation2], 2
  %1534 = vsyncmov %s1533
  %s1535 = vpop.sfrf %1534
  %p1536 = scmp.eq.s32.totalorder %s1535, 0
  %p1537 = pneg %p1536
  %1539 = shalt.err (%p1537)
  %s1540 = scalar_lea.sflag [#allocation2], 3
  %1541 = vsyncmov %s1540
  %s1542 = vpop.sfrf %1541
  %p1543 = scmp.eq.s32.totalorder %s1542, 0
  %p1544 = pneg %p1543
  %1546 = shalt.err (%p1544)
  %s1547 = scalar_lea.sflag [#allocation2], 4
  %1548 = vsyncmov %s1547
  %s1549 = vpop.sfrf %1548
  %p1550 = scmp.eq.s32.totalorder %s1549, 0
  %p1551 = pneg %p1550
  %1553 = shalt.err (%p1551)
  %s1554 = scalar_lea.sflag [#allocation2], 5
  %1555 = vsyncmov %s1554
  %s1556 = vpop.sfrf %1555
  %p1557 = scmp.eq.s32.totalorder %s1556, 0
  %p1558 = pneg %p1557
  %1560 = shalt.err (%p1558)
  %s1561 = scalar_lea.sflag [#allocation2], 6
  %1562 = vsyncmov %s1561
  %s1563 = vpop.sfrf %1562
  %p1564 = scmp.eq.s32.totalorder %s1563, 0
  %p1565 = pneg %p1564
  %1567 = shalt.err (%p1565)
  %s1568 = scalar_lea.sflag [#allocation2], 7
  %1569 = vsyncmov %s1568
  %s1570 = vpop.sfrf %1569
  %p1571 = scmp.eq.s32.totalorder %s1570, 0
  %p1572 = pneg %p1571
  %1574 = shalt.err (%p1572)
  %s1575 = scalar_lea.sflag [#allocation2], 8
  %1576 = vsyncmov %s1575
  %s1577 = vpop.sfrf %1576
  %p1578 = scmp.eq.s32.totalorder %s1577, 0
  %p1579 = pneg %p1578
  %1581 = shalt.err (%p1579)
  %s1582 = scalar_lea.sflag [#allocation2], 9
  %1583 = vsyncmov %s1582
  %s1584 = vpop.sfrf %1583
  %p1585 = scmp.eq.s32.totalorder %s1584, 0
  %p1586 = pneg %p1585
  %1588 = shalt.err (%p1586)
  %s1589 = scalar_lea.sflag [#allocation2], 10
  %1590 = vsyncmov %s1589
  %s1591 = vpop.sfrf %1590
  %p1592 = scmp.eq.s32.totalorder %s1591, 0
  %p1593 = pneg %p1592
  %1595 = shalt.err (%p1593)
  %s1596 = scalar_lea.sflag [#allocation2], 11
  %1597 = vsyncmov %s1596
  %s1598 = vpop.sfrf %1597
  %p1599 = scmp.eq.s32.totalorder %s1598, 0
  %p1600 = pneg %p1599
  %1602 = shalt.err (%p1600)
  %s1603 = scalar_lea.sflag [#allocation2], 12
  %1604 = vsyncmov %s1603
  %s1605 = vpop.sfrf %1604
  %p1606 = scmp.eq.s32.totalorder %s1605, 0
  %p1607 = pneg %p1606
  %1609 = shalt.err (%p1607)
  %s1610 = scalar_lea.sflag [#allocation2], 13
  %1611 = vsyncmov %s1610
  %s1612 = vpop.sfrf %1611
  %p1613 = scmp.eq.s32.totalorder %s1612, 0
  %p1614 = pneg %p1613
  %1616 = shalt.err (%p1614)
  %s1617 = scalar_lea.sflag [#allocation2], 14
  %1618 = vsyncmov %s1617
  %s1619 = vpop.sfrf %1618
  %p1620 = scmp.eq.s32.totalorder %s1619, 0
  %p1621 = pneg %p1620
  %1623 = shalt.err (%p1621)
  %s1624 = scalar_lea.sflag [#allocation2], 15
  %1625 = vsyncmov %s1624
  %s1626 = vpop.sfrf %1625
  %p1627 = scmp.eq.s32.totalorder %s1626, 0
  %p1628 = pneg %p1627
  %1630 = shalt.err (%p1628)
  %s1631 = scalar_lea.sflag [#allocation2], 16
  %1632 = vsyncmov %s1631
  %s1633 = vpop.sfrf %1632
  %p1634 = scmp.eq.s32.totalorder %s1633, 0
  %p1635 = pneg %p1634
  %1637 = shalt.err (%p1635)
  %s1638 = scalar_lea.sflag [#allocation2], 17
  %1639 = vsyncmov %s1638
  %s1640 = vpop.sfrf %1639
  %p1641 = scmp.eq.s32.totalorder %s1640, 0
  %p1642 = pneg %p1641
  %1644 = shalt.err (%p1642)
  %s1645 = scalar_lea.sflag [#allocation2], 18
  %1646 = vsyncmov %s1645
  %s1647 = vpop.sfrf %1646
  %p1648 = scmp.eq.s32.totalorder %s1647, 0
  %p1649 = pneg %p1648
  %1651 = shalt.err (%p1649)
  %s1652 = scalar_lea.sflag [#allocation2], 19
  %1653 = vsyncmov %s1652
  %s1654 = vpop.sfrf %1653
  %p1655 = scmp.eq.s32.totalorder %s1654, 0
  %p1656 = pneg %p1655
  %1658 = shalt.err (%p1656)
  %s1659 = scalar_lea.sflag [#allocation2], 20
  %1660 = vsyncmov %s1659
  %s1661 = vpop.sfrf %1660
  %p1662 = scmp.eq.s32.totalorder %s1661, 0
  %p1663 = pneg %p1662
  %1665 = shalt.err (%p1663)
  %s1666 = scalar_lea.sflag [#allocation2], 21
  %1667 = vsyncmov %s1666
  %s1668 = vpop.sfrf %1667
  %p1669 = scmp.eq.s32.totalorder %s1668, 0
  %p1670 = pneg %p1669
  %1672 = shalt.err (%p1670)
  %s1673 = scalar_lea.sflag [#allocation2], 22
  %1674 = vsyncmov %s1673
  %s1675 = vpop.sfrf %1674
  %p1676 = scmp.eq.s32.totalorder %s1675, 0
  %p1677 = pneg %p1676
  %1679 = shalt.err (%p1677)
  %s1680 = scalar_lea.sflag [#allocation2], 23
  %1681 = vsyncmov %s1680
  %s1682 = vpop.sfrf %1681
  %p1683 = scmp.eq.s32.totalorder %s1682, 0
  %p1684 = pneg %p1683
  %1686 = shalt.err (%p1684)
  %s1687 = scalar_lea.sflag [#allocation2], 24
  %1688 = vsyncmov %s1687
  %s1689 = vpop.sfrf %1688
  %p1690 = scmp.eq.s32.totalorder %s1689, 0
  %p1691 = pneg %p1690
  %1693 = shalt.err (%p1691)
  %s1694 = scalar_lea.sflag [#allocation2], 25
  %1695 = vsyncmov %s1694
  %s1696 = vpop.sfrf %1695
  %p1697 = scmp.eq.s32.totalorder %s1696, 0
  %p1698 = pneg %p1697
  %1700 = shalt.err (%p1698)
  %s1701 = scalar_lea.sflag [#allocation2], 26
  %1702 = vsyncmov %s1701
  %s1703 = vpop.sfrf %1702
  %p1704 = scmp.eq.s32.totalorder %s1703, 0
  %p1705 = pneg %p1704
  %1707 = shalt.err (%p1705)
  %s1708 = scalar_lea.sflag [#allocation2], 27
  %1709 = vsyncmov %s1708
  %s1710 = vpop.sfrf %1709
  %p1711 = scmp.eq.s32.totalorder %s1710, 0
  %p1712 = pneg %p1711
  %1714 = shalt.err (%p1712)
  %s1715 = scalar_lea.sflag [#allocation2], 28
  %1716 = vsyncmov %s1715
  %s1717 = vpop.sfrf %1716
  %p1718 = scmp.eq.s32.totalorder %s1717, 0
  %p1719 = pneg %p1718
  %1721 = shalt.err (%p1719)
  %s1722 = scalar_lea.sflag [#allocation2], 29
  %1723 = vsyncmov %s1722
  %s1724 = vpop.sfrf %1723
  %p1725 = scmp.eq.s32.totalorder %s1724, 0
  %p1726 = pneg %p1725
  %1728 = shalt.err (%p1726)
  %s1729 = scalar_lea.sflag [#allocation2], 30
  %1730 = vsyncmov %s1729
  %s1731 = vpop.sfrf %1730
  %p1732 = scmp.eq.s32.totalorder %s1731, 0
  %p1733 = pneg %p1732
  %1735 = shalt.err (%p1733)
  %s1736 = scalar_lea.sflag [#allocation2], 31
  %1737 = vsyncmov %s1736
  %s1738 = vpop.sfrf %1737
  %p1739 = scmp.eq.s32.totalorder %s1738, 0
  %p1740 = pneg %p1739
  %1742 = shalt.err (%p1740)

// kernel: text_encoder_forward.4
$region0: #{text_encoder_forward.4}
  #allocation0 [shape = 'u32[]', space=smem, size = 0x4, offset = 0x4, fixed_abs, tag = 'smem constant byte address 0x4 - core index']
  #allocation1 [shape = 'u32[72,128]{1,0:T(1,128)}', space=vmem, size = 0x9000, scoped, tag = 'internal scratch']
  #allocation2 [shape = 'f32[8,64]{1,0:T(8,128)}', space=vmem, size = 0x1000, scoped, tag = 'scratch operand']
  #allocation3 [shape = 'f32[8,64]{1,0:T(8,128)}', space=vmem, size = 0x1000, scoped, tag = 'scratch operand']
  #allocation4 [shape = 'f32[32,256]{1,0:T(8,128)}', space=vmem, size = 0x8000, scoped, tag = 'scratch operand']
  #allocation5 [shape = 'f32[32,256]{1,0:T(8,128)}', space=vmem, size = 0x8000, scoped, tag = 'scratch operand']
  %s0 = inlined_call_operand.vmem [shape: f32[64,32], index: 0, kind: input, shape index: {}, may-alias: {0,1}]
  %s1 = inlined_call_operand.vmem [shape: f32[64,32], index: 1, kind: input, shape index: {}, may-alias: {0,1}]
  %s2 = inlined_call_operand.hbm [shape: f32[32,256], index: 2, kind: input, shape index: {}]
  %s3 = inlined_call_operand.hbm [shape: f32[32,256], index: 3, kind: input, shape index: {}]
  %s4 = inlined_call_operand.vmem [shape: f32[1,256], index: 4, kind: input, shape index: {}]
  %s5 = inlined_call_operand.hbm [shape: f32[64,256], index: 5, kind: input, shape index: {}]
  %s6 = inlined_call_operand.vmem [shape: f32[64,32], index: 6, kind: output, shape index: {0}]
  %s7 = inlined_call_operand.vmem [shape: f32[64,32], index: 7, kind: output, shape index: {1}]
  %8 = xla_tuple %s6, %s7
  %s9 = sld [smem:[#allocation0]]
  $region81: #{text_encoder_forward.4} parent=0
    _
  %s11 = ssub.s32 1, %s9
  %s12 = scalar_select 0, %s11, %s9
  $region1: #{text_encoder_forward.4} parent=0
    #allocation6 [shape = 'u8[32768]{0}', space=vmem, size = 0x8000, scoped, tag = 'input window, operand 2, single buffered']
    #allocation7 [shape = 's32[2]{0}', space=sflag, size = 0x8, scoped, tag = 'scoped memory for text_encoder_forward.4']
    #allocation8 [shape = 'u8[32768]{0}', space=vmem, size = 0x8000, scoped, tag = 'input window, operand 3, single buffered']
    #allocation9 [shape = 's32[1]{0}', space=sflag, size = 0x4, scoped, tag = 'scoped memory for text_encoder_forward.4']
    #allocation10 [shape = 'u8[65536]{0}', space=vmem, size = 0x10000, scoped, tag = 'input window, operand 5, single buffered']
    %13 = vsyncpa [#allocation7], 0
    %14 = vsyncpa [#allocation9], 0
    loop: start=0, step=1, limit=4
    $region2: #{text_encoder_forward.4} parent=1 // loop_pre_header
      _
    $region3: #{text_encoder_forward.4} parent=1 // loop_header
      %s16 = sphi 0, %s20
      %p17 = scmp.ge.s32.totalorder %s16, 4
      %s26 = sphi 0, %s28
      %s29 = sphi 0, %s26
      %s30 = sphi 0, %s29
      %s46 = sphi 0, %s30
      %s54 = sphi 0, %s56
      %s57 = sphi 0, %s54
      %s58 = sphi 0, %s57
      %s74 = sphi 0, %s58
      %s78 = sphi 0, %s78
      %s80 = sphi 0, %s78
      %s81 = sphi 0, %s80
      %s95 = sphi 0, %s81
      %s99 = sphi 0, %s99
      %s101 = sphi 0, %s99
      %s102 = sphi 0, %s101
      %s116 = sphi 0, %s102
      %s120 = sphi 0, %s120
      %s122 = sphi 0, %s120
      %s123 = sphi 0, %s122
      %s137 = sphi 0, %s123
      %s141 = sphi 0, %s141
      %s143 = sphi 0, %s141
      %s144 = sphi 0, %s143
      %s158 = sphi 0, %s144
      %s164 = sphi 0, %s166
      %s167 = sphi 0, %s164
      %s168 = sphi 0, %s167
      %s184 = sphi 0, %s168
      %s192 = sphi 0, %s194
      %s195 = sphi 0, %s192
      %s196 = sphi 0, %s195
      %s212 = sphi 0, %s196
    $region4: #{text_encoder_forward.4} parent=1 // loop_header_branch
      %19 = sbr.rel (%p17) target = $region8
    $region5: #{text_encoder_forward.4} parent=1 // loop_body
      %s21 = ssub.s32 %s16, 1
      %s22 = ssub.s32 %s16, 2
      %s23 = sadd.s32 %s16, 1
      %s24 = ssub.s32 %s16, %s23
      %p25 = scmp.eq.s32.totalorder %s24, 0
      %s27 = sadd.s32 %s26, 1
      %s28 = scalar_select %p25, %s26, %s27
      %p31 = pneg %p25
      %p32 = scmp.eq.s32.totalorder %s16, 1
      %p33 = por %p31, %p32
      %p34 = scmp.ne.s32.totalorder %s26, %s29
      %p35 = scmp.eq.s32.totalorder %s16, 0
      %p36 = por %p34, %p35
      %p37 = scmp.ne.s32.totalorder %s26, %s29
      %p38 = scmp.eq.s32.totalorder %s21, 1
      %p39 = por %p37, %p38
      %p40 = scmp.ne.s32.totalorder %s29, %s30
      %p41 = scmp.eq.s32.totalorder %s21, 0
      %p42 = por %p40, %p41
      %p43 = scmp.ne.s32.totalorder %s29, %s30
      %p44 = scmp.eq.s32.totalorder %s22, 1
      %p45 = por %p43, %p44
      %p47 = scmp.ne.s32.totalorder %s30, %s46
      %p48 = scmp.eq.s32.totalorder %s22, 0
      %p49 = por %p47, %p48
      %s50 = ssub.s32 1, %s16
      %s51 = ssub.s32 1, %s23
      %s52 = ssub.s32 %s50, %s51
      %p53 = scmp.eq.s32.totalorder %s52, 0
      %s55 = sadd.s32 %s54, 1
      %s56 = scalar_select %p53, %s54, %s55
      %p59 = pneg %p53
      %p60 = scmp.eq.s32.totalorder %s16, 1
      %p61 = por %p59, %p60
      %p62 = scmp.ne.s32.totalorder %s54, %s57
      %p63 = scmp.eq.s32.totalorder %s16, 0
      %p64 = por %p62, %p63
      %p65 = scmp.ne.s32.totalorder %s54, %s57
      %p66 = scmp.eq.s32.totalorder %s21, 1
      %p67 = por %p65, %p66
      %p68 = scmp.ne.s32.totalorder %s57, %s58
      %p69 = scmp.eq.s32.totalorder %s21, 0
      %p70 = por %p68, %p69
      %p71 = scmp.ne.s32.totalorder %s57, %s58
      %p72 = scmp.eq.s32.totalorder %s22, 1
      %p73 = por %p71, %p72
      %p75 = scmp.ne.s32.totalorder %s58, %s74
      %p76 = scmp.eq.s32.totalorder %s22, 0
      %p77 = por %p75, %p76
      %s79 = sadd.s32 %s78, 1
      %p82 = scmp.eq.s32.totalorder %s16, 1
      %p83 = scmp.ne.s32.totalorder %s78, %s80
      %p84 = scmp.eq.s32.totalorder %s16, 0
      %p85 = por %p83, %p84
      %p86 = scmp.ne.s32.totalorder %s78, %s80
      %p87 = scmp.eq.s32.totalorder %s21, 1
      %p88 = por %p86, %p87
      %p89 = scmp.ne.s32.totalorder %s80, %s81
      %p90 = scmp.eq.s32.totalorder %s21, 0
      %p91 = por %p89, %p90
      %p92 = scmp.ne.s32.totalorder %s80, %s81
      %p93 = scmp.eq.s32.totalorder %s22, 1
      %p94 = por %p92, %p93
      %p96 = scmp.ne.s32.totalorder %s81, %s95
      %p97 = scmp.eq.s32.totalorder %s22, 0
      %p98 = por %p96, %p97
      %s100 = sadd.s32 %s99, 1
      %p103 = scmp.eq.s32.totalorder %s16, 1
      %p104 = scmp.ne.s32.totalorder %s99, %s101
      %p105 = scmp.eq.s32.totalorder %s16, 0
      %p106 = por %p104, %p105
      %p107 = scmp.ne.s32.totalorder %s99, %s101
      %p108 = scmp.eq.s32.totalorder %s21, 1
      %p109 = por %p107, %p108
      %p110 = scmp.ne.s32.totalorder %s101, %s102
      %p111 = scmp.eq.s32.totalorder %s21, 0
      %p112 = por %p110, %p111
      %p113 = scmp.ne.s32.totalorder %s101, %s102
      %p114 = scmp.eq.s32.totalorder %s22, 1
      %p115 = por %p113, %p114
      %p117 = scmp.ne.s32.totalorder %s102, %s116
      %p118 = scmp.eq.s32.totalorder %s22, 0
      %p119 = por %p117, %p118
      %s121 = sadd.s32 %s120, 1
      %p124 = scmp.eq.s32.totalorder %s16, 1
      %p125 = scmp.ne.s32.totalorder %s120, %s122
      %p126 = scmp.eq.s32.totalorder %s16, 0
      %p127 = por %p125, %p126
      %p128 = scmp.ne.s32.totalorder %s120, %s122
      %p129 = scmp.eq.s32.totalorder %s21, 1
      %p130 = por %p128, %p129
      %p131 = scmp.ne.s32.totalorder %s122, %s123
      %p132 = scmp.eq.s32.totalorder %s21, 0
      %p133 = por %p131, %p132
      %p134 = scmp.ne.s32.totalorder %s122, %s123
      %p135 = scmp.eq.s32.totalorder %s22, 1
      %p136 = por %p134, %p135
      %p138 = scmp.ne.s32.totalorder %s123, %s137
      %p139 = scmp.eq.s32.totalorder %s22, 0
      %p140 = por %p138, %p139
      %s142 = sadd.s32 %s141, 1
      %p145 = scmp.eq.s32.totalorder %s16, 1
      %p146 = scmp.ne.s32.totalorder %s141, %s143
      %p147 = scmp.eq.s32.totalorder %s16, 0
      %p148 = por %p146, %p147
      %p149 = scmp.ne.s32.totalorder %s141, %s143
      %p150 = scmp.eq.s32.totalorder %s21, 1
      %p151 = por %p149, %p150
      %p152 = scmp.ne.s32.totalorder %s143, %s144
      %p153 = scmp.eq.s32.totalorder %s21, 0
      %p154 = por %p152, %p153
      %p155 = scmp.ne.s32.totalorder %s143, %s144
      %p156 = scmp.eq.s32.totalorder %s22, 1
      %p157 = por %p155, %p156
      %p159 = scmp.ne.s32.totalorder %s144, %s158
      %p160 = scmp.eq.s32.totalorder %s22, 0
      %p161 = por %p159, %p160
      %s162 = ssub.s32 %s16, %s23
      %p163 = scmp.eq.s32.totalorder %s162, 0
      %s165 = sadd.s32 %s164, 1
      %s166 = scalar_select %p163, %s164, %s165
      %p169 = pneg %p163
      %p170 = scmp.eq.s32.totalorder %s16, 1
      %p171 = por %p169, %p170
      %p172 = scmp.ne.s32.totalorder %s164, %s167
      %p173 = scmp.eq.s32.totalorder %s16, 0
      %p174 = por %p172, %p173
      %p175 = scmp.ne.s32.totalorder %s164, %s167
      %p176 = scmp.eq.s32.totalorder %s21, 1
      %p177 = por %p175, %p176
      %p178 = scmp.ne.s32.totalorder %s167, %s168
      %p179 = scmp.eq.s32.totalorder %s21, 0
      %p180 = por %p178, %p179
      %p181 = scmp.ne.s32.totalorder %s167, %s168
      %p182 = scmp.eq.s32.totalorder %s22, 1
      %p183 = por %p181, %p182
      %p185 = scmp.ne.s32.totalorder %s168, %s184
      %p186 = scmp.eq.s32.totalorder %s22, 0
      %p187 = por %p185, %p186
      %s188 = ssub.s32 1, %s16
      %s189 = ssub.s32 1, %s23
      %s190 = ssub.s32 %s188, %s189
      %p191 = scmp.eq.s32.totalorder %s190, 0
      %s193 = sadd.s32 %s192, 1
      %s194 = scalar_select %p191, %s192, %s193
      %p197 = pneg %p191
      %p198 = scmp.eq.s32.totalorder %s16, 1
      %p199 = por %p197, %p198
      %p200 = scmp.ne.s32.totalorder %s192, %s195
      %p201 = scmp.eq.s32.totalorder %s16, 0
      %p202 = por %p200, %p201
      %p203 = scmp.ne.s32.totalorder %s192, %s195
      %p204 = scmp.eq.s32.totalorder %s21, 1
      %p205 = por %p203, %p204
      %p206 = scmp.ne.s32.totalorder %s195, %s196
      %p207 = scmp.eq.s32.totalorder %s21, 0
      %p208 = por %p206, %p207
      %p209 = scmp.ne.s32.totalorder %s195, %s196
      %p210 = scmp.eq.s32.totalorder %s22, 1
      %p211 = por %p209, %p210
      %p213 = scmp.ne.s32.totalorder %s196, %s212
      %p214 = scmp.eq.s32.totalorder %s22, 0
      %p215 = por %p213, %p214
      %p216 = scmp.le.s32.totalorder 1, %s16
      %p217 = scmp.lt.s32.totalorder %s16, 3
      %p218 = pnand %p216, %p217
      %p219 = pneg %p218
      // Predicated region
      $region9: #{text_encoder_forward.4} parent=5 // pred_check
        _
      $region10: #{text_encoder_forward.4} parent=5 // pred_check_branch
        %221 = sbr.rel (%p218) target = $region12
      $region11: #{text_encoder_forward.4} parent=5 // pred_region
        %s222 = ssub.s32 %s16, 1
        // Predicated region
        $region13: #{text_encoder_forward.4} parent=11 // pred_check
          %p223 = pneg %p91
        $region14: #{text_encoder_forward.4} parent=11 // pred_check_branch
          %225 = sbr.rel (%p223) target = $region16
        $region15: #{text_encoder_forward.4} parent=11 // pred_region
          %227 = vsyncadd [#allocation7], 0
          %s228 = sshll.u32 %s2, 4
          %s229 = int_to_ptr.hbm [resolvable:$true] %s228
          %s230 = sshll.u32 [#allocation6], 4
          %s231 = int_to_ptr.vmem [resolvable:$true] %s230
          %236 = dma.hbm_to_vmem [thread:$0]  %s229, 1024, %s231, [#allocation7], 256, 256, 16
        $region16: #{text_encoder_forward.4} parent=11 // pred_fallthru
          _
        // Predicated region
        $region17: #{text_encoder_forward.4} parent=11 // pred_check
          %p237 = pneg %p112
        $region18: #{text_encoder_forward.4} parent=11 // pred_check_branch
          %239 = sbr.rel (%p237) target = $region20
        $region19: #{text_encoder_forward.4} parent=11 // pred_region
          %241 = vsyncadd [#allocation9], 0
          %s242 = sshll.u32 %s3, 4
          %s243 = int_to_ptr.hbm [resolvable:$true] %s242
          %s244 = sshll.u32 [#allocation8], 4
          %s245 = int_to_ptr.vmem [resolvable:$true] %s244
          %250 = dma.hbm_to_vmem [thread:$0]  %s243, 1024, %s245, [#allocation9], 256, 256, 16
        $region20: #{text_encoder_forward.4} parent=11 // pred_fallthru
          _
        // Predicated region
        $region21: #{text_encoder_forward.4} parent=11 // pred_check
          %p251 = pneg %p133
        $region22: #{text_encoder_forward.4} parent=11 // pred_check_branch
          %253 = sbr.rel (%p251) target = $region24
        $region23: #{text_encoder_forward.4} parent=11 // pred_region
          _
        $region24: #{text_encoder_forward.4} parent=11 // pred_fallthru
          _
        // Predicated region
        $region25: #{text_encoder_forward.4} parent=11 // pred_check
          %p254 = pneg %p154
        $region26: #{text_encoder_forward.4} parent=11 // pred_check_branch
          %256 = sbr.rel (%p254) target = $region28
        $region27: #{text_encoder_forward.4} parent=11 // pred_region
          %258 = vsyncadd [#allocation9], 0
          %s259 = sshll.u32 %s5, 4
          %s260 = int_to_ptr.hbm [resolvable:$true] %s259
          %s261 = sshll.u32 [#allocation10], 4
          %s262 = int_to_ptr.vmem [resolvable:$true] %s261
          %267 = dma.hbm_to_vmem [thread:$0]  %s260, 2048, %s262, [#allocation9], 256, 256, 16
        $region28: #{text_encoder_forward.4} parent=11 // pred_fallthru
          _
      $region12: #{text_encoder_forward.4} parent=5 // pred_fallthru
        _
      %p268 = scmp.lt.s32.totalorder %s16, 2
      // Predicated region
      $region29: #{text_encoder_forward.4} parent=5 // pred_check
        %p269 = pneg %p268
      $region30: #{text_encoder_forward.4} parent=5 // pred_check_branch
        %271 = sbr.rel (%p269) target = $region32
      $region31: #{text_encoder_forward.4} parent=5 // pred_region
        // Predicated region
        $region33: #{text_encoder_forward.4} parent=31 // pred_check
          %p272 = pneg %p36
        $region34: #{text_encoder_forward.4} parent=31 // pred_check_branch
          %274 = sbr.rel (%p272) target = $region36
        $region35: #{text_encoder_forward.4} parent=31 // pred_region
          %s275 = smul.u32 4, %s16
          %p276 = scmp.lt.s32.totalorder %s275, 7
          %s277 = scalar_select %p276, %s275, 7
          %s278 = smul.addr %s277, 8
          %s279 = scalar_lea.vmem %s0, %s278
          %s280 = smul.u32 4, %s16
        $region36: #{text_encoder_forward.4} parent=31 // pred_fallthru
          _
        // Predicated region
        $region37: #{text_encoder_forward.4} parent=31 // pred_check
          %p281 = pneg %p64
        $region38: #{text_encoder_forward.4} parent=31 // pred_check_branch
          %283 = sbr.rel (%p281) target = $region40
        $region39: #{text_encoder_forward.4} parent=31 // pred_region
          %s284 = ssub.s32 1, %s16
          %s285 = smul.u32 4, %s284
          %p286 = scmp.lt.s32.totalorder %s285, 7
          %s287 = scalar_select %p286, %s285, 7
          %s288 = smul.addr %s287, 8
          %s289 = scalar_lea.vmem %s1, %s288
          %s290 = ssub.s32 1, %s16
          %s291 = smul.u32 4, %s290
        $region40: #{text_encoder_forward.4} parent=31 // pred_fallthru
          _
      $region32: #{text_encoder_forward.4} parent=5 // pred_fallthru
        _
      %p292 = scmp.le.s32.totalorder 1, %s16
      %p293 = scmp.lt.s32.totalorder %s16, 3
      %p294 = pnand %p292, %p293
      %p295 = pneg %p294
      // Predicated region
      $region41: #{text_encoder_forward.4} parent=5 // pred_check
        _
      $region42: #{text_encoder_forward.4} parent=5 // pred_check_branch
        %297 = sbr.rel (%p294) target = $region44
      $region43: #{text_encoder_forward.4} parent=5 // pred_region
        %s298 = ssub.s32 %s16, 1
        // Predicated region
        $region45: #{text_encoder_forward.4} parent=43 // pred_check
          %p299 = pneg %p91
        $region46: #{text_encoder_forward.4} parent=43 // pred_check_branch
          %301 = sbr.rel (%p299) target = $region48
        $region47: #{text_encoder_forward.4} parent=43 // pred_region
          %303 = dma.done [#allocation7], 1024
        $region48: #{text_encoder_forward.4} parent=43 // pred_fallthru
          _
        // Predicated region
        $region49: #{text_encoder_forward.4} parent=43 // pred_check
          %p304 = pneg %p112
        $region50: #{text_encoder_forward.4} parent=43 // pred_check_branch
          %306 = sbr.rel (%p304) target = $region52
        $region51: #{text_encoder_forward.4} parent=43 // pred_region
          %308 = dma.done [#allocation9], 1024
        $region52: #{text_encoder_forward.4} parent=43 // pred_fallthru
          _
        // Predicated region
        $region53: #{text_encoder_forward.4} parent=43 // pred_check
          %p309 = pneg %p154
        $region54: #{text_encoder_forward.4} parent=43 // pred_check_branch
          %311 = sbr.rel (%p309) target = $region56
        $region55: #{text_encoder_forward.4} parent=43 // pred_region
          %313 = dma.done [#allocation9], 2048
        $region56: #{text_encoder_forward.4} parent=43 // pred_fallthru
          _
        %s314 = smul.u32 4, %s21
        %p315 = scmp.lt.s32.totalorder %s314, 7
        %s316 = scalar_select %p315, %s314, 7
        %s317 = smul.addr %s316, 8
        %s318 = scalar_lea.vmem %s0, %s317
        %p319 = pneg %p42
        %p320 = pneg %p39
        %s321 = ssub.s32 1, %s21
        %s322 = smul.u32 4, %s321
        %p323 = scmp.lt.s32.totalorder %s322, 7
        %s324 = scalar_select %p323, %s322, 7
        %s325 = smul.addr %s324, 8
        %s326 = scalar_lea.vmem %s1, %s325
        %p327 = pneg %p70
        %p328 = pneg %p67
        %p329 = pneg %p91
        %p330 = pneg %p88
        %p331 = pneg %p112
        %p332 = pneg %p109
        %p333 = pneg %p133
        %p334 = pneg %p130
        %p335 = pneg %p154
        %p336 = pneg %p151
        %p337 = pneg %p180
        %p338 = pneg %p177
        %s339 = smul.u32 4, %s21
        %p340 = scmp.lt.s32.totalorder %s339, 7
        %s341 = scalar_select %p340, %s339, 7
        %s342 = smul.addr %s341, 8
        %s343 = scalar_lea.vmem %s6, %s342
        %p344 = pneg %p208
        %p345 = pneg %p205
        %s346 = ssub.s32 1, %s21
        %s347 = smul.u32 4, %s346
        %p348 = scmp.lt.s32.totalorder %s347, 7
        %s349 = scalar_select %p348, %s347, 7
        %s350 = smul.addr %s349, 8
        %s351 = scalar_lea.vmem %s7, %s350
        %s352 = smul.u32 4, %s21
        %p353 = scmp.lt.s32.totalorder %s352, 7
        %s354 = scalar_select %p353, %s352, 7
        %s355 = smul.addr %s354, 8
        %s356 = scalar_lea.vmem %s0, %s355
        %s357 = smul.u32 4, %s21
        %s358 = ssub.s32 1, %s21
        %s359 = smul.u32 4, %s358
        %p360 = scmp.lt.s32.totalorder %s359, 7
        %s361 = scalar_select %p360, %s359, 7
        %s362 = smul.addr %s361, 8
        %s363 = scalar_lea.vmem %s1, %s362
        %s364 = ssub.s32 1, %s21
        %s365 = smul.u32 4, %s364
        %s366 = smul.u32 4, %s21
        %p367 = scmp.lt.s32.totalorder %s366, 7
        %s368 = scalar_select %p367, %s366, 7
        %s369 = smul.addr %s368, 8
        %s370 = scalar_lea.vmem %s6, %s369
        %s371 = smul.u32 4, %s21
        %s372 = ssub.s32 1, %s21
        %s373 = smul.u32 4, %s372
        %p374 = scmp.lt.s32.totalorder %s373, 7
        %s375 = scalar_select %p374, %s373, 7
        %s376 = smul.addr %s375, 8
        %s377 = scalar_lea.vmem %s7, %s376
        %s378 = ssub.s32 1, %s21
        %s379 = smul.u32 4, %s378
        %p380 = scmp.eq.s32.totalorder %s21, 0
        // Predicated region
        $region57: #{text_encoder_forward.4} parent=43 // pred_check
          %p381 = pneg %p380
        $region58: #{text_encoder_forward.4} parent=43 // pred_check_branch
          %383 = sbr.rel (%p381) target = $region60
        $region59: #{text_encoder_forward.4} parent=43 // pred_region
          %vm384 = vcmask 523264
          %385 = vst.msk [vmem:[#allocation2] sm:$0xff] %vm384, 0.0
          %386 = vst.msk [vmem:[#allocation3] sm:$0xff] %vm384, 0.0
        $region60: #{text_encoder_forward.4} parent=43 // pred_fallthru
          _
        %v387 = vld [vmem:[%s4] sm:$0x3]
        %v388 = vld [vmem:[%s356] sm:$0xff]
        %v389 = vld [vmem:[%s356 + $0x8] sm:$0xff]
        %v390 = vld [vmem:[%s356 + $0x10] sm:$0xff]
        %v391 = vld [vmem:[%s356 + $0x18] sm:$0xff]
        %v392 = vld [vmem:[#allocation6] sm:$0xff]
        %v393 = vld [vmem:[#allocation6 + $0x8] sm:$0xff]
        %v394 = vld [vmem:[#allocation6 + $0x10] sm:$0xff]
        %v395 = vld [vmem:[#allocation6 + $0x18] sm:$0xff]
        %v396 = vld [vmem:[#allocation6 + $0x20] sm:$0xff]
        %v397 = vld [vmem:[#allocation6 + $0x28] sm:$0xff]
        %v398 = vld [vmem:[#allocation6 + $0x30] sm:$0xff]
        %v399 = vld [vmem:[#allocation6 + $0x38] sm:$0xff]
        %vm400 = vcmask 261120
        %v402 = vsel %vm400, %v388, 0
        %v405 = vsel %vm400, %v389, 0
        %v408 = vsel %vm400, %v390, 0
        %v411 = vsel %vm400, %v391, 0
        %413 = vmatpush.msra.mxu0 0.0
        %414 = vmatpush.msra.mxu0 0.0
        %415 = vmatpush.msra.mxu0 0.0
        %416 = vmatpush.msra.mxu0 0.0
        %417 = vmatpush.msra.mxu0 0.0
        %418 = vmatpush.msra.mxu0 0.0
        %419 = vmatpush.msra.mxu0 0.0
        %420 = vmatpush.msra.mxu0 0.0
        %421 = vmatpush.msra.mxu0 0.0
        %422 = vmatpush.msra.mxu0 0.0
        %423 = vmatpush.msra.mxu0 0.0
        %424 = vmatpush.msra.mxu0 0.0
        %425 = vmatpush.msra.mxu0 %v398
        %426 = vmatpush.msra.mxu0 %v396
        %427 = vmatpush.msra.mxu0 %v394
        %428 = vmatpush.msra.mxu0 %v392
        %429 = vmatmul.f32.gmra.mxu0 %v402
        %v430 = vpop.f32.mrf.mxu0
        %v431 = vadd.f32 0.0, %v430
        %432 = vmatmul.f32.gmra.mxu0 %v405
        %v433 = vpop.f32.mrf.mxu0
        %v434 = vadd.f32 0.0, %v433
        %435 = vmatmul.f32.gmra.mxu0 %v408
        %v436 = vpop.f32.mrf.mxu0
        %v437 = vadd.f32 0.0, %v436
        %438 = vmatmul.f32.gmra.mxu0 %v411
        %v439 = vpop.f32.mrf.mxu0
        %v440 = vadd.f32 0.0, %v439
        %441 = vdwg.mxu0
        %442 = vmatpush.msra.mxu0 0.0
        %443 = vmatpush.msra.mxu0 0.0
        %444 = vmatpush.msra.mxu0 0.0
        %445 = vmatpush.msra.mxu0 0.0
        %446 = vmatpush.msra.mxu0 0.0
        %447 = vmatpush.msra.mxu0 0.0
        %448 = vmatpush.msra.mxu0 0.0
        %449 = vmatpush.msra.mxu0 0.0
        %450 = vmatpush.msra.mxu0 0.0
        %451 = vmatpush.msra.mxu0 0.0
        %452 = vmatpush.msra.mxu0 0.0
        %453 = vmatpush.msra.mxu0 0.0
        %454 = vmatpush.msra.mxu0 %v399
        %455 = vmatpush.msra.mxu0 %v397
        %456 = vmatpush.msra.mxu0 %v395
        %457 = vmatpush.msra.mxu0 %v393
        %458 = vmatmul.f32.gmra.mxu0 %v402
        %v459 = vpop.f32.mrf.mxu0
        %v460 = vadd.f32 0.0, %v459
        %461 = vmatmul.f32.gmra.mxu0 %v405
        %v462 = vpop.f32.mrf.mxu0
        %v463 = vadd.f32 0.0, %v462
        %464 = vmatmul.f32.gmra.mxu0 %v408
        %v465 = vpop.f32.mrf.mxu0
        %v466 = vadd.f32 0.0, %v465
        %467 = vmatmul.f32.gmra.mxu0 %v411
        %v468 = vpop.f32.mrf.mxu0
        %v469 = vadd.f32 0.0, %v468
        %470 = vdwg.mxu0
        %v472 = vperm.slane %v387, 0
        %v473 = vperm.slane %v387, 1
        %v476 = vadd.f32 %v472, %v431
        %v477 = vadd.f32 %v473, %v460
        %v478 = vadd.f32 %v472, %v434
        %v479 = vadd.f32 %v473, %v463
        %v480 = vadd.f32 %v472, %v437
        %v481 = vadd.f32 %v473, %v466
        %v482 = vadd.f32 %v472, %v440
        %v483 = vadd.f32 %v473, %v469
        %484 = vst [vmem:[#allocation4] sm:$0xff] %v476
        %485 = vst [vmem:[#allocation4 + $0x8] sm:$0xff] %v477
        %486 = vst [vmem:[#allocation4 + $0x10] sm:$0xff] %v478
        %487 = vst [vmem:[#allocation4 + $0x18] sm:$0xff] %v479
        %488 = vst [vmem:[#allocation4 + $0x20] sm:$0xff] %v480
        %489 = vst [vmem:[#allocation4 + $0x28] sm:$0xff] %v481
        %490 = vst [vmem:[#allocation4 + $0x30] sm:$0xff] %v482
        %491 = vst [vmem:[#allocation4 + $0x38] sm:$0xff] %v483
        %v492 = vld [vmem:[%s363] sm:$0xff]
        %v493 = vld [vmem:[%s363 + $0x8] sm:$0xff]
        %v494 = vld [vmem:[%s363 + $0x10] sm:$0xff]
        %v495 = vld [vmem:[%s363 + $0x18] sm:$0xff]
        %v496 = vld [vmem:[#allocation8] sm:$0xff]
        %v497 = vld [vmem:[#allocation8 + $0x8] sm:$0xff]
        %v498 = vld [vmem:[#allocation8 + $0x10] sm:$0xff]
        %v499 = vld [vmem:[#allocation8 + $0x18] sm:$0xff]
        %v500 = vld [vmem:[#allocation8 + $0x20] sm:$0xff]
        %v501 = vld [vmem:[#allocation8 + $0x28] sm:$0xff]
        %v502 = vld [vmem:[#allocation8 + $0x30] sm:$0xff]
        %v503 = vld [vmem:[#allocation8 + $0x38] sm:$0xff]
        %v505 = vsel %vm400, %v492, 0
        %v508 = vsel %vm400, %v493, 0
        %v511 = vsel %vm400, %v494, 0
        %v514 = vsel %vm400, %v495, 0
        %516 = vmatpush.msra.mxu0 0.0
        %517 = vmatpush.msra.mxu0 0.0
        %518 = vmatpush.msra.mxu0 0.0
        %519 = vmatpush.msra.mxu0 0.0
        %520 = vmatpush.msra.mxu0 0.0
        %521 = vmatpush.msra.mxu0 0.0
        %522 = vmatpush.msra.mxu0 0.0
        %523 = vmatpush.msra.mxu0 0.0
        %524 = vmatpush.msra.mxu0 0.0
        %525 = vmatpush.msra.mxu0 0.0
        %526 = vmatpush.msra.mxu0 0.0
        %527 = vmatpush.msra.mxu0 0.0
        %528 = vmatpush.msra.mxu0 %v502
        %529 = vmatpush.msra.mxu0 %v500
        %530 = vmatpush.msra.mxu0 %v498
        %531 = vmatpush.msra.mxu0 %v496
        %532 = vmatmul.f32.gmra.mxu0 %v505
        %v533 = vpop.f32.mrf.mxu0
        %v534 = vadd.f32 0.0, %v533
        %535 = vmatmul.f32.gmra.mxu0 %v508
        %v536 = vpop.f32.mrf.mxu0
        %v537 = vadd.f32 0.0, %v536
        %538 = vmatmul.f32.gmra.mxu0 %v511
        %v539 = vpop.f32.mrf.mxu0
        %v540 = vadd.f32 0.0, %v539
        %541 = vmatmul.f32.gmra.mxu0 %v514
        %v542 = vpop.f32.mrf.mxu0
        %v543 = vadd.f32 0.0, %v542
        %544 = vdwg.mxu0
        %545 = vmatpush.msra.mxu0 0.0
        %546 = vmatpush.msra.mxu0 0.0
        %547 = vmatpush.msra.mxu0 0.0
        %548 = vmatpush.msra.mxu0 0.0
        %549 = vmatpush.msra.mxu0 0.0
        %550 = vmatpush.msra.mxu0 0.0
        %551 = vmatpush.msra.mxu0 0.0
        %552 = vmatpush.msra.mxu0 0.0
        %553 = vmatpush.msra.mxu0 0.0
        %554 = vmatpush.msra.mxu0 0.0
        %555 = vmatpush.msra.mxu0 0.0
        %556 = vmatpush.msra.mxu0 0.0
        %557 = vmatpush.msra.mxu0 %v503
        %558 = vmatpush.msra.mxu0 %v501
        %559 = vmatpush.msra.mxu0 %v499
        %560 = vmatpush.msra.mxu0 %v497
        %561 = vmatmul.f32.gmra.mxu0 %v505
        %v562 = vpop.f32.mrf.mxu0
        %v563 = vadd.f32 0.0, %v562
        %564 = vmatmul.f32.gmra.mxu0 %v508
        %v565 = vpop.f32.mrf.mxu0
        %v566 = vadd.f32 0.0, %v565
        %567 = vmatmul.f32.gmra.mxu0 %v511
        %v568 = vpop.f32.mrf.mxu0
        %v569 = vadd.f32 0.0, %v568
        %570 = vmatmul.f32.gmra.mxu0 %v514
        %v571 = vpop.f32.mrf.mxu0
        %v572 = vadd.f32 0.0, %v571
        %573 = vdwg.mxu0
        %574 = vst [vmem:[#allocation5] sm:$0xff] %v534
        %575 = vst [vmem:[#allocation5 + $0x8] sm:$0xff] %v563
        %576 = vst [vmem:[#allocation5 + $0x10] sm:$0xff] %v537
        %577 = vst [vmem:[#allocation5 + $0x18] sm:$0xff] %v566
        %578 = vst [vmem:[#allocation5 + $0x20] sm:$0xff] %v540
        %579 = vst [vmem:[#allocation5 + $0x28] sm:$0xff] %v569
        %580 = vst [vmem:[#allocation5 + $0x30] sm:$0xff] %v543
        %581 = vst [vmem:[#allocation5 + $0x38] sm:$0xff] %v572
        %v582 = vld [vmem:[#allocation10] sm:$0xff]
        %v583 = vld [vmem:[#allocation10 + $0x8] sm:$0xff]
        %v584 = vld [vmem:[#allocation10 + $0x10] sm:$0xff]
        %v585 = vld [vmem:[#allocation10 + $0x18] sm:$0xff]
        %v586 = vld [vmem:[#allocation10 + $0x20] sm:$0xff]
        %v587 = vld [vmem:[#allocation10 + $0x28] sm:$0xff]
        %v588 = vld [vmem:[#allocation10 + $0x30] sm:$0xff]
        %v589 = vld [vmem:[#allocation10 + $0x38] sm:$0xff]
        %v590 = vld [vmem:[#allocation10 + $0x40] sm:$0xff]
        %v591 = vld [vmem:[#allocation10 + $0x48] sm:$0xff]
        %v592 = vld [vmem:[#allocation10 + $0x50] sm:$0xff]
        %v593 = vld [vmem:[#allocation10 + $0x58] sm:$0xff]
        %v594 = vld [vmem:[#allocation10 + $0x60] sm:$0xff]
        %v595 = vld [vmem:[#allocation10 + $0x68] sm:$0xff]
        %v596 = vld [vmem:[#allocation10 + $0x70] sm:$0xff]
        %v597 = vld [vmem:[#allocation10 + $0x78] sm:$0xff]
        %v598 = vlaneseq
        %v599 = vand.u32 %v598, 127
        %v600 = vadd.s32 %v599, 128
        %vm601 = vcmp.ge.s32.totalorder %v599, 128
        %vm602 = vcmp.ge.s32.totalorder %v600, 128
        %vm603 = vcmp.lt.s32.totalorder %v599, 192
        %vm604 = vcmp.lt.s32.totalorder %v600, 192
        %vm605 = vmand %vm601, %vm603
        %vm606 = vmand %vm602, %vm604
        %v607 = vld [vmem:[#allocation2] sm:$0xff]
        %v608 = vld [vmem:[#allocation3] sm:$0xff]
        %v609 = vld [vmem:[#allocation4] sm:$0xff]
        %v610 = vld [vmem:[#allocation4 + $0x8] sm:$0xff]
        %v611 = vld [vmem:[#allocation5 + $0x30] sm:$0xff]
        %v612 = vld [vmem:[#allocation5 + $0x38] sm:$0xff]
        %v613 = vadd.f32 %v609, %v611
        %v614 = vadd.f32 %v610, %v612
        %vm615 = vcmask 523264
        %v617 = vsel %vm615, %v607, 0
        %619 = vmatpush.msra.mxu0 0.0
        %620 = vmatpush.msra.mxu0 0.0
        %621 = vmatpush.msra.mxu0 0.0
        %622 = vmatpush.msra.mxu0 0.0
        %623 = vmatpush.msra.mxu0 0.0
        %624 = vmatpush.msra.mxu0 0.0
        %625 = vmatpush.msra.mxu0 0.0
        %626 = vmatpush.msra.mxu0 0.0
        %627 = vmatpush.msra.mxu0 %v596
        %628 = vmatpush.msra.mxu0 %v594
        %629 = vmatpush.msra.mxu0 %v592
        %630 = vmatpush.msra.mxu0 %v590
        %631 = vmatpush.msra.mxu0 %v588
        %632 = vmatpush.msra.mxu0 %v586
        %633 = vmatpush.msra.mxu0 %v584
        %634 = vmatpush.msra.mxu0 %v582
        %635 = vmatmul.f32.gmra.mxu0 %v617
        %v636 = vpop.f32.mrf.mxu0
        %v637 = vadd.f32 0.0, %v636
        %638 = vdwg.mxu0
        %639 = vmatpush.msra.mxu0 0.0
        %640 = vmatpush.msra.mxu0 0.0
        %641 = vmatpush.msra.mxu0 0.0
        %642 = vmatpush.msra.mxu0 0.0
        %643 = vmatpush.msra.mxu0 0.0
        %644 = vmatpush.msra.mxu0 0.0
        %645 = vmatpush.msra.mxu0 0.0
        %646 = vmatpush.msra.mxu0 0.0
        %647 = vmatpush.msra.mxu0 %v597
        %648 = vmatpush.msra.mxu0 %v595
        %649 = vmatpush.msra.mxu0 %v593
        %650 = vmatpush.msra.mxu0 %v591
        %651 = vmatpush.msra.mxu0 %v589
        %652 = vmatpush.msra.mxu0 %v587
        %653 = vmatpush.msra.mxu0 %v585
        %654 = vmatpush.msra.mxu0 %v583
        %655 = vmatmul.f32.gmra.mxu0 %v617
        %v656 = vpop.f32.mrf.mxu0
        %v657 = vadd.f32 0.0, %v656
        %658 = vdwg.mxu0
        %v659 = vadd.f32 %v613, %v637
        %v660 = vadd.f32 %v614, %v657
        %v661 = vtanh.pop %v659
        %v662 = vtanh.pop %v660
        %v663 = vxor.u32 %v659, 2147483648
        %v664 = vxor.u32 %v660, 2147483648
        %v665 = vmul.f32 %v663, 1.442695
        %v666 = vpow.pop %v665
        %v667 = vmul.f32 %v664, 1.442695
        %v668 = vpow.pop %v667
        %v669 = vadd.f32 %v666, 1.0
        %v670 = vadd.f32 %v668, 1.0
        %v671 = vrcp.pop %v669
        %v672 = vmul.f32 %v669, %v671
        %v673 = vsub.f32 1.0, %v672
        %v674 = vmul.f32 %v671, %v673
        %v675 = vadd.f32 %v671, %v674
        %vm676 = vweird.f32 %v669
        %vm677 = vweird.f32 %v671
        %vm678 = vmor %vm676, %vm677
        %v679 = vsel %vm678, %v671, %v675
        %v680 = vand.u32 2147483647, %v669
        %vm681 = vcmp.eq.f32.partialorder %v680, 8.507059e+37
        %v682 = vand.u32 %v669, 2147483648
        %v683 = vor.u32 1.1754944e-38, %v682
        %v684 = vsel %vm681, %v683, %v679
        %v685 = vmul.f32 1.0, %v684
        %v686 = vrcp.pop %v670
        %v687 = vmul.f32 %v670, %v686
        %v688 = vsub.f32 1.0, %v687
        %v689 = vmul.f32 %v686, %v688
        %v690 = vadd.f32 %v686, %v689
        %vm691 = vweird.f32 %v670
        %vm692 = vweird.f32 %v686
        %vm693 = vmor %vm691, %vm692
        %v694 = vsel %vm693, %v686, %v690
        %v695 = vand.u32 2147483647, %v670
        %vm696 = vcmp.eq.f32.partialorder %v695, 8.507059e+37
        %v697 = vand.u32 %v670, 2147483648
        %v698 = vor.u32 1.1754944e-38, %v697
        %v699 = vsel %vm696, %v698, %v694
        %v700 = vmul.f32 1.0, %v699
        %v701 = vsel %vm605, %v661, %v685
        %v702 = vsel %vm606, %v662, %v700
        %704 = vrot.lane.b32.xlu0 %v608, 64
        %v705 = vpop.permute.xlu0 %704
        %v707 = vmul.f32 %v701, %v705
        %v708 = vmul.f32 %v701, %v702
        %710 = vrot.lane.b32.xlu0 %v708, 64
        %v711 = vpop.permute.xlu0 %710
        %v713 = vadd.f32 %v707, %v711
        %v714 = vtanh.pop %v713
        %v715 = vmul.f32 %v702, %v714
        %717 = vrot.lane.b32.xlu0 %v715, 64
        %v718 = vpop.permute.xlu0 %717
        %720 = vst.msk [vmem:[%s370] sm:$0xff] %vm400, %v718
        %721 = vrot.lane.b32.xlu0 %v715, 32
        %v722 = vpop.permute.xlu0 %721
        %724 = vst.msk [vmem:[%s377 + $0x18] sm:$0xff] %vm400, %v722
        %v725 = vld [vmem:[#allocation4 + $0x10] sm:$0xff]
        %v726 = vld [vmem:[#allocation4 + $0x18] sm:$0xff]
        %v727 = vld [vmem:[#allocation5 + $0x20] sm:$0xff]
        %v728 = vld [vmem:[#allocation5 + $0x28] sm:$0xff]
        %v729 = vadd.f32 %v725, %v727
        %v730 = vadd.f32 %v726, %v728
        %v731 = vsel %vm615, %v718, 0
        %733 = vmatpush.msra.mxu0 0.0
        %734 = vmatpush.msra.mxu0 0.0
        %735 = vmatpush.msra.mxu0 0.0
        %736 = vmatpush.msra.mxu0 0.0
        %737 = vmatpush.msra.mxu0 0.0
        %738 = vmatpush.msra.mxu0 0.0
        %739 = vmatpush.msra.mxu0 0.0
        %740 = vmatpush.msra.mxu0 0.0
        %741 = vmatpush.msra.mxu0 %v596
        %742 = vmatpush.msra.mxu0 %v594
        %743 = vmatpush.msra.mxu0 %v592
        %744 = vmatpush.msra.mxu0 %v590
        %745 = vmatpush.msra.mxu0 %v588
        %746 = vmatpush.msra.mxu0 %v586
        %747 = vmatpush.msra.mxu0 %v584
        %748 = vmatpush.msra.mxu0 %v582
        %749 = vmatmul.f32.gmra.mxu0 %v731
        %v750 = vpop.f32.mrf.mxu0
        %v751 = vadd.f32 0.0, %v750
        %752 = vdwg.mxu0
        %753 = vmatpush.msra.mxu0 0.0
        %754 = vmatpush.msra.mxu0 0.0
        %755 = vmatpush.msra.mxu0 0.0
        %756 = vmatpush.msra.mxu0 0.0
        %757 = vmatpush.msra.mxu0 0.0
        %758 = vmatpush.msra.mxu0 0.0
        %759 = vmatpush.msra.mxu0 0.0
        %760 = vmatpush.msra.mxu0 0.0
        %761 = vmatpush.msra.mxu0 %v597
        %762 = vmatpush.msra.mxu0 %v595
        %763 = vmatpush.msra.mxu0 %v593
        %764 = vmatpush.msra.mxu0 %v591
        %765 = vmatpush.msra.mxu0 %v589
        %766 = vmatpush.msra.mxu0 %v587
        %767 = vmatpush.msra.mxu0 %v585
        %768 = vmatpush.msra.mxu0 %v583
        %769 = vmatmul.f32.gmra.mxu0 %v731
        %v770 = vpop.f32.mrf.mxu0
        %v771 = vadd.f32 0.0, %v770
        %772 = vdwg.mxu0
        %v773 = vadd.f32 %v729, %v751
        %v774 = vadd.f32 %v730, %v771
        %v775 = vtanh.pop %v773
        %v776 = vtanh.pop %v774
        %v777 = vxor.u32 %v773, 2147483648
        %v778 = vxor.u32 %v774, 2147483648
        %v779 = vmul.f32 %v777, 1.442695
        %v780 = vpow.pop %v779
        %v781 = vmul.f32 %v778, 1.442695
        %v782 = vpow.pop %v781
        %v783 = vadd.f32 %v780, 1.0
        %v784 = vadd.f32 %v782, 1.0
        %v785 = vrcp.pop %v783
        %v786 = vmul.f32 %v783, %v785
        %v787 = vsub.f32 1.0, %v786
        %v788 = vmul.f32 %v785, %v787
        %v789 = vadd.f32 %v785, %v788
        %vm790 = vweird.f32 %v783
        %vm791 = vweird.f32 %v785
        %vm792 = vmor %vm790, %vm791
        %v793 = vsel %vm792, %v785, %v789
        %v794 = vand.u32 2147483647, %v783
        %vm795 = vcmp.eq.f32.partialorder %v794, 8.507059e+37
        %v796 = vand.u32 %v783, 2147483648
        %v797 = vor.u32 1.1754944e-38, %v796
        %v798 = vsel %vm795, %v797, %v793
        %v799 = vmul.f32 1.0, %v798
        %v800 = vrcp.pop %v784
        %v801 = vmul.f32 %v784, %v800
        %v802 = vsub.f32 1.0, %v801
        %v803 = vmul.f32 %v800, %v802
        %v804 = vadd.f32 %v800, %v803
        %vm805 = vweird.f32 %v784
        %vm806 = vweird.f32 %v800
        %vm807 = vmor %vm805, %vm806
        %v808 = vsel %vm807, %v800, %v804
        %v809 = vand.u32 2147483647, %v784
        %vm810 = vcmp.eq.f32.partialorder %v809, 8.507059e+37
        %v811 = vand.u32 %v784, 2147483648
        %v812 = vor.u32 1.1754944e-38, %v811
        %v813 = vsel %vm810, %v812, %v808
        %v814 = vmul.f32 1.0, %v813
        %v815 = vsel %vm605, %v775, %v799
        %v816 = vsel %vm606, %v776, %v814
        %v817 = vmul.f32 %v815, %v713
        %v818 = vmul.f32 %v815, %v816
        %820 = vrot.lane.b32.xlu0 %v818, 64
        %v821 = vpop.permute.xlu0 %820
        %v823 = vadd.f32 %v817, %v821
        %v824 = vtanh.pop %v823
        %v825 = vmul.f32 %v816, %v824
        %827 = vrot.lane.b32.xlu0 %v825, 64
        %v828 = vpop.permute.xlu0 %827
        %830 = vst.msk [vmem:[%s370 + $0x8] sm:$0xff] %vm400, %v828
        %831 = vrot.lane.b32.xlu0 %v825, 32
        %v832 = vpop.permute.xlu0 %831
        %834 = vst.msk [vmem:[%s377 + $0x10] sm:$0xff] %vm400, %v832
        %v835 = vld [vmem:[#allocation4 + $0x20] sm:$0xff]
        %v836 = vld [vmem:[#allocation4 + $0x28] sm:$0xff]
        %v837 = vld [vmem:[#allocation5 + $0x10] sm:$0xff]
        %v838 = vld [vmem:[#allocation5 + $0x18] sm:$0xff]
        %v839 = vadd.f32 %v835, %v837
        %v840 = vadd.f32 %v836, %v838
        %v841 = vsel %vm615, %v828, 0
        %843 = vmatpush.msra.mxu0 0.0
        %844 = vmatpush.msra.mxu0 0.0
        %845 = vmatpush.msra.mxu0 0.0
        %846 = vmatpush.msra.mxu0 0.0
        %847 = vmatpush.msra.mxu0 0.0
        %848 = vmatpush.msra.mxu0 0.0
        %849 = vmatpush.msra.mxu0 0.0
        %850 = vmatpush.msra.mxu0 0.0
        %851 = vmatpush.msra.mxu0 %v596
        %852 = vmatpush.msra.mxu0 %v594
        %853 = vmatpush.msra.mxu0 %v592
        %854 = vmatpush.msra.mxu0 %v590
        %855 = vmatpush.msra.mxu0 %v588
        %856 = vmatpush.msra.mxu0 %v586
        %857 = vmatpush.msra.mxu0 %v584
        %858 = vmatpush.msra.mxu0 %v582
        %859 = vmatmul.f32.gmra.mxu0 %v841
        %v860 = vpop.f32.mrf.mxu0
        %v861 = vadd.f32 0.0, %v860
        %862 = vdwg.mxu0
        %863 = vmatpush.msra.mxu0 0.0
        %864 = vmatpush.msra.mxu0 0.0
        %865 = vmatpush.msra.mxu0 0.0
        %866 = vmatpush.msra.mxu0 0.0
        %867 = vmatpush.msra.mxu0 0.0
        %868 = vmatpush.msra.mxu0 0.0
        %869 = vmatpush.msra.mxu0 0.0
        %870 = vmatpush.msra.mxu0 0.0
        %871 = vmatpush.msra.mxu0 %v597
        %872 = vmatpush.msra.mxu0 %v595
        %873 = vmatpush.msra.mxu0 %v593
        %874 = vmatpush.msra.mxu0 %v591
        %875 = vmatpush.msra.mxu0 %v589
        %876 = vmatpush.msra.mxu0 %v587
        %877 = vmatpush.msra.mxu0 %v585
        %878 = vmatpush.msra.mxu0 %v583
        %879 = vmatmul.f32.gmra.mxu0 %v841
        %v880 = vpop.f32.mrf.mxu0
        %v881 = vadd.f32 0.0, %v880
        %882 = vdwg.mxu0
        %v883 = vadd.f32 %v839, %v861
        %v884 = vadd.f32 %v840, %v881
        %v885 = vtanh.pop %v883
        %v886 = vtanh.pop %v884
        %v887 = vxor.u32 %v883, 2147483648
        %v888 = vxor.u32 %v884, 2147483648
        %v889 = vmul.f32 %v887, 1.442695
        %v890 = vpow.pop %v889
        %v891 = vmul.f32 %v888, 1.442695
        %v892 = vpow.pop %v891
        %v893 = vadd.f32 %v890, 1.0
        %v894 = vadd.f32 %v892, 1.0
        %v895 = vrcp.pop %v893
        %v896 = vmul.f32 %v893, %v895
        %v897 = vsub.f32 1.0, %v896
        %v898 = vmul.f32 %v895, %v897
        %v899 = vadd.f32 %v895, %v898
        %vm900 = vweird.f32 %v893
        %vm901 = vweird.f32 %v895
        %vm902 = vmor %vm900, %vm901
        %v903 = vsel %vm902, %v895, %v899
        %v904 = vand.u32 2147483647, %v893
        %vm905 = vcmp.eq.f32.partialorder %v904, 8.507059e+37
        %v906 = vand.u32 %v893, 2147483648
        %v907 = vor.u32 1.1754944e-38, %v906
        %v908 = vsel %vm905, %v907, %v903
        %v909 = vmul.f32 1.0, %v908
        %v910 = vrcp.pop %v894
        %v911 = vmul.f32 %v894, %v910
        %v912 = vsub.f32 1.0, %v911
        %v913 = vmul.f32 %v910, %v912
        %v914 = vadd.f32 %v910, %v913
        %vm915 = vweird.f32 %v894
        %vm916 = vweird.f32 %v910
        %vm917 = vmor %vm915, %vm916
        %v918 = vsel %vm917, %v910, %v914
        %v919 = vand.u32 2147483647, %v894
        %vm920 = vcmp.eq.f32.partialorder %v919, 8.507059e+37
        %v921 = vand.u32 %v894, 2147483648
        %v922 = vor.u32 1.1754944e-38, %v921
        %v923 = vsel %vm920, %v922, %v918
        %v924 = vmul.f32 1.0, %v923
        %v925 = vsel %vm605, %v885, %v909
        %v926 = vsel %vm606, %v886, %v924
        %v927 = vmul.f32 %v925, %v823
        %v928 = vmul.f32 %v925, %v926
        %930 = vrot.lane.b32.xlu0 %v928, 64
        %v931 = vpop.permute.xlu0 %930
        %v933 = vadd.f32 %v927, %v931
        %v934 = vtanh.pop %v933
        %v935 = vmul.f32 %v926, %v934
        %937 = vrot.lane.b32.xlu0 %v935, 64
        %v938 = vpop.permute.xlu0 %937
        %940 = vst.msk [vmem:[%s370 + $0x10] sm:$0xff] %vm400, %v938
        %941 = vrot.lane.b32.xlu0 %v935, 32
        %v942 = vpop.permute.xlu0 %941
        %944 = vst.msk [vmem:[%s377 + $0x8] sm:$0xff] %vm400, %v942
        %v945 = vld [vmem:[#allocation4 + $0x30] sm:$0xff]
        %v946 = vld [vmem:[#allocation4 + $0x38] sm:$0xff]
        %v947 = vld [vmem:[#allocation5] sm:$0xff]
        %v948 = vld [vmem:[#allocation5 + $0x8] sm:$0xff]
        %v949 = vadd.f32 %v945, %v947
        %v950 = vadd.f32 %v946, %v948
        %v951 = vsel %vm615, %v938, 0
        %953 = vmatpush.msra.mxu0 0.0
        %954 = vmatpush.msra.mxu0 0.0
        %955 = vmatpush.msra.mxu0 0.0
        %956 = vmatpush.msra.mxu0 0.0
        %957 = vmatpush.msra.mxu0 0.0
        %958 = vmatpush.msra.mxu0 0.0
        %959 = vmatpush.msra.mxu0 0.0
        %960 = vmatpush.msra.mxu0 0.0
        %961 = vmatpush.msra.mxu0 %v596
        %962 = vmatpush.msra.mxu0 %v594
        %963 = vmatpush.msra.mxu0 %v592
        %964 = vmatpush.msra.mxu0 %v590
        %965 = vmatpush.msra.mxu0 %v588
        %966 = vmatpush.msra.mxu0 %v586
        %967 = vmatpush.msra.mxu0 %v584
        %968 = vmatpush.msra.mxu0 %v582
        %969 = vmatmul.f32.gmra.mxu0 %v951
        %v970 = vpop.f32.mrf.mxu0
        %v971 = vadd.f32 0.0, %v970
        %972 = vdwg.mxu0
        %973 = vmatpush.msra.mxu0 0.0
        %974 = vmatpush.msra.mxu0 0.0
        %975 = vmatpush.msra.mxu0 0.0
        %976 = vmatpush.msra.mxu0 0.0
        %977 = vmatpush.msra.mxu0 0.0
        %978 = vmatpush.msra.mxu0 0.0
        %979 = vmatpush.msra.mxu0 0.0
        %980 = vmatpush.msra.mxu0 0.0
        %981 = vmatpush.msra.mxu0 %v597
        %982 = vmatpush.msra.mxu0 %v595
        %983 = vmatpush.msra.mxu0 %v593
        %984 = vmatpush.msra.mxu0 %v591
        %985 = vmatpush.msra.mxu0 %v589
        %986 = vmatpush.msra.mxu0 %v587
        %987 = vmatpush.msra.mxu0 %v585
        %988 = vmatpush.msra.mxu0 %v583
        %989 = vmatmul.f32.gmra.mxu0 %v951
        %v990 = vpop.f32.mrf.mxu0
        %v991 = vadd.f32 0.0, %v990
        %992 = vdwg.mxu0
        %v993 = vadd.f32 %v949, %v971
        %v994 = vadd.f32 %v950, %v991
        %v995 = vtanh.pop %v993
        %v996 = vtanh.pop %v994
        %v997 = vxor.u32 %v993, 2147483648
        %v998 = vxor.u32 %v994, 2147483648
        %v999 = vmul.f32 %v997, 1.442695
        %v1000 = vpow.pop %v999
        %v1001 = vmul.f32 %v998, 1.442695
        %v1002 = vpow.pop %v1001
        %v1003 = vadd.f32 %v1000, 1.0
        %v1004 = vadd.f32 %v1002, 1.0
        %v1005 = vrcp.pop %v1003
        %v1006 = vmul.f32 %v1003, %v1005
        %v1007 = vsub.f32 1.0, %v1006
        %v1008 = vmul.f32 %v1005, %v1007
        %v1009 = vadd.f32 %v1005, %v1008
        %vm1010 = vweird.f32 %v1003
        %vm1011 = vweird.f32 %v1005
        %vm1012 = vmor %vm1010, %vm1011
        %v1013 = vsel %vm1012, %v1005, %v1009
        %v1014 = vand.u32 2147483647, %v1003
        %vm1015 = vcmp.eq.f32.partialorder %v1014, 8.507059e+37
        %v1016 = vand.u32 %v1003, 2147483648
        %v1017 = vor.u32 1.1754944e-38, %v1016
        %v1018 = vsel %vm1015, %v1017, %v1013
        %v1019 = vmul.f32 1.0, %v1018
        %v1020 = vrcp.pop %v1004
        %v1021 = vmul.f32 %v1004, %v1020
        %v1022 = vsub.f32 1.0, %v1021
        %v1023 = vmul.f32 %v1020, %v1022
        %v1024 = vadd.f32 %v1020, %v1023
        %vm1025 = vweird.f32 %v1004
        %vm1026 = vweird.f32 %v1020
        %vm1027 = vmor %vm1025, %vm1026
        %v1028 = vsel %vm1027, %v1020, %v1024
        %v1029 = vand.u32 2147483647, %v1004
        %vm1030 = vcmp.eq.f32.partialorder %v1029, 8.507059e+37
        %v1031 = vand.u32 %v1004, 2147483648
        %v1032 = vor.u32 1.1754944e-38, %v1031
        %v1033 = vsel %vm1030, %v1032, %v1028
        %v1034 = vmul.f32 1.0, %v1033
        %v1035 = vsel %vm605, %v995, %v1019
        %v1036 = vsel %vm606, %v996, %v1034
        %v1037 = vmul.f32 %v1035, %v933
        %v1038 = vmul.f32 %v1035, %v1036
        %1040 = vrot.lane.b32.xlu0 %v1038, 64
        %v1041 = vpop.permute.xlu0 %1040
        %v1043 = vadd.f32 %v1037, %v1041
        %v1044 = vtanh.pop %v1043
        %v1045 = vmul.f32 %v1036, %v1044
        %1047 = vrot.lane.b32.xlu0 %v1045, 64
        %v1048 = vpop.permute.xlu0 %1047
        %1050 = vst.msk [vmem:[%s370 + $0x18] sm:$0xff] %vm400, %v1048
        %1051 = vrot.lane.b32.xlu0 %v1045, 32
        %v1052 = vpop.permute.xlu0 %1051
        %1054 = vst.msk [vmem:[%s377] sm:$0xff] %vm400, %v1052
        %1055 = vst.msk [vmem:[#allocation2] sm:$0xff] %vm615, %v1048
        %1057 = vrot.lane.b32.xlu0 %v1043, 64
        %v1058 = vpop.permute.xlu0 %1057
        %1060 = vst.msk [vmem:[#allocation3] sm:$0xff] %vm615, %v1058
        %s1061 = smul.u32 4, %s21
        %p1062 = scmp.lt.s32.totalorder %s1061, 7
        %s1063 = scalar_select %p1062, %s1061, 7
        %s1064 = smul.addr %s1063, 8
        %s1065 = scalar_lea.vmem %s6, %s1064
        %s1066 = ssub.s32 1, %s21
        %s1067 = smul.u32 4, %s1066
        %p1068 = scmp.lt.s32.totalorder %s1067, 7
        %s1069 = scalar_select %p1068, %s1067, 7
        %s1070 = smul.addr %s1069, 8
        %s1071 = scalar_lea.vmem %s7, %s1070
        // Predicated region
        $region61: #{text_encoder_forward.4} parent=43 // pred_check
          %p1072 = pneg %p177
        $region62: #{text_encoder_forward.4} parent=43 // pred_check_branch
          %1074 = sbr.rel (%p1072) target = $region64
        $region63: #{text_encoder_forward.4} parent=43 // pred_region
          %s1075 = smul.u32 4, %s21
        $region64: #{text_encoder_forward.4} parent=43 // pred_fallthru
          _
        // Predicated region
        $region65: #{text_encoder_forward.4} parent=43 // pred_check
          %p1076 = pneg %p205
        $region66: #{text_encoder_forward.4} parent=43 // pred_check_branch
          %1078 = sbr.rel (%p1076) target = $region68
        $region67: #{text_encoder_forward.4} parent=43 // pred_region
          %s1079 = ssub.s32 1, %s21
          %s1080 = smul.u32 4, %s1079
        $region68: #{text_encoder_forward.4} parent=43 // pred_fallthru
          _
      $region44: #{text_encoder_forward.4} parent=5 // pred_fallthru
        _
      %p1081 = scmp.le.s32.totalorder 2, %s16
      // Predicated region
      $region69: #{text_encoder_forward.4} parent=5 // pred_check
        %p1082 = pneg %p1081
      $region70: #{text_encoder_forward.4} parent=5 // pred_check_branch
        %1084 = sbr.rel (%p1082) target = $region72
      $region71: #{text_encoder_forward.4} parent=5 // pred_region
        %s1085 = ssub.s32 %s16, 2
        // Predicated region
        $region73: #{text_encoder_forward.4} parent=71 // pred_check
          %p1086 = pneg %p183
        $region74: #{text_encoder_forward.4} parent=71 // pred_check_branch
          %1088 = sbr.rel (%p1086) target = $region76
        $region75: #{text_encoder_forward.4} parent=71 // pred_region
          %s1089 = smul.u32 4, %s22
          %p1090 = scmp.lt.s32.totalorder %s1089, 7
          %s1091 = scalar_select %p1090, %s1089, 7
          %s1092 = smul.addr %s1091, 8
          %s1093 = scalar_lea.vmem %s6, %s1092
        $region76: #{text_encoder_forward.4} parent=71 // pred_fallthru
          _
        // Predicated region
        $region77: #{text_encoder_forward.4} parent=71 // pred_check
          %p1094 = pneg %p211
        $region78: #{text_encoder_forward.4} parent=71 // pred_check_branch
          %1096 = sbr.rel (%p1094) target = $region80
        $region79: #{text_encoder_forward.4} parent=71 // pred_region
          %s1097 = ssub.s32 1, %s22
          %s1098 = smul.u32 4, %s1097
          %p1099 = scmp.lt.s32.totalorder %s1098, 7
          %s1100 = scalar_select %p1099, %s1098, 7
          %s1101 = smul.addr %s1100, 8
          %s1102 = scalar_lea.vmem %s7, %s1101
        $region80: #{text_encoder_forward.4} parent=71 // pred_fallthru
          _
      $region72: #{text_encoder_forward.4} parent=5 // pred_fallthru
        _
    $region6: #{text_encoder_forward.4} parent=1 // loop_footer
      %s20 = sadd.s32 1, %s16
    $region7: #{text_encoder_forward.4} parent=1 // loop_footer_branch
      %15 = sbr.rel target = $region3
    $region8: #{text_encoder_forward.4} parent=1 // loop_exit
      _
    %1103 = vsyncpa [#allocation7], 1
    %s1104 = scalar_lea.sflag [#allocation7], 1
    %1105 = vsyncpa %s1104, 1
    %1106 = vsyncpa [#allocation9], 1

// kernel: text_encoder_forward.5
$region0: #{text_encoder_forward.5}
  #allocation0 [shape = 'u32[]', space=smem, size = 0x4, offset = 0x4, fixed_abs, tag = 'smem constant byte address 0x4 - core index']
  #allocation1 [shape = 'u32[72,128]{1,0:T(1,128)}', space=vmem, size = 0x9000, scoped, tag = 'internal scratch']
  #allocation2 [shape = 'f32[8,64]{1,0:T(8,128)}', space=vmem, size = 0x1000, scoped, tag = 'scratch operand']
  #allocation3 [shape = 'f32[8,64]{1,0:T(8,128)}', space=vmem, size = 0x1000, scoped, tag = 'scratch operand']
  #allocation4 [shape = 'f32[32,256]{1,0:T(8,128)}', space=vmem, size = 0x8000, scoped, tag = 'scratch operand']
  #allocation5 [shape = 'f32[32,256]{1,0:T(8,128)}', space=vmem, size = 0x8000, scoped, tag = 'scratch operand']
  %s0 = inlined_call_operand.vmem [shape: f32[64,32], index: 0, kind: input, shape index: {}, may-alias: {0,2}]
  %s1 = inlined_call_operand.vmem [shape: f32[64,32], index: 1, kind: input, shape index: {}, may-alias: {1,3}]
  %s2 = inlined_call_operand.vmem [shape: f32[64,32], index: 2, kind: input, shape index: {}, may-alias: {0,2}]
  %s3 = inlined_call_operand.vmem [shape: f32[64,32], index: 3, kind: input, shape index: {}, may-alias: {1,3}]
  %s4 = inlined_call_operand.hbm [shape: f32[32,256], index: 4, kind: input, shape index: {}]
  %s5 = inlined_call_operand.hbm [shape: f32[32,256], index: 5, kind: input, shape index: {}]
  %s6 = inlined_call_operand.hbm [shape: f32[32,256], index: 6, kind: input, shape index: {}]
  %s7 = inlined_call_operand.hbm [shape: f32[32,256], index: 7, kind: input, shape index: {}]
  %s8 = inlined_call_operand.vmem [shape: f32[1,256], index: 8, kind: input, shape index: {}]
  %s9 = inlined_call_operand.hbm [shape: f32[64,256], index: 9, kind: input, shape index: {}]
  %s10 = inlined_call_operand.vmem [shape: f32[64,32], index: 10, kind: output, shape index: {0}]
  %s11 = inlined_call_operand.vmem [shape: f32[64,32], index: 11, kind: output, shape index: {1}]
  %12 = xla_tuple %s10, %s11
  %s13 = sld [smem:[#allocation0]]
  $region105: #{text_encoder_forward.5} parent=0
    _
  %s15 = ssub.s32 1, %s13
  %s16 = scalar_select 0, %s15, %s13
  $region1: #{text_encoder_forward.5} parent=0
    #allocation6 [shape = 'u8[32768]{0}', space=vmem, size = 0x8000, scoped, tag = 'input window, operand 4, single buffered']
    #allocation7 [shape = 's32[2]{0}', space=sflag, size = 0x8, scoped, tag = 'scoped memory for text_encoder_forward.5']
    #allocation8 [shape = 'u8[32768]{0}', space=vmem, size = 0x8000, scoped, tag = 'input window, operand 5, single buffered']
    #allocation9 [shape = 's32[1]{0}', space=sflag, size = 0x4, scoped, tag = 'scoped memory for text_encoder_forward.5']
    #allocation10 [shape = 'u8[32768]{0}', space=vmem, size = 0x8000, scoped, tag = 'input window, operand 6, single buffered']
    #allocation11 [shape = 'u8[32768]{0}', space=vmem, size = 0x8000, scoped, tag = 'input window, operand 7, single buffered']
    #allocation12 [shape = 's32[1]{0}', space=sflag, size = 0x4, scoped, tag = 'scoped memory for text_encoder_forward.5']
    #allocation13 [shape = 'u8[65536]{0}', space=vmem, size = 0x10000, scoped, tag = 'input window, operand 9, single buffered']
    %17 = vsyncpa [#allocation7], 0
    %18 = vsyncpa [#allocation9], 0
    %19 = vsyncpa [#allocation12], 0
    loop: start=0, step=1, limit=4
    $region2: #{text_encoder_forward.5} parent=1 // loop_pre_header
      _
    $region3: #{text_encoder_forward.5} parent=1 // loop_header
      %s21 = sphi 0, %s25
      %p22 = scmp.ge.s32.totalorder %s21, 4
      %s31 = sphi 0, %s33
      %s34 = sphi 0, %s31
      %s35 = sphi 0, %s34
      %s51 = sphi 0, %s35
      %s57 = sphi 0, %s59
      %s60 = sphi 0, %s57
      %s61 = sphi 0, %s60
      %s77 = sphi 0, %s61
      %s85 = sphi 0, %s87
      %s88 = sphi 0, %s85
      %s89 = sphi 0, %s88
      %s105 = sphi 0, %s89
      %s113 = sphi 0, %s115
      %s116 = sphi 0, %s113
      %s117 = sphi 0, %s116
      %s133 = sphi 0, %s117
      %s137 = sphi 0, %s137
      %s139 = sphi 0, %s137
      %s140 = sphi 0, %s139
      %s154 = sphi 0, %s140
      %s158 = sphi 0, %s158
      %s160 = sphi 0, %s158
      %s161 = sphi 0, %s160
      %s175 = sphi 0, %s161
      %s179 = sphi 0, %s179
      %s181 = sphi 0, %s179
      %s182 = sphi 0, %s181
      %s196 = sphi 0, %s182
      %s200 = sphi 0, %s200
      %s202 = sphi 0, %s200
      %s203 = sphi 0, %s202
      %s217 = sphi 0, %s203
      %s221 = sphi 0, %s221
      %s223 = sphi 0, %s221
      %s224 = sphi 0, %s223
      %s238 = sphi 0, %s224
      %s242 = sphi 0, %s242
      %s244 = sphi 0, %s242
      %s245 = sphi 0, %s244
      %s259 = sphi 0, %s245
      %s265 = sphi 0, %s267
      %s268 = sphi 0, %s265
      %s269 = sphi 0, %s268
      %s285 = sphi 0, %s269
      %s293 = sphi 0, %s295
      %s296 = sphi 0, %s293
      %s297 = sphi 0, %s296
      %s313 = sphi 0, %s297
    $region4: #{text_encoder_forward.5} parent=1 // loop_header_branch
      %24 = sbr.rel (%p22) target = $region8
    $region5: #{text_encoder_forward.5} parent=1 // loop_body
      %s26 = ssub.s32 %s21, 1
      %s27 = ssub.s32 %s21, 2
      %s28 = sadd.s32 %s21, 1
      %s29 = ssub.s32 %s21, %s28
      %p30 = scmp.eq.s32.totalorder %s29, 0
      %s32 = sadd.s32 %s31, 1
      %s33 = scalar_select %p30, %s31, %s32
      %p36 = pneg %p30
      %p37 = scmp.eq.s32.totalorder %s21, 1
      %p38 = por %p36, %p37
      %p39 = scmp.ne.s32.totalorder %s31, %s34
      %p40 = scmp.eq.s32.totalorder %s21, 0
      %p41 = por %p39, %p40
      %p42 = scmp.ne.s32.totalorder %s31, %s34
      %p43 = scmp.eq.s32.totalorder %s26, 1
      %p44 = por %p42, %p43
      %p45 = scmp.ne.s32.totalorder %s34, %s35
      %p46 = scmp.eq.s32.totalorder %s26, 0
      %p47 = por %p45, %p46
      %p48 = scmp.ne.s32.totalorder %s34, %s35
      %p49 = scmp.eq.s32.totalorder %s27, 1
      %p50 = por %p48, %p49
      %p52 = scmp.ne.s32.totalorder %s35, %s51
      %p53 = scmp.eq.s32.totalorder %s27, 0
      %p54 = por %p52, %p53
      %s55 = ssub.s32 %s21, %s28
      %p56 = scmp.eq.s32.totalorder %s55, 0
      %s58 = sadd.s32 %s57, 1
      %s59 = scalar_select %p56, %s57, %s58
      %p62 = pneg %p56
      %p63 = scmp.eq.s32.totalorder %s21, 1
      %p64 = por %p62, %p63
      %p65 = scmp.ne.s32.totalorder %s57, %s60
      %p66 = scmp.eq.s32.totalorder %s21, 0
      %p67 = por %p65, %p66
      %p68 = scmp.ne.s32.totalorder %s57, %s60
      %p69 = scmp.eq.s32.totalorder %s26, 1
      %p70 = por %p68, %p69
      %p71 = scmp.ne.s32.totalorder %s60, %s61
      %p72 = scmp.eq.s32.totalorder %s26, 0
      %p73 = por %p71, %p72
      %p74 = scmp.ne.s32.totalorder %s60, %s61
      %p75 = scmp.eq.s32.totalorder %s27, 1
      %p76 = por %p74, %p75
      %p78 = scmp.ne.s32.totalorder %s61, %s77
      %p79 = scmp.eq.s32.totalorder %s27, 0
      %p80 = por %p78, %p79
      %s81 = ssub.s32 1, %s21
      %s82 = ssub.s32 1, %s28
      %s83 = ssub.s32 %s81, %s82
      %p84 = scmp.eq.s32.totalorder %s83, 0
      %s86 = sadd.s32 %s85, 1
      %s87 = scalar_select %p84, %s85, %s86
      %p90 = pneg %p84
      %p91 = scmp.eq.s32.totalorder %s21, 1
      %p92 = por %p90, %p91
      %p93 = scmp.ne.s32.totalorder %s85, %s88
      %p94 = scmp.eq.s32.totalorder %s21, 0
      %p95 = por %p93, %p94
      %p96 = scmp.ne.s32.totalorder %s85, %s88
      %p97 = scmp.eq.s32.totalorder %s26, 1
      %p98 = por %p96, %p97
      %p99 = scmp.ne.s32.totalorder %s88, %s89
      %p100 = scmp.eq.s32.totalorder %s26, 0
      %p101 = por %p99, %p100
      %p102 = scmp.ne.s32.totalorder %s88, %s89
      %p103 = scmp.eq.s32.totalorder %s27, 1
      %p104 = por %p102, %p103
      %p106 = scmp.ne.s32.totalorder %s89, %s105
      %p107 = scmp.eq.s32.totalorder %s27, 0
      %p108 = por %p106, %p107
      %s109 = ssub.s32 1, %s21
      %s110 = ssub.s32 1, %s28
      %s111 = ssub.s32 %s109, %s110
      %p112 = scmp.eq.s32.totalorder %s111, 0
      %s114 = sadd.s32 %s113, 1
      %s115 = scalar_select %p112, %s113, %s114
      %p118 = pneg %p112
      %p119 = scmp.eq.s32.totalorder %s21, 1
      %p120 = por %p118, %p119
      %p121 = scmp.ne.s32.totalorder %s113, %s116
      %p122 = scmp.eq.s32.totalorder %s21, 0
      %p123 = por %p121, %p122
      %p124 = scmp.ne.s32.totalorder %s113, %s116
      %p125 = scmp.eq.s32.totalorder %s26, 1
      %p126 = por %p124, %p125
      %p127 = scmp.ne.s32.totalorder %s116, %s117
      %p128 = scmp.eq.s32.totalorder %s26, 0
      %p129 = por %p127, %p128
      %p130 = scmp.ne.s32.totalorder %s116, %s117
      %p131 = scmp.eq.s32.totalorder %s27, 1
      %p132 = por %p130, %p131
      %p134 = scmp.ne.s32.totalorder %s117, %s133
      %p135 = scmp.eq.s32.totalorder %s27, 0
      %p136 = por %p134, %p135
      %s138 = sadd.s32 %s137, 1
      %p141 = scmp.eq.s32.totalorder %s21, 1
      %p142 = scmp.ne.s32.totalorder %s137, %s139
      %p143 = scmp.eq.s32.totalorder %s21, 0
      %p144 = por %p142, %p143
      %p145 = scmp.ne.s32.totalorder %s137, %s139
      %p146 = scmp.eq.s32.totalorder %s26, 1
      %p147 = por %p145, %p146
      %p148 = scmp.ne.s32.totalorder %s139, %s140
      %p149 = scmp.eq.s32.totalorder %s26, 0
      %p150 = por %p148, %p149
      %p151 = scmp.ne.s32.totalorder %s139, %s140
      %p152 = scmp.eq.s32.totalorder %s27, 1
      %p153 = por %p151, %p152
      %p155 = scmp.ne.s32.totalorder %s140, %s154
      %p156 = scmp.eq.s32.totalorder %s27, 0
      %p157 = por %p155, %p156
      %s159 = sadd.s32 %s158, 1
      %p162 = scmp.eq.s32.totalorder %s21, 1
      %p163 = scmp.ne.s32.totalorder %s158, %s160
      %p164 = scmp.eq.s32.totalorder %s21, 0
      %p165 = por %p163, %p164
      %p166 = scmp.ne.s32.totalorder %s158, %s160
      %p167 = scmp.eq.s32.totalorder %s26, 1
      %p168 = por %p166, %p167
      %p169 = scmp.ne.s32.totalorder %s160, %s161
      %p170 = scmp.eq.s32.totalorder %s26, 0
      %p171 = por %p169, %p170
      %p172 = scmp.ne.s32.totalorder %s160, %s161
      %p173 = scmp.eq.s32.totalorder %s27, 1
      %p174 = por %p172, %p173
      %p176 = scmp.ne.s32.totalorder %s161, %s175
      %p177 = scmp.eq.s32.totalorder %s27, 0
      %p178 = por %p176, %p177
      %s180 = sadd.s32 %s179, 1
      %p183 = scmp.eq.s32.totalorder %s21, 1
      %p184 = scmp.ne.s32.totalorder %s179, %s181
      %p185 = scmp.eq.s32.totalorder %s21, 0
      %p186 = por %p184, %p185
      %p187 = scmp.ne.s32.totalorder %s179, %s181
      %p188 = scmp.eq.s32.totalorder %s26, 1
      %p189 = por %p187, %p188
      %p190 = scmp.ne.s32.totalorder %s181, %s182
      %p191 = scmp.eq.s32.totalorder %s26, 0
      %p192 = por %p190, %p191
      %p193 = scmp.ne.s32.totalorder %s181, %s182
      %p194 = scmp.eq.s32.totalorder %s27, 1
      %p195 = por %p193, %p194
      %p197 = scmp.ne.s32.totalorder %s182, %s196
      %p198 = scmp.eq.s32.totalorder %s27, 0
      %p199 = por %p197, %p198
      %s201 = sadd.s32 %s200, 1
      %p204 = scmp.eq.s32.totalorder %s21, 1
      %p205 = scmp.ne.s32.totalorder %s200, %s202
      %p206 = scmp.eq.s32.totalorder %s21, 0
      %p207 = por %p205, %p206
      %p208 = scmp.ne.s32.totalorder %s200, %s202
      %p209 = scmp.eq.s32.totalorder %s26, 1
      %p210 = por %p208, %p209
      %p211 = scmp.ne.s32.totalorder %s202, %s203
      %p212 = scmp.eq.s32.totalorder %s26, 0
      %p213 = por %p211, %p212
      %p214 = scmp.ne.s32.totalorder %s202, %s203
      %p215 = scmp.eq.s32.totalorder %s27, 1
      %p216 = por %p214, %p215
      %p218 = scmp.ne.s32.totalorder %s203, %s217
      %p219 = scmp.eq.s32.totalorder %s27, 0
      %p220 = por %p218, %p219
      %s222 = sadd.s32 %s221, 1
      %p225 = scmp.eq.s32.totalorder %s21, 1
      %p226 = scmp.ne.s32.totalorder %s221, %s223
      %p227 = scmp.eq.s32.totalorder %s21, 0
      %p228 = por %p226, %p227
      %p229 = scmp.ne.s32.totalorder %s221, %s223
      %p230 = scmp.eq.s32.totalorder %s26, 1
      %p231 = por %p229, %p230
      %p232 = scmp.ne.s32.totalorder %s223, %s224
      %p233 = scmp.eq.s32.totalorder %s26, 0
      %p234 = por %p232, %p233
      %p235 = scmp.ne.s32.totalorder %s223, %s224
      %p236 = scmp.eq.s32.totalorder %s27, 1
      %p237 = por %p235, %p236
      %p239 = scmp.ne.s32.totalorder %s224, %s238
      %p240 = scmp.eq.s32.totalorder %s27, 0
      %p241 = por %p239, %p240
      %s243 = sadd.s32 %s242, 1
      %p246 = scmp.eq.s32.totalorder %s21, 1
      %p247 = scmp.ne.s32.totalorder %s242, %s244
      %p248 = scmp.eq.s32.totalorder %s21, 0
      %p249 = por %p247, %p248
      %p250 = scmp.ne.s32.totalorder %s242, %s244
      %p251 = scmp.eq.s32.totalorder %s26, 1
      %p252 = por %p250, %p251
      %p253 = scmp.ne.s32.totalorder %s244, %s245
      %p254 = scmp.eq.s32.totalorder %s26, 0
      %p255 = por %p253, %p254
      %p256 = scmp.ne.s32.totalorder %s244, %s245
      %p257 = scmp.eq.s32.totalorder %s27, 1
      %p258 = por %p256, %p257
      %p260 = scmp.ne.s32.totalorder %s245, %s259
      %p261 = scmp.eq.s32.totalorder %s27, 0
      %p262 = por %p260, %p261
      %s263 = ssub.s32 %s21, %s28
      %p264 = scmp.eq.s32.totalorder %s263, 0
      %s266 = sadd.s32 %s265, 1
      %s267 = scalar_select %p264, %s265, %s266
      %p270 = pneg %p264
      %p271 = scmp.eq.s32.totalorder %s21, 1
      %p272 = por %p270, %p271
      %p273 = scmp.ne.s32.totalorder %s265, %s268
      %p274 = scmp.eq.s32.totalorder %s21, 0
      %p275 = por %p273, %p274
      %p276 = scmp.ne.s32.totalorder %s265, %s268
      %p277 = scmp.eq.s32.totalorder %s26, 1
      %p278 = por %p276, %p277
      %p279 = scmp.ne.s32.totalorder %s268, %s269
      %p280 = scmp.eq.s32.totalorder %s26, 0
      %p281 = por %p279, %p280
      %p282 = scmp.ne.s32.totalorder %s268, %s269
      %p283 = scmp.eq.s32.totalorder %s27, 1
      %p284 = por %p282, %p283
      %p286 = scmp.ne.s32.totalorder %s269, %s285
      %p287 = scmp.eq.s32.totalorder %s27, 0
      %p288 = por %p286, %p287
      %s289 = ssub.s32 1, %s21
      %s290 = ssub.s32 1, %s28
      %s291 = ssub.s32 %s289, %s290
      %p292 = scmp.eq.s32.totalorder %s291, 0
      %s294 = sadd.s32 %s293, 1
      %s295 = scalar_select %p292, %s293, %s294
      %p298 = pneg %p292
      %p299 = scmp.eq.s32.totalorder %s21, 1
      %p300 = por %p298, %p299
      %p301 = scmp.ne.s32.totalorder %s293, %s296
      %p302 = scmp.eq.s32.totalorder %s21, 0
      %p303 = por %p301, %p302
      %p304 = scmp.ne.s32.totalorder %s293, %s296
      %p305 = scmp.eq.s32.totalorder %s26, 1
      %p306 = por %p304, %p305
      %p307 = scmp.ne.s32.totalorder %s296, %s297
      %p308 = scmp.eq.s32.totalorder %s26, 0
      %p309 = por %p307, %p308
      %p310 = scmp.ne.s32.totalorder %s296, %s297
      %p311 = scmp.eq.s32.totalorder %s27, 1
      %p312 = por %p310, %p311
      %p314 = scmp.ne.s32.totalorder %s297, %s313
      %p315 = scmp.eq.s32.totalorder %s27, 0
      %p316 = por %p314, %p315
      %p317 = scmp.le.s32.totalorder 1, %s21
      %p318 = scmp.lt.s32.totalorder %s21, 3
      %p319 = pnand %p317, %p318
      %p320 = pneg %p319
      // Predicated region
      $region9: #{text_encoder_forward.5} parent=5 // pred_check
        _
      $region10: #{text_encoder_forward.5} parent=5 // pred_check_branch
        %322 = sbr.rel (%p319) target = $region12
      $region11: #{text_encoder_forward.5} parent=5 // pred_region
        %s323 = ssub.s32 %s21, 1
        // Predicated region
        $region13: #{text_encoder_forward.5} parent=11 // pred_check
          %p324 = pneg %p150
        $region14: #{text_encoder_forward.5} parent=11 // pred_check_branch
          %326 = sbr.rel (%p324) target = $region16
        $region15: #{text_encoder_forward.5} parent=11 // pred_region
          %328 = vsyncadd [#allocation7], 0
          %s329 = sshll.u32 %s4, 4
          %s330 = int_to_ptr.hbm [resolvable:$true] %s329
          %s331 = sshll.u32 [#allocation6], 4
          %s332 = int_to_ptr.vmem [resolvable:$true] %s331
          %337 = dma.hbm_to_vmem [thread:$0]  %s330, 1024, %s332, [#allocation7], 256, 256, 16
        $region16: #{text_encoder_forward.5} parent=11 // pred_fallthru
          _
        // Predicated region
        $region17: #{text_encoder_forward.5} parent=11 // pred_check
          %p338 = pneg %p171
        $region18: #{text_encoder_forward.5} parent=11 // pred_check_branch
          %340 = sbr.rel (%p338) target = $region20
        $region19: #{text_encoder_forward.5} parent=11 // pred_region
          %342 = vsyncadd [#allocation9], 0
          %s343 = sshll.u32 %s5, 4
          %s344 = int_to_ptr.hbm [resolvable:$true] %s343
          %s345 = sshll.u32 [#allocation8], 4
          %s346 = int_to_ptr.vmem [resolvable:$true] %s345
          %351 = dma.hbm_to_vmem [thread:$0]  %s344, 1024, %s346, [#allocation9], 256, 256, 16
        $region20: #{text_encoder_forward.5} parent=11 // pred_fallthru
          _
        // Predicated region
        $region21: #{text_encoder_forward.5} parent=11 // pred_check
          %p352 = pneg %p192
        $region22: #{text_encoder_forward.5} parent=11 // pred_check_branch
          %354 = sbr.rel (%p352) target = $region24
        $region23: #{text_encoder_forward.5} parent=11 // pred_region
          %356 = vsyncadd [#allocation9], 0
          %s357 = sshll.u32 %s6, 4
          %s358 = int_to_ptr.hbm [resolvable:$true] %s357
          %s359 = sshll.u32 [#allocation10], 4
          %s360 = int_to_ptr.vmem [resolvable:$true] %s359
          %365 = dma.hbm_to_vmem [thread:$0]  %s358, 1024, %s360, [#allocation9], 256, 256, 16
        $region24: #{text_encoder_forward.5} parent=11 // pred_fallthru
          _
        // Predicated region
        $region25: #{text_encoder_forward.5} parent=11 // pred_check
          %p366 = pneg %p213
        $region26: #{text_encoder_forward.5} parent=11 // pred_check_branch
          %368 = sbr.rel (%p366) target = $region28
        $region27: #{text_encoder_forward.5} parent=11 // pred_region
          %370 = vsyncadd [#allocation12], 0
          %s371 = sshll.u32 %s7, 4
          %s372 = int_to_ptr.hbm [resolvable:$true] %s371
          %s373 = sshll.u32 [#allocation11], 4
          %s374 = int_to_ptr.vmem [resolvable:$true] %s373
          %379 = dma.hbm_to_vmem [thread:$0]  %s372, 1024, %s374, [#allocation12], 256, 256, 16
        $region28: #{text_encoder_forward.5} parent=11 // pred_fallthru
          _
        // Predicated region
        $region29: #{text_encoder_forward.5} parent=11 // pred_check
          %p380 = pneg %p234
        $region30: #{text_encoder_forward.5} parent=11 // pred_check_branch
          %382 = sbr.rel (%p380) target = $region32
        $region31: #{text_encoder_forward.5} parent=11 // pred_region
          _
        $region32: #{text_encoder_forward.5} parent=11 // pred_fallthru
          _
        // Predicated region
        $region33: #{text_encoder_forward.5} parent=11 // pred_check
          %p383 = pneg %p255
        $region34: #{text_encoder_forward.5} parent=11 // pred_check_branch
          %385 = sbr.rel (%p383) target = $region36
        $region35: #{text_encoder_forward.5} parent=11 // pred_region
          %387 = vsyncadd [#allocation12], 0
          %s388 = sshll.u32 %s9, 4
          %s389 = int_to_ptr.hbm [resolvable:$true] %s388
          %s390 = sshll.u32 [#allocation13], 4
          %s391 = int_to_ptr.vmem [resolvable:$true] %s390
          %396 = dma.hbm_to_vmem [thread:$0]  %s389, 2048, %s391, [#allocation12], 256, 256, 16
        $region36: #{text_encoder_forward.5} parent=11 // pred_fallthru
          _
      $region12: #{text_encoder_forward.5} parent=5 // pred_fallthru
        _
      %p397 = scmp.lt.s32.totalorder %s21, 2
      // Predicated region
      $region37: #{text_encoder_forward.5} parent=5 // pred_check
        %p398 = pneg %p397
      $region38: #{text_encoder_forward.5} parent=5 // pred_check_branch
        %400 = sbr.rel (%p398) target = $region40
      $region39: #{text_encoder_forward.5} parent=5 // pred_region
        // Predicated region
        $region41: #{text_encoder_forward.5} parent=39 // pred_check
          %p401 = pneg %p41
        $region42: #{text_encoder_forward.5} parent=39 // pred_check_branch
          %403 = sbr.rel (%p401) target = $region44
        $region43: #{text_encoder_forward.5} parent=39 // pred_region
          %s404 = smul.u32 4, %s21
          %p405 = scmp.lt.s32.totalorder %s404, 7
          %s406 = scalar_select %p405, %s404, 7
          %s407 = smul.addr %s406, 8
          %s408 = scalar_lea.vmem %s0, %s407
          %s409 = smul.u32 4, %s21
        $region44: #{text_encoder_forward.5} parent=39 // pred_fallthru
          _
        // Predicated region
        $region45: #{text_encoder_forward.5} parent=39 // pred_check
          %p410 = pneg %p67
        $region46: #{text_encoder_forward.5} parent=39 // pred_check_branch
          %412 = sbr.rel (%p410) target = $region48
        $region47: #{text_encoder_forward.5} parent=39 // pred_region
          %s413 = smul.u32 4, %s21
          %p414 = scmp.lt.s32.totalorder %s413, 7
          %s415 = scalar_select %p414, %s413, 7
          %s416 = smul.addr %s415, 8
          %s417 = scalar_lea.vmem %s1, %s416
          %s418 = smul.u32 4, %s21
        $region48: #{text_encoder_forward.5} parent=39 // pred_fallthru
          _
        // Predicated region
        $region49: #{text_encoder_forward.5} parent=39 // pred_check
          %p419 = pneg %p95
        $region50: #{text_encoder_forward.5} parent=39 // pred_check_branch
          %421 = sbr.rel (%p419) target = $region52
        $region51: #{text_encoder_forward.5} parent=39 // pred_region
          %s422 = ssub.s32 1, %s21
          %s423 = smul.u32 4, %s422
          %p424 = scmp.lt.s32.totalorder %s423, 7
          %s425 = scalar_select %p424, %s423, 7
          %s426 = smul.addr %s425, 8
          %s427 = scalar_lea.vmem %s2, %s426
          %s428 = ssub.s32 1, %s21
          %s429 = smul.u32 4, %s428
        $region52: #{text_encoder_forward.5} parent=39 // pred_fallthru
          _
        // Predicated region
        $region53: #{text_encoder_forward.5} parent=39 // pred_check
          %p430 = pneg %p123
        $region54: #{text_encoder_forward.5} parent=39 // pred_check_branch
          %432 = sbr.rel (%p430) target = $region56
        $region55: #{text_encoder_forward.5} parent=39 // pred_region
          %s433 = ssub.s32 1, %s21
          %s434 = smul.u32 4, %s433
          %p435 = scmp.lt.s32.totalorder %s434, 7
          %s436 = scalar_select %p435, %s434, 7
          %s437 = smul.addr %s436, 8
          %s438 = scalar_lea.vmem %s3, %s437
          %s439 = ssub.s32 1, %s21
          %s440 = smul.u32 4, %s439
        $region56: #{text_encoder_forward.5} parent=39 // pred_fallthru
          _
      $region40: #{text_encoder_forward.5} parent=5 // pred_fallthru
        _
      %p441 = scmp.le.s32.totalorder 1, %s21
      %p442 = scmp.lt.s32.totalorder %s21, 3
      %p443 = pnand %p441, %p442
      %p444 = pneg %p443
      // Predicated region
      $region57: #{text_encoder_forward.5} parent=5 // pred_check
        _
      $region58: #{text_encoder_forward.5} parent=5 // pred_check_branch
        %446 = sbr.rel (%p443) target = $region60
      $region59: #{text_encoder_forward.5} parent=5 // pred_region
        %s447 = ssub.s32 %s21, 1
        // Predicated region
        $region61: #{text_encoder_forward.5} parent=59 // pred_check
          %p448 = pneg %p150
        $region62: #{text_encoder_forward.5} parent=59 // pred_check_branch
          %450 = sbr.rel (%p448) target = $region64
        $region63: #{text_encoder_forward.5} parent=59 // pred_region
          %452 = dma.done [#allocation7], 1024
        $region64: #{text_encoder_forward.5} parent=59 // pred_fallthru
          _
        // Predicated region
        $region65: #{text_encoder_forward.5} parent=59 // pred_check
          %p453 = pneg %p171
        $region66: #{text_encoder_forward.5} parent=59 // pred_check_branch
          %455 = sbr.rel (%p453) target = $region68
        $region67: #{text_encoder_forward.5} parent=59 // pred_region
          %457 = dma.done [#allocation9], 1024
        $region68: #{text_encoder_forward.5} parent=59 // pred_fallthru
          _
        // Predicated region
        $region69: #{text_encoder_forward.5} parent=59 // pred_check
          %p458 = pneg %p192
        $region70: #{text_encoder_forward.5} parent=59 // pred_check_branch
          %460 = sbr.rel (%p458) target = $region72
        $region71: #{text_encoder_forward.5} parent=59 // pred_region
          %462 = dma.done [#allocation9], 1024
        $region72: #{text_encoder_forward.5} parent=59 // pred_fallthru
          _
        // Predicated region
        $region73: #{text_encoder_forward.5} parent=59 // pred_check
          %p463 = pneg %p213
        $region74: #{text_encoder_forward.5} parent=59 // pred_check_branch
          %465 = sbr.rel (%p463) target = $region76
        $region75: #{text_encoder_forward.5} parent=59 // pred_region
          %467 = dma.done [#allocation12], 1024
        $region76: #{text_encoder_forward.5} parent=59 // pred_fallthru
          _
        // Predicated region
        $region77: #{text_encoder_forward.5} parent=59 // pred_check
          %p468 = pneg %p255
        $region78: #{text_encoder_forward.5} parent=59 // pred_check_branch
          %470 = sbr.rel (%p468) target = $region80
        $region79: #{text_encoder_forward.5} parent=59 // pred_region
          %472 = dma.done [#allocation12], 2048
        $region80: #{text_encoder_forward.5} parent=59 // pred_fallthru
          _
        %s473 = smul.u32 4, %s26
        %p474 = scmp.lt.s32.totalorder %s473, 7
        %s475 = scalar_select %p474, %s473, 7
        %s476 = smul.addr %s475, 8
        %s477 = scalar_lea.vmem %s0, %s476
        %p478 = pneg %p47
        %p479 = pneg %p44
        %s480 = smul.u32 4, %s26
        %p481 = scmp.lt.s32.totalorder %s480, 7
        %s482 = scalar_select %p481, %s480, 7
        %s483 = smul.addr %s482, 8
        %s484 = scalar_lea.vmem %s1, %s483
        %p485 = pneg %p73
        %p486 = pneg %p70
        %s487 = ssub.s32 1, %s26
        %s488 = smul.u32 4, %s487
        %p489 = scmp.lt.s32.totalorder %s488, 7
        %s490 = scalar_select %p489, %s488, 7
        %s491 = smul.addr %s490, 8
        %s492 = scalar_lea.vmem %s2, %s491
        %p493 = pneg %p101
        %p494 = pneg %p98
        %s495 = ssub.s32 1, %s26
        %s496 = smul.u32 4, %s495
        %p497 = scmp.lt.s32.totalorder %s496, 7
        %s498 = scalar_select %p497, %s496, 7
        %s499 = smul.addr %s498, 8
        %s500 = scalar_lea.vmem %s3, %s499
        %p501 = pneg %p129
        %p502 = pneg %p126
        %p503 = pneg %p150
        %p504 = pneg %p147
        %p505 = pneg %p171
        %p506 = pneg %p168
        %p507 = pneg %p192
        %p508 = pneg %p189
        %p509 = pneg %p213
        %p510 = pneg %p210
        %p511 = pneg %p234
        %p512 = pneg %p231
        %p513 = pneg %p255
        %p514 = pneg %p252
        %p515 = pneg %p281
        %p516 = pneg %p278
        %s517 = smul.u32 4, %s26
        %p518 = scmp.lt.s32.totalorder %s517, 7
        %s519 = scalar_select %p518, %s517, 7
        %s520 = smul.addr %s519, 8
        %s521 = scalar_lea.vmem %s10, %s520
        %p522 = pneg %p309
        %p523 = pneg %p306
        %s524 = ssub.s32 1, %s26
        %s525 = smul.u32 4, %s524
        %p526 = scmp.lt.s32.totalorder %s525, 7
        %s527 = scalar_select %p526, %s525, 7
        %s528 = smul.addr %s527, 8
        %s529 = scalar_lea.vmem %s11, %s528
        %s530 = smul.u32 4, %s26
        %p531 = scmp.lt.s32.totalorder %s530, 7
        %s532 = scalar_select %p531, %s530, 7
        %s533 = smul.addr %s532, 8
        %s534 = scalar_lea.vmem %s0, %s533
        %s535 = smul.u32 4, %s26
        %s536 = smul.u32 4, %s26
        %p537 = scmp.lt.s32.totalorder %s536, 7
        %s538 = scalar_select %p537, %s536, 7
        %s539 = smul.addr %s538, 8
        %s540 = scalar_lea.vmem %s1, %s539
        %s541 = smul.u32 4, %s26
        %s542 = ssub.s32 1, %s26
        %s543 = smul.u32 4, %s542
        %p544 = scmp.lt.s32.totalorder %s543, 7
        %s545 = scalar_select %p544, %s543, 7
        %s546 = smul.addr %s545, 8
        %s547 = scalar_lea.vmem %s2, %s546
        %s548 = ssub.s32 1, %s26
        %s549 = smul.u32 4, %s548
        %s550 = ssub.s32 1, %s26
        %s551 = smul.u32 4, %s550
        %p552 = scmp.lt.s32.totalorder %s551, 7
        %s553 = scalar_select %p552, %s551, 7
        %s554 = smul.addr %s553, 8
        %s555 = scalar_lea.vmem %s3, %s554
        %s556 = ssub.s32 1, %s26
        %s557 = smul.u32 4, %s556
        %s558 = smul.u32 4, %s26
        %p559 = scmp.lt.s32.totalorder %s558, 7
        %s560 = scalar_select %p559, %s558, 7
        %s561 = smul.addr %s560, 8
        %s562 = scalar_lea.vmem %s10, %s561
        %s563 = smul.u32 4, %s26
        %s564 = ssub.s32 1, %s26
        %s565 = smul.u32 4, %s564
        %p566 = scmp.lt.s32.totalorder %s565, 7
        %s567 = scalar_select %p566, %s565, 7
        %s568 = smul.addr %s567, 8
        %s569 = scalar_lea.vmem %s11, %s568
        %s570 = ssub.s32 1, %s26
        %s571 = smul.u32 4, %s570
        %p572 = scmp.eq.s32.totalorder %s26, 0
        // Predicated region
        $region81: #{text_encoder_forward.5} parent=59 // pred_check
          %p573 = pneg %p572
        $region82: #{text_encoder_forward.5} parent=59 // pred_check_branch
          %575 = sbr.rel (%p573) target = $region84
        $region83: #{text_encoder_forward.5} parent=59 // pred_region
          %vm576 = vcmask 523264
          %577 = vst.msk [vmem:[#allocation2] sm:$0xff] %vm576, 0.0
          %578 = vst.msk [vmem:[#allocation3] sm:$0xff] %vm576, 0.0
        $region84: #{text_encoder_forward.5} parent=59 // pred_fallthru
          _
        %v579 = vld [vmem:[%s8] sm:$0x3]
        %v580 = vld [vmem:[%s534] sm:$0xff]
        %v581 = vld [vmem:[%s534 + $0x8] sm:$0xff]
        %v582 = vld [vmem:[%s534 + $0x10] sm:$0xff]
        %v583 = vld [vmem:[%s534 + $0x18] sm:$0xff]
        %v584 = vld [vmem:[#allocation6] sm:$0xff]
        %v585 = vld [vmem:[#allocation6 + $0x8] sm:$0xff]
        %v586 = vld [vmem:[#allocation6 + $0x10] sm:$0xff]
        %v587 = vld [vmem:[#allocation6 + $0x18] sm:$0xff]
        %v588 = vld [vmem:[#allocation6 + $0x20] sm:$0xff]
        %v589 = vld [vmem:[#allocation6 + $0x28] sm:$0xff]
        %v590 = vld [vmem:[#allocation6 + $0x30] sm:$0xff]
        %v591 = vld [vmem:[#allocation6 + $0x38] sm:$0xff]
        %vm592 = vcmask 261120
        %v594 = vsel %vm592, %v580, 0
        %v597 = vsel %vm592, %v581, 0
        %v600 = vsel %vm592, %v582, 0
        %v603 = vsel %vm592, %v583, 0
        %605 = vmatpush.msra.mxu0 0.0
        %606 = vmatpush.msra.mxu0 0.0
        %607 = vmatpush.msra.mxu0 0.0
        %608 = vmatpush.msra.mxu0 0.0
        %609 = vmatpush.msra.mxu0 0.0
        %610 = vmatpush.msra.mxu0 0.0
        %611 = vmatpush.msra.mxu0 0.0
        %612 = vmatpush.msra.mxu0 0.0
        %613 = vmatpush.msra.mxu0 0.0
        %614 = vmatpush.msra.mxu0 0.0
        %615 = vmatpush.msra.mxu0 0.0
        %616 = vmatpush.msra.mxu0 0.0
        %617 = vmatpush.msra.mxu0 %v590
        %618 = vmatpush.msra.mxu0 %v588
        %619 = vmatpush.msra.mxu0 %v586
        %620 = vmatpush.msra.mxu0 %v584
        %621 = vmatmul.f32.gmra.mxu0 %v594
        %v622 = vpop.f32.mrf.mxu0
        %v623 = vadd.f32 0.0, %v622
        %624 = vmatmul.f32.gmra.mxu0 %v597
        %v625 = vpop.f32.mrf.mxu0
        %v626 = vadd.f32 0.0, %v625
        %627 = vmatmul.f32.gmra.mxu0 %v600
        %v628 = vpop.f32.mrf.mxu0
        %v629 = vadd.f32 0.0, %v628
        %630 = vmatmul.f32.gmra.mxu0 %v603
        %v631 = vpop.f32.mrf.mxu0
        %v632 = vadd.f32 0.0, %v631
        %633 = vdwg.mxu0
        %634 = vmatpush.msra.mxu0 0.0
        %635 = vmatpush.msra.mxu0 0.0
        %636 = vmatpush.msra.mxu0 0.0
        %637 = vmatpush.msra.mxu0 0.0
        %638 = vmatpush.msra.mxu0 0.0
        %639 = vmatpush.msra.mxu0 0.0
        %640 = vmatpush.msra.mxu0 0.0
        %641 = vmatpush.msra.mxu0 0.0
        %642 = vmatpush.msra.mxu0 0.0
        %643 = vmatpush.msra.mxu0 0.0
        %644 = vmatpush.msra.mxu0 0.0
        %645 = vmatpush.msra.mxu0 0.0
        %646 = vmatpush.msra.mxu0 %v591
        %647 = vmatpush.msra.mxu0 %v589
        %648 = vmatpush.msra.mxu0 %v587
        %649 = vmatpush.msra.mxu0 %v585
        %650 = vmatmul.f32.gmra.mxu0 %v594
        %v651 = vpop.f32.mrf.mxu0
        %v652 = vadd.f32 0.0, %v651
        %653 = vmatmul.f32.gmra.mxu0 %v597
        %v654 = vpop.f32.mrf.mxu0
        %v655 = vadd.f32 0.0, %v654
        %656 = vmatmul.f32.gmra.mxu0 %v600
        %v657 = vpop.f32.mrf.mxu0
        %v658 = vadd.f32 0.0, %v657
        %659 = vmatmul.f32.gmra.mxu0 %v603
        %v660 = vpop.f32.mrf.mxu0
        %v661 = vadd.f32 0.0, %v660
        %662 = vdwg.mxu0
        %v664 = vperm.slane %v579, 0
        %v665 = vperm.slane %v579, 1
        %v668 = vadd.f32 %v664, %v623
        %v669 = vadd.f32 %v665, %v652
        %v670 = vadd.f32 %v664, %v626
        %v671 = vadd.f32 %v665, %v655
        %v672 = vadd.f32 %v664, %v629
        %v673 = vadd.f32 %v665, %v658
        %v674 = vadd.f32 %v664, %v632
        %v675 = vadd.f32 %v665, %v661
        %v676 = vld [vmem:[%s540] sm:$0xff]
        %v677 = vld [vmem:[%s540 + $0x8] sm:$0xff]
        %v678 = vld [vmem:[%s540 + $0x10] sm:$0xff]
        %v679 = vld [vmem:[%s540 + $0x18] sm:$0xff]
        %v680 = vld [vmem:[#allocation8] sm:$0xff]
        %v681 = vld [vmem:[#allocation8 + $0x8] sm:$0xff]
        %v682 = vld [vmem:[#allocation8 + $0x10] sm:$0xff]
        %v683 = vld [vmem:[#allocation8 + $0x18] sm:$0xff]
        %v684 = vld [vmem:[#allocation8 + $0x20] sm:$0xff]
        %v685 = vld [vmem:[#allocation8 + $0x28] sm:$0xff]
        %v686 = vld [vmem:[#allocation8 + $0x30] sm:$0xff]
        %v687 = vld [vmem:[#allocation8 + $0x38] sm:$0xff]
        %v689 = vsel %vm592, %v676, 0
        %v692 = vsel %vm592, %v677, 0
        %v695 = vsel %vm592, %v678, 0
        %v698 = vsel %vm592, %v679, 0
        %700 = vmatpush.msra.mxu0 0.0
        %701 = vmatpush.msra.mxu0 0.0
        %702 = vmatpush.msra.mxu0 0.0
        %703 = vmatpush.msra.mxu0 0.0
        %704 = vmatpush.msra.mxu0 0.0
        %705 = vmatpush.msra.mxu0 0.0
        %706 = vmatpush.msra.mxu0 0.0
        %707 = vmatpush.msra.mxu0 0.0
        %708 = vmatpush.msra.mxu0 0.0
        %709 = vmatpush.msra.mxu0 0.0
        %710 = vmatpush.msra.mxu0 0.0
        %711 = vmatpush.msra.mxu0 0.0
        %712 = vmatpush.msra.mxu0 %v686
        %713 = vmatpush.msra.mxu0 %v684
        %714 = vmatpush.msra.mxu0 %v682
        %715 = vmatpush.msra.mxu0 %v680
        %716 = vmatmul.f32.gmra.mxu0 %v689
        %v717 = vpop.f32.mrf.mxu0
        %v718 = vadd.f32 0.0, %v717
        %719 = vmatmul.f32.gmra.mxu0 %v692
        %v720 = vpop.f32.mrf.mxu0
        %v721 = vadd.f32 0.0, %v720
        %722 = vmatmul.f32.gmra.mxu0 %v695
        %v723 = vpop.f32.mrf.mxu0
        %v724 = vadd.f32 0.0, %v723
        %725 = vmatmul.f32.gmra.mxu0 %v698
        %v726 = vpop.f32.mrf.mxu0
        %v727 = vadd.f32 0.0, %v726
        %728 = vdwg.mxu0
        %729 = vmatpush.msra.mxu0 0.0
        %730 = vmatpush.msra.mxu0 0.0
        %731 = vmatpush.msra.mxu0 0.0
        %732 = vmatpush.msra.mxu0 0.0
        %733 = vmatpush.msra.mxu0 0.0
        %734 = vmatpush.msra.mxu0 0.0
        %735 = vmatpush.msra.mxu0 0.0
        %736 = vmatpush.msra.mxu0 0.0
        %737 = vmatpush.msra.mxu0 0.0
        %738 = vmatpush.msra.mxu0 0.0
        %739 = vmatpush.msra.mxu0 0.0
        %740 = vmatpush.msra.mxu0 0.0
        %741 = vmatpush.msra.mxu0 %v687
        %742 = vmatpush.msra.mxu0 %v685
        %743 = vmatpush.msra.mxu0 %v683
        %744 = vmatpush.msra.mxu0 %v681
        %745 = vmatmul.f32.gmra.mxu0 %v689
        %v746 = vpop.f32.mrf.mxu0
        %v747 = vadd.f32 0.0, %v746
        %748 = vmatmul.f32.gmra.mxu0 %v692
        %v749 = vpop.f32.mrf.mxu0
        %v750 = vadd.f32 0.0, %v749
        %751 = vmatmul.f32.gmra.mxu0 %v695
        %v752 = vpop.f32.mrf.mxu0
        %v753 = vadd.f32 0.0, %v752
        %754 = vmatmul.f32.gmra.mxu0 %v698
        %v755 = vpop.f32.mrf.mxu0
        %v756 = vadd.f32 0.0, %v755
        %757 = vdwg.mxu0
        %v758 = vadd.f32 %v668, %v718
        %v759 = vadd.f32 %v669, %v747
        %v760 = vadd.f32 %v670, %v721
        %v761 = vadd.f32 %v671, %v750
        %v762 = vadd.f32 %v672, %v724
        %v763 = vadd.f32 %v673, %v753
        %v764 = vadd.f32 %v674, %v727
        %v765 = vadd.f32 %v675, %v756
        %766 = vst [vmem:[#allocation4] sm:$0xff] %v758
        %767 = vst [vmem:[#allocation4 + $0x8] sm:$0xff] %v759
        %768 = vst [vmem:[#allocation4 + $0x10] sm:$0xff] %v760
        %769 = vst [vmem:[#allocation4 + $0x18] sm:$0xff] %v761
        %770 = vst [vmem:[#allocation4 + $0x20] sm:$0xff] %v762
        %771 = vst [vmem:[#allocation4 + $0x28] sm:$0xff] %v763
        %772 = vst [vmem:[#allocation4 + $0x30] sm:$0xff] %v764
        %773 = vst [vmem:[#allocation4 + $0x38] sm:$0xff] %v765
        %v774 = vld [vmem:[%s547] sm:$0xff]
        %v775 = vld [vmem:[%s547 + $0x8] sm:$0xff]
        %v776 = vld [vmem:[%s547 + $0x10] sm:$0xff]
        %v777 = vld [vmem:[%s547 + $0x18] sm:$0xff]
        %v778 = vld [vmem:[#allocation10] sm:$0xff]
        %v779 = vld [vmem:[#allocation10 + $0x8] sm:$0xff]
        %v780 = vld [vmem:[#allocation10 + $0x10] sm:$0xff]
        %v781 = vld [vmem:[#allocation10 + $0x18] sm:$0xff]
        %v782 = vld [vmem:[#allocation10 + $0x20] sm:$0xff]
        %v783 = vld [vmem:[#allocation10 + $0x28] sm:$0xff]
        %v784 = vld [vmem:[#allocation10 + $0x30] sm:$0xff]
        %v785 = vld [vmem:[#allocation10 + $0x38] sm:$0xff]
        %v786 = vld [vmem:[%s555] sm:$0xff]
        %v787 = vld [vmem:[%s555 + $0x8] sm:$0xff]
        %v788 = vld [vmem:[%s555 + $0x10] sm:$0xff]
        %v789 = vld [vmem:[%s555 + $0x18] sm:$0xff]
        %v790 = vld [vmem:[#allocation11] sm:$0xff]
        %v791 = vld [vmem:[#allocation11 + $0x8] sm:$0xff]
        %v792 = vld [vmem:[#allocation11 + $0x10] sm:$0xff]
        %v793 = vld [vmem:[#allocation11 + $0x18] sm:$0xff]
        %v794 = vld [vmem:[#allocation11 + $0x20] sm:$0xff]
        %v795 = vld [vmem:[#allocation11 + $0x28] sm:$0xff]
        %v796 = vld [vmem:[#allocation11 + $0x30] sm:$0xff]
        %v797 = vld [vmem:[#allocation11 + $0x38] sm:$0xff]
        %v799 = vsel %vm592, %v786, 0
        %v802 = vsel %vm592, %v787, 0
        %v805 = vsel %vm592, %v788, 0
        %v808 = vsel %vm592, %v789, 0
        %810 = vmatpush.msra.mxu0 0.0
        %811 = vmatpush.msra.mxu0 0.0
        %812 = vmatpush.msra.mxu0 0.0
        %813 = vmatpush.msra.mxu0 0.0
        %814 = vmatpush.msra.mxu0 0.0
        %815 = vmatpush.msra.mxu0 0.0
        %816 = vmatpush.msra.mxu0 0.0
        %817 = vmatpush.msra.mxu0 0.0
        %818 = vmatpush.msra.mxu0 0.0
        %819 = vmatpush.msra.mxu0 0.0
        %820 = vmatpush.msra.mxu0 0.0
        %821 = vmatpush.msra.mxu0 0.0
        %822 = vmatpush.msra.mxu0 %v796
        %823 = vmatpush.msra.mxu0 %v794
        %824 = vmatpush.msra.mxu0 %v792
        %825 = vmatpush.msra.mxu0 %v790
        %826 = vmatmul.f32.gmra.mxu0 %v799
        %v827 = vpop.f32.mrf.mxu0
        %v828 = vadd.f32 0.0, %v827
        %829 = vmatmul.f32.gmra.mxu0 %v802
        %v830 = vpop.f32.mrf.mxu0
        %v831 = vadd.f32 0.0, %v830
        %832 = vmatmul.f32.gmra.mxu0 %v805
        %v833 = vpop.f32.mrf.mxu0
        %v834 = vadd.f32 0.0, %v833
        %835 = vmatmul.f32.gmra.mxu0 %v808
        %v836 = vpop.f32.mrf.mxu0
        %v837 = vadd.f32 0.0, %v836
        %838 = vdwg.mxu0
        %839 = vmatpush.msra.mxu0 0.0
        %840 = vmatpush.msra.mxu0 0.0
        %841 = vmatpush.msra.mxu0 0.0
        %842 = vmatpush.msra.mxu0 0.0
        %843 = vmatpush.msra.mxu0 0.0
        %844 = vmatpush.msra.mxu0 0.0
        %845 = vmatpush.msra.mxu0 0.0
        %846 = vmatpush.msra.mxu0 0.0
        %847 = vmatpush.msra.mxu0 0.0
        %848 = vmatpush.msra.mxu0 0.0
        %849 = vmatpush.msra.mxu0 0.0
        %850 = vmatpush.msra.mxu0 0.0
        %851 = vmatpush.msra.mxu0 %v797
        %852 = vmatpush.msra.mxu0 %v795
        %853 = vmatpush.msra.mxu0 %v793
        %854 = vmatpush.msra.mxu0 %v791
        %855 = vmatmul.f32.gmra.mxu0 %v799
        %v856 = vpop.f32.mrf.mxu0
        %v857 = vadd.f32 0.0, %v856
        %858 = vmatmul.f32.gmra.mxu0 %v802
        %v859 = vpop.f32.mrf.mxu0
        %v860 = vadd.f32 0.0, %v859
        %861 = vmatmul.f32.gmra.mxu0 %v805
        %v862 = vpop.f32.mrf.mxu0
        %v863 = vadd.f32 0.0, %v862
        %864 = vmatmul.f32.gmra.mxu0 %v808
        %v865 = vpop.f32.mrf.mxu0
        %v866 = vadd.f32 0.0, %v865
        %867 = vdwg.mxu0
        %v869 = vsel %vm592, %v774, 0
        %v872 = vsel %vm592, %v775, 0
        %v875 = vsel %vm592, %v776, 0
        %v878 = vsel %vm592, %v777, 0
        %880 = vmatpush.msra.mxu0 0.0
        %881 = vmatpush.msra.mxu0 0.0
        %882 = vmatpush.msra.mxu0 0.0
        %883 = vmatpush.msra.mxu0 0.0
        %884 = vmatpush.msra.mxu0 0.0
        %885 = vmatpush.msra.mxu0 0.0
        %886 = vmatpush.msra.mxu0 0.0
        %887 = vmatpush.msra.mxu0 0.0
        %888 = vmatpush.msra.mxu0 0.0
        %889 = vmatpush.msra.mxu0 0.0
        %890 = vmatpush.msra.mxu0 0.0
        %891 = vmatpush.msra.mxu0 0.0
        %892 = vmatpush.msra.mxu0 %v784
        %893 = vmatpush.msra.mxu0 %v782
        %894 = vmatpush.msra.mxu0 %v780
        %895 = vmatpush.msra.mxu0 %v778
        %896 = vmatmul.f32.gmra.mxu0 %v869
        %v897 = vpop.f32.mrf.mxu0
        %v898 = vadd.f32 %v828, %v897
        %899 = vmatmul.f32.gmra.mxu0 %v872
        %v900 = vpop.f32.mrf.mxu0
        %v901 = vadd.f32 %v831, %v900
        %902 = vmatmul.f32.gmra.mxu0 %v875
        %v903 = vpop.f32.mrf.mxu0
        %v904 = vadd.f32 %v834, %v903
        %905 = vmatmul.f32.gmra.mxu0 %v878
        %v906 = vpop.f32.mrf.mxu0
        %v907 = vadd.f32 %v837, %v906
        %908 = vdwg.mxu0
        %909 = vmatpush.msra.mxu0 0.0
        %910 = vmatpush.msra.mxu0 0.0
        %911 = vmatpush.msra.mxu0 0.0
        %912 = vmatpush.msra.mxu0 0.0
        %913 = vmatpush.msra.mxu0 0.0
        %914 = vmatpush.msra.mxu0 0.0
        %915 = vmatpush.msra.mxu0 0.0
        %916 = vmatpush.msra.mxu0 0.0
        %917 = vmatpush.msra.mxu0 0.0
        %918 = vmatpush.msra.mxu0 0.0
        %919 = vmatpush.msra.mxu0 0.0
        %920 = vmatpush.msra.mxu0 0.0
        %921 = vmatpush.msra.mxu0 %v785
        %922 = vmatpush.msra.mxu0 %v783
        %923 = vmatpush.msra.mxu0 %v781
        %924 = vmatpush.msra.mxu0 %v779
        %925 = vmatmul.f32.gmra.mxu0 %v869
        %v926 = vpop.f32.mrf.mxu0
        %v927 = vadd.f32 %v857, %v926
        %928 = vmatmul.f32.gmra.mxu0 %v872
        %v929 = vpop.f32.mrf.mxu0
        %v930 = vadd.f32 %v860, %v929
        %931 = vmatmul.f32.gmra.mxu0 %v875
        %v932 = vpop.f32.mrf.mxu0
        %v933 = vadd.f32 %v863, %v932
        %934 = vmatmul.f32.gmra.mxu0 %v878
        %v935 = vpop.f32.mrf.mxu0
        %v936 = vadd.f32 %v866, %v935
        %937 = vdwg.mxu0
        %938 = vst [vmem:[#allocation5] sm:$0xff] %v898
        %939 = vst [vmem:[#allocation5 + $0x8] sm:$0xff] %v927
        %940 = vst [vmem:[#allocation5 + $0x10] sm:$0xff] %v901
        %941 = vst [vmem:[#allocation5 + $0x18] sm:$0xff] %v930
        %942 = vst [vmem:[#allocation5 + $0x20] sm:$0xff] %v904
        %943 = vst [vmem:[#allocation5 + $0x28] sm:$0xff] %v933
        %944 = vst [vmem:[#allocation5 + $0x30] sm:$0xff] %v907
        %945 = vst [vmem:[#allocation5 + $0x38] sm:$0xff] %v936
        %v946 = vld [vmem:[#allocation13] sm:$0xff]
        %v947 = vld [vmem:[#allocation13 + $0x8] sm:$0xff]
        %v948 = vld [vmem:[#allocation13 + $0x10] sm:$0xff]
        %v949 = vld [vmem:[#allocation13 + $0x18] sm:$0xff]
        %v950 = vld [vmem:[#allocation13 + $0x20] sm:$0xff]
        %v951 = vld [vmem:[#allocation13 + $0x28] sm:$0xff]
        %v952 = vld [vmem:[#allocation13 + $0x30] sm:$0xff]
        %v953 = vld [vmem:[#allocation13 + $0x38] sm:$0xff]
        %v954 = vld [vmem:[#allocation13 + $0x40] sm:$0xff]
        %v955 = vld [vmem:[#allocation13 + $0x48] sm:$0xff]
        %v956 = vld [vmem:[#allocation13 + $0x50] sm:$0xff]
        %v957 = vld [vmem:[#allocation13 + $0x58] sm:$0xff]
        %v958 = vld [vmem:[#allocation13 + $0x60] sm:$0xff]
        %v959 = vld [vmem:[#allocation13 + $0x68] sm:$0xff]
        %v960 = vld [vmem:[#allocation13 + $0x70] sm:$0xff]
        %v961 = vld [vmem:[#allocation13 + $0x78] sm:$0xff]
        %v962 = vlaneseq
        %v963 = vand.u32 %v962, 127
        %v964 = vadd.s32 %v963, 128
        %vm965 = vcmp.ge.s32.totalorder %v963, 128
        %vm966 = vcmp.ge.s32.totalorder %v964, 128
        %vm967 = vcmp.lt.s32.totalorder %v963, 192
        %vm968 = vcmp.lt.s32.totalorder %v964, 192
        %vm969 = vmand %vm965, %vm967
        %vm970 = vmand %vm966, %vm968
        %v971 = vld [vmem:[#allocation2] sm:$0xff]
        %v972 = vld [vmem:[#allocation3] sm:$0xff]
        %v973 = vld [vmem:[#allocation4] sm:$0xff]
        %v974 = vld [vmem:[#allocation4 + $0x8] sm:$0xff]
        %v975 = vld [vmem:[#allocation5 + $0x30] sm:$0xff]
        %v976 = vld [vmem:[#allocation5 + $0x38] sm:$0xff]
        %v977 = vadd.f32 %v973, %v975
        %v978 = vadd.f32 %v974, %v976
        %vm979 = vcmask 523264
        %v981 = vsel %vm979, %v971, 0
        %983 = vmatpush.msra.mxu0 0.0
        %984 = vmatpush.msra.mxu0 0.0
        %985 = vmatpush.msra.mxu0 0.0
        %986 = vmatpush.msra.mxu0 0.0
        %987 = vmatpush.msra.mxu0 0.0
        %988 = vmatpush.msra.mxu0 0.0
        %989 = vmatpush.msra.mxu0 0.0
        %990 = vmatpush.msra.mxu0 0.0
        %991 = vmatpush.msra.mxu0 %v960
        %992 = vmatpush.msra.mxu0 %v958
        %993 = vmatpush.msra.mxu0 %v956
        %994 = vmatpush.msra.mxu0 %v954
        %995 = vmatpush.msra.mxu0 %v952
        %996 = vmatpush.msra.mxu0 %v950
        %997 = vmatpush.msra.mxu0 %v948
        %998 = vmatpush.msra.mxu0 %v946
        %999 = vmatmul.f32.gmra.mxu0 %v981
        %v1000 = vpop.f32.mrf.mxu0
        %v1001 = vadd.f32 0.0, %v1000
        %1002 = vdwg.mxu0
        %1003 = vmatpush.msra.mxu0 0.0
        %1004 = vmatpush.msra.mxu0 0.0
        %1005 = vmatpush.msra.mxu0 0.0
        %1006 = vmatpush.msra.mxu0 0.0
        %1007 = vmatpush.msra.mxu0 0.0
        %1008 = vmatpush.msra.mxu0 0.0
        %1009 = vmatpush.msra.mxu0 0.0
        %1010 = vmatpush.msra.mxu0 0.0
        %1011 = vmatpush.msra.mxu0 %v961
        %1012 = vmatpush.msra.mxu0 %v959
        %1013 = vmatpush.msra.mxu0 %v957
        %1014 = vmatpush.msra.mxu0 %v955
        %1015 = vmatpush.msra.mxu0 %v953
        %1016 = vmatpush.msra.mxu0 %v951
        %1017 = vmatpush.msra.mxu0 %v949
        %1018 = vmatpush.msra.mxu0 %v947
        %1019 = vmatmul.f32.gmra.mxu0 %v981
        %v1020 = vpop.f32.mrf.mxu0
        %v1021 = vadd.f32 0.0, %v1020
        %1022 = vdwg.mxu0
        %v1023 = vadd.f32 %v977, %v1001
        %v1024 = vadd.f32 %v978, %v1021
        %v1025 = vtanh.pop %v1023
        %v1026 = vtanh.pop %v1024
        %v1027 = vxor.u32 %v1023, 2147483648
        %v1028 = vxor.u32 %v1024, 2147483648
        %v1029 = vmul.f32 %v1027, 1.442695
        %v1030 = vpow.pop %v1029
        %v1031 = vmul.f32 %v1028, 1.442695
        %v1032 = vpow.pop %v1031
        %v1033 = vadd.f32 %v1030, 1.0
        %v1034 = vadd.f32 %v1032, 1.0
        %v1035 = vrcp.pop %v1033
        %v1036 = vmul.f32 %v1033, %v1035
        %v1037 = vsub.f32 1.0, %v1036
        %v1038 = vmul.f32 %v1035, %v1037
        %v1039 = vadd.f32 %v1035, %v1038
        %vm1040 = vweird.f32 %v1033
        %vm1041 = vweird.f32 %v1035
        %vm1042 = vmor %vm1040, %vm1041
        %v1043 = vsel %vm1042, %v1035, %v1039
        %v1044 = vand.u32 2147483647, %v1033
        %vm1045 = vcmp.eq.f32.partialorder %v1044, 8.507059e+37
        %v1046 = vand.u32 %v1033, 2147483648
        %v1047 = vor.u32 1.1754944e-38, %v1046
        %v1048 = vsel %vm1045, %v1047, %v1043
        %v1049 = vmul.f32 1.0, %v1048
        %v1050 = vrcp.pop %v1034
        %v1051 = vmul.f32 %v1034, %v1050
        %v1052 = vsub.f32 1.0, %v1051
        %v1053 = vmul.f32 %v1050, %v1052
        %v1054 = vadd.f32 %v1050, %v1053
        %vm1055 = vweird.f32 %v1034
        %vm1056 = vweird.f32 %v1050
        %vm1057 = vmor %vm1055, %vm1056
        %v1058 = vsel %vm1057, %v1050, %v1054
        %v1059 = vand.u32 2147483647, %v1034
        %vm1060 = vcmp.eq.f32.partialorder %v1059, 8.507059e+37
        %v1061 = vand.u32 %v1034, 2147483648
        %v1062 = vor.u32 1.1754944e-38, %v1061
        %v1063 = vsel %vm1060, %v1062, %v1058
        %v1064 = vmul.f32 1.0, %v1063
        %v1065 = vsel %vm969, %v1025, %v1049
        %v1066 = vsel %vm970, %v1026, %v1064
        %1068 = vrot.lane.b32.xlu0 %v972, 64
        %v1069 = vpop.permute.xlu0 %1068
        %v1071 = vmul.f32 %v1065, %v1069
        %v1072 = vmul.f32 %v1065, %v1066
        %1074 = vrot.lane.b32.xlu0 %v1072, 64
        %v1075 = vpop.permute.xlu0 %1074
        %v1077 = vadd.f32 %v1071, %v1075
        %v1078 = vtanh.pop %v1077
        %v1079 = vmul.f32 %v1066, %v1078
        %1081 = vrot.lane.b32.xlu0 %v1079, 64
        %v1082 = vpop.permute.xlu0 %1081
        %1084 = vst.msk [vmem:[%s562] sm:$0xff] %vm592, %v1082
        %1085 = vrot.lane.b32.xlu0 %v1079, 32
        %v1086 = vpop.permute.xlu0 %1085
        %1088 = vst.msk [vmem:[%s569 + $0x18] sm:$0xff] %vm592, %v1086
        %v1089 = vld [vmem:[#allocation4 + $0x10] sm:$0xff]
        %v1090 = vld [vmem:[#allocation4 + $0x18] sm:$0xff]
        %v1091 = vld [vmem:[#allocation5 + $0x20] sm:$0xff]
        %v1092 = vld [vmem:[#allocation5 + $0x28] sm:$0xff]
        %v1093 = vadd.f32 %v1089, %v1091
        %v1094 = vadd.f32 %v1090, %v1092
        %v1095 = vsel %vm979, %v1082, 0
        %1097 = vmatpush.msra.mxu0 0.0
        %1098 = vmatpush.msra.mxu0 0.0
        %1099 = vmatpush.msra.mxu0 0.0
        %1100 = vmatpush.msra.mxu0 0.0
        %1101 = vmatpush.msra.mxu0 0.0
        %1102 = vmatpush.msra.mxu0 0.0
        %1103 = vmatpush.msra.mxu0 0.0
        %1104 = vmatpush.msra.mxu0 0.0
        %1105 = vmatpush.msra.mxu0 %v960
        %1106 = vmatpush.msra.mxu0 %v958
        %1107 = vmatpush.msra.mxu0 %v956
        %1108 = vmatpush.msra.mxu0 %v954
        %1109 = vmatpush.msra.mxu0 %v952
        %1110 = vmatpush.msra.mxu0 %v950
        %1111 = vmatpush.msra.mxu0 %v948
        %1112 = vmatpush.msra.mxu0 %v946
        %1113 = vmatmul.f32.gmra.mxu0 %v1095
        %v1114 = vpop.f32.mrf.mxu0
        %v1115 = vadd.f32 0.0, %v1114
        %1116 = vdwg.mxu0
        %1117 = vmatpush.msra.mxu0 0.0
        %1118 = vmatpush.msra.mxu0 0.0
        %1119 = vmatpush.msra.mxu0 0.0
        %1120 = vmatpush.msra.mxu0 0.0
        %1121 = vmatpush.msra.mxu0 0.0
        %1122 = vmatpush.msra.mxu0 0.0
        %1123 = vmatpush.msra.mxu0 0.0
        %1124 = vmatpush.msra.mxu0 0.0
        %1125 = vmatpush.msra.mxu0 %v961
        %1126 = vmatpush.msra.mxu0 %v959
        %1127 = vmatpush.msra.mxu0 %v957
        %1128 = vmatpush.msra.mxu0 %v955
        %1129 = vmatpush.msra.mxu0 %v953
        %1130 = vmatpush.msra.mxu0 %v951
        %1131 = vmatpush.msra.mxu0 %v949
        %1132 = vmatpush.msra.mxu0 %v947
        %1133 = vmatmul.f32.gmra.mxu0 %v1095
        %v1134 = vpop.f32.mrf.mxu0
        %v1135 = vadd.f32 0.0, %v1134
        %1136 = vdwg.mxu0
        %v1137 = vadd.f32 %v1093, %v1115
        %v1138 = vadd.f32 %v1094, %v1135
        %v1139 = vtanh.pop %v1137
        %v1140 = vtanh.pop %v1138
        %v1141 = vxor.u32 %v1137, 2147483648
        %v1142 = vxor.u32 %v1138, 2147483648
        %v1143 = vmul.f32 %v1141, 1.442695
        %v1144 = vpow.pop %v1143
        %v1145 = vmul.f32 %v1142, 1.442695
        %v1146 = vpow.pop %v1145
        %v1147 = vadd.f32 %v1144, 1.0
        %v1148 = vadd.f32 %v1146, 1.0
        %v1149 = vrcp.pop %v1147
        %v1150 = vmul.f32 %v1147, %v1149
        %v1151 = vsub.f32 1.0, %v1150
        %v1152 = vmul.f32 %v1149, %v1151
        %v1153 = vadd.f32 %v1149, %v1152
        %vm1154 = vweird.f32 %v1147
        %vm1155 = vweird.f32 %v1149
        %vm1156 = vmor %vm1154, %vm1155
        %v1157 = vsel %vm1156, %v1149, %v1153
        %v1158 = vand.u32 2147483647, %v1147
        %vm1159 = vcmp.eq.f32.partialorder %v1158, 8.507059e+37
        %v1160 = vand.u32 %v1147, 2147483648
        %v1161 = vor.u32 1.1754944e-38, %v1160
        %v1162 = vsel %vm1159, %v1161, %v1157
        %v1163 = vmul.f32 1.0, %v1162
        %v1164 = vrcp.pop %v1148
        %v1165 = vmul.f32 %v1148, %v1164
        %v1166 = vsub.f32 1.0, %v1165
        %v1167 = vmul.f32 %v1164, %v1166
        %v1168 = vadd.f32 %v1164, %v1167
        %vm1169 = vweird.f32 %v1148
        %vm1170 = vweird.f32 %v1164
        %vm1171 = vmor %vm1169, %vm1170
        %v1172 = vsel %vm1171, %v1164, %v1168
        %v1173 = vand.u32 2147483647, %v1148
        %vm1174 = vcmp.eq.f32.partialorder %v1173, 8.507059e+37
        %v1175 = vand.u32 %v1148, 2147483648
        %v1176 = vor.u32 1.1754944e-38, %v1175
        %v1177 = vsel %vm1174, %v1176, %v1172
        %v1178 = vmul.f32 1.0, %v1177
        %v1179 = vsel %vm969, %v1139, %v1163
        %v1180 = vsel %vm970, %v1140, %v1178
        %v1181 = vmul.f32 %v1179, %v1077
        %v1182 = vmul.f32 %v1179, %v1180
        %1184 = vrot.lane.b32.xlu0 %v1182, 64
        %v1185 = vpop.permute.xlu0 %1184
        %v1187 = vadd.f32 %v1181, %v1185
        %v1188 = vtanh.pop %v1187
        %v1189 = vmul.f32 %v1180, %v1188
        %1191 = vrot.lane.b32.xlu0 %v1189, 64
        %v1192 = vpop.permute.xlu0 %1191
        %1194 = vst.msk [vmem:[%s562 + $0x8] sm:$0xff] %vm592, %v1192
        %1195 = vrot.lane.b32.xlu0 %v1189, 32
        %v1196 = vpop.permute.xlu0 %1195
        %1198 = vst.msk [vmem:[%s569 + $0x10] sm:$0xff] %vm592, %v1196
        %v1199 = vld [vmem:[#allocation4 + $0x20] sm:$0xff]
        %v1200 = vld [vmem:[#allocation4 + $0x28] sm:$0xff]
        %v1201 = vld [vmem:[#allocation5 + $0x10] sm:$0xff]
        %v1202 = vld [vmem:[#allocation5 + $0x18] sm:$0xff]
        %v1203 = vadd.f32 %v1199, %v1201
        %v1204 = vadd.f32 %v1200, %v1202
        %v1205 = vsel %vm979, %v1192, 0
        %1207 = vmatpush.msra.mxu0 0.0
        %1208 = vmatpush.msra.mxu0 0.0
        %1209 = vmatpush.msra.mxu0 0.0
        %1210 = vmatpush.msra.mxu0 0.0
        %1211 = vmatpush.msra.mxu0 0.0
        %1212 = vmatpush.msra.mxu0 0.0
        %1213 = vmatpush.msra.mxu0 0.0
        %1214 = vmatpush.msra.mxu0 0.0
        %1215 = vmatpush.msra.mxu0 %v960
        %1216 = vmatpush.msra.mxu0 %v958
        %1217 = vmatpush.msra.mxu0 %v956
        %1218 = vmatpush.msra.mxu0 %v954
        %1219 = vmatpush.msra.mxu0 %v952
        %1220 = vmatpush.msra.mxu0 %v950
        %1221 = vmatpush.msra.mxu0 %v948
        %1222 = vmatpush.msra.mxu0 %v946
        %1223 = vmatmul.f32.gmra.mxu0 %v1205
        %v1224 = vpop.f32.mrf.mxu0
        %v1225 = vadd.f32 0.0, %v1224
        %1226 = vdwg.mxu0
        %1227 = vmatpush.msra.mxu0 0.0
        %1228 = vmatpush.msra.mxu0 0.0
        %1229 = vmatpush.msra.mxu0 0.0
        %1230 = vmatpush.msra.mxu0 0.0
        %1231 = vmatpush.msra.mxu0 0.0
        %1232 = vmatpush.msra.mxu0 0.0
        %1233 = vmatpush.msra.mxu0 0.0
        %1234 = vmatpush.msra.mxu0 0.0
        %1235 = vmatpush.msra.mxu0 %v961
        %1236 = vmatpush.msra.mxu0 %v959
        %1237 = vmatpush.msra.mxu0 %v957
        %1238 = vmatpush.msra.mxu0 %v955
        %1239 = vmatpush.msra.mxu0 %v953
        %1240 = vmatpush.msra.mxu0 %v951
        %1241 = vmatpush.msra.mxu0 %v949
        %1242 = vmatpush.msra.mxu0 %v947
        %1243 = vmatmul.f32.gmra.mxu0 %v1205
        %v1244 = vpop.f32.mrf.mxu0
        %v1245 = vadd.f32 0.0, %v1244
        %1246 = vdwg.mxu0
        %v1247 = vadd.f32 %v1203, %v1225
        %v1248 = vadd.f32 %v1204, %v1245
        %v1249 = vtanh.pop %v1247
        %v1250 = vtanh.pop %v1248
        %v1251 = vxor.u32 %v1247, 2147483648
        %v1252 = vxor.u32 %v1248, 2147483648
        %v1253 = vmul.f32 %v1251, 1.442695
        %v1254 = vpow.pop %v1253
        %v1255 = vmul.f32 %v1252, 1.442695
        %v1256 = vpow.pop %v1255
        %v1257 = vadd.f32 %v1254, 1.0
        %v1258 = vadd.f32 %v1256, 1.0
        %v1259 = vrcp.pop %v1257
        %v1260 = vmul.f32 %v1257, %v1259
        %v1261 = vsub.f32 1.0, %v1260
        %v1262 = vmul.f32 %v1259, %v1261
        %v1263 = vadd.f32 %v1259, %v1262
        %vm1264 = vweird.f32 %v1257
        %vm1265 = vweird.f32 %v1259
        %vm1266 = vmor %vm1264, %vm1265
        %v1267 = vsel %vm1266, %v1259, %v1263
        %v1268 = vand.u32 2147483647, %v1257
        %vm1269 = vcmp.eq.f32.partialorder %v1268, 8.507059e+37
        %v1270 = vand.u32 %v1257, 2147483648
        %v1271 = vor.u32 1.1754944e-38, %v1270
        %v1272 = vsel %vm1269, %v1271, %v1267
        %v1273 = vmul.f32 1.0, %v1272
        %v1274 = vrcp.pop %v1258
        %v1275 = vmul.f32 %v1258, %v1274
        %v1276 = vsub.f32 1.0, %v1275
        %v1277 = vmul.f32 %v1274, %v1276
        %v1278 = vadd.f32 %v1274, %v1277
        %vm1279 = vweird.f32 %v1258
        %vm1280 = vweird.f32 %v1274
        %vm1281 = vmor %vm1279, %vm1280
        %v1282 = vsel %vm1281, %v1274, %v1278
        %v1283 = vand.u32 2147483647, %v1258
        %vm1284 = vcmp.eq.f32.partialorder %v1283, 8.507059e+37
        %v1285 = vand.u32 %v1258, 2147483648
        %v1286 = vor.u32 1.1754944e-38, %v1285
        %v1287 = vsel %vm1284, %v1286, %v1282
        %v1288 = vmul.f32 1.0, %v1287
        %v1289 = vsel %vm969, %v1249, %v1273
        %v1290 = vsel %vm970, %v1250, %v1288
        %v1291 = vmul.f32 %v1289, %v1187
        %v1292 = vmul.f32 %v1289, %v1290
        %1294 = vrot.lane.b32.xlu0 %v1292, 64
        %v1295 = vpop.permute.xlu0 %1294
        %v1297 = vadd.f32 %v1291, %v1295
        %v1298 = vtanh.pop %v1297
        %v1299 = vmul.f32 %v1290, %v1298
        %1301 = vrot.lane.b32.xlu0 %v1299, 64
        %v1302 = vpop.permute.xlu0 %1301
        %1304 = vst.msk [vmem:[%s562 + $0x10] sm:$0xff] %vm592, %v1302
        %1305 = vrot.lane.b32.xlu0 %v1299, 32
        %v1306 = vpop.permute.xlu0 %1305
        %1308 = vst.msk [vmem:[%s569 + $0x8] sm:$0xff] %vm592, %v1306
        %v1309 = vld [vmem:[#allocation4 + $0x30] sm:$0xff]
        %v1310 = vld [vmem:[#allocation4 + $0x38] sm:$0xff]
        %v1311 = vld [vmem:[#allocation5] sm:$0xff]
        %v1312 = vld [vmem:[#allocation5 + $0x8] sm:$0xff]
        %v1313 = vadd.f32 %v1309, %v1311
        %v1314 = vadd.f32 %v1310, %v1312
        %v1315 = vsel %vm979, %v1302, 0
        %1317 = vmatpush.msra.mxu0 0.0
        %1318 = vmatpush.msra.mxu0 0.0
        %1319 = vmatpush.msra.mxu0 0.0
        %1320 = vmatpush.msra.mxu0 0.0
        %1321 = vmatpush.msra.mxu0 0.0
        %1322 = vmatpush.msra.mxu0 0.0
        %1323 = vmatpush.msra.mxu0 0.0
        %1324 = vmatpush.msra.mxu0 0.0
        %1325 = vmatpush.msra.mxu0 %v960
        %1326 = vmatpush.msra.mxu0 %v958
        %1327 = vmatpush.msra.mxu0 %v956
        %1328 = vmatpush.msra.mxu0 %v954
        %1329 = vmatpush.msra.mxu0 %v952
        %1330 = vmatpush.msra.mxu0 %v950
        %1331 = vmatpush.msra.mxu0 %v948
        %1332 = vmatpush.msra.mxu0 %v946
        %1333 = vmatmul.f32.gmra.mxu0 %v1315
        %v1334 = vpop.f32.mrf.mxu0
        %v1335 = vadd.f32 0.0, %v1334
        %1336 = vdwg.mxu0
        %1337 = vmatpush.msra.mxu0 0.0
        %1338 = vmatpush.msra.mxu0 0.0
        %1339 = vmatpush.msra.mxu0 0.0
        %1340 = vmatpush.msra.mxu0 0.0
        %1341 = vmatpush.msra.mxu0 0.0
        %1342 = vmatpush.msra.mxu0 0.0
        %1343 = vmatpush.msra.mxu0 0.0
        %1344 = vmatpush.msra.mxu0 0.0
        %1345 = vmatpush.msra.mxu0 %v961
        %1346 = vmatpush.msra.mxu0 %v959
        %1347 = vmatpush.msra.mxu0 %v957
        %1348 = vmatpush.msra.mxu0 %v955
        %1349 = vmatpush.msra.mxu0 %v953
        %1350 = vmatpush.msra.mxu0 %v951
        %1351 = vmatpush.msra.mxu0 %v949
        %1352 = vmatpush.msra.mxu0 %v947
        %1353 = vmatmul.f32.gmra.mxu0 %v1315
        %v1354 = vpop.f32.mrf.mxu0
        %v1355 = vadd.f32 0.0, %v1354
        %1356 = vdwg.mxu0
        %v1357 = vadd.f32 %v1313, %v1335
        %v1358 = vadd.f32 %v1314, %v1355
        %v1359 = vtanh.pop %v1357
        %v1360 = vtanh.pop %v1358
        %v1361 = vxor.u32 %v1357, 2147483648
        %v1362 = vxor.u32 %v1358, 2147483648
        %v1363 = vmul.f32 %v1361, 1.442695
        %v1364 = vpow.pop %v1363
        %v1365 = vmul.f32 %v1362, 1.442695
        %v1366 = vpow.pop %v1365
        %v1367 = vadd.f32 %v1364, 1.0
        %v1368 = vadd.f32 %v1366, 1.0
        %v1369 = vrcp.pop %v1367
        %v1370 = vmul.f32 %v1367, %v1369
        %v1371 = vsub.f32 1.0, %v1370
        %v1372 = vmul.f32 %v1369, %v1371
        %v1373 = vadd.f32 %v1369, %v1372
        %vm1374 = vweird.f32 %v1367
        %vm1375 = vweird.f32 %v1369
        %vm1376 = vmor %vm1374, %vm1375
        %v1377 = vsel %vm1376, %v1369, %v1373
        %v1378 = vand.u32 2147483647, %v1367
        %vm1379 = vcmp.eq.f32.partialorder %v1378, 8.507059e+37
        %v1380 = vand.u32 %v1367, 2147483648
        %v1381 = vor.u32 1.1754944e-38, %v1380
        %v1382 = vsel %vm1379, %v1381, %v1377
        %v1383 = vmul.f32 1.0, %v1382
        %v1384 = vrcp.pop %v1368
        %v1385 = vmul.f32 %v1368, %v1384
        %v1386 = vsub.f32 1.0, %v1385
        %v1387 = vmul.f32 %v1384, %v1386
        %v1388 = vadd.f32 %v1384, %v1387
        %vm1389 = vweird.f32 %v1368
        %vm1390 = vweird.f32 %v1384
        %vm1391 = vmor %vm1389, %vm1390
        %v1392 = vsel %vm1391, %v1384, %v1388
        %v1393 = vand.u32 2147483647, %v1368
        %vm1394 = vcmp.eq.f32.partialorder %v1393, 8.507059e+37
        %v1395 = vand.u32 %v1368, 2147483648
        %v1396 = vor.u32 1.1754944e-38, %v1395
        %v1397 = vsel %vm1394, %v1396, %v1392
        %v1398 = vmul.f32 1.0, %v1397
        %v1399 = vsel %vm969, %v1359, %v1383
        %v1400 = vsel %vm970, %v1360, %v1398
        %v1401 = vmul.f32 %v1399, %v1297
        %v1402 = vmul.f32 %v1399, %v1400
        %1404 = vrot.lane.b32.xlu0 %v1402, 64
        %v1405 = vpop.permute.xlu0 %1404
        %v1407 = vadd.f32 %v1401, %v1405
        %v1408 = vtanh.pop %v1407
        %v1409 = vmul.f32 %v1400, %v1408
        %1411 = vrot.lane.b32.xlu0 %v1409, 64
        %v1412 = vpop.permute.xlu0 %1411
        %1414 = vst.msk [vmem:[%s562 + $0x18] sm:$0xff] %vm592, %v1412
        %1415 = vrot.lane.b32.xlu0 %v1409, 32
        %v1416 = vpop.permute.xlu0 %1415
        %1418 = vst.msk [vmem:[%s569] sm:$0xff] %vm592, %v1416
        %1419 = vst.msk [vmem:[#allocation2] sm:$0xff] %vm979, %v1412
        %1421 = vrot.lane.b32.xlu0 %v1407, 64
        %v1422 = vpop.permute.xlu0 %1421
        %1424 = vst.msk [vmem:[#allocation3] sm:$0xff] %vm979, %v1422
        %s1425 = smul.u32 4, %s26
        %p1426 = scmp.lt.s32.totalorder %s1425, 7
        %s1427 = scalar_select %p1426, %s1425, 7
        %s1428 = smul.addr %s1427, 8
        %s1429 = scalar_lea.vmem %s10, %s1428
        %s1430 = ssub.s32 1, %s26
        %s1431 = smul.u32 4, %s1430
        %p1432 = scmp.lt.s32.totalorder %s1431, 7
        %s1433 = scalar_select %p1432, %s1431, 7
        %s1434 = smul.addr %s1433, 8
        %s1435 = scalar_lea.vmem %s11, %s1434
        // Predicated region
        $region85: #{text_encoder_forward.5} parent=59 // pred_check
          %p1436 = pneg %p278
        $region86: #{text_encoder_forward.5} parent=59 // pred_check_branch
          %1438 = sbr.rel (%p1436) target = $region88
        $region87: #{text_encoder_forward.5} parent=59 // pred_region
          %s1439 = smul.u32 4, %s26
        $region88: #{text_encoder_forward.5} parent=59 // pred_fallthru
          _
        // Predicated region
        $region89: #{text_encoder_forward.5} parent=59 // pred_check
          %p1440 = pneg %p306
        $region90: #{text_encoder_forward.5} parent=59 // pred_check_branch
          %1442 = sbr.rel (%p1440) target = $region92
        $region91: #{text_encoder_forward.5} parent=59 // pred_region
          %s1443 = ssub.s32 1, %s26
          %s1444 = smul.u32 4, %s1443
        $region92: #{text_encoder_forward.5} parent=59 // pred_fallthru
          _
      $region60: #{text_encoder_forward.5} parent=5 // pred_fallthru
        _
      %p1445 = scmp.le.s32.totalorder 2, %s21
      // Predicated region
      $region93: #{text_encoder_forward.5} parent=5 // pred_check
        %p1446 = pneg %p1445
      $region94: #{text_encoder_forward.5} parent=5 // pred_check_branch
        %1448 = sbr.rel (%p1446) target = $region96
      $region95: #{text_encoder_forward.5} parent=5 // pred_region
        %s1449 = ssub.s32 %s21, 2
        // Predicated region
        $region97: #{text_encoder_forward.5} parent=95 // pred_check
          %p1450 = pneg %p284
        $region98: #{text_encoder_forward.5} parent=95 // pred_check_branch
          %1452 = sbr.rel (%p1450) target = $region100
        $region99: #{text_encoder_forward.5} parent=95 // pred_region
          %s1453 = smul.u32 4, %s27
          %p1454 = scmp.lt.s32.totalorder %s1453, 7
          %s1455 = scalar_select %p1454, %s1453, 7
          %s1456 = smul.addr %s1455, 8
          %s1457 = scalar_lea.vmem %s10, %s1456
        $region100: #{text_encoder_forward.5} parent=95 // pred_fallthru
          _
        // Predicated region
        $region101: #{text_encoder_forward.5} parent=95 // pred_check
          %p1458 = pneg %p312
        $region102: #{text_encoder_forward.5} parent=95 // pred_check_branch
          %1460 = sbr.rel (%p1458) target = $region104
        $region103: #{text_encoder_forward.5} parent=95 // pred_region
          %s1461 = ssub.s32 1, %s27
          %s1462 = smul.u32 4, %s1461
          %p1463 = scmp.lt.s32.totalorder %s1462, 7
          %s1464 = scalar_select %p1463, %s1462, 7
          %s1465 = smul.addr %s1464, 8
          %s1466 = scalar_lea.vmem %s11, %s1465
        $region104: #{text_encoder_forward.5} parent=95 // pred_fallthru
          _
      $region96: #{text_encoder_forward.5} parent=5 // pred_fallthru
        _
    $region6: #{text_encoder_forward.5} parent=1 // loop_footer
      %s25 = sadd.s32 1, %s21
    $region7: #{text_encoder_forward.5} parent=1 // loop_footer_branch
      %20 = sbr.rel target = $region3
    $region8: #{text_encoder_forward.5} parent=1 // loop_exit
      _
    %1467 = vsyncpa [#allocation7], 1
    %s1468 = scalar_lea.sflag [#allocation7], 1
    %1469 = vsyncpa %s1468, 1
    %1470 = vsyncpa [#allocation9], 1
    %1471 = vsyncpa [#allocation12], 1

</llo_original>
